<compile_context>
chip_gen: v5e
topology: v5e:2x2
jax: 0.10.0
libtpu: 0.0.40
codegen_flags: <defaults>
</compile_context>

<pallas_src>
import jax
import jax.numpy as jnp
from jax import lax
from jax.experimental import pallas as pl
from jax.experimental.pallas import tpu as pltpu
import numpy as np

C = 64        # channel width of the ResNet trunk
NCLASS = 4    # output classes
EPS = 1e-5    # BatchNorm eps


def resnet_kernel(xcol_ref, we_ref, be_ref, wblk_ref, bblk_ref,
                  wfc_ref, bfc_ref, out_ref):
    """Forward pass for Bs batch elements (one grid step).

    xcol_ref : (1, Bs*L, 8)  bf16 im2col of the raw input (entry taps, 7->8)
    we_ref   : (8, C)        bf16 entry conv weight, BN scale folded, tap 7 zero
    be_ref   : (1, C)        f32 folded entry bias
    wblk_ref : (6, 3, C, C)  bf16 per-tap conv weights, BN scale folded
    bblk_ref : (6, 1, C)     f32 folded conv biases
    wfc_ref  : (C, NCLASS)   bf16 final linear weight (transposed)
    bfc_ref  : (1, NCLASS)   f32 final linear bias
    out_ref  : (1, Bs, NCLASS) softmax probabilities
    """
    Bs = out_ref.shape[1]
    M = xcol_ref.shape[1]          # Bs * L (batch fused into matmul M dim)
    L = M // Bs

    # ---- entry: Conv1d(1, 64, k=7, pad=3) + folded BN + ReLU (one MXU dot) --
    h = jnp.dot(xcol_ref[0], we_ref[...],
                preferred_element_type=jnp.float32)            # (M, C) f32
    h = jnp.maximum(h + be_ref[...], 0.0)

    # Boundary masks for the +-1 sublane shifts: per-batch rows 0 / L-1 must be
    # zero (conv zero padding); the roll otherwise wraps across batch elements.
    row = lax.broadcasted_iota(jnp.int32, (M, 1), 0)
    first_row = (row % L) == 0
    last_row = (row % L) == (L - 1)

    def conv3(hf, j):
        # hf: (M, C) f32. Conv1d(64, 64, k=3, pad=1) + folded BN as three
        # accumulating K=64 dots; shifted operands are in-register sublane
        # rolls (XLU) with boundary zero-mask. No VMEM scratch, no concat.
        hb = hf.astype(jnp.bfloat16)
        down = jnp.where(first_row, 0.0,
                         pltpu.roll(hf, shift=1, axis=0)).astype(jnp.bfloat16)
        up = jnp.where(last_row, 0.0,
                       pltpu.roll(hf, shift=M - 1, axis=0)).astype(jnp.bfloat16)
        acc = jnp.dot(down, wblk_ref[j, 0], preferred_element_type=jnp.float32)
        acc += jnp.dot(hb, wblk_ref[j, 1], preferred_element_type=jnp.float32)
        acc += jnp.dot(up, wblk_ref[j, 2], preferred_element_type=jnp.float32)
        return acc + bblk_ref[j]                               # (M, C) f32

    # ---- three residual blocks ---------------------------------------------
    for b in range(3):
        y = jnp.maximum(conv3(h, 2 * b), 0.0)
        y = conv3(y, 2 * b + 1)
        h = jnp.maximum(y + h, 0.0)

    # ---- AdaptiveAvgPool1d(1) + Linear(64, 4) + softmax ---------------------
    pooled = jnp.sum(h.reshape(Bs, L, C), axis=1) * (1.0 / L)      # (Bs, C)
    logits = jnp.dot(pooled.astype(jnp.bfloat16), wfc_ref[...],
                     preferred_element_type=jnp.float32) + bfc_ref[...]
    m = jnp.max(logits, axis=1, keepdims=True)
    e = jnp.exp(logits - m)
    out_ref[0] = e / jnp.sum(e, axis=1, keepdims=True)   # exact divide (sums to 1)


def _num_tensorcores():
    """2 TensorCores per chip on v7x-class TPUs; 1 on v5e/v6e."""
    try:
        kind = jax.devices()[0].device_kind.lower()
    except Exception:
        return 1
    return 2 if ("v7" in kind or "tpu7" in kind) else 1


def resnet_forward(x, prepped):
    """x: (B, L) float32 -> (B, 4) softmax probabilities."""
    B, L = x.shape
    we, be, wblk, bblk, wfc, bfc = prepped

    # im2col for the entry k=7 conv (taps padded 7 -> 8), bf16 MXU operand.
    # (Moving this in-kernel is a known secondary optimization.)
    xp = jnp.pad(x, ((0, 0), (3, 3)))
    taps = [xp[:, k:k + L] for k in range(7)] + [jnp.zeros_like(x)]
    xcol_full = jnp.stack(taps, axis=-1).astype(jnp.bfloat16)       # (B, L, 8)

    # Grid config: G=1 on single-TC chips; G=2 + CORE_PARALLEL on v7x so the
    # batch halves land on different TensorCores. Fallback kept for safety.
    nc = _num_tensorcores()
    if nc >= 2 and B % nc == 0:
        grid_cfgs = [(nc, (pltpu.CORE_PARALLEL,)), (1, ("arbitrary",))]
    else:
        grid_cfgs = [(1, ("arbitrary",))]

    last_err = None
    for G, sem in grid_cfgs:
        bstep = B // G
        xcol = xcol_full.reshape(G, bstep * L, 8)
        try:
            out = pl.pallas_call(
                resnet_kernel,
                out_shape=jax.ShapeDtypeStruct((G, bstep, NCLASS), jnp.float32),
                grid_spec=pltpu.PrefetchScalarGridSpec(
                    num_scalar_prefetch=0,
                    grid=(G,),
                    in_specs=[
                        pl.BlockSpec((1, bstep * L, 8), lambda g: (g, 0, 0)),
                        pl.BlockSpec((8, C), lambda g: (0, 0)),
                        pl.BlockSpec((1, C), lambda g: (0, 0)),
                        pl.BlockSpec((6, 3, C, C), lambda g: (0, 0, 0, 0)),
                        pl.BlockSpec((6, 1, C), lambda g: (0, 0, 0)),
                        pl.BlockSpec((C, NCLASS), lambda g: (0, 0)),
                        pl.BlockSpec((1, NCLASS), lambda g: (0, 0)),
                    ],
                    out_specs=pl.BlockSpec((1, bstep, NCLASS),
                                           lambda g: (g, 0, 0)),
                ),
                compiler_params=pltpu.CompilerParams(dimension_semantics=sem),
            )(xcol, we, be, wblk, bblk, wfc, bfc)
            out = jax.block_until_ready(out)
            return out.reshape(B, NCLASS)
        except Exception as e:           # fall back to the safe G=1 config
            last_err = e
    raise last_err


def init_raw_params(key):
    """Deterministic synthetic weights matching the PyTorch module shapes."""
    ks = iter(jax.random.split(key, 64))
    nxt = lambda: next(ks)

    def bn():
        g = 1.0 + 0.1 * jax.random.normal(nxt(), (C,), jnp.float32)
        beta = 0.1 * jax.random.normal(nxt(), (C,), jnp.float32)
        mean = 0.1 * jax.random.normal(nxt(), (C,), jnp.float32)
        var = 0.5 + jax.random.uniform(nxt(), (C,), jnp.float32)
        return g, beta, mean, var

    w0 = jax.random.normal(nxt(), (C, 1, 7), jnp.float32) / jnp.sqrt(7.0)
    b0 = 0.05 * jax.random.normal(nxt(), (C,), jnp.float32)
    entry = (w0, b0) + bn()

    blocks = []
    for _ in range(6):
        w = jax.random.normal(nxt(), (C, C, 3), jnp.float32) / jnp.sqrt(3.0 * C)
        b = 0.05 * jax.random.normal(nxt(), (C,), jnp.float32)
        blocks.append((w, b) + bn())

    wf = jax.random.normal(nxt(), (NCLASS, C), jnp.float32) / jnp.sqrt(float(C))
    bf = 0.05 * jax.random.normal(nxt(), (NCLASS,), jnp.float32)
    return entry, blocks, (wf, bf)


def prepare_params(raw):
    """Fold eval-mode BN into the conv weights/biases and pack for the kernel."""
    (w0, b0, g0, be0, m0, v0), blocks, (wf, bf) = raw

    def fold(conv_b, gamma, beta, mean, var):
        scale = gamma / jnp.sqrt(var + EPS)
        bias = (conv_b - mean) * scale + beta
        return scale, bias

    s0, bb0 = fold(b0, g0, be0, m0, v0)
    we7 = jnp.transpose(w0[:, 0, :], (1, 0)) * s0                   # (7, C)
    we = jnp.concatenate([we7, jnp.zeros((1, C), jnp.float32)], axis=0)
    we = we.astype(jnp.bfloat16)                                    # (8, C)
    be = bb0.reshape(1, C)

    wblk_list, bblk_list = [], []
    for (w, b, g, bt, m, v) in blocks:
        s, bb = fold(b, g, bt, m, v)
        wk = jnp.transpose(w, (2, 1, 0)) * s                        # (3, Cin, Cout)
        wblk_list.append(wk.astype(jnp.bfloat16))
        bblk_list.append(bb.reshape(1, C))
    wblk = jnp.stack(wblk_list)                                     # (6, 3, C, C)
    bblk = jnp.stack(bblk_list)                                     # (6, 1, C)

    wfc = jnp.transpose(wf).astype(jnp.bfloat16)                    # (C, 4) bf16
    bfc = bf.reshape(1, NCLASS)
    return (we, be, wblk, bblk, wfc, bfc)


def reference_prepared(x, prepped):
    """Pure-JAX mirror of the kernel math (bf16 matmul operands, f32 accum)."""
    we, be, wblk, bblk, wfc, bfc = prepped
    B, L = x.shape
    xp = jnp.pad(x, ((0, 0), (3, 3)))
    taps = [xp[:, k:k + L] for k in range(7)] + [jnp.zeros_like(x)]
    xcol = jnp.stack(taps, axis=-1).astype(jnp.bfloat16).astype(jnp.float32)
    h = jnp.einsum('blk,kc->blc', xcol, we.astype(jnp.float32),
                   precision=lax.Precision.HIGHEST)
    h = jax.nn.relu(h + be[0])

    def conv3(hin, j):
        hq = hin.astype(jnp.bfloat16).astype(jnp.float32)
        hp = jnp.pad(hq, ((0, 0), (1, 1), (0, 0)))
        w = wblk[j].astype(jnp.float32)                             # (3, C, C)
        y = sum(jnp.einsum('blc,cd->bld', hp[:, k:k + L, :], w[k],
                           precision=lax.Precision.HIGHEST)
                for k in range(3))
        return y + bblk[j]

    for b in range(3):
        y = jax.nn.relu(conv3(h, 2 * b))
        y = conv3(y, 2 * b + 1)
        h = jax.nn.relu(y + h)
    pooled = h.mean(axis=1).astype(jnp.bfloat16).astype(jnp.float32)
    logits = pooled @ wfc.astype(jnp.float32) + bfc[0]
    return jax.nn.softmax(logits, axis=1)


def reference_f32(x, raw):
    """Full-f32 eval-mode forward identical to the PyTorch module."""
    (w0, b0, g0, be0, m0, v0), blocks, (wf, bf) = raw
    B, L = x.shape

    def bn(z, g, bt, m, v):
        return (z - m) / jnp.sqrt(v + EPS) * g + bt

    xp = jnp.pad(x, ((0, 0), (3, 3)))
    xs = jnp.stack([xp[:, k:k + L] for k in range(7)], axis=-1)     # (B, L, 7)
    we = jnp.transpose(w0[:, 0, :], (1, 0))                         # (7, C)
    h = jnp.einsum('blk,kc->blc', xs, we,
                   precision=lax.Precision.HIGHEST) + b0
    h = jax.nn.relu(bn(h, g0, be0, m0, v0))

    def conv3(hin, blk):
        w, b, g, bt, m, v = blk
        hp = jnp.pad(hin, ((0, 0), (1, 1), (0, 0)))
        hs = jnp.stack([hp[:, k:k + L] for k in range(3)], axis=2)  # (B, L, 3, C)
        y = jnp.einsum('blkc,kcd->bld', hs, jnp.transpose(w, (2, 1, 0)),
                       precision=lax.Precision.HIGHEST) + b
        return bn(y, g, bt, m, v)

    for i in range(3):
        y = jax.nn.relu(conv3(h, blocks[2 * i]))
        y = conv3(y, blocks[2 * i + 1])
        h = jax.nn.relu(y + h)
    pooled = h.mean(axis=1)
    logits = pooled @ jnp.transpose(wf) + bf
    return jax.nn.softmax(logits, axis=1)


if __name__ == "__main__":
    key = jax.random.PRNGKey(0)
    kx, kp = jax.random.split(key)
    B, L = 4, 128                       # batch and input_length
    x = jax.random.normal(kx, (B, L), jnp.float32)
    raw = init_raw_params(kp)
    prepped = prepare_params(raw)

    out = jax.block_until_ready(resnet_forward(x, prepped))

    # Tight check vs a pure-JAX mirror of the kernel's bf16-operand math.
    ref_mirror = reference_prepared(x, prepped)
    np.testing.assert_allclose(np.asarray(out), np.asarray(ref_mirror),
                               atol=2e-3, rtol=2e-2)
    # Looser semantic check vs the full-f32 PyTorch-equivalent forward.
    ref_full = reference_f32(x, raw)
    np.testing.assert_allclose(np.asarray(out), np.asarray(ref_full),
                               atol=3e-2, rtol=5e-2)
    assert out.shape == (B, NCLASS)
    np.testing.assert_allclose(np.asarray(out).sum(axis=1), np.ones(B),
                               atol=1e-5)
    print("KERNEL_OK")
</pallas_src>

<mosaic_0001>
module attributes {stable_mosaic.version = 11 : i64} {
  func.func @resnet_kernel(%arg0: i32, %arg1: memref<1x512x8xbf16, #tpu.memory_space<vmem>>, %arg2: memref<8x64xbf16, #tpu.memory_space<vmem>>, %arg3: memref<1x64xf32, #tpu.memory_space<vmem>>, %arg4: memref<6x3x64x64xbf16, #tpu.memory_space<vmem>>, %arg5: memref<6x1x64xf32, #tpu.memory_space<vmem>>, %arg6: memref<64x4xbf16, #tpu.memory_space<vmem>>, %arg7: memref<1x4xf32, #tpu.memory_space<vmem>>, %arg8: memref<1x4x4xf32, #tpu.memory_space<vmem>>) attributes {dimension_semantics = [#tpu.dimension_semantics<arbitrary>], iteration_bounds = array<i64: 1>, scalar_prefetch = 0 : i64, scratch_operands = 0 : i64, tpu.core_type = #tpu.core_type<tc>, window_params = [{transform_indices = @transform_0, window_bounds = array<i64: 1, 512, 8>}, {pipeline_mode = #tpu.pipeline_mode<synchronous>, transform_indices = @transform_1, window_bounds = array<i64: 8, 64>}, {pipeline_mode = #tpu.pipeline_mode<synchronous>, transform_indices = @transform_2, window_bounds = array<i64: 1, 64>}, {pipeline_mode = #tpu.pipeline_mode<synchronous>, transform_indices = @transform_3, window_bounds = array<i64: 6, 3, 64, 64>}, {pipeline_mode = #tpu.pipeline_mode<synchronous>, transform_indices = @transform_4, window_bounds = array<i64: 6, 1, 64>}, {pipeline_mode = #tpu.pipeline_mode<synchronous>, transform_indices = @transform_5, window_bounds = array<i64: 64, 4>}, {pipeline_mode = #tpu.pipeline_mode<synchronous>, transform_indices = @transform_6, window_bounds = array<i64: 1, 4>}, {transform_indices = @transform_7, window_bounds = array<i64: 1, 4, 4>}]} {
    %c0 = arith.constant 0 : index
    %c0_0 = arith.constant 0 : index
    %c0_1 = arith.constant 0 : index
    %0 = vector.load %arg1[%c0, %c0_0, %c0_1] : memref<1x512x8xbf16, #tpu.memory_space<vmem>>, vector<1x512x8xbf16>
    %1 = vector.shape_cast %0 : vector<1x512x8xbf16> to vector<512x8xbf16>
    %c0_2 = arith.constant 0 : index
    %c0_3 = arith.constant 0 : index
    %2 = vector.load %arg2[%c0_2, %c0_3] : memref<8x64xbf16, #tpu.memory_space<vmem>>, vector<8x64xbf16>
    %cst = arith.constant dense<0.000000e+00> : vector<512x64xf32>
    %3 = tpu.matmul %1, %2, %cst {dimension_numbers = #tpu.dot_dimension_numbers<[1], [0], [0], [1], [0, 0, 1, 1], [], []>} : vector<512x8xbf16>, vector<8x64xbf16>, vector<512x64xf32> -> vector<512x64xf32>
    %c0_4 = arith.constant 0 : index
    %c0_5 = arith.constant 0 : index
    %4 = vector.load %arg3[%c0_4, %c0_5] : memref<1x64xf32, #tpu.memory_space<vmem>>, vector<1x64xf32>
    %5 = vector.broadcast %4 : vector<1x64xf32> to vector<512x64xf32>
    %6 = arith.addf %3, %5 : vector<512x64xf32>
    %cst_6 = arith.constant 0.000000e+00 : f32
    %7 = vector.broadcast %cst_6 : f32 to vector<512x64xf32>
    %8 = arith.maximumf %6, %7 : vector<512x64xf32>
    %9 = tpu.iota {dimensions = array<i32: 0>} : vector<512x1xi32>
    %c128_i32 = arith.constant 128 : i32
    %c0_i32 = arith.constant 0 : i32
    %10 = arith.cmpi eq, %c128_i32, %c0_i32 : i32
    %c1_i32 = arith.constant 1 : i32
    %11 = arith.select %10, %c1_i32, %c128_i32 : i32
    %12 = vector.broadcast %11 : i32 to vector<512x1xi32>
    %13 = arith.remsi %9, %12 : vector<512x1xi32>
    %c0_i32_7 = arith.constant 0 : i32
    %14 = vector.broadcast %c0_i32_7 : i32 to vector<512x1xi32>
    %15 = arith.cmpi ne, %13, %14 : vector<512x1xi32>
    %c0_i32_8 = arith.constant 0 : i32
    %16 = vector.broadcast %c0_i32_8 : i32 to vector<512x1xi32>
    %17 = arith.cmpi slt, %13, %16 : vector<512x1xi32>
    %c0_i32_9 = arith.constant 0 : i32
    %18 = arith.cmpi slt, %11, %c0_i32_9 : i32
    %19 = vector.broadcast %18 : i1 to vector<512x1xi1>
    %20 = vector.broadcast %19 : vector<512x1xi1> to vector<512x1xi1>
    %21 = arith.xori %17, %20 : vector<512x1xi1>
    %22 = arith.andi %21, %15 : vector<512x1xi1>
    %23 = vector.broadcast %11 : i32 to vector<512x1xi32>
    %24 = arith.addi %13, %23 : vector<512x1xi32>
    %25 = arith.select %22, %24, %13 : vector<512x1xi1>, vector<512x1xi32>
    %c0_i32_10 = arith.constant 0 : i32
    %26 = vector.broadcast %c0_i32_10 : i32 to vector<512x1xi32>
    %27 = arith.cmpi eq, %25, %26 : vector<512x1xi32>
    %c128_i32_11 = arith.constant 128 : i32
    %c0_i32_12 = arith.constant 0 : i32
    %28 = arith.cmpi eq, %c128_i32_11, %c0_i32_12 : i32
    %c1_i32_13 = arith.constant 1 : i32
    %29 = arith.select %28, %c1_i32_13, %c128_i32_11 : i32
    %30 = vector.broadcast %29 : i32 to vector<512x1xi32>
    %31 = arith.remsi %9, %30 : vector<512x1xi32>
    %c0_i32_14 = arith.constant 0 : i32
    %32 = vector.broadcast %c0_i32_14 : i32 to vector<512x1xi32>
    %33 = arith.cmpi ne, %31, %32 : vector<512x1xi32>
    %c0_i32_15 = arith.constant 0 : i32
    %34 = vector.broadcast %c0_i32_15 : i32 to vector<512x1xi32>
    %35 = arith.cmpi slt, %31, %34 : vector<512x1xi32>
    %c0_i32_16 = arith.constant 0 : i32
    %36 = arith.cmpi slt, %29, %c0_i32_16 : i32
    %37 = vector.broadcast %36 : i1 to vector<512x1xi1>
    %38 = vector.broadcast %37 : vector<512x1xi1> to vector<512x1xi1>
    %39 = arith.xori %35, %38 : vector<512x1xi1>
    %40 = arith.andi %39, %33 : vector<512x1xi1>
    %41 = vector.broadcast %29 : i32 to vector<512x1xi32>
    %42 = arith.addi %31, %41 : vector<512x1xi32>
    %43 = arith.select %40, %42, %31 : vector<512x1xi1>, vector<512x1xi32>
    %c127_i32 = arith.constant 127 : i32
    %44 = vector.broadcast %c127_i32 : i32 to vector<512x1xi32>
    %45 = arith.cmpi eq, %43, %44 : vector<512x1xi32>
    %46 = arith.truncf %8 : vector<512x64xf32> to vector<512x64xbf16>
    %c1_i32_17 = arith.constant 1 : i32
    %47 = tpu.dynamic_rotate %8 by %c1_i32_17 dim 0 : vector<512x64xf32>, i32 -> vector<512x64xf32>
    %cst_18 = arith.constant 0.000000e+00 : f32
    %48 = vector.shape_cast %27 : vector<512x1xi1> to vector<512x1xi1>
    %49 = vector.broadcast %48 : vector<512x1xi1> to vector<512x64xi1>
    %50 = vector.broadcast %cst_18 : f32 to vector<512x64xf32>
    %51 = arith.select %49, %50, %47 : vector<512x64xi1>, vector<512x64xf32>
    %52 = arith.truncf %51 : vector<512x64xf32> to vector<512x64xbf16>
    %c511_i32 = arith.constant 511 : i32
    %53 = tpu.dynamic_rotate %8 by %c511_i32 dim 0 : vector<512x64xf32>, i32 -> vector<512x64xf32>
    %cst_19 = arith.constant 0.000000e+00 : f32
    %54 = vector.shape_cast %45 : vector<512x1xi1> to vector<512x1xi1>
    %55 = vector.broadcast %54 : vector<512x1xi1> to vector<512x64xi1>
    %56 = vector.broadcast %cst_19 : f32 to vector<512x64xf32>
    %57 = arith.select %55, %56, %53 : vector<512x64xi1>, vector<512x64xf32>
    %58 = arith.truncf %57 : vector<512x64xf32> to vector<512x64xbf16>
    %c0_20 = arith.constant 0 : index
    %c0_21 = arith.constant 0 : index
    %c0_22 = arith.constant 0 : index
    %c0_23 = arith.constant 0 : index
    %59 = vector.load %arg4[%c0_20, %c0_21, %c0_22, %c0_23] : memref<6x3x64x64xbf16, #tpu.memory_space<vmem>>, vector<1x1x64x64xbf16>
    %60 = vector.shape_cast %59 : vector<1x1x64x64xbf16> to vector<64x64xbf16>
    %cst_24 = arith.constant dense<0.000000e+00> : vector<512x64xf32>
    %61 = tpu.matmul %52, %60, %cst_24 {dimension_numbers = #tpu.dot_dimension_numbers<[1], [0], [0], [1], [0, 0, 1, 1], [], []>} : vector<512x64xbf16>, vector<64x64xbf16>, vector<512x64xf32> -> vector<512x64xf32>
    %c0_25 = arith.constant 0 : index
    %c1 = arith.constant 1 : index
    %c0_26 = arith.constant 0 : index
    %c0_27 = arith.constant 0 : index
    %62 = vector.load %arg4[%c0_25, %c1, %c0_26, %c0_27] : memref<6x3x64x64xbf16, #tpu.memory_space<vmem>>, vector<1x1x64x64xbf16>
    %63 = vector.shape_cast %62 : vector<1x1x64x64xbf16> to vector<64x64xbf16>
    %cst_28 = arith.constant dense<0.000000e+00> : vector<512x64xf32>
    %64 = tpu.matmul %46, %63, %cst_28 {dimension_numbers = #tpu.dot_dimension_numbers<[1], [0], [0], [1], [0, 0, 1, 1], [], []>} : vector<512x64xbf16>, vector<64x64xbf16>, vector<512x64xf32> -> vector<512x64xf32>
    %65 = arith.addf %61, %64 : vector<512x64xf32>
    %c0_29 = arith.constant 0 : index
    %c2 = arith.constant 2 : index
    %c0_30 = arith.constant 0 : index
    %c0_31 = arith.constant 0 : index
    %66 = vector.load %arg4[%c0_29, %c2, %c0_30, %c0_31] : memref<6x3x64x64xbf16, #tpu.memory_space<vmem>>, vector<1x1x64x64xbf16>
    %67 = vector.shape_cast %66 : vector<1x1x64x64xbf16> to vector<64x64xbf16>
    %cst_32 = arith.constant dense<0.000000e+00> : vector<512x64xf32>
    %68 = tpu.matmul %58, %67, %cst_32 {dimension_numbers = #tpu.dot_dimension_numbers<[1], [0], [0], [1], [0, 0, 1, 1], [], []>} : vector<512x64xbf16>, vector<64x64xbf16>, vector<512x64xf32> -> vector<512x64xf32>
    %69 = arith.addf %65, %68 : vector<512x64xf32>
    %c0_33 = arith.constant 0 : index
    %c0_34 = arith.constant 0 : index
    %c0_35 = arith.constant 0 : index
    %70 = vector.load %arg5[%c0_33, %c0_34, %c0_35] : memref<6x1x64xf32, #tpu.memory_space<vmem>>, vector<1x1x64xf32>
    %71 = vector.shape_cast %70 : vector<1x1x64xf32> to vector<1x64xf32>
    %72 = vector.broadcast %71 : vector<1x64xf32> to vector<512x64xf32>
    %73 = arith.addf %69, %72 : vector<512x64xf32>
    %cst_36 = arith.constant 0.000000e+00 : f32
    %74 = vector.broadcast %cst_36 : f32 to vector<512x64xf32>
    %75 = arith.maximumf %73, %74 : vector<512x64xf32>
    %76 = arith.truncf %75 : vector<512x64xf32> to vector<512x64xbf16>
    %c1_i32_37 = arith.constant 1 : i32
    %77 = tpu.dynamic_rotate %75 by %c1_i32_37 dim 0 : vector<512x64xf32>, i32 -> vector<512x64xf32>
    %cst_38 = arith.constant 0.000000e+00 : f32
    %78 = vector.shape_cast %27 : vector<512x1xi1> to vector<512x1xi1>
    %79 = vector.broadcast %78 : vector<512x1xi1> to vector<512x64xi1>
    %80 = vector.broadcast %cst_38 : f32 to vector<512x64xf32>
    %81 = arith.select %79, %80, %77 : vector<512x64xi1>, vector<512x64xf32>
    %82 = arith.truncf %81 : vector<512x64xf32> to vector<512x64xbf16>
    %c511_i32_39 = arith.constant 511 : i32
    %83 = tpu.dynamic_rotate %75 by %c511_i32_39 dim 0 : vector<512x64xf32>, i32 -> vector<512x64xf32>
    %cst_40 = arith.constant 0.000000e+00 : f32
    %84 = vector.shape_cast %45 : vector<512x1xi1> to vector<512x1xi1>
    %85 = vector.broadcast %84 : vector<512x1xi1> to vector<512x64xi1>
    %86 = vector.broadcast %cst_40 : f32 to vector<512x64xf32>
    %87 = arith.select %85, %86, %83 : vector<512x64xi1>, vector<512x64xf32>
    %88 = arith.truncf %87 : vector<512x64xf32> to vector<512x64xbf16>
    %c1_41 = arith.constant 1 : index
    %c0_42 = arith.constant 0 : index
    %c0_43 = arith.constant 0 : index
    %c0_44 = arith.constant 0 : index
    %89 = vector.load %arg4[%c1_41, %c0_42, %c0_43, %c0_44] : memref<6x3x64x64xbf16, #tpu.memory_space<vmem>>, vector<1x1x64x64xbf16>
    %90 = vector.shape_cast %89 : vector<1x1x64x64xbf16> to vector<64x64xbf16>
    %cst_45 = arith.constant dense<0.000000e+00> : vector<512x64xf32>
    %91 = tpu.matmul %82, %90, %cst_45 {dimension_numbers = #tpu.dot_dimension_numbers<[1], [0], [0], [1], [0, 0, 1, 1], [], []>} : vector<512x64xbf16>, vector<64x64xbf16>, vector<512x64xf32> -> vector<512x64xf32>
    %c1_46 = arith.constant 1 : index
    %c1_47 = arith.constant 1 : index
    %c0_48 = arith.constant 0 : index
    %c0_49 = arith.constant 0 : index
    %92 = vector.load %arg4[%c1_46, %c1_47, %c0_48, %c0_49] : memref<6x3x64x64xbf16, #tpu.memory_space<vmem>>, vector<1x1x64x64xbf16>
    %93 = vector.shape_cast %92 : vector<1x1x64x64xbf16> to vector<64x64xbf16>
    %cst_50 = arith.constant dense<0.000000e+00> : vector<512x64xf32>
    %94 = tpu.matmul %76, %93, %cst_50 {dimension_numbers = #tpu.dot_dimension_numbers<[1], [0], [0], [1], [0, 0, 1, 1], [], []>} : vector<512x64xbf16>, vector<64x64xbf16>, vector<512x64xf32> -> vector<512x64xf32>
    %95 = arith.addf %91, %94 : vector<512x64xf32>
    %c1_51 = arith.constant 1 : index
    %c2_52 = arith.constant 2 : index
    %c0_53 = arith.constant 0 : index
    %c0_54 = arith.constant 0 : index
    %96 = vector.load %arg4[%c1_51, %c2_52, %c0_53, %c0_54] : memref<6x3x64x64xbf16, #tpu.memory_space<vmem>>, vector<1x1x64x64xbf16>
    %97 = vector.shape_cast %96 : vector<1x1x64x64xbf16> to vector<64x64xbf16>
    %cst_55 = arith.constant dense<0.000000e+00> : vector<512x64xf32>
    %98 = tpu.matmul %88, %97, %cst_55 {dimension_numbers = #tpu.dot_dimension_numbers<[1], [0], [0], [1], [0, 0, 1, 1], [], []>} : vector<512x64xbf16>, vector<64x64xbf16>, vector<512x64xf32> -> vector<512x64xf32>
    %99 = arith.addf %95, %98 : vector<512x64xf32>
    %c1_56 = arith.constant 1 : index
    %c0_57 = arith.constant 0 : index
    %c0_58 = arith.constant 0 : index
    %100 = vector.load %arg5[%c1_56, %c0_57, %c0_58] : memref<6x1x64xf32, #tpu.memory_space<vmem>>, vector<1x1x64xf32>
    %101 = vector.shape_cast %100 : vector<1x1x64xf32> to vector<1x64xf32>
    %102 = vector.broadcast %101 : vector<1x64xf32> to vector<512x64xf32>
    %103 = arith.addf %99, %102 : vector<512x64xf32>
    %104 = arith.addf %103, %8 : vector<512x64xf32>
    %cst_59 = arith.constant 0.000000e+00 : f32
    %105 = vector.broadcast %cst_59 : f32 to vector<512x64xf32>
    %106 = arith.maximumf %104, %105 : vector<512x64xf32>
    %107 = arith.truncf %106 : vector<512x64xf32> to vector<512x64xbf16>
    %c1_i32_60 = arith.constant 1 : i32
    %108 = tpu.dynamic_rotate %106 by %c1_i32_60 dim 0 : vector<512x64xf32>, i32 -> vector<512x64xf32>
    %cst_61 = arith.constant 0.000000e+00 : f32
    %109 = vector.shape_cast %27 : vector<512x1xi1> to vector<512x1xi1>
    %110 = vector.broadcast %109 : vector<512x1xi1> to vector<512x64xi1>
    %111 = vector.broadcast %cst_61 : f32 to vector<512x64xf32>
    %112 = arith.select %110, %111, %108 : vector<512x64xi1>, vector<512x64xf32>
    %113 = arith.truncf %112 : vector<512x64xf32> to vector<512x64xbf16>
    %c511_i32_62 = arith.constant 511 : i32
    %114 = tpu.dynamic_rotate %106 by %c511_i32_62 dim 0 : vector<512x64xf32>, i32 -> vector<512x64xf32>
    %cst_63 = arith.constant 0.000000e+00 : f32
    %115 = vector.shape_cast %45 : vector<512x1xi1> to vector<512x1xi1>
    %116 = vector.broadcast %115 : vector<512x1xi1> to vector<512x64xi1>
    %117 = vector.broadcast %cst_63 : f32 to vector<512x64xf32>
    %118 = arith.select %116, %117, %114 : vector<512x64xi1>, vector<512x64xf32>
    %119 = arith.truncf %118 : vector<512x64xf32> to vector<512x64xbf16>
    %c2_64 = arith.constant 2 : index
    %c0_65 = arith.constant 0 : index
    %c0_66 = arith.constant 0 : index
    %c0_67 = arith.constant 0 : index
    %120 = vector.load %arg4[%c2_64, %c0_65, %c0_66, %c0_67] : memref<6x3x64x64xbf16, #tpu.memory_space<vmem>>, vector<1x1x64x64xbf16>
    %121 = vector.shape_cast %120 : vector<1x1x64x64xbf16> to vector<64x64xbf16>
    %cst_68 = arith.constant dense<0.000000e+00> : vector<512x64xf32>
    %122 = tpu.matmul %113, %121, %cst_68 {dimension_numbers = #tpu.dot_dimension_numbers<[1], [0], [0], [1], [0, 0, 1, 1], [], []>} : vector<512x64xbf16>, vector<64x64xbf16>, vector<512x64xf32> -> vector<512x64xf32>
    %c2_69 = arith.constant 2 : index
    %c1_70 = arith.constant 1 : index
    %c0_71 = arith.constant 0 : index
    %c0_72 = arith.constant 0 : index
    %123 = vector.load %arg4[%c2_69, %c1_70, %c0_71, %c0_72] : memref<6x3x64x64xbf16, #tpu.memory_space<vmem>>, vector<1x1x64x64xbf16>
    %124 = vector.shape_cast %123 : vector<1x1x64x64xbf16> to vector<64x64xbf16>
    %cst_73 = arith.constant dense<0.000000e+00> : vector<512x64xf32>
    %125 = tpu.matmul %107, %124, %cst_73 {dimension_numbers = #tpu.dot_dimension_numbers<[1], [0], [0], [1], [0, 0, 1, 1], [], []>} : vector<512x64xbf16>, vector<64x64xbf16>, vector<512x64xf32> -> vector<512x64xf32>
    %126 = arith.addf %122, %125 : vector<512x64xf32>
    %c2_74 = arith.constant 2 : index
    %c2_75 = arith.constant 2 : index
    %c0_76 = arith.constant 0 : index
    %c0_77 = arith.constant 0 : index
    %127 = vector.load %arg4[%c2_74, %c2_75, %c0_76, %c0_77] : memref<6x3x64x64xbf16, #tpu.memory_space<vmem>>, vector<1x1x64x64xbf16>
    %128 = vector.shape_cast %127 : vector<1x1x64x64xbf16> to vector<64x64xbf16>
    %cst_78 = arith.constant dense<0.000000e+00> : vector<512x64xf32>
    %129 = tpu.matmul %119, %128, %cst_78 {dimension_numbers = #tpu.dot_dimension_numbers<[1], [0], [0], [1], [0, 0, 1, 1], [], []>} : vector<512x64xbf16>, vector<64x64xbf16>, vector<512x64xf32> -> vector<512x64xf32>
    %130 = arith.addf %126, %129 : vector<512x64xf32>
    %c2_79 = arith.constant 2 : index
    %c0_80 = arith.constant 0 : index
    %c0_81 = arith.constant 0 : index
    %131 = vector.load %arg5[%c2_79, %c0_80, %c0_81] : memref<6x1x64xf32, #tpu.memory_space<vmem>>, vector<1x1x64xf32>
    %132 = vector.shape_cast %131 : vector<1x1x64xf32> to vector<1x64xf32>
    %133 = vector.broadcast %132 : vector<1x64xf32> to vector<512x64xf32>
    %134 = arith.addf %130, %133 : vector<512x64xf32>
    %cst_82 = arith.constant 0.000000e+00 : f32
    %135 = vector.broadcast %cst_82 : f32 to vector<512x64xf32>
    %136 = arith.maximumf %134, %135 : vector<512x64xf32>
    %137 = arith.truncf %136 : vector<512x64xf32> to vector<512x64xbf16>
    %c1_i32_83 = arith.constant 1 : i32
    %138 = tpu.dynamic_rotate %136 by %c1_i32_83 dim 0 : vector<512x64xf32>, i32 -> vector<512x64xf32>
    %cst_84 = arith.constant 0.000000e+00 : f32
    %139 = vector.shape_cast %27 : vector<512x1xi1> to vector<512x1xi1>
    %140 = vector.broadcast %139 : vector<512x1xi1> to vector<512x64xi1>
    %141 = vector.broadcast %cst_84 : f32 to vector<512x64xf32>
    %142 = arith.select %140, %141, %138 : vector<512x64xi1>, vector<512x64xf32>
    %143 = arith.truncf %142 : vector<512x64xf32> to vector<512x64xbf16>
    %c511_i32_85 = arith.constant 511 : i32
    %144 = tpu.dynamic_rotate %136 by %c511_i32_85 dim 0 : vector<512x64xf32>, i32 -> vector<512x64xf32>
    %cst_86 = arith.constant 0.000000e+00 : f32
    %145 = vector.shape_cast %45 : vector<512x1xi1> to vector<512x1xi1>
    %146 = vector.broadcast %145 : vector<512x1xi1> to vector<512x64xi1>
    %147 = vector.broadcast %cst_86 : f32 to vector<512x64xf32>
    %148 = arith.select %146, %147, %144 : vector<512x64xi1>, vector<512x64xf32>
    %149 = arith.truncf %148 : vector<512x64xf32> to vector<512x64xbf16>
    %c3 = arith.constant 3 : index
    %c0_87 = arith.constant 0 : index
    %c0_88 = arith.constant 0 : index
    %c0_89 = arith.constant 0 : index
    %150 = vector.load %arg4[%c3, %c0_87, %c0_88, %c0_89] : memref<6x3x64x64xbf16, #tpu.memory_space<vmem>>, vector<1x1x64x64xbf16>
    %151 = vector.shape_cast %150 : vector<1x1x64x64xbf16> to vector<64x64xbf16>
    %cst_90 = arith.constant dense<0.000000e+00> : vector<512x64xf32>
    %152 = tpu.matmul %143, %151, %cst_90 {dimension_numbers = #tpu.dot_dimension_numbers<[1], [0], [0], [1], [0, 0, 1, 1], [], []>} : vector<512x64xbf16>, vector<64x64xbf16>, vector<512x64xf32> -> vector<512x64xf32>
    %c3_91 = arith.constant 3 : index
    %c1_92 = arith.constant 1 : index
    %c0_93 = arith.constant 0 : index
    %c0_94 = arith.constant 0 : index
    %153 = vector.load %arg4[%c3_91, %c1_92, %c0_93, %c0_94] : memref<6x3x64x64xbf16, #tpu.memory_space<vmem>>, vector<1x1x64x64xbf16>
    %154 = vector.shape_cast %153 : vector<1x1x64x64xbf16> to vector<64x64xbf16>
    %cst_95 = arith.constant dense<0.000000e+00> : vector<512x64xf32>
    %155 = tpu.matmul %137, %154, %cst_95 {dimension_numbers = #tpu.dot_dimension_numbers<[1], [0], [0], [1], [0, 0, 1, 1], [], []>} : vector<512x64xbf16>, vector<64x64xbf16>, vector<512x64xf32> -> vector<512x64xf32>
    %156 = arith.addf %152, %155 : vector<512x64xf32>
    %c3_96 = arith.constant 3 : index
    %c2_97 = arith.constant 2 : index
    %c0_98 = arith.constant 0 : index
    %c0_99 = arith.constant 0 : index
    %157 = vector.load %arg4[%c3_96, %c2_97, %c0_98, %c0_99] : memref<6x3x64x64xbf16, #tpu.memory_space<vmem>>, vector<1x1x64x64xbf16>
    %158 = vector.shape_cast %157 : vector<1x1x64x64xbf16> to vector<64x64xbf16>
    %cst_100 = arith.constant dense<0.000000e+00> : vector<512x64xf32>
    %159 = tpu.matmul %149, %158, %cst_100 {dimension_numbers = #tpu.dot_dimension_numbers<[1], [0], [0], [1], [0, 0, 1, 1], [], []>} : vector<512x64xbf16>, vector<64x64xbf16>, vector<512x64xf32> -> vector<512x64xf32>
    %160 = arith.addf %156, %159 : vector<512x64xf32>
    %c3_101 = arith.constant 3 : index
    %c0_102 = arith.constant 0 : index
    %c0_103 = arith.constant 0 : index
    %161 = vector.load %arg5[%c3_101, %c0_102, %c0_103] : memref<6x1x64xf32, #tpu.memory_space<vmem>>, vector<1x1x64xf32>
    %162 = vector.shape_cast %161 : vector<1x1x64xf32> to vector<1x64xf32>
    %163 = vector.broadcast %162 : vector<1x64xf32> to vector<512x64xf32>
    %164 = arith.addf %160, %163 : vector<512x64xf32>
    %165 = arith.addf %164, %106 : vector<512x64xf32>
    %cst_104 = arith.constant 0.000000e+00 : f32
    %166 = vector.broadcast %cst_104 : f32 to vector<512x64xf32>
    %167 = arith.maximumf %165, %166 : vector<512x64xf32>
    %168 = arith.truncf %167 : vector<512x64xf32> to vector<512x64xbf16>
    %c1_i32_105 = arith.constant 1 : i32
    %169 = tpu.dynamic_rotate %167 by %c1_i32_105 dim 0 : vector<512x64xf32>, i32 -> vector<512x64xf32>
    %cst_106 = arith.constant 0.000000e+00 : f32
    %170 = vector.shape_cast %27 : vector<512x1xi1> to vector<512x1xi1>
    %171 = vector.broadcast %170 : vector<512x1xi1> to vector<512x64xi1>
    %172 = vector.broadcast %cst_106 : f32 to vector<512x64xf32>
    %173 = arith.select %171, %172, %169 : vector<512x64xi1>, vector<512x64xf32>
    %174 = arith.truncf %173 : vector<512x64xf32> to vector<512x64xbf16>
    %c511_i32_107 = arith.constant 511 : i32
    %175 = tpu.dynamic_rotate %167 by %c511_i32_107 dim 0 : vector<512x64xf32>, i32 -> vector<512x64xf32>
    %cst_108 = arith.constant 0.000000e+00 : f32
    %176 = vector.shape_cast %45 : vector<512x1xi1> to vector<512x1xi1>
    %177 = vector.broadcast %176 : vector<512x1xi1> to vector<512x64xi1>
    %178 = vector.broadcast %cst_108 : f32 to vector<512x64xf32>
    %179 = arith.select %177, %178, %175 : vector<512x64xi1>, vector<512x64xf32>
    %180 = arith.truncf %179 : vector<512x64xf32> to vector<512x64xbf16>
    %c4 = arith.constant 4 : index
    %c0_109 = arith.constant 0 : index
    %c0_110 = arith.constant 0 : index
    %c0_111 = arith.constant 0 : index
    %181 = vector.load %arg4[%c4, %c0_109, %c0_110, %c0_111] : memref<6x3x64x64xbf16, #tpu.memory_space<vmem>>, vector<1x1x64x64xbf16>
    %182 = vector.shape_cast %181 : vector<1x1x64x64xbf16> to vector<64x64xbf16>
    %cst_112 = arith.constant dense<0.000000e+00> : vector<512x64xf32>
    %183 = tpu.matmul %174, %182, %cst_112 {dimension_numbers = #tpu.dot_dimension_numbers<[1], [0], [0], [1], [0, 0, 1, 1], [], []>} : vector<512x64xbf16>, vector<64x64xbf16>, vector<512x64xf32> -> vector<512x64xf32>
    %c4_113 = arith.constant 4 : index
    %c1_114 = arith.constant 1 : index
    %c0_115 = arith.constant 0 : index
    %c0_116 = arith.constant 0 : index
    %184 = vector.load %arg4[%c4_113, %c1_114, %c0_115, %c0_116] : memref<6x3x64x64xbf16, #tpu.memory_space<vmem>>, vector<1x1x64x64xbf16>
    %185 = vector.shape_cast %184 : vector<1x1x64x64xbf16> to vector<64x64xbf16>
    %cst_117 = arith.constant dense<0.000000e+00> : vector<512x64xf32>
    %186 = tpu.matmul %168, %185, %cst_117 {dimension_numbers = #tpu.dot_dimension_numbers<[1], [0], [0], [1], [0, 0, 1, 1], [], []>} : vector<512x64xbf16>, vector<64x64xbf16>, vector<512x64xf32> -> vector<512x64xf32>
    %187 = arith.addf %183, %186 : vector<512x64xf32>
    %c4_118 = arith.constant 4 : index
    %c2_119 = arith.constant 2 : index
    %c0_120 = arith.constant 0 : index
    %c0_121 = arith.constant 0 : index
    %188 = vector.load %arg4[%c4_118, %c2_119, %c0_120, %c0_121] : memref<6x3x64x64xbf16, #tpu.memory_space<vmem>>, vector<1x1x64x64xbf16>
    %189 = vector.shape_cast %188 : vector<1x1x64x64xbf16> to vector<64x64xbf16>
    %cst_122 = arith.constant dense<0.000000e+00> : vector<512x64xf32>
    %190 = tpu.matmul %180, %189, %cst_122 {dimension_numbers = #tpu.dot_dimension_numbers<[1], [0], [0], [1], [0, 0, 1, 1], [], []>} : vector<512x64xbf16>, vector<64x64xbf16>, vector<512x64xf32> -> vector<512x64xf32>
    %191 = arith.addf %187, %190 : vector<512x64xf32>
    %c4_123 = arith.constant 4 : index
    %c0_124 = arith.constant 0 : index
    %c0_125 = arith.constant 0 : index
    %192 = vector.load %arg5[%c4_123, %c0_124, %c0_125] : memref<6x1x64xf32, #tpu.memory_space<vmem>>, vector<1x1x64xf32>
    %193 = vector.shape_cast %192 : vector<1x1x64xf32> to vector<1x64xf32>
    %194 = vector.broadcast %193 : vector<1x64xf32> to vector<512x64xf32>
    %195 = arith.addf %191, %194 : vector<512x64xf32>
    %cst_126 = arith.constant 0.000000e+00 : f32
    %196 = vector.broadcast %cst_126 : f32 to vector<512x64xf32>
    %197 = arith.maximumf %195, %196 : vector<512x64xf32>
    %198 = arith.truncf %197 : vector<512x64xf32> to vector<512x64xbf16>
    %c1_i32_127 = arith.constant 1 : i32
    %199 = tpu.dynamic_rotate %197 by %c1_i32_127 dim 0 : vector<512x64xf32>, i32 -> vector<512x64xf32>
    %cst_128 = arith.constant 0.000000e+00 : f32
    %200 = vector.shape_cast %27 : vector<512x1xi1> to vector<512x1xi1>
    %201 = vector.broadcast %200 : vector<512x1xi1> to vector<512x64xi1>
    %202 = vector.broadcast %cst_128 : f32 to vector<512x64xf32>
    %203 = arith.select %201, %202, %199 : vector<512x64xi1>, vector<512x64xf32>
    %204 = arith.truncf %203 : vector<512x64xf32> to vector<512x64xbf16>
    %c511_i32_129 = arith.constant 511 : i32
    %205 = tpu.dynamic_rotate %197 by %c511_i32_129 dim 0 : vector<512x64xf32>, i32 -> vector<512x64xf32>
    %cst_130 = arith.constant 0.000000e+00 : f32
    %206 = vector.shape_cast %45 : vector<512x1xi1> to vector<512x1xi1>
    %207 = vector.broadcast %206 : vector<512x1xi1> to vector<512x64xi1>
    %208 = vector.broadcast %cst_130 : f32 to vector<512x64xf32>
    %209 = arith.select %207, %208, %205 : vector<512x64xi1>, vector<512x64xf32>
    %210 = arith.truncf %209 : vector<512x64xf32> to vector<512x64xbf16>
    %c5 = arith.constant 5 : index
    %c0_131 = arith.constant 0 : index
    %c0_132 = arith.constant 0 : index
    %c0_133 = arith.constant 0 : index
    %211 = vector.load %arg4[%c5, %c0_131, %c0_132, %c0_133] : memref<6x3x64x64xbf16, #tpu.memory_space<vmem>>, vector<1x1x64x64xbf16>
    %212 = vector.shape_cast %211 : vector<1x1x64x64xbf16> to vector<64x64xbf16>
    %cst_134 = arith.constant dense<0.000000e+00> : vector<512x64xf32>
    %213 = tpu.matmul %204, %212, %cst_134 {dimension_numbers = #tpu.dot_dimension_numbers<[1], [0], [0], [1], [0, 0, 1, 1], [], []>} : vector<512x64xbf16>, vector<64x64xbf16>, vector<512x64xf32> -> vector<512x64xf32>
    %c5_135 = arith.constant 5 : index
    %c1_136 = arith.constant 1 : index
    %c0_137 = arith.constant 0 : index
    %c0_138 = arith.constant 0 : index
    %214 = vector.load %arg4[%c5_135, %c1_136, %c0_137, %c0_138] : memref<6x3x64x64xbf16, #tpu.memory_space<vmem>>, vector<1x1x64x64xbf16>
    %215 = vector.shape_cast %214 : vector<1x1x64x64xbf16> to vector<64x64xbf16>
    %cst_139 = arith.constant dense<0.000000e+00> : vector<512x64xf32>
    %216 = tpu.matmul %198, %215, %cst_139 {dimension_numbers = #tpu.dot_dimension_numbers<[1], [0], [0], [1], [0, 0, 1, 1], [], []>} : vector<512x64xbf16>, vector<64x64xbf16>, vector<512x64xf32> -> vector<512x64xf32>
    %217 = arith.addf %213, %216 : vector<512x64xf32>
    %c5_140 = arith.constant 5 : index
    %c2_141 = arith.constant 2 : index
    %c0_142 = arith.constant 0 : index
    %c0_143 = arith.constant 0 : index
    %218 = vector.load %arg4[%c5_140, %c2_141, %c0_142, %c0_143] : memref<6x3x64x64xbf16, #tpu.memory_space<vmem>>, vector<1x1x64x64xbf16>
    %219 = vector.shape_cast %218 : vector<1x1x64x64xbf16> to vector<64x64xbf16>
    %cst_144 = arith.constant dense<0.000000e+00> : vector<512x64xf32>
    %220 = tpu.matmul %210, %219, %cst_144 {dimension_numbers = #tpu.dot_dimension_numbers<[1], [0], [0], [1], [0, 0, 1, 1], [], []>} : vector<512x64xbf16>, vector<64x64xbf16>, vector<512x64xf32> -> vector<512x64xf32>
    %221 = arith.addf %217, %220 : vector<512x64xf32>
    %c5_145 = arith.constant 5 : index
    %c0_146 = arith.constant 0 : index
    %c0_147 = arith.constant 0 : index
    %222 = vector.load %arg5[%c5_145, %c0_146, %c0_147] : memref<6x1x64xf32, #tpu.memory_space<vmem>>, vector<1x1x64xf32>
    %223 = vector.shape_cast %222 : vector<1x1x64xf32> to vector<1x64xf32>
    %224 = vector.broadcast %223 : vector<1x64xf32> to vector<512x64xf32>
    %225 = arith.addf %221, %224 : vector<512x64xf32>
    %226 = arith.addf %225, %167 : vector<512x64xf32>
    %cst_148 = arith.constant 0.000000e+00 : f32
    %227 = vector.broadcast %cst_148 : f32 to vector<512x64xf32>
    %228 = arith.maximumf %226, %227 : vector<512x64xf32>
    %229 = vector.shape_cast %228 : vector<512x64xf32> to vector<4x128x64xf32>
    %cst_149 = arith.constant dense<0.000000e+00> : vector<4x64xf32>
    %230 = vector.multi_reduction <add>, %229, %cst_149 [1] : vector<4x128x64xf32> to vector<4x64xf32>
    %cst_150 = arith.constant 7.812500e-03 : f32
    %231 = vector.broadcast %cst_150 : f32 to vector<4x64xf32>
    %232 = arith.mulf %230, %231 : vector<4x64xf32>
    %233 = arith.truncf %232 : vector<4x64xf32> to vector<4x64xbf16>
    %c0_151 = arith.constant 0 : index
    %c0_152 = arith.constant 0 : index
    %234 = vector.load %arg6[%c0_151, %c0_152] : memref<64x4xbf16, #tpu.memory_space<vmem>>, vector<64x4xbf16>
    %cst_153 = arith.constant dense<0.000000e+00> : vector<4x4xf32>
    %235 = tpu.matmul %233, %234, %cst_153 {dimension_numbers = #tpu.dot_dimension_numbers<[1], [0], [0], [1], [0, 0, 1, 1], [], []>} : vector<4x64xbf16>, vector<64x4xbf16>, vector<4x4xf32> -> vector<4x4xf32>
    %c0_154 = arith.constant 0 : index
    %c0_155 = arith.constant 0 : index
    %236 = vector.load %arg7[%c0_154, %c0_155] : memref<1x4xf32, #tpu.memory_space<vmem>>, vector<1x4xf32>
    %237 = vector.broadcast %236 : vector<1x4xf32> to vector<4x4xf32>
    %238 = arith.addf %235, %237 : vector<4x4xf32>
    %cst_156 = arith.constant dense<0xFF800000> : vector<4xf32>
    %239 = vector.multi_reduction <maximumf>, %238, %cst_156 [1] : vector<4x4xf32> to vector<4xf32>
    %240 = vector.shape_cast %239 : vector<4xf32> to vector<4x1xf32>
    %241 = vector.broadcast %240 : vector<4x1xf32> to vector<4x4xf32>
    %242 = arith.subf %238, %241 : vector<4x4xf32>
    %243 = math.exp %242 : vector<4x4xf32>
    %cst_157 = arith.constant dense<0.000000e+00> : vector<4xf32>
    %244 = vector.multi_reduction <add>, %243, %cst_157 [1] : vector<4x4xf32> to vector<4xf32>
    %245 = vector.shape_cast %244 : vector<4xf32> to vector<4x1xf32>
    %246 = vector.broadcast %245 : vector<4x1xf32> to vector<4x4xf32>
    %247 = arith.divf %243, %246 : vector<4x4xf32>
    %c0_158 = arith.constant 0 : index
    %c0_159 = arith.constant 0 : index
    %c0_160 = arith.constant 0 : index
    %248 = vector.load %arg8[%c0_158, %c0_159, %c0_160] : memref<1x4x4xf32, #tpu.memory_space<vmem>>, vector<1x4x4xf32>
    %249 = vector.shape_cast %248 : vector<1x4x4xf32> to vector<4x4xf32>
    %250 = vector.shape_cast %247 : vector<4x4xf32> to vector<1x4x4xf32>
    tpu.vector_store %arg8[%c0_158, %c0_159, %c0_160], %250 {strides = array<i32>} : memref<1x4x4xf32, #tpu.memory_space<vmem>>, vector<1x4x4xf32>,
    return
  }
  func.func @transform_0(%arg0: i32) -> (i32, i32, i32) {
    %c0_i32 = arith.constant 0 : i32
    %c0_i32_0 = arith.constant 0 : i32
    %c0_i32_1 = arith.constant 0 : i32
    return %arg0, %c0_i32, %c0_i32_0 : i32, i32, i32
  }
  func.func @transform_1(%arg0: i32) -> (i32, i32) {
    %c0_i32 = arith.constant 0 : i32
    %c0_i32_0 = arith.constant 0 : i32
    %c0_i32_1 = arith.constant 0 : i32
    return %c0_i32, %c0_i32_0 : i32, i32
  }
  func.func @transform_2(%arg0: i32) -> (i32, i32) {
    %c0_i32 = arith.constant 0 : i32
    %c0_i32_0 = arith.constant 0 : i32
    %c0_i32_1 = arith.constant 0 : i32
    return %c0_i32, %c0_i32_0 : i32, i32
  }
  func.func @transform_3(%arg0: i32) -> (i32, i32, i32, i32) {
    %c0_i32 = arith.constant 0 : i32
    %c0_i32_0 = arith.constant 0 : i32
    %c0_i32_1 = arith.constant 0 : i32
    %c0_i32_2 = arith.constant 0 : i32
    %c0_i32_3 = arith.constant 0 : i32
    return %c0_i32, %c0_i32_0, %c0_i32_1, %c0_i32_2 : i32, i32, i32, i32
  }
  func.func @transform_4(%arg0: i32) -> (i32, i32, i32) {
    %c0_i32 = arith.constant 0 : i32
    %c0_i32_0 = arith.constant 0 : i32
    %c0_i32_1 = arith.constant 0 : i32
    %c0_i32_2 = arith.constant 0 : i32
    return %c0_i32, %c0_i32_0, %c0_i32_1 : i32, i32, i32
  }
  func.func @transform_5(%arg0: i32) -> (i32, i32) {
    %c0_i32 = arith.constant 0 : i32
    %c0_i32_0 = arith.constant 0 : i32
    %c0_i32_1 = arith.constant 0 : i32
    return %c0_i32, %c0_i32_0 : i32, i32
  }
  func.func @transform_6(%arg0: i32) -> (i32, i32) {
    %c0_i32 = arith.constant 0 : i32
    %c0_i32_0 = arith.constant 0 : i32
    %c0_i32_1 = arith.constant 0 : i32
    return %c0_i32, %c0_i32_0 : i32, i32
  }
  func.func @transform_7(%arg0: i32) -> (i32, i32, i32) {
    %c0_i32 = arith.constant 0 : i32
    %c0_i32_0 = arith.constant 0 : i32
    %c0_i32_1 = arith.constant 0 : i32
    return %arg0, %c0_i32, %c0_i32_0 : i32, i32, i32
  }
}

</mosaic_0001>

<llo_original>
// kernel: tpu_custom_call.1
$region0: #{tpu_custom_call.1}
  #allocation0 [shape = 'u32[]', space=smem, size = 0x4, offset = 0x4, fixed_abs, tag = 'smem constant byte address 0x4 - core index']
  #allocation1 [shape = 'u32[72,128]{1,0:T(1,128)}', space=vmem, size = 0x9000, scoped, tag = 'internal scratch']
  %s0 = inlined_call_operand.vmem [shape: bf16[1,512,8], index: 0, kind: input, shape index: {}]
  %s1 = inlined_call_operand.vmem [shape: bf16[8,64], index: 1, kind: input, shape index: {}]
  %s2 = inlined_call_operand.vmem [shape: f32[1,64], index: 2, kind: input, shape index: {}]
  %s3 = inlined_call_operand.hbm [shape: bf16[6,3,64,64], index: 3, kind: input, shape index: {}]
  %s4 = inlined_call_operand.vmem [shape: f32[6,1,64], index: 4, kind: input, shape index: {}]
  %s5 = inlined_call_operand.vmem [shape: bf16[64,4], index: 5, kind: input, shape index: {}]
  %s6 = inlined_call_operand.vmem [shape: f32[1,4], index: 6, kind: input, shape index: {}]
  %s7 = inlined_call_operand.hbm [shape: f32[1,4,4], index: 7, kind: output, shape index: {}]
  %s8 = sld [smem:[#allocation0]]
  $region42: #{tpu_custom_call.1} parent=0
    _
  %s10 = ssub.s32 1, %s8
  %s11 = scalar_select 0, %s10, %s8
  $region1: #{tpu_custom_call.1} parent=0
    #allocation2 [shape = 'u8[294912]{0}', space=vmem, size = 0x48000, scoped, tag = 'input window, operand 3, single buffered']
    #allocation3 [shape = 's32[1]{0}', space=sflag, size = 0x4, scoped, tag = 'scoped memory for tpu_custom_call.1']
    #allocation4 [shape = 's32[1]{0}', space=sflag, size = 0x4, scoped, tag = 'scoped memory for tpu_custom_call.1']
    #allocation5 [shape = 'u8[2048]{0}', space=vmem, size = 0x800, scoped, tag = 'output window, operand 0, single buffered']
    %12 = vsyncpa [#allocation3], 0
    %13 = vsyncpa [#allocation4], 0
    // Predicated region
    $region2: #{tpu_custom_call.1} parent=1 // pred_check
      _
    $region3: #{tpu_custom_call.1} parent=1 // pred_check_branch
      %15 = sbr.rel (0) target = $region5
    $region4: #{tpu_custom_call.1} parent=1 // pred_region
      _
    $region5: #{tpu_custom_call.1} parent=1 // pred_fallthru
      _
    // Predicated region
    $region6: #{tpu_custom_call.1} parent=1 // pred_check
      _
    $region7: #{tpu_custom_call.1} parent=1 // pred_check_branch
      %17 = sbr.rel (0) target = $region9
    $region8: #{tpu_custom_call.1} parent=1 // pred_region
      _
    $region9: #{tpu_custom_call.1} parent=1 // pred_fallthru
      _
    // Predicated region
    $region10: #{tpu_custom_call.1} parent=1 // pred_check
      _
    $region11: #{tpu_custom_call.1} parent=1 // pred_check_branch
      %19 = sbr.rel (0) target = $region13
    $region12: #{tpu_custom_call.1} parent=1 // pred_region
      _
    $region13: #{tpu_custom_call.1} parent=1 // pred_fallthru
      _
    // Predicated region
    $region14: #{tpu_custom_call.1} parent=1 // pred_check
      _
    $region15: #{tpu_custom_call.1} parent=1 // pred_check_branch
      %21 = sbr.rel (0) target = $region17
    $region16: #{tpu_custom_call.1} parent=1 // pred_region
      %23 = vsyncadd [#allocation3], 0
      %s24 = sshll.u32 %s3, 4
      %s25 = int_to_ptr.hbm [resolvable:$true] %s24
      %s26 = sshll.u32 [#allocation2], 4
      %s27 = int_to_ptr.vmem [resolvable:$true] %s26
      %32 = dma.hbm_to_vmem [thread:$0]  %s25, 9216, %s27, [#allocation3], 64, 64, 4
    $region17: #{tpu_custom_call.1} parent=1 // pred_fallthru
      _
    // Predicated region
    $region18: #{tpu_custom_call.1} parent=1 // pred_check
      _
    $region19: #{tpu_custom_call.1} parent=1 // pred_check_branch
      %34 = sbr.rel (0) target = $region21
    $region20: #{tpu_custom_call.1} parent=1 // pred_region
      _
    $region21: #{tpu_custom_call.1} parent=1 // pred_fallthru
      _
    // Predicated region
    $region22: #{tpu_custom_call.1} parent=1 // pred_check
      _
    $region23: #{tpu_custom_call.1} parent=1 // pred_check_branch
      %36 = sbr.rel (0) target = $region25
    $region24: #{tpu_custom_call.1} parent=1 // pred_region
      _
    $region25: #{tpu_custom_call.1} parent=1 // pred_fallthru
      _
    // Predicated region
    $region26: #{tpu_custom_call.1} parent=1 // pred_check
      _
    $region27: #{tpu_custom_call.1} parent=1 // pred_check_branch
      %38 = sbr.rel (0) target = $region29
    $region28: #{tpu_custom_call.1} parent=1 // pred_region
      _
    $region29: #{tpu_custom_call.1} parent=1 // pred_fallthru
      _
    // Predicated region
    $region30: #{tpu_custom_call.1} parent=1 // pred_check
      _
    $region31: #{tpu_custom_call.1} parent=1 // pred_check_branch
      %40 = sbr.rel (0) target = $region33
    $region32: #{tpu_custom_call.1} parent=1 // pred_region
      %42 = dma.done [#allocation3], 9216
    $region33: #{tpu_custom_call.1} parent=1 // pred_fallthru
      _
    %v44 = vld [vmem:[%s0] sm:$0xf]
    %v45 = vld [vmem:[%s0 + $0x4] sm:$0xf]
    %v46 = vld [vmem:[%s0 + $0x8] sm:$0xf]
    %v47 = vld [vmem:[%s0 + $0xc] sm:$0xf]
    %v48 = vld [vmem:[%s0 + $0x10] sm:$0xf]
    %v49 = vld [vmem:[%s0 + $0x14] sm:$0xf]
    %v50 = vld [vmem:[%s0 + $0x18] sm:$0xf]
    %v51 = vld [vmem:[%s0 + $0x1c] sm:$0xf]
    %v52 = vld [vmem:[%s0 + $0x20] sm:$0xf]
    %v53 = vld [vmem:[%s0 + $0x24] sm:$0xf]
    %v54 = vld [vmem:[%s0 + $0x28] sm:$0xf]
    %v55 = vld [vmem:[%s0 + $0x2c] sm:$0xf]
    %v56 = vld [vmem:[%s0 + $0x30] sm:$0xf]
    %v57 = vld [vmem:[%s0 + $0x34] sm:$0xf]
    %v58 = vld [vmem:[%s0 + $0x38] sm:$0xf]
    %v59 = vld [vmem:[%s0 + $0x3c] sm:$0xf]
    %v60 = vld [vmem:[%s0 + $0x40] sm:$0xf]
    %v61 = vld [vmem:[%s0 + $0x44] sm:$0xf]
    %v62 = vld [vmem:[%s0 + $0x48] sm:$0xf]
    %v63 = vld [vmem:[%s0 + $0x4c] sm:$0xf]
    %v64 = vld [vmem:[%s0 + $0x50] sm:$0xf]
    %v65 = vld [vmem:[%s0 + $0x54] sm:$0xf]
    %v66 = vld [vmem:[%s0 + $0x58] sm:$0xf]
    %v67 = vld [vmem:[%s0 + $0x5c] sm:$0xf]
    %v68 = vld [vmem:[%s0 + $0x60] sm:$0xf]
    %v69 = vld [vmem:[%s0 + $0x64] sm:$0xf]
    %v70 = vld [vmem:[%s0 + $0x68] sm:$0xf]
    %v71 = vld [vmem:[%s0 + $0x6c] sm:$0xf]
    %v72 = vld [vmem:[%s0 + $0x70] sm:$0xf]
    %v73 = vld [vmem:[%s0 + $0x74] sm:$0xf]
    %v74 = vld [vmem:[%s0 + $0x78] sm:$0xf]
    %v75 = vld [vmem:[%s0 + $0x7c] sm:$0xf]
    %v76 = vld [vmem:[%s0 + $0x80] sm:$0xf]
    %v77 = vld [vmem:[%s0 + $0x84] sm:$0xf]
    %v78 = vld [vmem:[%s0 + $0x88] sm:$0xf]
    %v79 = vld [vmem:[%s0 + $0x8c] sm:$0xf]
    %v80 = vld [vmem:[%s0 + $0x90] sm:$0xf]
    %v81 = vld [vmem:[%s0 + $0x94] sm:$0xf]
    %v82 = vld [vmem:[%s0 + $0x98] sm:$0xf]
    %v83 = vld [vmem:[%s0 + $0x9c] sm:$0xf]
    %v84 = vld [vmem:[%s0 + $0xa0] sm:$0xf]
    %v85 = vld [vmem:[%s0 + $0xa4] sm:$0xf]
    %v86 = vld [vmem:[%s0 + $0xa8] sm:$0xf]
    %v87 = vld [vmem:[%s0 + $0xac] sm:$0xf]
    %v88 = vld [vmem:[%s0 + $0xb0] sm:$0xf]
    %v89 = vld [vmem:[%s0 + $0xb4] sm:$0xf]
    %v90 = vld [vmem:[%s0 + $0xb8] sm:$0xf]
    %v91 = vld [vmem:[%s0 + $0xbc] sm:$0xf]
    %v92 = vld [vmem:[%s0 + $0xc0] sm:$0xf]
    %v93 = vld [vmem:[%s0 + $0xc4] sm:$0xf]
    %v94 = vld [vmem:[%s0 + $0xc8] sm:$0xf]
    %v95 = vld [vmem:[%s0 + $0xcc] sm:$0xf]
    %v96 = vld [vmem:[%s0 + $0xd0] sm:$0xf]
    %v97 = vld [vmem:[%s0 + $0xd4] sm:$0xf]
    %v98 = vld [vmem:[%s0 + $0xd8] sm:$0xf]
    %v99 = vld [vmem:[%s0 + $0xdc] sm:$0xf]
    %v100 = vld [vmem:[%s0 + $0xe0] sm:$0xf]
    %v101 = vld [vmem:[%s0 + $0xe4] sm:$0xf]
    %v102 = vld [vmem:[%s0 + $0xe8] sm:$0xf]
    %v103 = vld [vmem:[%s0 + $0xec] sm:$0xf]
    %v104 = vld [vmem:[%s0 + $0xf0] sm:$0xf]
    %v105 = vld [vmem:[%s0 + $0xf4] sm:$0xf]
    %v106 = vld [vmem:[%s0 + $0xf8] sm:$0xf]
    %v107 = vld [vmem:[%s0 + $0xfc] sm:$0xf]
    %v108 = vld [vmem:[%s1] sm:$0xf]
    %v109 = vld [vmem:[%s2] sm:$0x1]
    %v111 = vperm.slane %v109, 0
    %v177 = vunpack.c.l.b16 %v44
    %v178 = vunpack.c.l.b16 %v45
    %v179 = vunpack.c.l.b16 %v46
    %v180 = vunpack.c.l.b16 %v47
    %v181 = vunpack.c.l.b16 %v48
    %v182 = vunpack.c.l.b16 %v49
    %v183 = vunpack.c.l.b16 %v50
    %v184 = vunpack.c.l.b16 %v51
    %v185 = vunpack.c.l.b16 %v52
    %v186 = vunpack.c.l.b16 %v53
    %v187 = vunpack.c.l.b16 %v54
    %v188 = vunpack.c.l.b16 %v55
    %v189 = vunpack.c.l.b16 %v56
    %v190 = vunpack.c.l.b16 %v57
    %v191 = vunpack.c.l.b16 %v58
    %v192 = vunpack.c.l.b16 %v59
    %v193 = vunpack.c.l.b16 %v60
    %v194 = vunpack.c.l.b16 %v61
    %v195 = vunpack.c.l.b16 %v62
    %v196 = vunpack.c.l.b16 %v63
    %v197 = vunpack.c.l.b16 %v64
    %v198 = vunpack.c.l.b16 %v65
    %v199 = vunpack.c.l.b16 %v66
    %v200 = vunpack.c.l.b16 %v67
    %v201 = vunpack.c.l.b16 %v68
    %v202 = vunpack.c.l.b16 %v69
    %v203 = vunpack.c.l.b16 %v70
    %v204 = vunpack.c.l.b16 %v71
    %v205 = vunpack.c.l.b16 %v72
    %v206 = vunpack.c.l.b16 %v73
    %v207 = vunpack.c.l.b16 %v74
    %v208 = vunpack.c.l.b16 %v75
    %v209 = vunpack.c.l.b16 %v76
    %v210 = vunpack.c.l.b16 %v77
    %v211 = vunpack.c.l.b16 %v78
    %v212 = vunpack.c.l.b16 %v79
    %v213 = vunpack.c.l.b16 %v80
    %v214 = vunpack.c.l.b16 %v81
    %v215 = vunpack.c.l.b16 %v82
    %v216 = vunpack.c.l.b16 %v83
    %v217 = vunpack.c.l.b16 %v84
    %v218 = vunpack.c.l.b16 %v85
    %v219 = vunpack.c.l.b16 %v86
    %v220 = vunpack.c.l.b16 %v87
    %v221 = vunpack.c.l.b16 %v88
    %v222 = vunpack.c.l.b16 %v89
    %v223 = vunpack.c.l.b16 %v90
    %v224 = vunpack.c.l.b16 %v91
    %v225 = vunpack.c.l.b16 %v92
    %v226 = vunpack.c.l.b16 %v93
    %v227 = vunpack.c.l.b16 %v94
    %v228 = vunpack.c.l.b16 %v95
    %v229 = vunpack.c.l.b16 %v96
    %v230 = vunpack.c.l.b16 %v97
    %v231 = vunpack.c.l.b16 %v98
    %v232 = vunpack.c.l.b16 %v99
    %v233 = vunpack.c.l.b16 %v100
    %v234 = vunpack.c.l.b16 %v101
    %v235 = vunpack.c.l.b16 %v102
    %v236 = vunpack.c.l.b16 %v103
    %v237 = vunpack.c.l.b16 %v104
    %v238 = vunpack.c.l.b16 %v105
    %v239 = vunpack.c.l.b16 %v106
    %v240 = vunpack.c.l.b16 %v107
    %v241 = vpack.c.b16 %v178, %v177
    %v242 = vpack.c.b16 %v180, %v179
    %v243 = vpack.c.b16 %v182, %v181
    %v244 = vpack.c.b16 %v184, %v183
    %v245 = vpack.c.b16 %v186, %v185
    %v246 = vpack.c.b16 %v188, %v187
    %v247 = vpack.c.b16 %v190, %v189
    %v248 = vpack.c.b16 %v192, %v191
    %v249 = vpack.c.b16 %v194, %v193
    %v250 = vpack.c.b16 %v196, %v195
    %v251 = vpack.c.b16 %v198, %v197
    %v252 = vpack.c.b16 %v200, %v199
    %v253 = vpack.c.b16 %v202, %v201
    %v254 = vpack.c.b16 %v204, %v203
    %v255 = vpack.c.b16 %v206, %v205
    %v256 = vpack.c.b16 %v208, %v207
    %v257 = vpack.c.b16 %v210, %v209
    %v258 = vpack.c.b16 %v212, %v211
    %v259 = vpack.c.b16 %v214, %v213
    %v260 = vpack.c.b16 %v216, %v215
    %v261 = vpack.c.b16 %v218, %v217
    %v262 = vpack.c.b16 %v220, %v219
    %v263 = vpack.c.b16 %v222, %v221
    %v264 = vpack.c.b16 %v224, %v223
    %v265 = vpack.c.b16 %v226, %v225
    %v266 = vpack.c.b16 %v228, %v227
    %v267 = vpack.c.b16 %v230, %v229
    %v268 = vpack.c.b16 %v232, %v231
    %v269 = vpack.c.b16 %v234, %v233
    %v270 = vpack.c.b16 %v236, %v235
    %v271 = vpack.c.b16 %v238, %v237
    %v272 = vpack.c.b16 %v240, %v239
    %vm273 = vcmask 64512
    %v275 = vsel %vm273, %v241, 0
    %v278 = vsel %vm273, %v242, 0
    %v281 = vsel %vm273, %v243, 0
    %v284 = vsel %vm273, %v244, 0
    %v287 = vsel %vm273, %v245, 0
    %v290 = vsel %vm273, %v246, 0
    %v293 = vsel %vm273, %v247, 0
    %v296 = vsel %vm273, %v248, 0
    %v299 = vsel %vm273, %v249, 0
    %v302 = vsel %vm273, %v250, 0
    %v305 = vsel %vm273, %v251, 0
    %v308 = vsel %vm273, %v252, 0
    %v311 = vsel %vm273, %v253, 0
    %v314 = vsel %vm273, %v254, 0
    %v317 = vsel %vm273, %v255, 0
    %v320 = vsel %vm273, %v256, 0
    %v323 = vsel %vm273, %v257, 0
    %v326 = vsel %vm273, %v258, 0
    %v329 = vsel %vm273, %v259, 0
    %v332 = vsel %vm273, %v260, 0
    %v335 = vsel %vm273, %v261, 0
    %v338 = vsel %vm273, %v262, 0
    %v341 = vsel %vm273, %v263, 0
    %v344 = vsel %vm273, %v264, 0
    %v347 = vsel %vm273, %v265, 0
    %v350 = vsel %vm273, %v266, 0
    %v353 = vsel %vm273, %v267, 0
    %v356 = vsel %vm273, %v268, 0
    %v359 = vsel %vm273, %v269, 0
    %v362 = vsel %vm273, %v270, 0
    %v365 = vsel %vm273, %v271, 0
    %v368 = vsel %vm273, %v272, 0
    %vm370 = vcmask 1043456
    %v372 = vsel %vm370, %v108, 0
    %374 = vmatpush.bf16.msra.mxu0 0
    %375 = vmatpush.bf16.msra.mxu0 0
    %376 = vmatpush.bf16.msra.mxu0 0
    %377 = vmatpush.bf16.msra.mxu0 0
    %378 = vmatpush.bf16.msra.mxu0 0
    %379 = vmatpush.bf16.msra.mxu0 0
    %380 = vmatpush.bf16.msra.mxu0 0
    %381 = vmatpush.bf16.msra.mxu0 %v372
    %382 = vmatmul.bf16.gmra.mxu0 %v275
    %v383 = vpop.f32.mrf.mxu0
    %v384 = vadd.f32 %v111, %v383
    %v385 = vpop.f32.mrf.mxu0
    %v386 = vadd.f32 %v111, %v385
    %387 = vmatmul.bf16.gmra.mxu0 %v278
    %v388 = vpop.f32.mrf.mxu0
    %v389 = vadd.f32 %v111, %v388
    %v390 = vpop.f32.mrf.mxu0
    %v391 = vadd.f32 %v111, %v390
    %392 = vmatmul.bf16.gmra.mxu0 %v281
    %v393 = vpop.f32.mrf.mxu0
    %v394 = vadd.f32 %v111, %v393
    %v395 = vpop.f32.mrf.mxu0
    %v396 = vadd.f32 %v111, %v395
    %397 = vmatmul.bf16.gmra.mxu0 %v284
    %v398 = vpop.f32.mrf.mxu0
    %v399 = vadd.f32 %v111, %v398
    %v400 = vpop.f32.mrf.mxu0
    %v401 = vadd.f32 %v111, %v400
    %402 = vmatmul.bf16.gmra.mxu0 %v287
    %v403 = vpop.f32.mrf.mxu0
    %v404 = vadd.f32 %v111, %v403
    %v405 = vpop.f32.mrf.mxu0
    %v406 = vadd.f32 %v111, %v405
    %407 = vmatmul.bf16.gmra.mxu0 %v290
    %v408 = vpop.f32.mrf.mxu0
    %v409 = vadd.f32 %v111, %v408
    %v410 = vpop.f32.mrf.mxu0
    %v411 = vadd.f32 %v111, %v410
    %412 = vmatmul.bf16.gmra.mxu0 %v293
    %v413 = vpop.f32.mrf.mxu0
    %v414 = vadd.f32 %v111, %v413
    %v415 = vpop.f32.mrf.mxu0
    %v416 = vadd.f32 %v111, %v415
    %417 = vmatmul.bf16.gmra.mxu0 %v296
    %v418 = vpop.f32.mrf.mxu0
    %v419 = vadd.f32 %v111, %v418
    %v420 = vpop.f32.mrf.mxu0
    %v421 = vadd.f32 %v111, %v420
    %422 = vmatmul.bf16.gmra.mxu0 %v299
    %v423 = vpop.f32.mrf.mxu0
    %v424 = vadd.f32 %v111, %v423
    %v425 = vpop.f32.mrf.mxu0
    %v426 = vadd.f32 %v111, %v425
    %427 = vmatmul.bf16.gmra.mxu0 %v302
    %v428 = vpop.f32.mrf.mxu0
    %v429 = vadd.f32 %v111, %v428
    %v430 = vpop.f32.mrf.mxu0
    %v431 = vadd.f32 %v111, %v430
    %432 = vmatmul.bf16.gmra.mxu0 %v305
    %v433 = vpop.f32.mrf.mxu0
    %v434 = vadd.f32 %v111, %v433
    %v435 = vpop.f32.mrf.mxu0
    %v436 = vadd.f32 %v111, %v435
    %437 = vmatmul.bf16.gmra.mxu0 %v308
    %v438 = vpop.f32.mrf.mxu0
    %v439 = vadd.f32 %v111, %v438
    %v440 = vpop.f32.mrf.mxu0
    %v441 = vadd.f32 %v111, %v440
    %442 = vmatmul.bf16.gmra.mxu0 %v311
    %v443 = vpop.f32.mrf.mxu0
    %v444 = vadd.f32 %v111, %v443
    %v445 = vpop.f32.mrf.mxu0
    %v446 = vadd.f32 %v111, %v445
    %447 = vmatmul.bf16.gmra.mxu0 %v314
    %v448 = vpop.f32.mrf.mxu0
    %v449 = vadd.f32 %v111, %v448
    %v450 = vpop.f32.mrf.mxu0
    %v451 = vadd.f32 %v111, %v450
    %452 = vmatmul.bf16.gmra.mxu0 %v317
    %v453 = vpop.f32.mrf.mxu0
    %v454 = vadd.f32 %v111, %v453
    %v455 = vpop.f32.mrf.mxu0
    %v456 = vadd.f32 %v111, %v455
    %457 = vmatmul.bf16.gmra.mxu0 %v320
    %v458 = vpop.f32.mrf.mxu0
    %v459 = vadd.f32 %v111, %v458
    %v460 = vpop.f32.mrf.mxu0
    %v461 = vadd.f32 %v111, %v460
    %462 = vmatmul.bf16.gmra.mxu0 %v323
    %v463 = vpop.f32.mrf.mxu0
    %v464 = vadd.f32 %v111, %v463
    %v465 = vpop.f32.mrf.mxu0
    %v466 = vadd.f32 %v111, %v465
    %467 = vmatmul.bf16.gmra.mxu0 %v326
    %v468 = vpop.f32.mrf.mxu0
    %v469 = vadd.f32 %v111, %v468
    %v470 = vpop.f32.mrf.mxu0
    %v471 = vadd.f32 %v111, %v470
    %472 = vmatmul.bf16.gmra.mxu0 %v329
    %v473 = vpop.f32.mrf.mxu0
    %v474 = vadd.f32 %v111, %v473
    %v475 = vpop.f32.mrf.mxu0
    %v476 = vadd.f32 %v111, %v475
    %477 = vmatmul.bf16.gmra.mxu0 %v332
    %v478 = vpop.f32.mrf.mxu0
    %v479 = vadd.f32 %v111, %v478
    %v480 = vpop.f32.mrf.mxu0
    %v481 = vadd.f32 %v111, %v480
    %482 = vmatmul.bf16.gmra.mxu0 %v335
    %v483 = vpop.f32.mrf.mxu0
    %v484 = vadd.f32 %v111, %v483
    %v485 = vpop.f32.mrf.mxu0
    %v486 = vadd.f32 %v111, %v485
    %487 = vmatmul.bf16.gmra.mxu0 %v338
    %v488 = vpop.f32.mrf.mxu0
    %v489 = vadd.f32 %v111, %v488
    %v490 = vpop.f32.mrf.mxu0
    %v491 = vadd.f32 %v111, %v490
    %492 = vmatmul.bf16.gmra.mxu0 %v341
    %v493 = vpop.f32.mrf.mxu0
    %v494 = vadd.f32 %v111, %v493
    %v495 = vpop.f32.mrf.mxu0
    %v496 = vadd.f32 %v111, %v495
    %497 = vmatmul.bf16.gmra.mxu0 %v344
    %v498 = vpop.f32.mrf.mxu0
    %v499 = vadd.f32 %v111, %v498
    %v500 = vpop.f32.mrf.mxu0
    %v501 = vadd.f32 %v111, %v500
    %502 = vmatmul.bf16.gmra.mxu0 %v347
    %v503 = vpop.f32.mrf.mxu0
    %v504 = vadd.f32 %v111, %v503
    %v505 = vpop.f32.mrf.mxu0
    %v506 = vadd.f32 %v111, %v505
    %507 = vmatmul.bf16.gmra.mxu0 %v350
    %v508 = vpop.f32.mrf.mxu0
    %v509 = vadd.f32 %v111, %v508
    %v510 = vpop.f32.mrf.mxu0
    %v511 = vadd.f32 %v111, %v510
    %512 = vmatmul.bf16.gmra.mxu0 %v353
    %v513 = vpop.f32.mrf.mxu0
    %v514 = vadd.f32 %v111, %v513
    %v515 = vpop.f32.mrf.mxu0
    %v516 = vadd.f32 %v111, %v515
    %517 = vmatmul.bf16.gmra.mxu0 %v356
    %v518 = vpop.f32.mrf.mxu0
    %v519 = vadd.f32 %v111, %v518
    %v520 = vpop.f32.mrf.mxu0
    %v521 = vadd.f32 %v111, %v520
    %522 = vmatmul.bf16.gmra.mxu0 %v359
    %v523 = vpop.f32.mrf.mxu0
    %v524 = vadd.f32 %v111, %v523
    %v525 = vpop.f32.mrf.mxu0
    %v526 = vadd.f32 %v111, %v525
    %527 = vmatmul.bf16.gmra.mxu0 %v362
    %v528 = vpop.f32.mrf.mxu0
    %v529 = vadd.f32 %v111, %v528
    %v530 = vpop.f32.mrf.mxu0
    %v531 = vadd.f32 %v111, %v530
    %532 = vmatmul.bf16.gmra.mxu0 %v365
    %v533 = vpop.f32.mrf.mxu0
    %v534 = vadd.f32 %v111, %v533
    %v535 = vpop.f32.mrf.mxu0
    %v536 = vadd.f32 %v111, %v535
    %537 = vmatmul.bf16.gmra.mxu0 %v368
    %v538 = vpop.f32.mrf.mxu0
    %v539 = vadd.f32 %v111, %v538
    %v540 = vpop.f32.mrf.mxu0
    %v541 = vadd.f32 %v111, %v540
    %542 = vdwg.mxu0
    %v543 = vmax.f32 %v384, 0.0
    %v544 = vmax.f32 %v386, 0.0
    %v545 = vmax.f32 %v389, 0.0
    %v546 = vmax.f32 %v391, 0.0
    %v547 = vmax.f32 %v394, 0.0
    %v548 = vmax.f32 %v396, 0.0
    %v549 = vmax.f32 %v399, 0.0
    %v550 = vmax.f32 %v401, 0.0
    %v551 = vmax.f32 %v404, 0.0
    %v552 = vmax.f32 %v406, 0.0
    %v553 = vmax.f32 %v409, 0.0
    %v554 = vmax.f32 %v411, 0.0
    %v555 = vmax.f32 %v414, 0.0
    %v556 = vmax.f32 %v416, 0.0
    %v557 = vmax.f32 %v419, 0.0
    %v558 = vmax.f32 %v421, 0.0
    %v559 = vmax.f32 %v424, 0.0
    %v560 = vmax.f32 %v426, 0.0
    %v561 = vmax.f32 %v429, 0.0
    %v562 = vmax.f32 %v431, 0.0
    %v563 = vmax.f32 %v434, 0.0
    %v564 = vmax.f32 %v436, 0.0
    %v565 = vmax.f32 %v439, 0.0
    %v566 = vmax.f32 %v441, 0.0
    %v567 = vmax.f32 %v444, 0.0
    %v568 = vmax.f32 %v446, 0.0
    %v569 = vmax.f32 %v449, 0.0
    %v570 = vmax.f32 %v451, 0.0
    %v571 = vmax.f32 %v454, 0.0
    %v572 = vmax.f32 %v456, 0.0
    %v573 = vmax.f32 %v459, 0.0
    %v574 = vmax.f32 %v461, 0.0
    %v575 = vmax.f32 %v464, 0.0
    %v576 = vmax.f32 %v466, 0.0
    %v577 = vmax.f32 %v469, 0.0
    %v578 = vmax.f32 %v471, 0.0
    %v579 = vmax.f32 %v474, 0.0
    %v580 = vmax.f32 %v476, 0.0
    %v581 = vmax.f32 %v479, 0.0
    %v582 = vmax.f32 %v481, 0.0
    %v583 = vmax.f32 %v484, 0.0
    %v584 = vmax.f32 %v486, 0.0
    %v585 = vmax.f32 %v489, 0.0
    %v586 = vmax.f32 %v491, 0.0
    %v587 = vmax.f32 %v494, 0.0
    %v588 = vmax.f32 %v496, 0.0
    %v589 = vmax.f32 %v499, 0.0
    %v590 = vmax.f32 %v501, 0.0
    %v591 = vmax.f32 %v504, 0.0
    %v592 = vmax.f32 %v506, 0.0
    %v593 = vmax.f32 %v509, 0.0
    %v594 = vmax.f32 %v511, 0.0
    %v595 = vmax.f32 %v514, 0.0
    %v596 = vmax.f32 %v516, 0.0
    %v597 = vmax.f32 %v519, 0.0
    %v598 = vmax.f32 %v521, 0.0
    %v599 = vmax.f32 %v524, 0.0
    %v600 = vmax.f32 %v526, 0.0
    %v601 = vmax.f32 %v529, 0.0
    %v602 = vmax.f32 %v531, 0.0
    %v603 = vmax.f32 %v534, 0.0
    %v604 = vmax.f32 %v536, 0.0
    %v605 = vmax.f32 %v539, 0.0
    %v606 = vmax.f32 %v541, 0.0
    %v607 = vlaneseq
    %v608 = vshrl.u32 %v607, 7
    %v609 = vadd.s32 %v608, 8
    %v610 = vadd.s32 %v608, 16
    %v611 = vadd.s32 %v608, 24
    %v612 = vadd.s32 %v608, 32
    %v613 = vadd.s32 %v608, 40
    %v614 = vadd.s32 %v608, 48
    %v615 = vadd.s32 %v608, 56
    %v616 = vadd.s32 %v608, 64
    %v617 = vadd.s32 %v608, 72
    %v618 = vadd.s32 %v608, 80
    %v619 = vadd.s32 %v608, 88
    %v620 = vadd.s32 %v608, 96
    %v621 = vadd.s32 %v608, 104
    %v622 = vadd.s32 %v608, 112
    %v623 = vadd.s32 %v608, 120
    %v624 = vadd.s32 %v608, 128
    %v625 = vadd.s32 %v608, 136
    %v626 = vadd.s32 %v608, 144
    %v627 = vadd.s32 %v608, 152
    %v628 = vadd.s32 %v608, 160
    %v629 = vadd.s32 %v608, 168
    %v630 = vadd.s32 %v608, 176
    %v631 = vadd.s32 %v608, 184
    %v632 = vadd.s32 %v608, 192
    %v633 = vadd.s32 %v608, 200
    %v634 = vadd.s32 %v608, 208
    %v635 = vadd.s32 %v608, 216
    %v636 = vadd.s32 %v608, 224
    %v637 = vadd.s32 %v608, 232
    %v638 = vadd.s32 %v608, 240
    %v639 = vadd.s32 %v608, 248
    %v640 = vadd.s32 %v608, 256
    %v641 = vadd.s32 %v608, 264
    %v642 = vadd.s32 %v608, 272
    %v643 = vadd.s32 %v608, 280
    %v644 = vadd.s32 %v608, 288
    %v645 = vadd.s32 %v608, 296
    %v646 = vadd.s32 %v608, 304
    %v647 = vadd.s32 %v608, 312
    %v648 = vadd.s32 %v608, 320
    %v649 = vadd.s32 %v608, 328
    %v650 = vadd.s32 %v608, 336
    %v651 = vadd.s32 %v608, 344
    %v652 = vadd.s32 %v608, 352
    %v653 = vadd.s32 %v608, 360
    %v654 = vadd.s32 %v608, 368
    %v655 = vadd.s32 %v608, 376
    %v656 = vadd.s32 %v608, 384
    %v657 = vadd.s32 %v608, 392
    %v658 = vadd.s32 %v608, 400
    %v659 = vadd.s32 %v608, 408
    %v660 = vadd.s32 %v608, 416
    %v661 = vadd.s32 %v608, 424
    %v662 = vadd.s32 %v608, 432
    %v663 = vadd.s32 %v608, 440
    %v664 = vadd.s32 %v608, 448
    %v665 = vadd.s32 %v608, 456
    %v666 = vadd.s32 %v608, 464
    %v667 = vadd.s32 %v608, 472
    %v668 = vadd.s32 %v608, 480
    %v669 = vadd.s32 %v608, 488
    %v670 = vadd.s32 %v608, 496
    %v671 = vadd.s32 %v608, 504
    %vm672 = vcmp.lt.s32.totalorder %v608, 0
    %v673 = vsub.s32 0, %v608
    %v674 = vsel %vm672, %v673, %v608
    %v675 = vshrl.u32 %v674, 7
    %v676 = vand.u32 %v674, 127
    %v677 = vsub.s32 0, %v676
    %v678 = vsel %vm672, %v677, %v676
    %vm679 = vcmp.lt.s32.totalorder %v609, 0
    %v680 = vsub.s32 0, %v609
    %v681 = vsel %vm679, %v680, %v609
    %v682 = vshrl.u32 %v681, 7
    %v683 = vand.u32 %v681, 127
    %v684 = vsub.s32 0, %v683
    %v685 = vsel %vm679, %v684, %v683
    %vm686 = vcmp.lt.s32.totalorder %v610, 0
    %v687 = vsub.s32 0, %v610
    %v688 = vsel %vm686, %v687, %v610
    %v689 = vshrl.u32 %v688, 7
    %v690 = vand.u32 %v688, 127
    %v691 = vsub.s32 0, %v690
    %v692 = vsel %vm686, %v691, %v690
    %vm693 = vcmp.lt.s32.totalorder %v611, 0
    %v694 = vsub.s32 0, %v611
    %v695 = vsel %vm693, %v694, %v611
    %v696 = vshrl.u32 %v695, 7
    %v697 = vand.u32 %v695, 127
    %v698 = vsub.s32 0, %v697
    %v699 = vsel %vm693, %v698, %v697
    %vm700 = vcmp.lt.s32.totalorder %v612, 0
    %v701 = vsub.s32 0, %v612
    %v702 = vsel %vm700, %v701, %v612
    %v703 = vshrl.u32 %v702, 7
    %v704 = vand.u32 %v702, 127
    %v705 = vsub.s32 0, %v704
    %v706 = vsel %vm700, %v705, %v704
    %vm707 = vcmp.lt.s32.totalorder %v613, 0
    %v708 = vsub.s32 0, %v613
    %v709 = vsel %vm707, %v708, %v613
    %v710 = vshrl.u32 %v709, 7
    %v711 = vand.u32 %v709, 127
    %v712 = vsub.s32 0, %v711
    %v713 = vsel %vm707, %v712, %v711
    %vm714 = vcmp.lt.s32.totalorder %v614, 0
    %v715 = vsub.s32 0, %v614
    %v716 = vsel %vm714, %v715, %v614
    %v717 = vshrl.u32 %v716, 7
    %v718 = vand.u32 %v716, 127
    %v719 = vsub.s32 0, %v718
    %v720 = vsel %vm714, %v719, %v718
    %vm721 = vcmp.lt.s32.totalorder %v615, 0
    %v722 = vsub.s32 0, %v615
    %v723 = vsel %vm721, %v722, %v615
    %v724 = vshrl.u32 %v723, 7
    %v725 = vand.u32 %v723, 127
    %v726 = vsub.s32 0, %v725
    %v727 = vsel %vm721, %v726, %v725
    %vm728 = vcmp.lt.s32.totalorder %v616, 0
    %v729 = vsub.s32 0, %v616
    %v730 = vsel %vm728, %v729, %v616
    %v731 = vshrl.u32 %v730, 7
    %v732 = vand.u32 %v730, 127
    %v733 = vsub.s32 0, %v732
    %v734 = vsel %vm728, %v733, %v732
    %vm735 = vcmp.lt.s32.totalorder %v617, 0
    %v736 = vsub.s32 0, %v617
    %v737 = vsel %vm735, %v736, %v617
    %v738 = vshrl.u32 %v737, 7
    %v739 = vand.u32 %v737, 127
    %v740 = vsub.s32 0, %v739
    %v741 = vsel %vm735, %v740, %v739
    %vm742 = vcmp.lt.s32.totalorder %v618, 0
    %v743 = vsub.s32 0, %v618
    %v744 = vsel %vm742, %v743, %v618
    %v745 = vshrl.u32 %v744, 7
    %v746 = vand.u32 %v744, 127
    %v747 = vsub.s32 0, %v746
    %v748 = vsel %vm742, %v747, %v746
    %vm749 = vcmp.lt.s32.totalorder %v619, 0
    %v750 = vsub.s32 0, %v619
    %v751 = vsel %vm749, %v750, %v619
    %v752 = vshrl.u32 %v751, 7
    %v753 = vand.u32 %v751, 127
    %v754 = vsub.s32 0, %v753
    %v755 = vsel %vm749, %v754, %v753
    %vm756 = vcmp.lt.s32.totalorder %v620, 0
    %v757 = vsub.s32 0, %v620
    %v758 = vsel %vm756, %v757, %v620
    %v759 = vshrl.u32 %v758, 7
    %v760 = vand.u32 %v758, 127
    %v761 = vsub.s32 0, %v760
    %v762 = vsel %vm756, %v761, %v760
    %vm763 = vcmp.lt.s32.totalorder %v621, 0
    %v764 = vsub.s32 0, %v621
    %v765 = vsel %vm763, %v764, %v621
    %v766 = vshrl.u32 %v765, 7
    %v767 = vand.u32 %v765, 127
    %v768 = vsub.s32 0, %v767
    %v769 = vsel %vm763, %v768, %v767
    %vm770 = vcmp.lt.s32.totalorder %v622, 0
    %v771 = vsub.s32 0, %v622
    %v772 = vsel %vm770, %v771, %v622
    %v773 = vshrl.u32 %v772, 7
    %v774 = vand.u32 %v772, 127
    %v775 = vsub.s32 0, %v774
    %v776 = vsel %vm770, %v775, %v774
    %vm777 = vcmp.lt.s32.totalorder %v623, 0
    %v778 = vsub.s32 0, %v623
    %v779 = vsel %vm777, %v778, %v623
    %v780 = vshrl.u32 %v779, 7
    %v781 = vand.u32 %v779, 127
    %v782 = vsub.s32 0, %v781
    %v783 = vsel %vm777, %v782, %v781
    %vm784 = vcmp.lt.s32.totalorder %v624, 0
    %v785 = vsub.s32 0, %v624
    %v786 = vsel %vm784, %v785, %v624
    %v787 = vshrl.u32 %v786, 7
    %v788 = vand.u32 %v786, 127
    %v789 = vsub.s32 0, %v788
    %v790 = vsel %vm784, %v789, %v788
    %vm791 = vcmp.lt.s32.totalorder %v625, 0
    %v792 = vsub.s32 0, %v625
    %v793 = vsel %vm791, %v792, %v625
    %v794 = vshrl.u32 %v793, 7
    %v795 = vand.u32 %v793, 127
    %v796 = vsub.s32 0, %v795
    %v797 = vsel %vm791, %v796, %v795
    %vm798 = vcmp.lt.s32.totalorder %v626, 0
    %v799 = vsub.s32 0, %v626
    %v800 = vsel %vm798, %v799, %v626
    %v801 = vshrl.u32 %v800, 7
    %v802 = vand.u32 %v800, 127
    %v803 = vsub.s32 0, %v802
    %v804 = vsel %vm798, %v803, %v802
    %vm805 = vcmp.lt.s32.totalorder %v627, 0
    %v806 = vsub.s32 0, %v627
    %v807 = vsel %vm805, %v806, %v627
    %v808 = vshrl.u32 %v807, 7
    %v809 = vand.u32 %v807, 127
    %v810 = vsub.s32 0, %v809
    %v811 = vsel %vm805, %v810, %v809
    %vm812 = vcmp.lt.s32.totalorder %v628, 0
    %v813 = vsub.s32 0, %v628
    %v814 = vsel %vm812, %v813, %v628
    %v815 = vshrl.u32 %v814, 7
    %v816 = vand.u32 %v814, 127
    %v817 = vsub.s32 0, %v816
    %v818 = vsel %vm812, %v817, %v816
    %vm819 = vcmp.lt.s32.totalorder %v629, 0
    %v820 = vsub.s32 0, %v629
    %v821 = vsel %vm819, %v820, %v629
    %v822 = vshrl.u32 %v821, 7
    %v823 = vand.u32 %v821, 127
    %v824 = vsub.s32 0, %v823
    %v825 = vsel %vm819, %v824, %v823
    %vm826 = vcmp.lt.s32.totalorder %v630, 0
    %v827 = vsub.s32 0, %v630
    %v828 = vsel %vm826, %v827, %v630
    %v829 = vshrl.u32 %v828, 7
    %v830 = vand.u32 %v828, 127
    %v831 = vsub.s32 0, %v830
    %v832 = vsel %vm826, %v831, %v830
    %vm833 = vcmp.lt.s32.totalorder %v631, 0
    %v834 = vsub.s32 0, %v631
    %v835 = vsel %vm833, %v834, %v631
    %v836 = vshrl.u32 %v835, 7
    %v837 = vand.u32 %v835, 127
    %v838 = vsub.s32 0, %v837
    %v839 = vsel %vm833, %v838, %v837
    %vm840 = vcmp.lt.s32.totalorder %v632, 0
    %v841 = vsub.s32 0, %v632
    %v842 = vsel %vm840, %v841, %v632
    %v843 = vshrl.u32 %v842, 7
    %v844 = vand.u32 %v842, 127
    %v845 = vsub.s32 0, %v844
    %v846 = vsel %vm840, %v845, %v844
    %vm847 = vcmp.lt.s32.totalorder %v633, 0
    %v848 = vsub.s32 0, %v633
    %v849 = vsel %vm847, %v848, %v633
    %v850 = vshrl.u32 %v849, 7
    %v851 = vand.u32 %v849, 127
    %v852 = vsub.s32 0, %v851
    %v853 = vsel %vm847, %v852, %v851
    %vm854 = vcmp.lt.s32.totalorder %v634, 0
    %v855 = vsub.s32 0, %v634
    %v856 = vsel %vm854, %v855, %v634
    %v857 = vshrl.u32 %v856, 7
    %v858 = vand.u32 %v856, 127
    %v859 = vsub.s32 0, %v858
    %v860 = vsel %vm854, %v859, %v858
    %vm861 = vcmp.lt.s32.totalorder %v635, 0
    %v862 = vsub.s32 0, %v635
    %v863 = vsel %vm861, %v862, %v635
    %v864 = vshrl.u32 %v863, 7
    %v865 = vand.u32 %v863, 127
    %v866 = vsub.s32 0, %v865
    %v867 = vsel %vm861, %v866, %v865
    %vm868 = vcmp.lt.s32.totalorder %v636, 0
    %v869 = vsub.s32 0, %v636
    %v870 = vsel %vm868, %v869, %v636
    %v871 = vshrl.u32 %v870, 7
    %v872 = vand.u32 %v870, 127
    %v873 = vsub.s32 0, %v872
    %v874 = vsel %vm868, %v873, %v872
    %vm875 = vcmp.lt.s32.totalorder %v637, 0
    %v876 = vsub.s32 0, %v637
    %v877 = vsel %vm875, %v876, %v637
    %v878 = vshrl.u32 %v877, 7
    %v879 = vand.u32 %v877, 127
    %v880 = vsub.s32 0, %v879
    %v881 = vsel %vm875, %v880, %v879
    %vm882 = vcmp.lt.s32.totalorder %v638, 0
    %v883 = vsub.s32 0, %v638
    %v884 = vsel %vm882, %v883, %v638
    %v885 = vshrl.u32 %v884, 7
    %v886 = vand.u32 %v884, 127
    %v887 = vsub.s32 0, %v886
    %v888 = vsel %vm882, %v887, %v886
    %vm889 = vcmp.lt.s32.totalorder %v639, 0
    %v890 = vsub.s32 0, %v639
    %v891 = vsel %vm889, %v890, %v639
    %v892 = vshrl.u32 %v891, 7
    %v893 = vand.u32 %v891, 127
    %v894 = vsub.s32 0, %v893
    %v895 = vsel %vm889, %v894, %v893
    %vm896 = vcmp.lt.s32.totalorder %v640, 0
    %v897 = vsub.s32 0, %v640
    %v898 = vsel %vm896, %v897, %v640
    %v899 = vshrl.u32 %v898, 7
    %v900 = vand.u32 %v898, 127
    %v901 = vsub.s32 0, %v900
    %v902 = vsel %vm896, %v901, %v900
    %vm903 = vcmp.lt.s32.totalorder %v641, 0
    %v904 = vsub.s32 0, %v641
    %v905 = vsel %vm903, %v904, %v641
    %v906 = vshrl.u32 %v905, 7
    %v907 = vand.u32 %v905, 127
    %v908 = vsub.s32 0, %v907
    %v909 = vsel %vm903, %v908, %v907
    %vm910 = vcmp.lt.s32.totalorder %v642, 0
    %v911 = vsub.s32 0, %v642
    %v912 = vsel %vm910, %v911, %v642
    %v913 = vshrl.u32 %v912, 7
    %v914 = vand.u32 %v912, 127
    %v915 = vsub.s32 0, %v914
    %v916 = vsel %vm910, %v915, %v914
    %vm917 = vcmp.lt.s32.totalorder %v643, 0
    %v918 = vsub.s32 0, %v643
    %v919 = vsel %vm917, %v918, %v643
    %v920 = vshrl.u32 %v919, 7
    %v921 = vand.u32 %v919, 127
    %v922 = vsub.s32 0, %v921
    %v923 = vsel %vm917, %v922, %v921
    %vm924 = vcmp.lt.s32.totalorder %v644, 0
    %v925 = vsub.s32 0, %v644
    %v926 = vsel %vm924, %v925, %v644
    %v927 = vshrl.u32 %v926, 7
    %v928 = vand.u32 %v926, 127
    %v929 = vsub.s32 0, %v928
    %v930 = vsel %vm924, %v929, %v928
    %vm931 = vcmp.lt.s32.totalorder %v645, 0
    %v932 = vsub.s32 0, %v645
    %v933 = vsel %vm931, %v932, %v645
    %v934 = vshrl.u32 %v933, 7
    %v935 = vand.u32 %v933, 127
    %v936 = vsub.s32 0, %v935
    %v937 = vsel %vm931, %v936, %v935
    %vm938 = vcmp.lt.s32.totalorder %v646, 0
    %v939 = vsub.s32 0, %v646
    %v940 = vsel %vm938, %v939, %v646
    %v941 = vshrl.u32 %v940, 7
    %v942 = vand.u32 %v940, 127
    %v943 = vsub.s32 0, %v942
    %v944 = vsel %vm938, %v943, %v942
    %vm945 = vcmp.lt.s32.totalorder %v647, 0
    %v946 = vsub.s32 0, %v647
    %v947 = vsel %vm945, %v946, %v647
    %v948 = vshrl.u32 %v947, 7
    %v949 = vand.u32 %v947, 127
    %v950 = vsub.s32 0, %v949
    %v951 = vsel %vm945, %v950, %v949
    %vm952 = vcmp.lt.s32.totalorder %v648, 0
    %v953 = vsub.s32 0, %v648
    %v954 = vsel %vm952, %v953, %v648
    %v955 = vshrl.u32 %v954, 7
    %v956 = vand.u32 %v954, 127
    %v957 = vsub.s32 0, %v956
    %v958 = vsel %vm952, %v957, %v956
    %vm959 = vcmp.lt.s32.totalorder %v649, 0
    %v960 = vsub.s32 0, %v649
    %v961 = vsel %vm959, %v960, %v649
    %v962 = vshrl.u32 %v961, 7
    %v963 = vand.u32 %v961, 127
    %v964 = vsub.s32 0, %v963
    %v965 = vsel %vm959, %v964, %v963
    %vm966 = vcmp.lt.s32.totalorder %v650, 0
    %v967 = vsub.s32 0, %v650
    %v968 = vsel %vm966, %v967, %v650
    %v969 = vshrl.u32 %v968, 7
    %v970 = vand.u32 %v968, 127
    %v971 = vsub.s32 0, %v970
    %v972 = vsel %vm966, %v971, %v970
    %vm973 = vcmp.lt.s32.totalorder %v651, 0
    %v974 = vsub.s32 0, %v651
    %v975 = vsel %vm973, %v974, %v651
    %v976 = vshrl.u32 %v975, 7
    %v977 = vand.u32 %v975, 127
    %v978 = vsub.s32 0, %v977
    %v979 = vsel %vm973, %v978, %v977
    %vm980 = vcmp.lt.s32.totalorder %v652, 0
    %v981 = vsub.s32 0, %v652
    %v982 = vsel %vm980, %v981, %v652
    %v983 = vshrl.u32 %v982, 7
    %v984 = vand.u32 %v982, 127
    %v985 = vsub.s32 0, %v984
    %v986 = vsel %vm980, %v985, %v984
    %vm987 = vcmp.lt.s32.totalorder %v653, 0
    %v988 = vsub.s32 0, %v653
    %v989 = vsel %vm987, %v988, %v653
    %v990 = vshrl.u32 %v989, 7
    %v991 = vand.u32 %v989, 127
    %v992 = vsub.s32 0, %v991
    %v993 = vsel %vm987, %v992, %v991
    %vm994 = vcmp.lt.s32.totalorder %v654, 0
    %v995 = vsub.s32 0, %v654
    %v996 = vsel %vm994, %v995, %v654
    %v997 = vshrl.u32 %v996, 7
    %v998 = vand.u32 %v996, 127
    %v999 = vsub.s32 0, %v998
    %v1000 = vsel %vm994, %v999, %v998
    %vm1001 = vcmp.lt.s32.totalorder %v655, 0
    %v1002 = vsub.s32 0, %v655
    %v1003 = vsel %vm1001, %v1002, %v655
    %v1004 = vshrl.u32 %v1003, 7
    %v1005 = vand.u32 %v1003, 127
    %v1006 = vsub.s32 0, %v1005
    %v1007 = vsel %vm1001, %v1006, %v1005
    %vm1008 = vcmp.lt.s32.totalorder %v656, 0
    %v1009 = vsub.s32 0, %v656
    %v1010 = vsel %vm1008, %v1009, %v656
    %v1011 = vshrl.u32 %v1010, 7
    %v1012 = vand.u32 %v1010, 127
    %v1013 = vsub.s32 0, %v1012
    %v1014 = vsel %vm1008, %v1013, %v1012
    %vm1015 = vcmp.lt.s32.totalorder %v657, 0
    %v1016 = vsub.s32 0, %v657
    %v1017 = vsel %vm1015, %v1016, %v657
    %v1018 = vshrl.u32 %v1017, 7
    %v1019 = vand.u32 %v1017, 127
    %v1020 = vsub.s32 0, %v1019
    %v1021 = vsel %vm1015, %v1020, %v1019
    %vm1022 = vcmp.lt.s32.totalorder %v658, 0
    %v1023 = vsub.s32 0, %v658
    %v1024 = vsel %vm1022, %v1023, %v658
    %v1025 = vshrl.u32 %v1024, 7
    %v1026 = vand.u32 %v1024, 127
    %v1027 = vsub.s32 0, %v1026
    %v1028 = vsel %vm1022, %v1027, %v1026
    %vm1029 = vcmp.lt.s32.totalorder %v659, 0
    %v1030 = vsub.s32 0, %v659
    %v1031 = vsel %vm1029, %v1030, %v659
    %v1032 = vshrl.u32 %v1031, 7
    %v1033 = vand.u32 %v1031, 127
    %v1034 = vsub.s32 0, %v1033
    %v1035 = vsel %vm1029, %v1034, %v1033
    %vm1036 = vcmp.lt.s32.totalorder %v660, 0
    %v1037 = vsub.s32 0, %v660
    %v1038 = vsel %vm1036, %v1037, %v660
    %v1039 = vshrl.u32 %v1038, 7
    %v1040 = vand.u32 %v1038, 127
    %v1041 = vsub.s32 0, %v1040
    %v1042 = vsel %vm1036, %v1041, %v1040
    %vm1043 = vcmp.lt.s32.totalorder %v661, 0
    %v1044 = vsub.s32 0, %v661
    %v1045 = vsel %vm1043, %v1044, %v661
    %v1046 = vshrl.u32 %v1045, 7
    %v1047 = vand.u32 %v1045, 127
    %v1048 = vsub.s32 0, %v1047
    %v1049 = vsel %vm1043, %v1048, %v1047
    %vm1050 = vcmp.lt.s32.totalorder %v662, 0
    %v1051 = vsub.s32 0, %v662
    %v1052 = vsel %vm1050, %v1051, %v662
    %v1053 = vshrl.u32 %v1052, 7
    %v1054 = vand.u32 %v1052, 127
    %v1055 = vsub.s32 0, %v1054
    %v1056 = vsel %vm1050, %v1055, %v1054
    %vm1057 = vcmp.lt.s32.totalorder %v663, 0
    %v1058 = vsub.s32 0, %v663
    %v1059 = vsel %vm1057, %v1058, %v663
    %v1060 = vshrl.u32 %v1059, 7
    %v1061 = vand.u32 %v1059, 127
    %v1062 = vsub.s32 0, %v1061
    %v1063 = vsel %vm1057, %v1062, %v1061
    %vm1064 = vcmp.lt.s32.totalorder %v664, 0
    %v1065 = vsub.s32 0, %v664
    %v1066 = vsel %vm1064, %v1065, %v664
    %v1067 = vshrl.u32 %v1066, 7
    %v1068 = vand.u32 %v1066, 127
    %v1069 = vsub.s32 0, %v1068
    %v1070 = vsel %vm1064, %v1069, %v1068
    %vm1071 = vcmp.lt.s32.totalorder %v665, 0
    %v1072 = vsub.s32 0, %v665
    %v1073 = vsel %vm1071, %v1072, %v665
    %v1074 = vshrl.u32 %v1073, 7
    %v1075 = vand.u32 %v1073, 127
    %v1076 = vsub.s32 0, %v1075
    %v1077 = vsel %vm1071, %v1076, %v1075
    %vm1078 = vcmp.lt.s32.totalorder %v666, 0
    %v1079 = vsub.s32 0, %v666
    %v1080 = vsel %vm1078, %v1079, %v666
    %v1081 = vshrl.u32 %v1080, 7
    %v1082 = vand.u32 %v1080, 127
    %v1083 = vsub.s32 0, %v1082
    %v1084 = vsel %vm1078, %v1083, %v1082
    %vm1085 = vcmp.lt.s32.totalorder %v667, 0
    %v1086 = vsub.s32 0, %v667
    %v1087 = vsel %vm1085, %v1086, %v667
    %v1088 = vshrl.u32 %v1087, 7
    %v1089 = vand.u32 %v1087, 127
    %v1090 = vsub.s32 0, %v1089
    %v1091 = vsel %vm1085, %v1090, %v1089
    %vm1092 = vcmp.lt.s32.totalorder %v668, 0
    %v1093 = vsub.s32 0, %v668
    %v1094 = vsel %vm1092, %v1093, %v668
    %v1095 = vshrl.u32 %v1094, 7
    %v1096 = vand.u32 %v1094, 127
    %v1097 = vsub.s32 0, %v1096
    %v1098 = vsel %vm1092, %v1097, %v1096
    %vm1099 = vcmp.lt.s32.totalorder %v669, 0
    %v1100 = vsub.s32 0, %v669
    %v1101 = vsel %vm1099, %v1100, %v669
    %v1102 = vshrl.u32 %v1101, 7
    %v1103 = vand.u32 %v1101, 127
    %v1104 = vsub.s32 0, %v1103
    %v1105 = vsel %vm1099, %v1104, %v1103
    %vm1106 = vcmp.lt.s32.totalorder %v670, 0
    %v1107 = vsub.s32 0, %v670
    %v1108 = vsel %vm1106, %v1107, %v670
    %v1109 = vshrl.u32 %v1108, 7
    %v1110 = vand.u32 %v1108, 127
    %v1111 = vsub.s32 0, %v1110
    %v1112 = vsel %vm1106, %v1111, %v1110
    %vm1113 = vcmp.lt.s32.totalorder %v671, 0
    %v1114 = vsub.s32 0, %v671
    %v1115 = vsel %vm1113, %v1114, %v671
    %v1116 = vshrl.u32 %v1115, 7
    %v1117 = vand.u32 %v1115, 127
    %v1118 = vsub.s32 0, %v1117
    %v1119 = vsel %vm1113, %v1118, %v1117
    %vm1120 = vcmp.ne.s32.totalorder %v678, 0
    %vm1121 = vcmp.ne.s32.totalorder %v685, 0
    %vm1122 = vcmp.ne.s32.totalorder %v692, 0
    %vm1123 = vcmp.ne.s32.totalorder %v699, 0
    %vm1124 = vcmp.ne.s32.totalorder %v706, 0
    %vm1125 = vcmp.ne.s32.totalorder %v713, 0
    %vm1126 = vcmp.ne.s32.totalorder %v720, 0
    %vm1127 = vcmp.ne.s32.totalorder %v727, 0
    %vm1128 = vcmp.ne.s32.totalorder %v734, 0
    %vm1129 = vcmp.ne.s32.totalorder %v741, 0
    %vm1130 = vcmp.ne.s32.totalorder %v748, 0
    %vm1131 = vcmp.ne.s32.totalorder %v755, 0
    %vm1132 = vcmp.ne.s32.totalorder %v762, 0
    %vm1133 = vcmp.ne.s32.totalorder %v769, 0
    %vm1134 = vcmp.ne.s32.totalorder %v776, 0
    %vm1135 = vcmp.ne.s32.totalorder %v783, 0
    %vm1136 = vcmp.ne.s32.totalorder %v790, 0
    %vm1137 = vcmp.ne.s32.totalorder %v797, 0
    %vm1138 = vcmp.ne.s32.totalorder %v804, 0
    %vm1139 = vcmp.ne.s32.totalorder %v811, 0
    %vm1140 = vcmp.ne.s32.totalorder %v818, 0
    %vm1141 = vcmp.ne.s32.totalorder %v825, 0
    %vm1142 = vcmp.ne.s32.totalorder %v832, 0
    %vm1143 = vcmp.ne.s32.totalorder %v839, 0
    %vm1144 = vcmp.ne.s32.totalorder %v846, 0
    %vm1145 = vcmp.ne.s32.totalorder %v853, 0
    %vm1146 = vcmp.ne.s32.totalorder %v860, 0
    %vm1147 = vcmp.ne.s32.totalorder %v867, 0
    %vm1148 = vcmp.ne.s32.totalorder %v874, 0
    %vm1149 = vcmp.ne.s32.totalorder %v881, 0
    %vm1150 = vcmp.ne.s32.totalorder %v888, 0
    %vm1151 = vcmp.ne.s32.totalorder %v895, 0
    %vm1152 = vcmp.ne.s32.totalorder %v902, 0
    %vm1153 = vcmp.ne.s32.totalorder %v909, 0
    %vm1154 = vcmp.ne.s32.totalorder %v916, 0
    %vm1155 = vcmp.ne.s32.totalorder %v923, 0
    %vm1156 = vcmp.ne.s32.totalorder %v930, 0
    %vm1157 = vcmp.ne.s32.totalorder %v937, 0
    %vm1158 = vcmp.ne.s32.totalorder %v944, 0
    %vm1159 = vcmp.ne.s32.totalorder %v951, 0
    %vm1160 = vcmp.ne.s32.totalorder %v958, 0
    %vm1161 = vcmp.ne.s32.totalorder %v965, 0
    %vm1162 = vcmp.ne.s32.totalorder %v972, 0
    %vm1163 = vcmp.ne.s32.totalorder %v979, 0
    %vm1164 = vcmp.ne.s32.totalorder %v986, 0
    %vm1165 = vcmp.ne.s32.totalorder %v993, 0
    %vm1166 = vcmp.ne.s32.totalorder %v1000, 0
    %vm1167 = vcmp.ne.s32.totalorder %v1007, 0
    %vm1168 = vcmp.ne.s32.totalorder %v1014, 0
    %vm1169 = vcmp.ne.s32.totalorder %v1021, 0
    %vm1170 = vcmp.ne.s32.totalorder %v1028, 0
    %vm1171 = vcmp.ne.s32.totalorder %v1035, 0
    %vm1172 = vcmp.ne.s32.totalorder %v1042, 0
    %vm1173 = vcmp.ne.s32.totalorder %v1049, 0
    %vm1174 = vcmp.ne.s32.totalorder %v1056, 0
    %vm1175 = vcmp.ne.s32.totalorder %v1063, 0
    %vm1176 = vcmp.ne.s32.totalorder %v1070, 0
    %vm1177 = vcmp.ne.s32.totalorder %v1077, 0
    %vm1178 = vcmp.ne.s32.totalorder %v1084, 0
    %vm1179 = vcmp.ne.s32.totalorder %v1091, 0
    %vm1180 = vcmp.ne.s32.totalorder %v1098, 0
    %vm1181 = vcmp.ne.s32.totalorder %v1105, 0
    %vm1182 = vcmp.ne.s32.totalorder %v1112, 0
    %vm1183 = vcmp.ne.s32.totalorder %v1119, 0
    %vm1184 = vcmp.lt.s32.totalorder %v678, 0
    %vm1185 = vcmp.lt.s32.totalorder %v685, 0
    %vm1186 = vcmp.lt.s32.totalorder %v692, 0
    %vm1187 = vcmp.lt.s32.totalorder %v699, 0
    %vm1188 = vcmp.lt.s32.totalorder %v706, 0
    %vm1189 = vcmp.lt.s32.totalorder %v713, 0
    %vm1190 = vcmp.lt.s32.totalorder %v720, 0
    %vm1191 = vcmp.lt.s32.totalorder %v727, 0
    %vm1192 = vcmp.lt.s32.totalorder %v734, 0
    %vm1193 = vcmp.lt.s32.totalorder %v741, 0
    %vm1194 = vcmp.lt.s32.totalorder %v748, 0
    %vm1195 = vcmp.lt.s32.totalorder %v755, 0
    %vm1196 = vcmp.lt.s32.totalorder %v762, 0
    %vm1197 = vcmp.lt.s32.totalorder %v769, 0
    %vm1198 = vcmp.lt.s32.totalorder %v776, 0
    %vm1199 = vcmp.lt.s32.totalorder %v783, 0
    %vm1200 = vcmp.lt.s32.totalorder %v790, 0
    %vm1201 = vcmp.lt.s32.totalorder %v797, 0
    %vm1202 = vcmp.lt.s32.totalorder %v804, 0
    %vm1203 = vcmp.lt.s32.totalorder %v811, 0
    %vm1204 = vcmp.lt.s32.totalorder %v818, 0
    %vm1205 = vcmp.lt.s32.totalorder %v825, 0
    %vm1206 = vcmp.lt.s32.totalorder %v832, 0
    %vm1207 = vcmp.lt.s32.totalorder %v839, 0
    %vm1208 = vcmp.lt.s32.totalorder %v846, 0
    %vm1209 = vcmp.lt.s32.totalorder %v853, 0
    %vm1210 = vcmp.lt.s32.totalorder %v860, 0
    %vm1211 = vcmp.lt.s32.totalorder %v867, 0
    %vm1212 = vcmp.lt.s32.totalorder %v874, 0
    %vm1213 = vcmp.lt.s32.totalorder %v881, 0
    %vm1214 = vcmp.lt.s32.totalorder %v888, 0
    %vm1215 = vcmp.lt.s32.totalorder %v895, 0
    %vm1216 = vcmp.lt.s32.totalorder %v902, 0
    %vm1217 = vcmp.lt.s32.totalorder %v909, 0
    %vm1218 = vcmp.lt.s32.totalorder %v916, 0
    %vm1219 = vcmp.lt.s32.totalorder %v923, 0
    %vm1220 = vcmp.lt.s32.totalorder %v930, 0
    %vm1221 = vcmp.lt.s32.totalorder %v937, 0
    %vm1222 = vcmp.lt.s32.totalorder %v944, 0
    %vm1223 = vcmp.lt.s32.totalorder %v951, 0
    %vm1224 = vcmp.lt.s32.totalorder %v958, 0
    %vm1225 = vcmp.lt.s32.totalorder %v965, 0
    %vm1226 = vcmp.lt.s32.totalorder %v972, 0
    %vm1227 = vcmp.lt.s32.totalorder %v979, 0
    %vm1228 = vcmp.lt.s32.totalorder %v986, 0
    %vm1229 = vcmp.lt.s32.totalorder %v993, 0
    %vm1230 = vcmp.lt.s32.totalorder %v1000, 0
    %vm1231 = vcmp.lt.s32.totalorder %v1007, 0
    %vm1232 = vcmp.lt.s32.totalorder %v1014, 0
    %vm1233 = vcmp.lt.s32.totalorder %v1021, 0
    %vm1234 = vcmp.lt.s32.totalorder %v1028, 0
    %vm1235 = vcmp.lt.s32.totalorder %v1035, 0
    %vm1236 = vcmp.lt.s32.totalorder %v1042, 0
    %vm1237 = vcmp.lt.s32.totalorder %v1049, 0
    %vm1238 = vcmp.lt.s32.totalorder %v1056, 0
    %vm1239 = vcmp.lt.s32.totalorder %v1063, 0
    %vm1240 = vcmp.lt.s32.totalorder %v1070, 0
    %vm1241 = vcmp.lt.s32.totalorder %v1077, 0
    %vm1242 = vcmp.lt.s32.totalorder %v1084, 0
    %vm1243 = vcmp.lt.s32.totalorder %v1091, 0
    %vm1244 = vcmp.lt.s32.totalorder %v1098, 0
    %vm1245 = vcmp.lt.s32.totalorder %v1105, 0
    %vm1246 = vcmp.lt.s32.totalorder %v1112, 0
    %vm1247 = vcmp.lt.s32.totalorder %v1119, 0
    %vm1248 = vmand %vm1184, %vm1120
    %vm1249 = vmand %vm1185, %vm1121
    %vm1250 = vmand %vm1186, %vm1122
    %vm1251 = vmand %vm1187, %vm1123
    %vm1252 = vmand %vm1188, %vm1124
    %vm1253 = vmand %vm1189, %vm1125
    %vm1254 = vmand %vm1190, %vm1126
    %vm1255 = vmand %vm1191, %vm1127
    %vm1256 = vmand %vm1192, %vm1128
    %vm1257 = vmand %vm1193, %vm1129
    %vm1258 = vmand %vm1194, %vm1130
    %vm1259 = vmand %vm1195, %vm1131
    %vm1260 = vmand %vm1196, %vm1132
    %vm1261 = vmand %vm1197, %vm1133
    %vm1262 = vmand %vm1198, %vm1134
    %vm1263 = vmand %vm1199, %vm1135
    %vm1264 = vmand %vm1200, %vm1136
    %vm1265 = vmand %vm1201, %vm1137
    %vm1266 = vmand %vm1202, %vm1138
    %vm1267 = vmand %vm1203, %vm1139
    %vm1268 = vmand %vm1204, %vm1140
    %vm1269 = vmand %vm1205, %vm1141
    %vm1270 = vmand %vm1206, %vm1142
    %vm1271 = vmand %vm1207, %vm1143
    %vm1272 = vmand %vm1208, %vm1144
    %vm1273 = vmand %vm1209, %vm1145
    %vm1274 = vmand %vm1210, %vm1146
    %vm1275 = vmand %vm1211, %vm1147
    %vm1276 = vmand %vm1212, %vm1148
    %vm1277 = vmand %vm1213, %vm1149
    %vm1278 = vmand %vm1214, %vm1150
    %vm1279 = vmand %vm1215, %vm1151
    %vm1280 = vmand %vm1216, %vm1152
    %vm1281 = vmand %vm1217, %vm1153
    %vm1282 = vmand %vm1218, %vm1154
    %vm1283 = vmand %vm1219, %vm1155
    %vm1284 = vmand %vm1220, %vm1156
    %vm1285 = vmand %vm1221, %vm1157
    %vm1286 = vmand %vm1222, %vm1158
    %vm1287 = vmand %vm1223, %vm1159
    %vm1288 = vmand %vm1224, %vm1160
    %vm1289 = vmand %vm1225, %vm1161
    %vm1290 = vmand %vm1226, %vm1162
    %vm1291 = vmand %vm1227, %vm1163
    %vm1292 = vmand %vm1228, %vm1164
    %vm1293 = vmand %vm1229, %vm1165
    %vm1294 = vmand %vm1230, %vm1166
    %vm1295 = vmand %vm1231, %vm1167
    %vm1296 = vmand %vm1232, %vm1168
    %vm1297 = vmand %vm1233, %vm1169
    %vm1298 = vmand %vm1234, %vm1170
    %vm1299 = vmand %vm1235, %vm1171
    %vm1300 = vmand %vm1236, %vm1172
    %vm1301 = vmand %vm1237, %vm1173
    %vm1302 = vmand %vm1238, %vm1174
    %vm1303 = vmand %vm1239, %vm1175
    %vm1304 = vmand %vm1240, %vm1176
    %vm1305 = vmand %vm1241, %vm1177
    %vm1306 = vmand %vm1242, %vm1178
    %vm1307 = vmand %vm1243, %vm1179
    %vm1308 = vmand %vm1244, %vm1180
    %vm1309 = vmand %vm1245, %vm1181
    %vm1310 = vmand %vm1246, %vm1182
    %vm1311 = vmand %vm1247, %vm1183
    %v1312 = vadd.s32 %v678, 128
    %v1313 = vadd.s32 %v685, 128
    %v1314 = vadd.s32 %v692, 128
    %v1315 = vadd.s32 %v699, 128
    %v1316 = vadd.s32 %v706, 128
    %v1317 = vadd.s32 %v713, 128
    %v1318 = vadd.s32 %v720, 128
    %v1319 = vadd.s32 %v727, 128
    %v1320 = vadd.s32 %v734, 128
    %v1321 = vadd.s32 %v741, 128
    %v1322 = vadd.s32 %v748, 128
    %v1323 = vadd.s32 %v755, 128
    %v1324 = vadd.s32 %v762, 128
    %v1325 = vadd.s32 %v769, 128
    %v1326 = vadd.s32 %v776, 128
    %v1327 = vadd.s32 %v783, 128
    %v1328 = vadd.s32 %v790, 128
    %v1329 = vadd.s32 %v797, 128
    %v1330 = vadd.s32 %v804, 128
    %v1331 = vadd.s32 %v811, 128
    %v1332 = vadd.s32 %v818, 128
    %v1333 = vadd.s32 %v825, 128
    %v1334 = vadd.s32 %v832, 128
    %v1335 = vadd.s32 %v839, 128
    %v1336 = vadd.s32 %v846, 128
    %v1337 = vadd.s32 %v853, 128
    %v1338 = vadd.s32 %v860, 128
    %v1339 = vadd.s32 %v867, 128
    %v1340 = vadd.s32 %v874, 128
    %v1341 = vadd.s32 %v881, 128
    %v1342 = vadd.s32 %v888, 128
    %v1343 = vadd.s32 %v895, 128
    %v1344 = vadd.s32 %v902, 128
    %v1345 = vadd.s32 %v909, 128
    %v1346 = vadd.s32 %v916, 128
    %v1347 = vadd.s32 %v923, 128
    %v1348 = vadd.s32 %v930, 128
    %v1349 = vadd.s32 %v937, 128
    %v1350 = vadd.s32 %v944, 128
    %v1351 = vadd.s32 %v951, 128
    %v1352 = vadd.s32 %v958, 128
    %v1353 = vadd.s32 %v965, 128
    %v1354 = vadd.s32 %v972, 128
    %v1355 = vadd.s32 %v979, 128
    %v1356 = vadd.s32 %v986, 128
    %v1357 = vadd.s32 %v993, 128
    %v1358 = vadd.s32 %v1000, 128
    %v1359 = vadd.s32 %v1007, 128
    %v1360 = vadd.s32 %v1014, 128
    %v1361 = vadd.s32 %v1021, 128
    %v1362 = vadd.s32 %v1028, 128
    %v1363 = vadd.s32 %v1035, 128
    %v1364 = vadd.s32 %v1042, 128
    %v1365 = vadd.s32 %v1049, 128
    %v1366 = vadd.s32 %v1056, 128
    %v1367 = vadd.s32 %v1063, 128
    %v1368 = vadd.s32 %v1070, 128
    %v1369 = vadd.s32 %v1077, 128
    %v1370 = vadd.s32 %v1084, 128
    %v1371 = vadd.s32 %v1091, 128
    %v1372 = vadd.s32 %v1098, 128
    %v1373 = vadd.s32 %v1105, 128
    %v1374 = vadd.s32 %v1112, 128
    %v1375 = vadd.s32 %v1119, 128
    %v1376 = vsel %vm1248, %v1312, %v678
    %v1377 = vsel %vm1249, %v1313, %v685
    %v1378 = vsel %vm1250, %v1314, %v692
    %v1379 = vsel %vm1251, %v1315, %v699
    %v1380 = vsel %vm1252, %v1316, %v706
    %v1381 = vsel %vm1253, %v1317, %v713
    %v1382 = vsel %vm1254, %v1318, %v720
    %v1383 = vsel %vm1255, %v1319, %v727
    %v1384 = vsel %vm1256, %v1320, %v734
    %v1385 = vsel %vm1257, %v1321, %v741
    %v1386 = vsel %vm1258, %v1322, %v748
    %v1387 = vsel %vm1259, %v1323, %v755
    %v1388 = vsel %vm1260, %v1324, %v762
    %v1389 = vsel %vm1261, %v1325, %v769
    %v1390 = vsel %vm1262, %v1326, %v776
    %v1391 = vsel %vm1263, %v1327, %v783
    %v1392 = vsel %vm1264, %v1328, %v790
    %v1393 = vsel %vm1265, %v1329, %v797
    %v1394 = vsel %vm1266, %v1330, %v804
    %v1395 = vsel %vm1267, %v1331, %v811
    %v1396 = vsel %vm1268, %v1332, %v818
    %v1397 = vsel %vm1269, %v1333, %v825
    %v1398 = vsel %vm1270, %v1334, %v832
    %v1399 = vsel %vm1271, %v1335, %v839
    %v1400 = vsel %vm1272, %v1336, %v846
    %v1401 = vsel %vm1273, %v1337, %v853
    %v1402 = vsel %vm1274, %v1338, %v860
    %v1403 = vsel %vm1275, %v1339, %v867
    %v1404 = vsel %vm1276, %v1340, %v874
    %v1405 = vsel %vm1277, %v1341, %v881
    %v1406 = vsel %vm1278, %v1342, %v888
    %v1407 = vsel %vm1279, %v1343, %v895
    %v1408 = vsel %vm1280, %v1344, %v902
    %v1409 = vsel %vm1281, %v1345, %v909
    %v1410 = vsel %vm1282, %v1346, %v916
    %v1411 = vsel %vm1283, %v1347, %v923
    %v1412 = vsel %vm1284, %v1348, %v930
    %v1413 = vsel %vm1285, %v1349, %v937
    %v1414 = vsel %vm1286, %v1350, %v944
    %v1415 = vsel %vm1287, %v1351, %v951
    %v1416 = vsel %vm1288, %v1352, %v958
    %v1417 = vsel %vm1289, %v1353, %v965
    %v1418 = vsel %vm1290, %v1354, %v972
    %v1419 = vsel %vm1291, %v1355, %v979
    %v1420 = vsel %vm1292, %v1356, %v986
    %v1421 = vsel %vm1293, %v1357, %v993
    %v1422 = vsel %vm1294, %v1358, %v1000
    %v1423 = vsel %vm1295, %v1359, %v1007
    %v1424 = vsel %vm1296, %v1360, %v1014
    %v1425 = vsel %vm1297, %v1361, %v1021
    %v1426 = vsel %vm1298, %v1362, %v1028
    %v1427 = vsel %vm1299, %v1363, %v1035
    %v1428 = vsel %vm1300, %v1364, %v1042
    %v1429 = vsel %vm1301, %v1365, %v1049
    %v1430 = vsel %vm1302, %v1366, %v1056
    %v1431 = vsel %vm1303, %v1367, %v1063
    %v1432 = vsel %vm1304, %v1368, %v1070
    %v1433 = vsel %vm1305, %v1369, %v1077
    %v1434 = vsel %vm1306, %v1370, %v1084
    %v1435 = vsel %vm1307, %v1371, %v1091
    %v1436 = vsel %vm1308, %v1372, %v1098
    %v1437 = vsel %vm1309, %v1373, %v1105
    %v1438 = vsel %vm1310, %v1374, %v1112
    %v1439 = vsel %vm1311, %v1375, %v1119
    %vm1440 = vcmp.eq.s32.totalorder %v1376, 0
    %vm1441 = vcmp.eq.s32.totalorder %v1377, 0
    %vm1442 = vcmp.eq.s32.totalorder %v1378, 0
    %vm1443 = vcmp.eq.s32.totalorder %v1379, 0
    %vm1444 = vcmp.eq.s32.totalorder %v1380, 0
    %vm1445 = vcmp.eq.s32.totalorder %v1381, 0
    %vm1446 = vcmp.eq.s32.totalorder %v1382, 0
    %vm1447 = vcmp.eq.s32.totalorder %v1383, 0
    %vm1448 = vcmp.eq.s32.totalorder %v1384, 0
    %vm1449 = vcmp.eq.s32.totalorder %v1385, 0
    %vm1450 = vcmp.eq.s32.totalorder %v1386, 0
    %vm1451 = vcmp.eq.s32.totalorder %v1387, 0
    %vm1452 = vcmp.eq.s32.totalorder %v1388, 0
    %vm1453 = vcmp.eq.s32.totalorder %v1389, 0
    %vm1454 = vcmp.eq.s32.totalorder %v1390, 0
    %vm1455 = vcmp.eq.s32.totalorder %v1391, 0
    %vm1456 = vcmp.eq.s32.totalorder %v1392, 0
    %vm1457 = vcmp.eq.s32.totalorder %v1393, 0
    %vm1458 = vcmp.eq.s32.totalorder %v1394, 0
    %vm1459 = vcmp.eq.s32.totalorder %v1395, 0
    %vm1460 = vcmp.eq.s32.totalorder %v1396, 0
    %vm1461 = vcmp.eq.s32.totalorder %v1397, 0
    %vm1462 = vcmp.eq.s32.totalorder %v1398, 0
    %vm1463 = vcmp.eq.s32.totalorder %v1399, 0
    %vm1464 = vcmp.eq.s32.totalorder %v1400, 0
    %vm1465 = vcmp.eq.s32.totalorder %v1401, 0
    %vm1466 = vcmp.eq.s32.totalorder %v1402, 0
    %vm1467 = vcmp.eq.s32.totalorder %v1403, 0
    %vm1468 = vcmp.eq.s32.totalorder %v1404, 0
    %vm1469 = vcmp.eq.s32.totalorder %v1405, 0
    %vm1470 = vcmp.eq.s32.totalorder %v1406, 0
    %vm1471 = vcmp.eq.s32.totalorder %v1407, 0
    %vm1472 = vcmp.eq.s32.totalorder %v1408, 0
    %vm1473 = vcmp.eq.s32.totalorder %v1409, 0
    %vm1474 = vcmp.eq.s32.totalorder %v1410, 0
    %vm1475 = vcmp.eq.s32.totalorder %v1411, 0
    %vm1476 = vcmp.eq.s32.totalorder %v1412, 0
    %vm1477 = vcmp.eq.s32.totalorder %v1413, 0
    %vm1478 = vcmp.eq.s32.totalorder %v1414, 0
    %vm1479 = vcmp.eq.s32.totalorder %v1415, 0
    %vm1480 = vcmp.eq.s32.totalorder %v1416, 0
    %vm1481 = vcmp.eq.s32.totalorder %v1417, 0
    %vm1482 = vcmp.eq.s32.totalorder %v1418, 0
    %vm1483 = vcmp.eq.s32.totalorder %v1419, 0
    %vm1484 = vcmp.eq.s32.totalorder %v1420, 0
    %vm1485 = vcmp.eq.s32.totalorder %v1421, 0
    %vm1486 = vcmp.eq.s32.totalorder %v1422, 0
    %vm1487 = vcmp.eq.s32.totalorder %v1423, 0
    %vm1488 = vcmp.eq.s32.totalorder %v1424, 0
    %vm1489 = vcmp.eq.s32.totalorder %v1425, 0
    %vm1490 = vcmp.eq.s32.totalorder %v1426, 0
    %vm1491 = vcmp.eq.s32.totalorder %v1427, 0
    %vm1492 = vcmp.eq.s32.totalorder %v1428, 0
    %vm1493 = vcmp.eq.s32.totalorder %v1429, 0
    %vm1494 = vcmp.eq.s32.totalorder %v1430, 0
    %vm1495 = vcmp.eq.s32.totalorder %v1431, 0
    %vm1496 = vcmp.eq.s32.totalorder %v1432, 0
    %vm1497 = vcmp.eq.s32.totalorder %v1433, 0
    %vm1498 = vcmp.eq.s32.totalorder %v1434, 0
    %vm1499 = vcmp.eq.s32.totalorder %v1435, 0
    %vm1500 = vcmp.eq.s32.totalorder %v1436, 0
    %vm1501 = vcmp.eq.s32.totalorder %v1437, 0
    %vm1502 = vcmp.eq.s32.totalorder %v1438, 0
    %vm1503 = vcmp.eq.s32.totalorder %v1439, 0
    %vm1504 = vcmp.eq.s32.totalorder %v1376, 127
    %vm1505 = vcmp.eq.s32.totalorder %v1377, 127
    %vm1506 = vcmp.eq.s32.totalorder %v1378, 127
    %vm1507 = vcmp.eq.s32.totalorder %v1379, 127
    %vm1508 = vcmp.eq.s32.totalorder %v1380, 127
    %vm1509 = vcmp.eq.s32.totalorder %v1381, 127
    %vm1510 = vcmp.eq.s32.totalorder %v1382, 127
    %vm1511 = vcmp.eq.s32.totalorder %v1383, 127
    %vm1512 = vcmp.eq.s32.totalorder %v1384, 127
    %vm1513 = vcmp.eq.s32.totalorder %v1385, 127
    %vm1514 = vcmp.eq.s32.totalorder %v1386, 127
    %vm1515 = vcmp.eq.s32.totalorder %v1387, 127
    %vm1516 = vcmp.eq.s32.totalorder %v1388, 127
    %vm1517 = vcmp.eq.s32.totalorder %v1389, 127
    %vm1518 = vcmp.eq.s32.totalorder %v1390, 127
    %vm1519 = vcmp.eq.s32.totalorder %v1391, 127
    %vm1520 = vcmp.eq.s32.totalorder %v1392, 127
    %vm1521 = vcmp.eq.s32.totalorder %v1393, 127
    %vm1522 = vcmp.eq.s32.totalorder %v1394, 127
    %vm1523 = vcmp.eq.s32.totalorder %v1395, 127
    %vm1524 = vcmp.eq.s32.totalorder %v1396, 127
    %vm1525 = vcmp.eq.s32.totalorder %v1397, 127
    %vm1526 = vcmp.eq.s32.totalorder %v1398, 127
    %vm1527 = vcmp.eq.s32.totalorder %v1399, 127
    %vm1528 = vcmp.eq.s32.totalorder %v1400, 127
    %vm1529 = vcmp.eq.s32.totalorder %v1401, 127
    %vm1530 = vcmp.eq.s32.totalorder %v1402, 127
    %vm1531 = vcmp.eq.s32.totalorder %v1403, 127
    %vm1532 = vcmp.eq.s32.totalorder %v1404, 127
    %vm1533 = vcmp.eq.s32.totalorder %v1405, 127
    %vm1534 = vcmp.eq.s32.totalorder %v1406, 127
    %vm1535 = vcmp.eq.s32.totalorder %v1407, 127
    %vm1536 = vcmp.eq.s32.totalorder %v1408, 127
    %vm1537 = vcmp.eq.s32.totalorder %v1409, 127
    %vm1538 = vcmp.eq.s32.totalorder %v1410, 127
    %vm1539 = vcmp.eq.s32.totalorder %v1411, 127
    %vm1540 = vcmp.eq.s32.totalorder %v1412, 127
    %vm1541 = vcmp.eq.s32.totalorder %v1413, 127
    %vm1542 = vcmp.eq.s32.totalorder %v1414, 127
    %vm1543 = vcmp.eq.s32.totalorder %v1415, 127
    %vm1544 = vcmp.eq.s32.totalorder %v1416, 127
    %vm1545 = vcmp.eq.s32.totalorder %v1417, 127
    %vm1546 = vcmp.eq.s32.totalorder %v1418, 127
    %vm1547 = vcmp.eq.s32.totalorder %v1419, 127
    %vm1548 = vcmp.eq.s32.totalorder %v1420, 127
    %vm1549 = vcmp.eq.s32.totalorder %v1421, 127
    %vm1550 = vcmp.eq.s32.totalorder %v1422, 127
    %vm1551 = vcmp.eq.s32.totalorder %v1423, 127
    %vm1552 = vcmp.eq.s32.totalorder %v1424, 127
    %vm1553 = vcmp.eq.s32.totalorder %v1425, 127
    %vm1554 = vcmp.eq.s32.totalorder %v1426, 127
    %vm1555 = vcmp.eq.s32.totalorder %v1427, 127
    %vm1556 = vcmp.eq.s32.totalorder %v1428, 127
    %vm1557 = vcmp.eq.s32.totalorder %v1429, 127
    %vm1558 = vcmp.eq.s32.totalorder %v1430, 127
    %vm1559 = vcmp.eq.s32.totalorder %v1431, 127
    %vm1560 = vcmp.eq.s32.totalorder %v1432, 127
    %vm1561 = vcmp.eq.s32.totalorder %v1433, 127
    %vm1562 = vcmp.eq.s32.totalorder %v1434, 127
    %vm1563 = vcmp.eq.s32.totalorder %v1435, 127
    %vm1564 = vcmp.eq.s32.totalorder %v1436, 127
    %vm1565 = vcmp.eq.s32.totalorder %v1437, 127
    %vm1566 = vcmp.eq.s32.totalorder %v1438, 127
    %vm1567 = vcmp.eq.s32.totalorder %v1439, 127
    %v1568 = vpack.c.bf16 %v544, %v543
    %v1569 = vpack.c.bf16 %v546, %v545
    %v1570 = vpack.c.bf16 %v548, %v547
    %v1571 = vpack.c.bf16 %v550, %v549
    %v1572 = vpack.c.bf16 %v552, %v551
    %v1573 = vpack.c.bf16 %v554, %v553
    %v1574 = vpack.c.bf16 %v556, %v555
    %v1575 = vpack.c.bf16 %v558, %v557
    %v1576 = vpack.c.bf16 %v560, %v559
    %v1577 = vpack.c.bf16 %v562, %v561
    %v1578 = vpack.c.bf16 %v564, %v563
    %v1579 = vpack.c.bf16 %v566, %v565
    %v1580 = vpack.c.bf16 %v568, %v567
    %v1581 = vpack.c.bf16 %v570, %v569
    %v1582 = vpack.c.bf16 %v572, %v571
    %v1583 = vpack.c.bf16 %v574, %v573
    %v1584 = vpack.c.bf16 %v576, %v575
    %v1585 = vpack.c.bf16 %v578, %v577
    %v1586 = vpack.c.bf16 %v580, %v579
    %v1587 = vpack.c.bf16 %v582, %v581
    %v1588 = vpack.c.bf16 %v584, %v583
    %v1589 = vpack.c.bf16 %v586, %v585
    %v1590 = vpack.c.bf16 %v588, %v587
    %v1591 = vpack.c.bf16 %v590, %v589
    %v1592 = vpack.c.bf16 %v592, %v591
    %v1593 = vpack.c.bf16 %v594, %v593
    %v1594 = vpack.c.bf16 %v596, %v595
    %v1595 = vpack.c.bf16 %v598, %v597
    %v1596 = vpack.c.bf16 %v600, %v599
    %v1597 = vpack.c.bf16 %v602, %v601
    %v1598 = vpack.c.bf16 %v604, %v603
    %v1599 = vpack.c.bf16 %v606, %v605
    %v1600 = vrot.slane %v543, 7
    %v1601 = vrot.slane %v544, 7
    %v1602 = vrot.slane %v545, 7
    %v1603 = vrot.slane %v546, 7
    %v1604 = vrot.slane %v547, 7
    %v1605 = vrot.slane %v548, 7
    %v1606 = vrot.slane %v549, 7
    %v1607 = vrot.slane %v550, 7
    %v1608 = vrot.slane %v551, 7
    %v1609 = vrot.slane %v552, 7
    %v1610 = vrot.slane %v553, 7
    %v1611 = vrot.slane %v554, 7
    %v1612 = vrot.slane %v555, 7
    %v1613 = vrot.slane %v556, 7
    %v1614 = vrot.slane %v557, 7
    %v1615 = vrot.slane %v558, 7
    %v1616 = vrot.slane %v559, 7
    %v1617 = vrot.slane %v560, 7
    %v1618 = vrot.slane %v561, 7
    %v1619 = vrot.slane %v562, 7
    %v1620 = vrot.slane %v563, 7
    %v1621 = vrot.slane %v564, 7
    %v1622 = vrot.slane %v565, 7
    %v1623 = vrot.slane %v566, 7
    %v1624 = vrot.slane %v567, 7
    %v1625 = vrot.slane %v568, 7
    %v1626 = vrot.slane %v569, 7
    %v1627 = vrot.slane %v570, 7
    %v1628 = vrot.slane %v571, 7
    %v1629 = vrot.slane %v572, 7
    %v1630 = vrot.slane %v573, 7
    %v1631 = vrot.slane %v574, 7
    %v1632 = vrot.slane %v575, 7
    %v1633 = vrot.slane %v576, 7
    %v1634 = vrot.slane %v577, 7
    %v1635 = vrot.slane %v578, 7
    %v1636 = vrot.slane %v579, 7
    %v1637 = vrot.slane %v580, 7
    %v1638 = vrot.slane %v581, 7
    %v1639 = vrot.slane %v582, 7
    %v1640 = vrot.slane %v583, 7
    %v1641 = vrot.slane %v584, 7
    %v1642 = vrot.slane %v585, 7
    %v1643 = vrot.slane %v586, 7
    %v1644 = vrot.slane %v587, 7
    %v1645 = vrot.slane %v588, 7
    %v1646 = vrot.slane %v589, 7
    %v1647 = vrot.slane %v590, 7
    %v1648 = vrot.slane %v591, 7
    %v1649 = vrot.slane %v592, 7
    %v1650 = vrot.slane %v593, 7
    %v1651 = vrot.slane %v594, 7
    %v1652 = vrot.slane %v595, 7
    %v1653 = vrot.slane %v596, 7
    %v1654 = vrot.slane %v597, 7
    %v1655 = vrot.slane %v598, 7
    %v1656 = vrot.slane %v599, 7
    %v1657 = vrot.slane %v600, 7
    %v1658 = vrot.slane %v601, 7
    %v1659 = vrot.slane %v602, 7
    %v1660 = vrot.slane %v603, 7
    %v1661 = vrot.slane %v604, 7
    %v1662 = vrot.slane %v605, 7
    %v1663 = vrot.slane %v606, 7
    %vm1664 = vcmp.lt.s32.totalorder %v608, 1
    %v1665 = vsel %vm1664, %v1662, %v1663
    %v1666 = vsel %vm1664, %v1661, %v1662
    %v1667 = vsel %vm1664, %v1660, %v1661
    %v1668 = vsel %vm1664, %v1659, %v1660
    %v1669 = vsel %vm1664, %v1658, %v1659
    %v1670 = vsel %vm1664, %v1657, %v1658
    %v1671 = vsel %vm1664, %v1656, %v1657
    %v1672 = vsel %vm1664, %v1655, %v1656
    %v1673 = vsel %vm1664, %v1654, %v1655
    %v1674 = vsel %vm1664, %v1653, %v1654
    %v1675 = vsel %vm1664, %v1652, %v1653
    %v1676 = vsel %vm1664, %v1651, %v1652
    %v1677 = vsel %vm1664, %v1650, %v1651
    %v1678 = vsel %vm1664, %v1649, %v1650
    %v1679 = vsel %vm1664, %v1648, %v1649
    %v1680 = vsel %vm1664, %v1647, %v1648
    %v1681 = vsel %vm1664, %v1646, %v1647
    %v1682 = vsel %vm1664, %v1645, %v1646
    %v1683 = vsel %vm1664, %v1644, %v1645
    %v1684 = vsel %vm1664, %v1643, %v1644
    %v1685 = vsel %vm1664, %v1642, %v1643
    %v1686 = vsel %vm1664, %v1641, %v1642
    %v1687 = vsel %vm1664, %v1640, %v1641
    %v1688 = vsel %vm1664, %v1639, %v1640
    %v1689 = vsel %vm1664, %v1638, %v1639
    %v1690 = vsel %vm1664, %v1637, %v1638
    %v1691 = vsel %vm1664, %v1636, %v1637
    %v1692 = vsel %vm1664, %v1635, %v1636
    %v1693 = vsel %vm1664, %v1634, %v1635
    %v1694 = vsel %vm1664, %v1633, %v1634
    %v1695 = vsel %vm1664, %v1632, %v1633
    %v1696 = vsel %vm1664, %v1631, %v1632
    %v1697 = vsel %vm1664, %v1630, %v1631
    %v1698 = vsel %vm1664, %v1629, %v1630
    %v1699 = vsel %vm1664, %v1628, %v1629
    %v1700 = vsel %vm1664, %v1627, %v1628
    %v1701 = vsel %vm1664, %v1626, %v1627
    %v1702 = vsel %vm1664, %v1625, %v1626
    %v1703 = vsel %vm1664, %v1624, %v1625
    %v1704 = vsel %vm1664, %v1623, %v1624
    %v1705 = vsel %vm1664, %v1622, %v1623
    %v1706 = vsel %vm1664, %v1621, %v1622
    %v1707 = vsel %vm1664, %v1620, %v1621
    %v1708 = vsel %vm1664, %v1619, %v1620
    %v1709 = vsel %vm1664, %v1618, %v1619
    %v1710 = vsel %vm1664, %v1617, %v1618
    %v1711 = vsel %vm1664, %v1616, %v1617
    %v1712 = vsel %vm1664, %v1615, %v1616
    %v1713 = vsel %vm1664, %v1614, %v1615
    %v1714 = vsel %vm1664, %v1613, %v1614
    %v1715 = vsel %vm1664, %v1612, %v1613
    %v1716 = vsel %vm1664, %v1611, %v1612
    %v1717 = vsel %vm1664, %v1610, %v1611
    %v1718 = vsel %vm1664, %v1609, %v1610
    %v1719 = vsel %vm1664, %v1608, %v1609
    %v1720 = vsel %vm1664, %v1607, %v1608
    %v1721 = vsel %vm1664, %v1606, %v1607
    %v1722 = vsel %vm1664, %v1605, %v1606
    %v1723 = vsel %vm1664, %v1604, %v1605
    %v1724 = vsel %vm1664, %v1603, %v1604
    %v1725 = vsel %vm1664, %v1602, %v1603
    %v1726 = vsel %vm1664, %v1601, %v1602
    %v1727 = vsel %vm1664, %v1600, %v1601
    %v1728 = vsel %vm1664, %v1663, %v1600
    %v1729 = vsel %vm1440, 1, 0
    %v1730 = vsel %vm1441, 1, 0
    %v1731 = vsel %vm1442, 1, 0
    %v1732 = vsel %vm1443, 1, 0
    %v1733 = vsel %vm1444, 1, 0
    %v1734 = vsel %vm1445, 1, 0
    %v1735 = vsel %vm1446, 1, 0
    %v1736 = vsel %vm1447, 1, 0
    %v1737 = vsel %vm1448, 1, 0
    %v1738 = vsel %vm1449, 1, 0
    %v1739 = vsel %vm1450, 1, 0
    %v1740 = vsel %vm1451, 1, 0
    %v1741 = vsel %vm1452, 1, 0
    %v1742 = vsel %vm1453, 1, 0
    %v1743 = vsel %vm1454, 1, 0
    %v1744 = vsel %vm1455, 1, 0
    %v1745 = vsel %vm1456, 1, 0
    %v1746 = vsel %vm1457, 1, 0
    %v1747 = vsel %vm1458, 1, 0
    %v1748 = vsel %vm1459, 1, 0
    %v1749 = vsel %vm1460, 1, 0
    %v1750 = vsel %vm1461, 1, 0
    %v1751 = vsel %vm1462, 1, 0
    %v1752 = vsel %vm1463, 1, 0
    %v1753 = vsel %vm1464, 1, 0
    %v1754 = vsel %vm1465, 1, 0
    %v1755 = vsel %vm1466, 1, 0
    %v1756 = vsel %vm1467, 1, 0
    %v1757 = vsel %vm1468, 1, 0
    %v1758 = vsel %vm1469, 1, 0
    %v1759 = vsel %vm1470, 1, 0
    %v1760 = vsel %vm1471, 1, 0
    %v1761 = vsel %vm1472, 1, 0
    %v1762 = vsel %vm1473, 1, 0
    %v1763 = vsel %vm1474, 1, 0
    %v1764 = vsel %vm1475, 1, 0
    %v1765 = vsel %vm1476, 1, 0
    %v1766 = vsel %vm1477, 1, 0
    %v1767 = vsel %vm1478, 1, 0
    %v1768 = vsel %vm1479, 1, 0
    %v1769 = vsel %vm1480, 1, 0
    %v1770 = vsel %vm1481, 1, 0
    %v1771 = vsel %vm1482, 1, 0
    %v1772 = vsel %vm1483, 1, 0
    %v1773 = vsel %vm1484, 1, 0
    %v1774 = vsel %vm1485, 1, 0
    %v1775 = vsel %vm1486, 1, 0
    %v1776 = vsel %vm1487, 1, 0
    %v1777 = vsel %vm1488, 1, 0
    %v1778 = vsel %vm1489, 1, 0
    %v1779 = vsel %vm1490, 1, 0
    %v1780 = vsel %vm1491, 1, 0
    %v1781 = vsel %vm1492, 1, 0
    %v1782 = vsel %vm1493, 1, 0
    %v1783 = vsel %vm1494, 1, 0
    %v1784 = vsel %vm1495, 1, 0
    %v1785 = vsel %vm1496, 1, 0
    %v1786 = vsel %vm1497, 1, 0
    %v1787 = vsel %vm1498, 1, 0
    %v1788 = vsel %vm1499, 1, 0
    %v1789 = vsel %vm1500, 1, 0
    %v1790 = vsel %vm1501, 1, 0
    %v1791 = vsel %vm1502, 1, 0
    %v1792 = vsel %vm1503, 1, 0
    %vm1793 = vcmp.eq.s32.totalorder %v1729, 1
    %vm1794 = vcmp.eq.s32.totalorder %v1730, 1
    %vm1795 = vcmp.eq.s32.totalorder %v1731, 1
    %vm1796 = vcmp.eq.s32.totalorder %v1732, 1
    %vm1797 = vcmp.eq.s32.totalorder %v1733, 1
    %vm1798 = vcmp.eq.s32.totalorder %v1734, 1
    %vm1799 = vcmp.eq.s32.totalorder %v1735, 1
    %vm1800 = vcmp.eq.s32.totalorder %v1736, 1
    %vm1801 = vcmp.eq.s32.totalorder %v1737, 1
    %vm1802 = vcmp.eq.s32.totalorder %v1738, 1
    %vm1803 = vcmp.eq.s32.totalorder %v1739, 1
    %vm1804 = vcmp.eq.s32.totalorder %v1740, 1
    %vm1805 = vcmp.eq.s32.totalorder %v1741, 1
    %vm1806 = vcmp.eq.s32.totalorder %v1742, 1
    %vm1807 = vcmp.eq.s32.totalorder %v1743, 1
    %vm1808 = vcmp.eq.s32.totalorder %v1744, 1
    %vm1809 = vcmp.eq.s32.totalorder %v1745, 1
    %vm1810 = vcmp.eq.s32.totalorder %v1746, 1
    %vm1811 = vcmp.eq.s32.totalorder %v1747, 1
    %vm1812 = vcmp.eq.s32.totalorder %v1748, 1
    %vm1813 = vcmp.eq.s32.totalorder %v1749, 1
    %vm1814 = vcmp.eq.s32.totalorder %v1750, 1
    %vm1815 = vcmp.eq.s32.totalorder %v1751, 1
    %vm1816 = vcmp.eq.s32.totalorder %v1752, 1
    %vm1817 = vcmp.eq.s32.totalorder %v1753, 1
    %vm1818 = vcmp.eq.s32.totalorder %v1754, 1
    %vm1819 = vcmp.eq.s32.totalorder %v1755, 1
    %vm1820 = vcmp.eq.s32.totalorder %v1756, 1
    %vm1821 = vcmp.eq.s32.totalorder %v1757, 1
    %vm1822 = vcmp.eq.s32.totalorder %v1758, 1
    %vm1823 = vcmp.eq.s32.totalorder %v1759, 1
    %vm1824 = vcmp.eq.s32.totalorder %v1760, 1
    %vm1825 = vcmp.eq.s32.totalorder %v1761, 1
    %vm1826 = vcmp.eq.s32.totalorder %v1762, 1
    %vm1827 = vcmp.eq.s32.totalorder %v1763, 1
    %vm1828 = vcmp.eq.s32.totalorder %v1764, 1
    %vm1829 = vcmp.eq.s32.totalorder %v1765, 1
    %vm1830 = vcmp.eq.s32.totalorder %v1766, 1
    %vm1831 = vcmp.eq.s32.totalorder %v1767, 1
    %vm1832 = vcmp.eq.s32.totalorder %v1768, 1
    %vm1833 = vcmp.eq.s32.totalorder %v1769, 1
    %vm1834 = vcmp.eq.s32.totalorder %v1770, 1
    %vm1835 = vcmp.eq.s32.totalorder %v1771, 1
    %vm1836 = vcmp.eq.s32.totalorder %v1772, 1
    %vm1837 = vcmp.eq.s32.totalorder %v1773, 1
    %vm1838 = vcmp.eq.s32.totalorder %v1774, 1
    %vm1839 = vcmp.eq.s32.totalorder %v1775, 1
    %vm1840 = vcmp.eq.s32.totalorder %v1776, 1
    %vm1841 = vcmp.eq.s32.totalorder %v1777, 1
    %vm1842 = vcmp.eq.s32.totalorder %v1778, 1
    %vm1843 = vcmp.eq.s32.totalorder %v1779, 1
    %vm1844 = vcmp.eq.s32.totalorder %v1780, 1
    %vm1845 = vcmp.eq.s32.totalorder %v1781, 1
    %vm1846 = vcmp.eq.s32.totalorder %v1782, 1
    %vm1847 = vcmp.eq.s32.totalorder %v1783, 1
    %vm1848 = vcmp.eq.s32.totalorder %v1784, 1
    %vm1849 = vcmp.eq.s32.totalorder %v1785, 1
    %vm1850 = vcmp.eq.s32.totalorder %v1786, 1
    %vm1851 = vcmp.eq.s32.totalorder %v1787, 1
    %vm1852 = vcmp.eq.s32.totalorder %v1788, 1
    %vm1853 = vcmp.eq.s32.totalorder %v1789, 1
    %vm1854 = vcmp.eq.s32.totalorder %v1790, 1
    %vm1855 = vcmp.eq.s32.totalorder %v1791, 1
    %vm1856 = vcmp.eq.s32.totalorder %v1792, 1
    %v1857 = vsel %vm1793, 0.0, %v1728
    %v1858 = vsel %vm1794, 0.0, %v1727
    %v1859 = vsel %vm1795, 0.0, %v1726
    %v1860 = vsel %vm1796, 0.0, %v1725
    %v1861 = vsel %vm1797, 0.0, %v1724
    %v1862 = vsel %vm1798, 0.0, %v1723
    %v1863 = vsel %vm1799, 0.0, %v1722
    %v1864 = vsel %vm1800, 0.0, %v1721
    %v1865 = vsel %vm1801, 0.0, %v1720
    %v1866 = vsel %vm1802, 0.0, %v1719
    %v1867 = vsel %vm1803, 0.0, %v1718
    %v1868 = vsel %vm1804, 0.0, %v1717
    %v1869 = vsel %vm1805, 0.0, %v1716
    %v1870 = vsel %vm1806, 0.0, %v1715
    %v1871 = vsel %vm1807, 0.0, %v1714
    %v1872 = vsel %vm1808, 0.0, %v1713
    %v1873 = vsel %vm1809, 0.0, %v1712
    %v1874 = vsel %vm1810, 0.0, %v1711
    %v1875 = vsel %vm1811, 0.0, %v1710
    %v1876 = vsel %vm1812, 0.0, %v1709
    %v1877 = vsel %vm1813, 0.0, %v1708
    %v1878 = vsel %vm1814, 0.0, %v1707
    %v1879 = vsel %vm1815, 0.0, %v1706
    %v1880 = vsel %vm1816, 0.0, %v1705
    %v1881 = vsel %vm1817, 0.0, %v1704
    %v1882 = vsel %vm1818, 0.0, %v1703
    %v1883 = vsel %vm1819, 0.0, %v1702
    %v1884 = vsel %vm1820, 0.0, %v1701
    %v1885 = vsel %vm1821, 0.0, %v1700
    %v1886 = vsel %vm1822, 0.0, %v1699
    %v1887 = vsel %vm1823, 0.0, %v1698
    %v1888 = vsel %vm1824, 0.0, %v1697
    %v1889 = vsel %vm1825, 0.0, %v1696
    %v1890 = vsel %vm1826, 0.0, %v1695
    %v1891 = vsel %vm1827, 0.0, %v1694
    %v1892 = vsel %vm1828, 0.0, %v1693
    %v1893 = vsel %vm1829, 0.0, %v1692
    %v1894 = vsel %vm1830, 0.0, %v1691
    %v1895 = vsel %vm1831, 0.0, %v1690
    %v1896 = vsel %vm1832, 0.0, %v1689
    %v1897 = vsel %vm1833, 0.0, %v1688
    %v1898 = vsel %vm1834, 0.0, %v1687
    %v1899 = vsel %vm1835, 0.0, %v1686
    %v1900 = vsel %vm1836, 0.0, %v1685
    %v1901 = vsel %vm1837, 0.0, %v1684
    %v1902 = vsel %vm1838, 0.0, %v1683
    %v1903 = vsel %vm1839, 0.0, %v1682
    %v1904 = vsel %vm1840, 0.0, %v1681
    %v1905 = vsel %vm1841, 0.0, %v1680
    %v1906 = vsel %vm1842, 0.0, %v1679
    %v1907 = vsel %vm1843, 0.0, %v1678
    %v1908 = vsel %vm1844, 0.0, %v1677
    %v1909 = vsel %vm1845, 0.0, %v1676
    %v1910 = vsel %vm1846, 0.0, %v1675
    %v1911 = vsel %vm1847, 0.0, %v1674
    %v1912 = vsel %vm1848, 0.0, %v1673
    %v1913 = vsel %vm1849, 0.0, %v1672
    %v1914 = vsel %vm1850, 0.0, %v1671
    %v1915 = vsel %vm1851, 0.0, %v1670
    %v1916 = vsel %vm1852, 0.0, %v1669
    %v1917 = vsel %vm1853, 0.0, %v1668
    %v1918 = vsel %vm1854, 0.0, %v1667
    %v1919 = vsel %vm1855, 0.0, %v1666
    %v1920 = vsel %vm1856, 0.0, %v1665
    %v1921 = vpack.c.bf16 %v1858, %v1857
    %v1922 = vpack.c.bf16 %v1860, %v1859
    %v1923 = vpack.c.bf16 %v1862, %v1861
    %v1924 = vpack.c.bf16 %v1864, %v1863
    %v1925 = vpack.c.bf16 %v1866, %v1865
    %v1926 = vpack.c.bf16 %v1868, %v1867
    %v1927 = vpack.c.bf16 %v1870, %v1869
    %v1928 = vpack.c.bf16 %v1872, %v1871
    %v1929 = vpack.c.bf16 %v1874, %v1873
    %v1930 = vpack.c.bf16 %v1876, %v1875
    %v1931 = vpack.c.bf16 %v1878, %v1877
    %v1932 = vpack.c.bf16 %v1880, %v1879
    %v1933 = vpack.c.bf16 %v1882, %v1881
    %v1934 = vpack.c.bf16 %v1884, %v1883
    %v1935 = vpack.c.bf16 %v1886, %v1885
    %v1936 = vpack.c.bf16 %v1888, %v1887
    %v1937 = vpack.c.bf16 %v1890, %v1889
    %v1938 = vpack.c.bf16 %v1892, %v1891
    %v1939 = vpack.c.bf16 %v1894, %v1893
    %v1940 = vpack.c.bf16 %v1896, %v1895
    %v1941 = vpack.c.bf16 %v1898, %v1897
    %v1942 = vpack.c.bf16 %v1900, %v1899
    %v1943 = vpack.c.bf16 %v1902, %v1901
    %v1944 = vpack.c.bf16 %v1904, %v1903
    %v1945 = vpack.c.bf16 %v1906, %v1905
    %v1946 = vpack.c.bf16 %v1908, %v1907
    %v1947 = vpack.c.bf16 %v1910, %v1909
    %v1948 = vpack.c.bf16 %v1912, %v1911
    %v1949 = vpack.c.bf16 %v1914, %v1913
    %v1950 = vpack.c.bf16 %v1916, %v1915
    %v1951 = vpack.c.bf16 %v1918, %v1917
    %v1952 = vpack.c.bf16 %v1920, %v1919
    %v1953 = vrot.slane %v543, 1
    %v1954 = vrot.slane %v544, 1
    %v1955 = vrot.slane %v545, 1
    %v1956 = vrot.slane %v546, 1
    %v1957 = vrot.slane %v547, 1
    %v1958 = vrot.slane %v548, 1
    %v1959 = vrot.slane %v549, 1
    %v1960 = vrot.slane %v550, 1
    %v1961 = vrot.slane %v551, 1
    %v1962 = vrot.slane %v552, 1
    %v1963 = vrot.slane %v553, 1
    %v1964 = vrot.slane %v554, 1
    %v1965 = vrot.slane %v555, 1
    %v1966 = vrot.slane %v556, 1
    %v1967 = vrot.slane %v557, 1
    %v1968 = vrot.slane %v558, 1
    %v1969 = vrot.slane %v559, 1
    %v1970 = vrot.slane %v560, 1
    %v1971 = vrot.slane %v561, 1
    %v1972 = vrot.slane %v562, 1
    %v1973 = vrot.slane %v563, 1
    %v1974 = vrot.slane %v564, 1
    %v1975 = vrot.slane %v565, 1
    %v1976 = vrot.slane %v566, 1
    %v1977 = vrot.slane %v567, 1
    %v1978 = vrot.slane %v568, 1
    %v1979 = vrot.slane %v569, 1
    %v1980 = vrot.slane %v570, 1
    %v1981 = vrot.slane %v571, 1
    %v1982 = vrot.slane %v572, 1
    %v1983 = vrot.slane %v573, 1
    %v1984 = vrot.slane %v574, 1
    %v1985 = vrot.slane %v575, 1
    %v1986 = vrot.slane %v576, 1
    %v1987 = vrot.slane %v577, 1
    %v1988 = vrot.slane %v578, 1
    %v1989 = vrot.slane %v579, 1
    %v1990 = vrot.slane %v580, 1
    %v1991 = vrot.slane %v581, 1
    %v1992 = vrot.slane %v582, 1
    %v1993 = vrot.slane %v583, 1
    %v1994 = vrot.slane %v584, 1
    %v1995 = vrot.slane %v585, 1
    %v1996 = vrot.slane %v586, 1
    %v1997 = vrot.slane %v587, 1
    %v1998 = vrot.slane %v588, 1
    %v1999 = vrot.slane %v589, 1
    %v2000 = vrot.slane %v590, 1
    %v2001 = vrot.slane %v591, 1
    %v2002 = vrot.slane %v592, 1
    %v2003 = vrot.slane %v593, 1
    %v2004 = vrot.slane %v594, 1
    %v2005 = vrot.slane %v595, 1
    %v2006 = vrot.slane %v596, 1
    %v2007 = vrot.slane %v597, 1
    %v2008 = vrot.slane %v598, 1
    %v2009 = vrot.slane %v599, 1
    %v2010 = vrot.slane %v600, 1
    %v2011 = vrot.slane %v601, 1
    %v2012 = vrot.slane %v602, 1
    %v2013 = vrot.slane %v603, 1
    %v2014 = vrot.slane %v604, 1
    %v2015 = vrot.slane %v605, 1
    %v2016 = vrot.slane %v606, 1
    %vm2017 = vcmp.lt.s32.totalorder %v608, 7
    %v2018 = vsel %vm2017, %v2015, %v2016
    %v2019 = vsel %vm2017, %v2014, %v2015
    %v2020 = vsel %vm2017, %v2013, %v2014
    %v2021 = vsel %vm2017, %v2012, %v2013
    %v2022 = vsel %vm2017, %v2011, %v2012
    %v2023 = vsel %vm2017, %v2010, %v2011
    %v2024 = vsel %vm2017, %v2009, %v2010
    %v2025 = vsel %vm2017, %v2008, %v2009
    %v2026 = vsel %vm2017, %v2007, %v2008
    %v2027 = vsel %vm2017, %v2006, %v2007
    %v2028 = vsel %vm2017, %v2005, %v2006
    %v2029 = vsel %vm2017, %v2004, %v2005
    %v2030 = vsel %vm2017, %v2003, %v2004
    %v2031 = vsel %vm2017, %v2002, %v2003
    %v2032 = vsel %vm2017, %v2001, %v2002
    %v2033 = vsel %vm2017, %v2000, %v2001
    %v2034 = vsel %vm2017, %v1999, %v2000
    %v2035 = vsel %vm2017, %v1998, %v1999
    %v2036 = vsel %vm2017, %v1997, %v1998
    %v2037 = vsel %vm2017, %v1996, %v1997
    %v2038 = vsel %vm2017, %v1995, %v1996
    %v2039 = vsel %vm2017, %v1994, %v1995
    %v2040 = vsel %vm2017, %v1993, %v1994
    %v2041 = vsel %vm2017, %v1992, %v1993
    %v2042 = vsel %vm2017, %v1991, %v1992
    %v2043 = vsel %vm2017, %v1990, %v1991
    %v2044 = vsel %vm2017, %v1989, %v1990
    %v2045 = vsel %vm2017, %v1988, %v1989
    %v2046 = vsel %vm2017, %v1987, %v1988
    %v2047 = vsel %vm2017, %v1986, %v1987
    %v2048 = vsel %vm2017, %v1985, %v1986
    %v2049 = vsel %vm2017, %v1984, %v1985
    %v2050 = vsel %vm2017, %v1983, %v1984
    %v2051 = vsel %vm2017, %v1982, %v1983
    %v2052 = vsel %vm2017, %v1981, %v1982
    %v2053 = vsel %vm2017, %v1980, %v1981
    %v2054 = vsel %vm2017, %v1979, %v1980
    %v2055 = vsel %vm2017, %v1978, %v1979
    %v2056 = vsel %vm2017, %v1977, %v1978
    %v2057 = vsel %vm2017, %v1976, %v1977
    %v2058 = vsel %vm2017, %v1975, %v1976
    %v2059 = vsel %vm2017, %v1974, %v1975
    %v2060 = vsel %vm2017, %v1973, %v1974
    %v2061 = vsel %vm2017, %v1972, %v1973
    %v2062 = vsel %vm2017, %v1971, %v1972
    %v2063 = vsel %vm2017, %v1970, %v1971
    %v2064 = vsel %vm2017, %v1969, %v1970
    %v2065 = vsel %vm2017, %v1968, %v1969
    %v2066 = vsel %vm2017, %v1967, %v1968
    %v2067 = vsel %vm2017, %v1966, %v1967
    %v2068 = vsel %vm2017, %v1965, %v1966
    %v2069 = vsel %vm2017, %v1964, %v1965
    %v2070 = vsel %vm2017, %v1963, %v1964
    %v2071 = vsel %vm2017, %v1962, %v1963
    %v2072 = vsel %vm2017, %v1961, %v1962
    %v2073 = vsel %vm2017, %v1960, %v1961
    %v2074 = vsel %vm2017, %v1959, %v1960
    %v2075 = vsel %vm2017, %v1958, %v1959
    %v2076 = vsel %vm2017, %v1957, %v1958
    %v2077 = vsel %vm2017, %v1956, %v1957
    %v2078 = vsel %vm2017, %v1955, %v1956
    %v2079 = vsel %vm2017, %v1954, %v1955
    %v2080 = vsel %vm2017, %v1953, %v1954
    %v2081 = vsel %vm2017, %v2016, %v1953
    %v2082 = vsel %vm1504, 1, 0
    %v2083 = vsel %vm1505, 1, 0
    %v2084 = vsel %vm1506, 1, 0
    %v2085 = vsel %vm1507, 1, 0
    %v2086 = vsel %vm1508, 1, 0
    %v2087 = vsel %vm1509, 1, 0
    %v2088 = vsel %vm1510, 1, 0
    %v2089 = vsel %vm1511, 1, 0
    %v2090 = vsel %vm1512, 1, 0
    %v2091 = vsel %vm1513, 1, 0
    %v2092 = vsel %vm1514, 1, 0
    %v2093 = vsel %vm1515, 1, 0
    %v2094 = vsel %vm1516, 1, 0
    %v2095 = vsel %vm1517, 1, 0
    %v2096 = vsel %vm1518, 1, 0
    %v2097 = vsel %vm1519, 1, 0
    %v2098 = vsel %vm1520, 1, 0
    %v2099 = vsel %vm1521, 1, 0
    %v2100 = vsel %vm1522, 1, 0
    %v2101 = vsel %vm1523, 1, 0
    %v2102 = vsel %vm1524, 1, 0
    %v2103 = vsel %vm1525, 1, 0
    %v2104 = vsel %vm1526, 1, 0
    %v2105 = vsel %vm1527, 1, 0
    %v2106 = vsel %vm1528, 1, 0
    %v2107 = vsel %vm1529, 1, 0
    %v2108 = vsel %vm1530, 1, 0
    %v2109 = vsel %vm1531, 1, 0
    %v2110 = vsel %vm1532, 1, 0
    %v2111 = vsel %vm1533, 1, 0
    %v2112 = vsel %vm1534, 1, 0
    %v2113 = vsel %vm1535, 1, 0
    %v2114 = vsel %vm1536, 1, 0
    %v2115 = vsel %vm1537, 1, 0
    %v2116 = vsel %vm1538, 1, 0
    %v2117 = vsel %vm1539, 1, 0
    %v2118 = vsel %vm1540, 1, 0
    %v2119 = vsel %vm1541, 1, 0
    %v2120 = vsel %vm1542, 1, 0
    %v2121 = vsel %vm1543, 1, 0
    %v2122 = vsel %vm1544, 1, 0
    %v2123 = vsel %vm1545, 1, 0
    %v2124 = vsel %vm1546, 1, 0
    %v2125 = vsel %vm1547, 1, 0
    %v2126 = vsel %vm1548, 1, 0
    %v2127 = vsel %vm1549, 1, 0
    %v2128 = vsel %vm1550, 1, 0
    %v2129 = vsel %vm1551, 1, 0
    %v2130 = vsel %vm1552, 1, 0
    %v2131 = vsel %vm1553, 1, 0
    %v2132 = vsel %vm1554, 1, 0
    %v2133 = vsel %vm1555, 1, 0
    %v2134 = vsel %vm1556, 1, 0
    %v2135 = vsel %vm1557, 1, 0
    %v2136 = vsel %vm1558, 1, 0
    %v2137 = vsel %vm1559, 1, 0
    %v2138 = vsel %vm1560, 1, 0
    %v2139 = vsel %vm1561, 1, 0
    %v2140 = vsel %vm1562, 1, 0
    %v2141 = vsel %vm1563, 1, 0
    %v2142 = vsel %vm1564, 1, 0
    %v2143 = vsel %vm1565, 1, 0
    %v2144 = vsel %vm1566, 1, 0
    %v2145 = vsel %vm1567, 1, 0
    %vm2146 = vcmp.eq.s32.totalorder %v2082, 1
    %vm2147 = vcmp.eq.s32.totalorder %v2083, 1
    %vm2148 = vcmp.eq.s32.totalorder %v2084, 1
    %vm2149 = vcmp.eq.s32.totalorder %v2085, 1
    %vm2150 = vcmp.eq.s32.totalorder %v2086, 1
    %vm2151 = vcmp.eq.s32.totalorder %v2087, 1
    %vm2152 = vcmp.eq.s32.totalorder %v2088, 1
    %vm2153 = vcmp.eq.s32.totalorder %v2089, 1
    %vm2154 = vcmp.eq.s32.totalorder %v2090, 1
    %vm2155 = vcmp.eq.s32.totalorder %v2091, 1
    %vm2156 = vcmp.eq.s32.totalorder %v2092, 1
    %vm2157 = vcmp.eq.s32.totalorder %v2093, 1
    %vm2158 = vcmp.eq.s32.totalorder %v2094, 1
    %vm2159 = vcmp.eq.s32.totalorder %v2095, 1
    %vm2160 = vcmp.eq.s32.totalorder %v2096, 1
    %vm2161 = vcmp.eq.s32.totalorder %v2097, 1
    %vm2162 = vcmp.eq.s32.totalorder %v2098, 1
    %vm2163 = vcmp.eq.s32.totalorder %v2099, 1
    %vm2164 = vcmp.eq.s32.totalorder %v2100, 1
    %vm2165 = vcmp.eq.s32.totalorder %v2101, 1
    %vm2166 = vcmp.eq.s32.totalorder %v2102, 1
    %vm2167 = vcmp.eq.s32.totalorder %v2103, 1
    %vm2168 = vcmp.eq.s32.totalorder %v2104, 1
    %vm2169 = vcmp.eq.s32.totalorder %v2105, 1
    %vm2170 = vcmp.eq.s32.totalorder %v2106, 1
    %vm2171 = vcmp.eq.s32.totalorder %v2107, 1
    %vm2172 = vcmp.eq.s32.totalorder %v2108, 1
    %vm2173 = vcmp.eq.s32.totalorder %v2109, 1
    %vm2174 = vcmp.eq.s32.totalorder %v2110, 1
    %vm2175 = vcmp.eq.s32.totalorder %v2111, 1
    %vm2176 = vcmp.eq.s32.totalorder %v2112, 1
    %vm2177 = vcmp.eq.s32.totalorder %v2113, 1
    %vm2178 = vcmp.eq.s32.totalorder %v2114, 1
    %vm2179 = vcmp.eq.s32.totalorder %v2115, 1
    %vm2180 = vcmp.eq.s32.totalorder %v2116, 1
    %vm2181 = vcmp.eq.s32.totalorder %v2117, 1
    %vm2182 = vcmp.eq.s32.totalorder %v2118, 1
    %vm2183 = vcmp.eq.s32.totalorder %v2119, 1
    %vm2184 = vcmp.eq.s32.totalorder %v2120, 1
    %vm2185 = vcmp.eq.s32.totalorder %v2121, 1
    %vm2186 = vcmp.eq.s32.totalorder %v2122, 1
    %vm2187 = vcmp.eq.s32.totalorder %v2123, 1
    %vm2188 = vcmp.eq.s32.totalorder %v2124, 1
    %vm2189 = vcmp.eq.s32.totalorder %v2125, 1
    %vm2190 = vcmp.eq.s32.totalorder %v2126, 1
    %vm2191 = vcmp.eq.s32.totalorder %v2127, 1
    %vm2192 = vcmp.eq.s32.totalorder %v2128, 1
    %vm2193 = vcmp.eq.s32.totalorder %v2129, 1
    %vm2194 = vcmp.eq.s32.totalorder %v2130, 1
    %vm2195 = vcmp.eq.s32.totalorder %v2131, 1
    %vm2196 = vcmp.eq.s32.totalorder %v2132, 1
    %vm2197 = vcmp.eq.s32.totalorder %v2133, 1
    %vm2198 = vcmp.eq.s32.totalorder %v2134, 1
    %vm2199 = vcmp.eq.s32.totalorder %v2135, 1
    %vm2200 = vcmp.eq.s32.totalorder %v2136, 1
    %vm2201 = vcmp.eq.s32.totalorder %v2137, 1
    %vm2202 = vcmp.eq.s32.totalorder %v2138, 1
    %vm2203 = vcmp.eq.s32.totalorder %v2139, 1
    %vm2204 = vcmp.eq.s32.totalorder %v2140, 1
    %vm2205 = vcmp.eq.s32.totalorder %v2141, 1
    %vm2206 = vcmp.eq.s32.totalorder %v2142, 1
    %vm2207 = vcmp.eq.s32.totalorder %v2143, 1
    %vm2208 = vcmp.eq.s32.totalorder %v2144, 1
    %vm2209 = vcmp.eq.s32.totalorder %v2145, 1
    %v2210 = vsel %vm2146, 0.0, %v2080
    %v2211 = vsel %vm2147, 0.0, %v2079
    %v2212 = vsel %vm2148, 0.0, %v2078
    %v2213 = vsel %vm2149, 0.0, %v2077
    %v2214 = vsel %vm2150, 0.0, %v2076
    %v2215 = vsel %vm2151, 0.0, %v2075
    %v2216 = vsel %vm2152, 0.0, %v2074
    %v2217 = vsel %vm2153, 0.0, %v2073
    %v2218 = vsel %vm2154, 0.0, %v2072
    %v2219 = vsel %vm2155, 0.0, %v2071
    %v2220 = vsel %vm2156, 0.0, %v2070
    %v2221 = vsel %vm2157, 0.0, %v2069
    %v2222 = vsel %vm2158, 0.0, %v2068
    %v2223 = vsel %vm2159, 0.0, %v2067
    %v2224 = vsel %vm2160, 0.0, %v2066
    %v2225 = vsel %vm2161, 0.0, %v2065
    %v2226 = vsel %vm2162, 0.0, %v2064
    %v2227 = vsel %vm2163, 0.0, %v2063
    %v2228 = vsel %vm2164, 0.0, %v2062
    %v2229 = vsel %vm2165, 0.0, %v2061
    %v2230 = vsel %vm2166, 0.0, %v2060
    %v2231 = vsel %vm2167, 0.0, %v2059
    %v2232 = vsel %vm2168, 0.0, %v2058
    %v2233 = vsel %vm2169, 0.0, %v2057
    %v2234 = vsel %vm2170, 0.0, %v2056
    %v2235 = vsel %vm2171, 0.0, %v2055
    %v2236 = vsel %vm2172, 0.0, %v2054
    %v2237 = vsel %vm2173, 0.0, %v2053
    %v2238 = vsel %vm2174, 0.0, %v2052
    %v2239 = vsel %vm2175, 0.0, %v2051
    %v2240 = vsel %vm2176, 0.0, %v2050
    %v2241 = vsel %vm2177, 0.0, %v2049
    %v2242 = vsel %vm2178, 0.0, %v2048
    %v2243 = vsel %vm2179, 0.0, %v2047
    %v2244 = vsel %vm2180, 0.0, %v2046
    %v2245 = vsel %vm2181, 0.0, %v2045
    %v2246 = vsel %vm2182, 0.0, %v2044
    %v2247 = vsel %vm2183, 0.0, %v2043
    %v2248 = vsel %vm2184, 0.0, %v2042
    %v2249 = vsel %vm2185, 0.0, %v2041
    %v2250 = vsel %vm2186, 0.0, %v2040
    %v2251 = vsel %vm2187, 0.0, %v2039
    %v2252 = vsel %vm2188, 0.0, %v2038
    %v2253 = vsel %vm2189, 0.0, %v2037
    %v2254 = vsel %vm2190, 0.0, %v2036
    %v2255 = vsel %vm2191, 0.0, %v2035
    %v2256 = vsel %vm2192, 0.0, %v2034
    %v2257 = vsel %vm2193, 0.0, %v2033
    %v2258 = vsel %vm2194, 0.0, %v2032
    %v2259 = vsel %vm2195, 0.0, %v2031
    %v2260 = vsel %vm2196, 0.0, %v2030
    %v2261 = vsel %vm2197, 0.0, %v2029
    %v2262 = vsel %vm2198, 0.0, %v2028
    %v2263 = vsel %vm2199, 0.0, %v2027
    %v2264 = vsel %vm2200, 0.0, %v2026
    %v2265 = vsel %vm2201, 0.0, %v2025
    %v2266 = vsel %vm2202, 0.0, %v2024
    %v2267 = vsel %vm2203, 0.0, %v2023
    %v2268 = vsel %vm2204, 0.0, %v2022
    %v2269 = vsel %vm2205, 0.0, %v2021
    %v2270 = vsel %vm2206, 0.0, %v2020
    %v2271 = vsel %vm2207, 0.0, %v2019
    %v2272 = vsel %vm2208, 0.0, %v2018
    %v2273 = vsel %vm2209, 0.0, %v2081
    %v2274 = vpack.c.bf16 %v2211, %v2210
    %v2275 = vpack.c.bf16 %v2213, %v2212
    %v2276 = vpack.c.bf16 %v2215, %v2214
    %v2277 = vpack.c.bf16 %v2217, %v2216
    %v2278 = vpack.c.bf16 %v2219, %v2218
    %v2279 = vpack.c.bf16 %v2221, %v2220
    %v2280 = vpack.c.bf16 %v2223, %v2222
    %v2281 = vpack.c.bf16 %v2225, %v2224
    %v2282 = vpack.c.bf16 %v2227, %v2226
    %v2283 = vpack.c.bf16 %v2229, %v2228
    %v2284 = vpack.c.bf16 %v2231, %v2230
    %v2285 = vpack.c.bf16 %v2233, %v2232
    %v2286 = vpack.c.bf16 %v2235, %v2234
    %v2287 = vpack.c.bf16 %v2237, %v2236
    %v2288 = vpack.c.bf16 %v2239, %v2238
    %v2289 = vpack.c.bf16 %v2241, %v2240
    %v2290 = vpack.c.bf16 %v2243, %v2242
    %v2291 = vpack.c.bf16 %v2245, %v2244
    %v2292 = vpack.c.bf16 %v2247, %v2246
    %v2293 = vpack.c.bf16 %v2249, %v2248
    %v2294 = vpack.c.bf16 %v2251, %v2250
    %v2295 = vpack.c.bf16 %v2253, %v2252
    %v2296 = vpack.c.bf16 %v2255, %v2254
    %v2297 = vpack.c.bf16 %v2257, %v2256
    %v2298 = vpack.c.bf16 %v2259, %v2258
    %v2299 = vpack.c.bf16 %v2261, %v2260
    %v2300 = vpack.c.bf16 %v2263, %v2262
    %v2301 = vpack.c.bf16 %v2265, %v2264
    %v2302 = vpack.c.bf16 %v2267, %v2266
    %v2303 = vpack.c.bf16 %v2269, %v2268
    %v2304 = vpack.c.bf16 %v2271, %v2270
    %v2305 = vpack.c.bf16 %v2273, %v2272
    %v2306 = vld [vmem:[#allocation2] sm:$0xf]
    %v2307 = vld [vmem:[#allocation2 + $0x4] sm:$0xf]
    %v2308 = vld [vmem:[#allocation2 + $0x8] sm:$0xf]
    %v2309 = vld [vmem:[#allocation2 + $0xc] sm:$0xf]
    %v2310 = vld [vmem:[#allocation2 + $0x10] sm:$0xf]
    %v2311 = vld [vmem:[#allocation2 + $0x14] sm:$0xf]
    %v2312 = vld [vmem:[#allocation2 + $0x18] sm:$0xf]
    %v2313 = vld [vmem:[#allocation2 + $0x1c] sm:$0xf]
    %s2314 = scalar_lea.vmem [#allocation2], 32
    %v2315 = vld [vmem:[%s2314] sm:$0xf]
    %v2316 = vld [vmem:[%s2314 + $0x4] sm:$0xf]
    %v2317 = vld [vmem:[%s2314 + $0x8] sm:$0xf]
    %v2318 = vld [vmem:[%s2314 + $0xc] sm:$0xf]
    %v2319 = vld [vmem:[%s2314 + $0x10] sm:$0xf]
    %v2320 = vld [vmem:[%s2314 + $0x14] sm:$0xf]
    %v2321 = vld [vmem:[%s2314 + $0x18] sm:$0xf]
    %v2322 = vld [vmem:[%s2314 + $0x1c] sm:$0xf]
    %v2331 = vunpack.c.l.b16 %v2315
    %v2332 = vunpack.c.l.b16 %v2316
    %v2333 = vunpack.c.l.b16 %v2317
    %v2334 = vunpack.c.l.b16 %v2318
    %v2335 = vunpack.c.l.b16 %v2319
    %v2336 = vunpack.c.l.b16 %v2320
    %v2337 = vunpack.c.l.b16 %v2321
    %v2338 = vunpack.c.l.b16 %v2322
    %v2339 = vpack.c.b16 %v2332, %v2331
    %v2340 = vpack.c.b16 %v2334, %v2333
    %v2341 = vpack.c.b16 %v2336, %v2335
    %v2342 = vpack.c.b16 %v2338, %v2337
    %vm2347 = vcmask 523264
    %v2349 = vsel %vm2347, %v1568, 0
    %v2352 = vsel %vm2347, %v1569, 0
    %v2355 = vsel %vm2347, %v1570, 0
    %v2358 = vsel %vm2347, %v1571, 0
    %v2361 = vsel %vm2347, %v1572, 0
    %v2364 = vsel %vm2347, %v1573, 0
    %v2367 = vsel %vm2347, %v1574, 0
    %v2370 = vsel %vm2347, %v1575, 0
    %v2373 = vsel %vm2347, %v1576, 0
    %v2376 = vsel %vm2347, %v1577, 0
    %v2379 = vsel %vm2347, %v1578, 0
    %v2382 = vsel %vm2347, %v1579, 0
    %v2385 = vsel %vm2347, %v1580, 0
    %v2388 = vsel %vm2347, %v1581, 0
    %v2391 = vsel %vm2347, %v1582, 0
    %v2394 = vsel %vm2347, %v1583, 0
    %v2397 = vsel %vm2347, %v1584, 0
    %v2400 = vsel %vm2347, %v1585, 0
    %v2403 = vsel %vm2347, %v1586, 0
    %v2406 = vsel %vm2347, %v1587, 0
    %v2409 = vsel %vm2347, %v1588, 0
    %v2412 = vsel %vm2347, %v1589, 0
    %v2415 = vsel %vm2347, %v1590, 0
    %v2418 = vsel %vm2347, %v1591, 0
    %v2421 = vsel %vm2347, %v1592, 0
    %v2424 = vsel %vm2347, %v1593, 0
    %v2427 = vsel %vm2347, %v1594, 0
    %v2430 = vsel %vm2347, %v1595, 0
    %v2433 = vsel %vm2347, %v1596, 0
    %v2436 = vsel %vm2347, %v1597, 0
    %v2439 = vsel %vm2347, %v1598, 0
    %v2442 = vsel %vm2347, %v1599, 0
    %2444 = vmatpush.bf16.msra.mxu0 0
    %2445 = vmatpush.bf16.msra.mxu0 0
    %2446 = vmatpush.bf16.msra.mxu0 0
    %2447 = vmatpush.bf16.msra.mxu0 0
    %2448 = vmatpush.bf16.msra.mxu0 %v2342
    %2449 = vmatpush.bf16.msra.mxu0 %v2341
    %2450 = vmatpush.bf16.msra.mxu0 %v2340
    %2451 = vmatpush.bf16.msra.mxu0 %v2339
    %2452 = vmatmul.bf16.gmra.mxu0 %v2349
    %v2453 = vpop.f32.mrf.mxu0
    %v2454 = vadd.f32 0.0, %v2453
    %v2455 = vpop.f32.mrf.mxu0
    %v2456 = vadd.f32 0.0, %v2455
    %2457 = vmatmul.bf16.gmra.mxu0 %v2352
    %v2458 = vpop.f32.mrf.mxu0
    %v2459 = vadd.f32 0.0, %v2458
    %v2460 = vpop.f32.mrf.mxu0
    %v2461 = vadd.f32 0.0, %v2460
    %2462 = vmatmul.bf16.gmra.mxu0 %v2355
    %v2463 = vpop.f32.mrf.mxu0
    %v2464 = vadd.f32 0.0, %v2463
    %v2465 = vpop.f32.mrf.mxu0
    %v2466 = vadd.f32 0.0, %v2465
    %2467 = vmatmul.bf16.gmra.mxu0 %v2358
    %v2468 = vpop.f32.mrf.mxu0
    %v2469 = vadd.f32 0.0, %v2468
    %v2470 = vpop.f32.mrf.mxu0
    %v2471 = vadd.f32 0.0, %v2470
    %2472 = vmatmul.bf16.gmra.mxu0 %v2361
    %v2473 = vpop.f32.mrf.mxu0
    %v2474 = vadd.f32 0.0, %v2473
    %v2475 = vpop.f32.mrf.mxu0
    %v2476 = vadd.f32 0.0, %v2475
    %2477 = vmatmul.bf16.gmra.mxu0 %v2364
    %v2478 = vpop.f32.mrf.mxu0
    %v2479 = vadd.f32 0.0, %v2478
    %v2480 = vpop.f32.mrf.mxu0
    %v2481 = vadd.f32 0.0, %v2480
    %2482 = vmatmul.bf16.gmra.mxu0 %v2367
    %v2483 = vpop.f32.mrf.mxu0
    %v2484 = vadd.f32 0.0, %v2483
    %v2485 = vpop.f32.mrf.mxu0
    %v2486 = vadd.f32 0.0, %v2485
    %2487 = vmatmul.bf16.gmra.mxu0 %v2370
    %v2488 = vpop.f32.mrf.mxu0
    %v2489 = vadd.f32 0.0, %v2488
    %v2490 = vpop.f32.mrf.mxu0
    %v2491 = vadd.f32 0.0, %v2490
    %2492 = vmatmul.bf16.gmra.mxu0 %v2373
    %v2493 = vpop.f32.mrf.mxu0
    %v2494 = vadd.f32 0.0, %v2493
    %v2495 = vpop.f32.mrf.mxu0
    %v2496 = vadd.f32 0.0, %v2495
    %2497 = vmatmul.bf16.gmra.mxu0 %v2376
    %v2498 = vpop.f32.mrf.mxu0
    %v2499 = vadd.f32 0.0, %v2498
    %v2500 = vpop.f32.mrf.mxu0
    %v2501 = vadd.f32 0.0, %v2500
    %2502 = vmatmul.bf16.gmra.mxu0 %v2379
    %v2503 = vpop.f32.mrf.mxu0
    %v2504 = vadd.f32 0.0, %v2503
    %v2505 = vpop.f32.mrf.mxu0
    %v2506 = vadd.f32 0.0, %v2505
    %2507 = vmatmul.bf16.gmra.mxu0 %v2382
    %v2508 = vpop.f32.mrf.mxu0
    %v2509 = vadd.f32 0.0, %v2508
    %v2510 = vpop.f32.mrf.mxu0
    %v2511 = vadd.f32 0.0, %v2510
    %2512 = vmatmul.bf16.gmra.mxu0 %v2385
    %v2513 = vpop.f32.mrf.mxu0
    %v2514 = vadd.f32 0.0, %v2513
    %v2515 = vpop.f32.mrf.mxu0
    %v2516 = vadd.f32 0.0, %v2515
    %2517 = vmatmul.bf16.gmra.mxu0 %v2388
    %v2518 = vpop.f32.mrf.mxu0
    %v2519 = vadd.f32 0.0, %v2518
    %v2520 = vpop.f32.mrf.mxu0
    %v2521 = vadd.f32 0.0, %v2520
    %2522 = vmatmul.bf16.gmra.mxu0 %v2391
    %v2523 = vpop.f32.mrf.mxu0
    %v2524 = vadd.f32 0.0, %v2523
    %v2525 = vpop.f32.mrf.mxu0
    %v2526 = vadd.f32 0.0, %v2525
    %2527 = vmatmul.bf16.gmra.mxu0 %v2394
    %v2528 = vpop.f32.mrf.mxu0
    %v2529 = vadd.f32 0.0, %v2528
    %v2530 = vpop.f32.mrf.mxu0
    %v2531 = vadd.f32 0.0, %v2530
    %2532 = vmatmul.bf16.gmra.mxu0 %v2397
    %v2533 = vpop.f32.mrf.mxu0
    %v2534 = vadd.f32 0.0, %v2533
    %v2535 = vpop.f32.mrf.mxu0
    %v2536 = vadd.f32 0.0, %v2535
    %2537 = vmatmul.bf16.gmra.mxu0 %v2400
    %v2538 = vpop.f32.mrf.mxu0
    %v2539 = vadd.f32 0.0, %v2538
    %v2540 = vpop.f32.mrf.mxu0
    %v2541 = vadd.f32 0.0, %v2540
    %2542 = vmatmul.bf16.gmra.mxu0 %v2403
    %v2543 = vpop.f32.mrf.mxu0
    %v2544 = vadd.f32 0.0, %v2543
    %v2545 = vpop.f32.mrf.mxu0
    %v2546 = vadd.f32 0.0, %v2545
    %2547 = vmatmul.bf16.gmra.mxu0 %v2406
    %v2548 = vpop.f32.mrf.mxu0
    %v2549 = vadd.f32 0.0, %v2548
    %v2550 = vpop.f32.mrf.mxu0
    %v2551 = vadd.f32 0.0, %v2550
    %2552 = vmatmul.bf16.gmra.mxu0 %v2409
    %v2553 = vpop.f32.mrf.mxu0
    %v2554 = vadd.f32 0.0, %v2553
    %v2555 = vpop.f32.mrf.mxu0
    %v2556 = vadd.f32 0.0, %v2555
    %2557 = vmatmul.bf16.gmra.mxu0 %v2412
    %v2558 = vpop.f32.mrf.mxu0
    %v2559 = vadd.f32 0.0, %v2558
    %v2560 = vpop.f32.mrf.mxu0
    %v2561 = vadd.f32 0.0, %v2560
    %2562 = vmatmul.bf16.gmra.mxu0 %v2415
    %v2563 = vpop.f32.mrf.mxu0
    %v2564 = vadd.f32 0.0, %v2563
    %v2565 = vpop.f32.mrf.mxu0
    %v2566 = vadd.f32 0.0, %v2565
    %2567 = vmatmul.bf16.gmra.mxu0 %v2418
    %v2568 = vpop.f32.mrf.mxu0
    %v2569 = vadd.f32 0.0, %v2568
    %v2570 = vpop.f32.mrf.mxu0
    %v2571 = vadd.f32 0.0, %v2570
    %2572 = vmatmul.bf16.gmra.mxu0 %v2421
    %v2573 = vpop.f32.mrf.mxu0
    %v2574 = vadd.f32 0.0, %v2573
    %v2575 = vpop.f32.mrf.mxu0
    %v2576 = vadd.f32 0.0, %v2575
    %2577 = vmatmul.bf16.gmra.mxu0 %v2424
    %v2578 = vpop.f32.mrf.mxu0
    %v2579 = vadd.f32 0.0, %v2578
    %v2580 = vpop.f32.mrf.mxu0
    %v2581 = vadd.f32 0.0, %v2580
    %2582 = vmatmul.bf16.gmra.mxu0 %v2427
    %v2583 = vpop.f32.mrf.mxu0
    %v2584 = vadd.f32 0.0, %v2583
    %v2585 = vpop.f32.mrf.mxu0
    %v2586 = vadd.f32 0.0, %v2585
    %2587 = vmatmul.bf16.gmra.mxu0 %v2430
    %v2588 = vpop.f32.mrf.mxu0
    %v2589 = vadd.f32 0.0, %v2588
    %v2590 = vpop.f32.mrf.mxu0
    %v2591 = vadd.f32 0.0, %v2590
    %2592 = vmatmul.bf16.gmra.mxu0 %v2433
    %v2593 = vpop.f32.mrf.mxu0
    %v2594 = vadd.f32 0.0, %v2593
    %v2595 = vpop.f32.mrf.mxu0
    %v2596 = vadd.f32 0.0, %v2595
    %2597 = vmatmul.bf16.gmra.mxu0 %v2436
    %v2598 = vpop.f32.mrf.mxu0
    %v2599 = vadd.f32 0.0, %v2598
    %v2600 = vpop.f32.mrf.mxu0
    %v2601 = vadd.f32 0.0, %v2600
    %2602 = vmatmul.bf16.gmra.mxu0 %v2439
    %v2603 = vpop.f32.mrf.mxu0
    %v2604 = vadd.f32 0.0, %v2603
    %v2605 = vpop.f32.mrf.mxu0
    %v2606 = vadd.f32 0.0, %v2605
    %2607 = vmatmul.bf16.gmra.mxu0 %v2442
    %v2608 = vpop.f32.mrf.mxu0
    %v2609 = vadd.f32 0.0, %v2608
    %v2610 = vpop.f32.mrf.mxu0
    %v2611 = vadd.f32 0.0, %v2610
    %2612 = vdwg.mxu0
    %v2621 = vunpack.c.l.b16 %v2306
    %v2622 = vunpack.c.l.b16 %v2307
    %v2623 = vunpack.c.l.b16 %v2308
    %v2624 = vunpack.c.l.b16 %v2309
    %v2625 = vunpack.c.l.b16 %v2310
    %v2626 = vunpack.c.l.b16 %v2311
    %v2627 = vunpack.c.l.b16 %v2312
    %v2628 = vunpack.c.l.b16 %v2313
    %v2629 = vpack.c.b16 %v2622, %v2621
    %v2630 = vpack.c.b16 %v2624, %v2623
    %v2631 = vpack.c.b16 %v2626, %v2625
    %v2632 = vpack.c.b16 %v2628, %v2627
    %v2638 = vsel %vm2347, %v1921, 0
    %v2641 = vsel %vm2347, %v1922, 0
    %v2644 = vsel %vm2347, %v1923, 0
    %v2647 = vsel %vm2347, %v1924, 0
    %v2650 = vsel %vm2347, %v1925, 0
    %v2653 = vsel %vm2347, %v1926, 0
    %v2656 = vsel %vm2347, %v1927, 0
    %v2659 = vsel %vm2347, %v1928, 0
    %v2662 = vsel %vm2347, %v1929, 0
    %v2665 = vsel %vm2347, %v1930, 0
    %v2668 = vsel %vm2347, %v1931, 0
    %v2671 = vsel %vm2347, %v1932, 0
    %v2674 = vsel %vm2347, %v1933, 0
    %v2677 = vsel %vm2347, %v1934, 0
    %v2680 = vsel %vm2347, %v1935, 0
    %v2683 = vsel %vm2347, %v1936, 0
    %v2686 = vsel %vm2347, %v1937, 0
    %v2689 = vsel %vm2347, %v1938, 0
    %v2692 = vsel %vm2347, %v1939, 0
    %v2695 = vsel %vm2347, %v1940, 0
    %v2698 = vsel %vm2347, %v1941, 0
    %v2701 = vsel %vm2347, %v1942, 0
    %v2704 = vsel %vm2347, %v1943, 0
    %v2707 = vsel %vm2347, %v1944, 0
    %v2710 = vsel %vm2347, %v1945, 0
    %v2713 = vsel %vm2347, %v1946, 0
    %v2716 = vsel %vm2347, %v1947, 0
    %v2719 = vsel %vm2347, %v1948, 0
    %v2722 = vsel %vm2347, %v1949, 0
    %v2725 = vsel %vm2347, %v1950, 0
    %v2728 = vsel %vm2347, %v1951, 0
    %v2731 = vsel %vm2347, %v1952, 0
    %2733 = vmatpush.bf16.msra.mxu0 0
    %2734 = vmatpush.bf16.msra.mxu0 0
    %2735 = vmatpush.bf16.msra.mxu0 0
    %2736 = vmatpush.bf16.msra.mxu0 0
    %2737 = vmatpush.bf16.msra.mxu0 %v2632
    %2738 = vmatpush.bf16.msra.mxu0 %v2631
    %2739 = vmatpush.bf16.msra.mxu0 %v2630
    %2740 = vmatpush.bf16.msra.mxu0 %v2629
    %2741 = vmatmul.bf16.gmra.mxu0 %v2638
    %v2742 = vpop.f32.mrf.mxu0
    %v2743 = vadd.f32 %v2454, %v2742
    %v2744 = vpop.f32.mrf.mxu0
    %v2745 = vadd.f32 %v2456, %v2744
    %2746 = vmatmul.bf16.gmra.mxu0 %v2641
    %v2747 = vpop.f32.mrf.mxu0
    %v2748 = vadd.f32 %v2459, %v2747
    %v2749 = vpop.f32.mrf.mxu0
    %v2750 = vadd.f32 %v2461, %v2749
    %2751 = vmatmul.bf16.gmra.mxu0 %v2644
    %v2752 = vpop.f32.mrf.mxu0
    %v2753 = vadd.f32 %v2464, %v2752
    %v2754 = vpop.f32.mrf.mxu0
    %v2755 = vadd.f32 %v2466, %v2754
    %2756 = vmatmul.bf16.gmra.mxu0 %v2647
    %v2757 = vpop.f32.mrf.mxu0
    %v2758 = vadd.f32 %v2469, %v2757
    %v2759 = vpop.f32.mrf.mxu0
    %v2760 = vadd.f32 %v2471, %v2759
    %2761 = vmatmul.bf16.gmra.mxu0 %v2650
    %v2762 = vpop.f32.mrf.mxu0
    %v2763 = vadd.f32 %v2474, %v2762
    %v2764 = vpop.f32.mrf.mxu0
    %v2765 = vadd.f32 %v2476, %v2764
    %2766 = vmatmul.bf16.gmra.mxu0 %v2653
    %v2767 = vpop.f32.mrf.mxu0
    %v2768 = vadd.f32 %v2479, %v2767
    %v2769 = vpop.f32.mrf.mxu0
    %v2770 = vadd.f32 %v2481, %v2769
    %2771 = vmatmul.bf16.gmra.mxu0 %v2656
    %v2772 = vpop.f32.mrf.mxu0
    %v2773 = vadd.f32 %v2484, %v2772
    %v2774 = vpop.f32.mrf.mxu0
    %v2775 = vadd.f32 %v2486, %v2774
    %2776 = vmatmul.bf16.gmra.mxu0 %v2659
    %v2777 = vpop.f32.mrf.mxu0
    %v2778 = vadd.f32 %v2489, %v2777
    %v2779 = vpop.f32.mrf.mxu0
    %v2780 = vadd.f32 %v2491, %v2779
    %2781 = vmatmul.bf16.gmra.mxu0 %v2662
    %v2782 = vpop.f32.mrf.mxu0
    %v2783 = vadd.f32 %v2494, %v2782
    %v2784 = vpop.f32.mrf.mxu0
    %v2785 = vadd.f32 %v2496, %v2784
    %2786 = vmatmul.bf16.gmra.mxu0 %v2665
    %v2787 = vpop.f32.mrf.mxu0
    %v2788 = vadd.f32 %v2499, %v2787
    %v2789 = vpop.f32.mrf.mxu0
    %v2790 = vadd.f32 %v2501, %v2789
    %2791 = vmatmul.bf16.gmra.mxu0 %v2668
    %v2792 = vpop.f32.mrf.mxu0
    %v2793 = vadd.f32 %v2504, %v2792
    %v2794 = vpop.f32.mrf.mxu0
    %v2795 = vadd.f32 %v2506, %v2794
    %2796 = vmatmul.bf16.gmra.mxu0 %v2671
    %v2797 = vpop.f32.mrf.mxu0
    %v2798 = vadd.f32 %v2509, %v2797
    %v2799 = vpop.f32.mrf.mxu0
    %v2800 = vadd.f32 %v2511, %v2799
    %2801 = vmatmul.bf16.gmra.mxu0 %v2674
    %v2802 = vpop.f32.mrf.mxu0
    %v2803 = vadd.f32 %v2514, %v2802
    %v2804 = vpop.f32.mrf.mxu0
    %v2805 = vadd.f32 %v2516, %v2804
    %2806 = vmatmul.bf16.gmra.mxu0 %v2677
    %v2807 = vpop.f32.mrf.mxu0
    %v2808 = vadd.f32 %v2519, %v2807
    %v2809 = vpop.f32.mrf.mxu0
    %v2810 = vadd.f32 %v2521, %v2809
    %2811 = vmatmul.bf16.gmra.mxu0 %v2680
    %v2812 = vpop.f32.mrf.mxu0
    %v2813 = vadd.f32 %v2524, %v2812
    %v2814 = vpop.f32.mrf.mxu0
    %v2815 = vadd.f32 %v2526, %v2814
    %2816 = vmatmul.bf16.gmra.mxu0 %v2683
    %v2817 = vpop.f32.mrf.mxu0
    %v2818 = vadd.f32 %v2529, %v2817
    %v2819 = vpop.f32.mrf.mxu0
    %v2820 = vadd.f32 %v2531, %v2819
    %2821 = vmatmul.bf16.gmra.mxu0 %v2686
    %v2822 = vpop.f32.mrf.mxu0
    %v2823 = vadd.f32 %v2534, %v2822
    %v2824 = vpop.f32.mrf.mxu0
    %v2825 = vadd.f32 %v2536, %v2824
    %2826 = vmatmul.bf16.gmra.mxu0 %v2689
    %v2827 = vpop.f32.mrf.mxu0
    %v2828 = vadd.f32 %v2539, %v2827
    %v2829 = vpop.f32.mrf.mxu0
    %v2830 = vadd.f32 %v2541, %v2829
    %2831 = vmatmul.bf16.gmra.mxu0 %v2692
    %v2832 = vpop.f32.mrf.mxu0
    %v2833 = vadd.f32 %v2544, %v2832
    %v2834 = vpop.f32.mrf.mxu0
    %v2835 = vadd.f32 %v2546, %v2834
    %2836 = vmatmul.bf16.gmra.mxu0 %v2695
    %v2837 = vpop.f32.mrf.mxu0
    %v2838 = vadd.f32 %v2549, %v2837
    %v2839 = vpop.f32.mrf.mxu0
    %v2840 = vadd.f32 %v2551, %v2839
    %2841 = vmatmul.bf16.gmra.mxu0 %v2698
    %v2842 = vpop.f32.mrf.mxu0
    %v2843 = vadd.f32 %v2554, %v2842
    %v2844 = vpop.f32.mrf.mxu0
    %v2845 = vadd.f32 %v2556, %v2844
    %2846 = vmatmul.bf16.gmra.mxu0 %v2701
    %v2847 = vpop.f32.mrf.mxu0
    %v2848 = vadd.f32 %v2559, %v2847
    %v2849 = vpop.f32.mrf.mxu0
    %v2850 = vadd.f32 %v2561, %v2849
    %2851 = vmatmul.bf16.gmra.mxu0 %v2704
    %v2852 = vpop.f32.mrf.mxu0
    %v2853 = vadd.f32 %v2564, %v2852
    %v2854 = vpop.f32.mrf.mxu0
    %v2855 = vadd.f32 %v2566, %v2854
    %2856 = vmatmul.bf16.gmra.mxu0 %v2707
    %v2857 = vpop.f32.mrf.mxu0
    %v2858 = vadd.f32 %v2569, %v2857
    %v2859 = vpop.f32.mrf.mxu0
    %v2860 = vadd.f32 %v2571, %v2859
    %2861 = vmatmul.bf16.gmra.mxu0 %v2710
    %v2862 = vpop.f32.mrf.mxu0
    %v2863 = vadd.f32 %v2574, %v2862
    %v2864 = vpop.f32.mrf.mxu0
    %v2865 = vadd.f32 %v2576, %v2864
    %2866 = vmatmul.bf16.gmra.mxu0 %v2713
    %v2867 = vpop.f32.mrf.mxu0
    %v2868 = vadd.f32 %v2579, %v2867
    %v2869 = vpop.f32.mrf.mxu0
    %v2870 = vadd.f32 %v2581, %v2869
    %2871 = vmatmul.bf16.gmra.mxu0 %v2716
    %v2872 = vpop.f32.mrf.mxu0
    %v2873 = vadd.f32 %v2584, %v2872
    %v2874 = vpop.f32.mrf.mxu0
    %v2875 = vadd.f32 %v2586, %v2874
    %2876 = vmatmul.bf16.gmra.mxu0 %v2719
    %v2877 = vpop.f32.mrf.mxu0
    %v2878 = vadd.f32 %v2589, %v2877
    %v2879 = vpop.f32.mrf.mxu0
    %v2880 = vadd.f32 %v2591, %v2879
    %2881 = vmatmul.bf16.gmra.mxu0 %v2722
    %v2882 = vpop.f32.mrf.mxu0
    %v2883 = vadd.f32 %v2594, %v2882
    %v2884 = vpop.f32.mrf.mxu0
    %v2885 = vadd.f32 %v2596, %v2884
    %2886 = vmatmul.bf16.gmra.mxu0 %v2725
    %v2887 = vpop.f32.mrf.mxu0
    %v2888 = vadd.f32 %v2599, %v2887
    %v2889 = vpop.f32.mrf.mxu0
    %v2890 = vadd.f32 %v2601, %v2889
    %2891 = vmatmul.bf16.gmra.mxu0 %v2728
    %v2892 = vpop.f32.mrf.mxu0
    %v2893 = vadd.f32 %v2604, %v2892
    %v2894 = vpop.f32.mrf.mxu0
    %v2895 = vadd.f32 %v2606, %v2894
    %2896 = vmatmul.bf16.gmra.mxu0 %v2731
    %v2897 = vpop.f32.mrf.mxu0
    %v2898 = vadd.f32 %v2609, %v2897
    %v2899 = vpop.f32.mrf.mxu0
    %v2900 = vadd.f32 %v2611, %v2899
    %2901 = vdwg.mxu0
    %s2902 = scalar_lea.vmem [#allocation2], 64
    %v2903 = vld [vmem:[%s2902] sm:$0xf]
    %v2904 = vld [vmem:[%s2902 + $0x4] sm:$0xf]
    %v2905 = vld [vmem:[%s2902 + $0x8] sm:$0xf]
    %v2906 = vld [vmem:[%s2902 + $0xc] sm:$0xf]
    %v2907 = vld [vmem:[%s2902 + $0x10] sm:$0xf]
    %v2908 = vld [vmem:[%s2902 + $0x14] sm:$0xf]
    %v2909 = vld [vmem:[%s2902 + $0x18] sm:$0xf]
    %v2910 = vld [vmem:[%s2902 + $0x1c] sm:$0xf]
    %v2919 = vunpack.c.l.b16 %v2903
    %v2920 = vunpack.c.l.b16 %v2904
    %v2921 = vunpack.c.l.b16 %v2905
    %v2922 = vunpack.c.l.b16 %v2906
    %v2923 = vunpack.c.l.b16 %v2907
    %v2924 = vunpack.c.l.b16 %v2908
    %v2925 = vunpack.c.l.b16 %v2909
    %v2926 = vunpack.c.l.b16 %v2910
    %v2927 = vpack.c.b16 %v2920, %v2919
    %v2928 = vpack.c.b16 %v2922, %v2921
    %v2929 = vpack.c.b16 %v2924, %v2923
    %v2930 = vpack.c.b16 %v2926, %v2925
    %v2936 = vsel %vm2347, %v2274, 0
    %v2939 = vsel %vm2347, %v2275, 0
    %v2942 = vsel %vm2347, %v2276, 0
    %v2945 = vsel %vm2347, %v2277, 0
    %v2948 = vsel %vm2347, %v2278, 0
    %v2951 = vsel %vm2347, %v2279, 0
    %v2954 = vsel %vm2347, %v2280, 0
    %v2957 = vsel %vm2347, %v2281, 0
    %v2960 = vsel %vm2347, %v2282, 0
    %v2963 = vsel %vm2347, %v2283, 0
    %v2966 = vsel %vm2347, %v2284, 0
    %v2969 = vsel %vm2347, %v2285, 0
    %v2972 = vsel %vm2347, %v2286, 0
    %v2975 = vsel %vm2347, %v2287, 0
    %v2978 = vsel %vm2347, %v2288, 0
    %v2981 = vsel %vm2347, %v2289, 0
    %v2984 = vsel %vm2347, %v2290, 0
    %v2987 = vsel %vm2347, %v2291, 0
    %v2990 = vsel %vm2347, %v2292, 0
    %v2993 = vsel %vm2347, %v2293, 0
    %v2996 = vsel %vm2347, %v2294, 0
    %v2999 = vsel %vm2347, %v2295, 0
    %v3002 = vsel %vm2347, %v2296, 0
    %v3005 = vsel %vm2347, %v2297, 0
    %v3008 = vsel %vm2347, %v2298, 0
    %v3011 = vsel %vm2347, %v2299, 0
    %v3014 = vsel %vm2347, %v2300, 0
    %v3017 = vsel %vm2347, %v2301, 0
    %v3020 = vsel %vm2347, %v2302, 0
    %v3023 = vsel %vm2347, %v2303, 0
    %v3026 = vsel %vm2347, %v2304, 0
    %v3029 = vsel %vm2347, %v2305, 0
    %3031 = vmatpush.bf16.msra.mxu0 0
    %3032 = vmatpush.bf16.msra.mxu0 0
    %3033 = vmatpush.bf16.msra.mxu0 0
    %3034 = vmatpush.bf16.msra.mxu0 0
    %3035 = vmatpush.bf16.msra.mxu0 %v2930
    %3036 = vmatpush.bf16.msra.mxu0 %v2929
    %3037 = vmatpush.bf16.msra.mxu0 %v2928
    %3038 = vmatpush.bf16.msra.mxu0 %v2927
    %3039 = vmatmul.bf16.gmra.mxu0 %v2936
    %v3040 = vpop.f32.mrf.mxu0
    %v3041 = vadd.f32 0.0, %v3040
    %v3042 = vpop.f32.mrf.mxu0
    %v3043 = vadd.f32 0.0, %v3042
    %3044 = vmatmul.bf16.gmra.mxu0 %v2939
    %v3045 = vpop.f32.mrf.mxu0
    %v3046 = vadd.f32 0.0, %v3045
    %v3047 = vpop.f32.mrf.mxu0
    %v3048 = vadd.f32 0.0, %v3047
    %3049 = vmatmul.bf16.gmra.mxu0 %v2942
    %v3050 = vpop.f32.mrf.mxu0
    %v3051 = vadd.f32 0.0, %v3050
    %v3052 = vpop.f32.mrf.mxu0
    %v3053 = vadd.f32 0.0, %v3052
    %3054 = vmatmul.bf16.gmra.mxu0 %v2945
    %v3055 = vpop.f32.mrf.mxu0
    %v3056 = vadd.f32 0.0, %v3055
    %v3057 = vpop.f32.mrf.mxu0
    %v3058 = vadd.f32 0.0, %v3057
    %3059 = vmatmul.bf16.gmra.mxu0 %v2948
    %v3060 = vpop.f32.mrf.mxu0
    %v3061 = vadd.f32 0.0, %v3060
    %v3062 = vpop.f32.mrf.mxu0
    %v3063 = vadd.f32 0.0, %v3062
    %3064 = vmatmul.bf16.gmra.mxu0 %v2951
    %v3065 = vpop.f32.mrf.mxu0
    %v3066 = vadd.f32 0.0, %v3065
    %v3067 = vpop.f32.mrf.mxu0
    %v3068 = vadd.f32 0.0, %v3067
    %3069 = vmatmul.bf16.gmra.mxu0 %v2954
    %v3070 = vpop.f32.mrf.mxu0
    %v3071 = vadd.f32 0.0, %v3070
    %v3072 = vpop.f32.mrf.mxu0
    %v3073 = vadd.f32 0.0, %v3072
    %3074 = vmatmul.bf16.gmra.mxu0 %v2957
    %v3075 = vpop.f32.mrf.mxu0
    %v3076 = vadd.f32 0.0, %v3075
    %v3077 = vpop.f32.mrf.mxu0
    %v3078 = vadd.f32 0.0, %v3077
    %3079 = vmatmul.bf16.gmra.mxu0 %v2960
    %v3080 = vpop.f32.mrf.mxu0
    %v3081 = vadd.f32 0.0, %v3080
    %v3082 = vpop.f32.mrf.mxu0
    %v3083 = vadd.f32 0.0, %v3082
    %3084 = vmatmul.bf16.gmra.mxu0 %v2963
    %v3085 = vpop.f32.mrf.mxu0
    %v3086 = vadd.f32 0.0, %v3085
    %v3087 = vpop.f32.mrf.mxu0
    %v3088 = vadd.f32 0.0, %v3087
    %3089 = vmatmul.bf16.gmra.mxu0 %v2966
    %v3090 = vpop.f32.mrf.mxu0
    %v3091 = vadd.f32 0.0, %v3090
    %v3092 = vpop.f32.mrf.mxu0
    %v3093 = vadd.f32 0.0, %v3092
    %3094 = vmatmul.bf16.gmra.mxu0 %v2969
    %v3095 = vpop.f32.mrf.mxu0
    %v3096 = vadd.f32 0.0, %v3095
    %v3097 = vpop.f32.mrf.mxu0
    %v3098 = vadd.f32 0.0, %v3097
    %3099 = vmatmul.bf16.gmra.mxu0 %v2972
    %v3100 = vpop.f32.mrf.mxu0
    %v3101 = vadd.f32 0.0, %v3100
    %v3102 = vpop.f32.mrf.mxu0
    %v3103 = vadd.f32 0.0, %v3102
    %3104 = vmatmul.bf16.gmra.mxu0 %v2975
    %v3105 = vpop.f32.mrf.mxu0
    %v3106 = vadd.f32 0.0, %v3105
    %v3107 = vpop.f32.mrf.mxu0
    %v3108 = vadd.f32 0.0, %v3107
    %3109 = vmatmul.bf16.gmra.mxu0 %v2978
    %v3110 = vpop.f32.mrf.mxu0
    %v3111 = vadd.f32 0.0, %v3110
    %v3112 = vpop.f32.mrf.mxu0
    %v3113 = vadd.f32 0.0, %v3112
    %3114 = vmatmul.bf16.gmra.mxu0 %v2981
    %v3115 = vpop.f32.mrf.mxu0
    %v3116 = vadd.f32 0.0, %v3115
    %v3117 = vpop.f32.mrf.mxu0
    %v3118 = vadd.f32 0.0, %v3117
    %3119 = vmatmul.bf16.gmra.mxu0 %v2984
    %v3120 = vpop.f32.mrf.mxu0
    %v3121 = vadd.f32 0.0, %v3120
    %v3122 = vpop.f32.mrf.mxu0
    %v3123 = vadd.f32 0.0, %v3122
    %3124 = vmatmul.bf16.gmra.mxu0 %v2987
    %v3125 = vpop.f32.mrf.mxu0
    %v3126 = vadd.f32 0.0, %v3125
    %v3127 = vpop.f32.mrf.mxu0
    %v3128 = vadd.f32 0.0, %v3127
    %3129 = vmatmul.bf16.gmra.mxu0 %v2990
    %v3130 = vpop.f32.mrf.mxu0
    %v3131 = vadd.f32 0.0, %v3130
    %v3132 = vpop.f32.mrf.mxu0
    %v3133 = vadd.f32 0.0, %v3132
    %3134 = vmatmul.bf16.gmra.mxu0 %v2993
    %v3135 = vpop.f32.mrf.mxu0
    %v3136 = vadd.f32 0.0, %v3135
    %v3137 = vpop.f32.mrf.mxu0
    %v3138 = vadd.f32 0.0, %v3137
    %3139 = vmatmul.bf16.gmra.mxu0 %v2996
    %v3140 = vpop.f32.mrf.mxu0
    %v3141 = vadd.f32 0.0, %v3140
    %v3142 = vpop.f32.mrf.mxu0
    %v3143 = vadd.f32 0.0, %v3142
    %3144 = vmatmul.bf16.gmra.mxu0 %v2999
    %v3145 = vpop.f32.mrf.mxu0
    %v3146 = vadd.f32 0.0, %v3145
    %v3147 = vpop.f32.mrf.mxu0
    %v3148 = vadd.f32 0.0, %v3147
    %3149 = vmatmul.bf16.gmra.mxu0 %v3002
    %v3150 = vpop.f32.mrf.mxu0
    %v3151 = vadd.f32 0.0, %v3150
    %v3152 = vpop.f32.mrf.mxu0
    %v3153 = vadd.f32 0.0, %v3152
    %3154 = vmatmul.bf16.gmra.mxu0 %v3005
    %v3155 = vpop.f32.mrf.mxu0
    %v3156 = vadd.f32 0.0, %v3155
    %v3157 = vpop.f32.mrf.mxu0
    %v3158 = vadd.f32 0.0, %v3157
    %3159 = vmatmul.bf16.gmra.mxu0 %v3008
    %v3160 = vpop.f32.mrf.mxu0
    %v3161 = vadd.f32 0.0, %v3160
    %v3162 = vpop.f32.mrf.mxu0
    %v3163 = vadd.f32 0.0, %v3162
    %3164 = vmatmul.bf16.gmra.mxu0 %v3011
    %v3165 = vpop.f32.mrf.mxu0
    %v3166 = vadd.f32 0.0, %v3165
    %v3167 = vpop.f32.mrf.mxu0
    %v3168 = vadd.f32 0.0, %v3167
    %3169 = vmatmul.bf16.gmra.mxu0 %v3014
    %v3170 = vpop.f32.mrf.mxu0
    %v3171 = vadd.f32 0.0, %v3170
    %v3172 = vpop.f32.mrf.mxu0
    %v3173 = vadd.f32 0.0, %v3172
    %3174 = vmatmul.bf16.gmra.mxu0 %v3017
    %v3175 = vpop.f32.mrf.mxu0
    %v3176 = vadd.f32 0.0, %v3175
    %v3177 = vpop.f32.mrf.mxu0
    %v3178 = vadd.f32 0.0, %v3177
    %3179 = vmatmul.bf16.gmra.mxu0 %v3020
    %v3180 = vpop.f32.mrf.mxu0
    %v3181 = vadd.f32 0.0, %v3180
    %v3182 = vpop.f32.mrf.mxu0
    %v3183 = vadd.f32 0.0, %v3182
    %3184 = vmatmul.bf16.gmra.mxu0 %v3023
    %v3185 = vpop.f32.mrf.mxu0
    %v3186 = vadd.f32 0.0, %v3185
    %v3187 = vpop.f32.mrf.mxu0
    %v3188 = vadd.f32 0.0, %v3187
    %3189 = vmatmul.bf16.gmra.mxu0 %v3026
    %v3190 = vpop.f32.mrf.mxu0
    %v3191 = vadd.f32 0.0, %v3190
    %v3192 = vpop.f32.mrf.mxu0
    %v3193 = vadd.f32 0.0, %v3192
    %3194 = vmatmul.bf16.gmra.mxu0 %v3029
    %v3195 = vpop.f32.mrf.mxu0
    %v3196 = vadd.f32 0.0, %v3195
    %v3197 = vpop.f32.mrf.mxu0
    %v3198 = vadd.f32 0.0, %v3197
    %3199 = vdwg.mxu0
    %v3200 = vadd.f32 %v2743, %v3041
    %v3201 = vadd.f32 %v2745, %v3043
    %v3202 = vadd.f32 %v2748, %v3046
    %v3203 = vadd.f32 %v2750, %v3048
    %v3204 = vadd.f32 %v2753, %v3051
    %v3205 = vadd.f32 %v2755, %v3053
    %v3206 = vadd.f32 %v2758, %v3056
    %v3207 = vadd.f32 %v2760, %v3058
    %v3208 = vadd.f32 %v2763, %v3061
    %v3209 = vadd.f32 %v2765, %v3063
    %v3210 = vadd.f32 %v2768, %v3066
    %v3211 = vadd.f32 %v2770, %v3068
    %v3212 = vadd.f32 %v2773, %v3071
    %v3213 = vadd.f32 %v2775, %v3073
    %v3214 = vadd.f32 %v2778, %v3076
    %v3215 = vadd.f32 %v2780, %v3078
    %v3216 = vadd.f32 %v2783, %v3081
    %v3217 = vadd.f32 %v2785, %v3083
    %v3218 = vadd.f32 %v2788, %v3086
    %v3219 = vadd.f32 %v2790, %v3088
    %v3220 = vadd.f32 %v2793, %v3091
    %v3221 = vadd.f32 %v2795, %v3093
    %v3222 = vadd.f32 %v2798, %v3096
    %v3223 = vadd.f32 %v2800, %v3098
    %v3224 = vadd.f32 %v2803, %v3101
    %v3225 = vadd.f32 %v2805, %v3103
    %v3226 = vadd.f32 %v2808, %v3106
    %v3227 = vadd.f32 %v2810, %v3108
    %v3228 = vadd.f32 %v2813, %v3111
    %v3229 = vadd.f32 %v2815, %v3113
    %v3230 = vadd.f32 %v2818, %v3116
    %v3231 = vadd.f32 %v2820, %v3118
    %v3232 = vadd.f32 %v2823, %v3121
    %v3233 = vadd.f32 %v2825, %v3123
    %v3234 = vadd.f32 %v2828, %v3126
    %v3235 = vadd.f32 %v2830, %v3128
    %v3236 = vadd.f32 %v2833, %v3131
    %v3237 = vadd.f32 %v2835, %v3133
    %v3238 = vadd.f32 %v2838, %v3136
    %v3239 = vadd.f32 %v2840, %v3138
    %v3240 = vadd.f32 %v2843, %v3141
    %v3241 = vadd.f32 %v2845, %v3143
    %v3242 = vadd.f32 %v2848, %v3146
    %v3243 = vadd.f32 %v2850, %v3148
    %v3244 = vadd.f32 %v2853, %v3151
    %v3245 = vadd.f32 %v2855, %v3153
    %v3246 = vadd.f32 %v2858, %v3156
    %v3247 = vadd.f32 %v2860, %v3158
    %v3248 = vadd.f32 %v2863, %v3161
    %v3249 = vadd.f32 %v2865, %v3163
    %v3250 = vadd.f32 %v2868, %v3166
    %v3251 = vadd.f32 %v2870, %v3168
    %v3252 = vadd.f32 %v2873, %v3171
    %v3253 = vadd.f32 %v2875, %v3173
    %v3254 = vadd.f32 %v2878, %v3176
    %v3255 = vadd.f32 %v2880, %v3178
    %v3256 = vadd.f32 %v2883, %v3181
    %v3257 = vadd.f32 %v2885, %v3183
    %v3258 = vadd.f32 %v2888, %v3186
    %v3259 = vadd.f32 %v2890, %v3188
    %v3260 = vadd.f32 %v2893, %v3191
    %v3261 = vadd.f32 %v2895, %v3193
    %v3262 = vadd.f32 %v2898, %v3196
    %v3263 = vadd.f32 %v2900, %v3198
    %v3264 = vld [vmem:[%s4] sm:$0x1]
    %v3266 = vperm.slane %v3264, 0
    %v3268 = vadd.f32 %v3200, %v3266
    %v3269 = vadd.f32 %v3201, %v3266
    %v3270 = vadd.f32 %v3202, %v3266
    %v3271 = vadd.f32 %v3203, %v3266
    %v3272 = vadd.f32 %v3204, %v3266
    %v3273 = vadd.f32 %v3205, %v3266
    %v3274 = vadd.f32 %v3206, %v3266
    %v3275 = vadd.f32 %v3207, %v3266
    %v3276 = vadd.f32 %v3208, %v3266
    %v3277 = vadd.f32 %v3209, %v3266
    %v3278 = vadd.f32 %v3210, %v3266
    %v3279 = vadd.f32 %v3211, %v3266
    %v3280 = vadd.f32 %v3212, %v3266
    %v3281 = vadd.f32 %v3213, %v3266
    %v3282 = vadd.f32 %v3214, %v3266
    %v3283 = vadd.f32 %v3215, %v3266
    %v3284 = vadd.f32 %v3216, %v3266
    %v3285 = vadd.f32 %v3217, %v3266
    %v3286 = vadd.f32 %v3218, %v3266
    %v3287 = vadd.f32 %v3219, %v3266
    %v3288 = vadd.f32 %v3220, %v3266
    %v3289 = vadd.f32 %v3221, %v3266
    %v3290 = vadd.f32 %v3222, %v3266
    %v3291 = vadd.f32 %v3223, %v3266
    %v3292 = vadd.f32 %v3224, %v3266
    %v3293 = vadd.f32 %v3225, %v3266
    %v3294 = vadd.f32 %v3226, %v3266
    %v3295 = vadd.f32 %v3227, %v3266
    %v3296 = vadd.f32 %v3228, %v3266
    %v3297 = vadd.f32 %v3229, %v3266
    %v3298 = vadd.f32 %v3230, %v3266
    %v3299 = vadd.f32 %v3231, %v3266
    %v3300 = vadd.f32 %v3232, %v3266
    %v3301 = vadd.f32 %v3233, %v3266
    %v3302 = vadd.f32 %v3234, %v3266
    %v3303 = vadd.f32 %v3235, %v3266
    %v3304 = vadd.f32 %v3236, %v3266
    %v3305 = vadd.f32 %v3237, %v3266
    %v3306 = vadd.f32 %v3238, %v3266
    %v3307 = vadd.f32 %v3239, %v3266
    %v3308 = vadd.f32 %v3240, %v3266
    %v3309 = vadd.f32 %v3241, %v3266
    %v3310 = vadd.f32 %v3242, %v3266
    %v3311 = vadd.f32 %v3243, %v3266
    %v3312 = vadd.f32 %v3244, %v3266
    %v3313 = vadd.f32 %v3245, %v3266
    %v3314 = vadd.f32 %v3246, %v3266
    %v3315 = vadd.f32 %v3247, %v3266
    %v3316 = vadd.f32 %v3248, %v3266
    %v3317 = vadd.f32 %v3249, %v3266
    %v3318 = vadd.f32 %v3250, %v3266
    %v3319 = vadd.f32 %v3251, %v3266
    %v3320 = vadd.f32 %v3252, %v3266
    %v3321 = vadd.f32 %v3253, %v3266
    %v3322 = vadd.f32 %v3254, %v3266
    %v3323 = vadd.f32 %v3255, %v3266
    %v3324 = vadd.f32 %v3256, %v3266
    %v3325 = vadd.f32 %v3257, %v3266
    %v3326 = vadd.f32 %v3258, %v3266
    %v3327 = vadd.f32 %v3259, %v3266
    %v3328 = vadd.f32 %v3260, %v3266
    %v3329 = vadd.f32 %v3261, %v3266
    %v3330 = vadd.f32 %v3262, %v3266
    %v3331 = vadd.f32 %v3263, %v3266
    %v3332 = vmax.f32 %v3268, 0.0
    %v3333 = vmax.f32 %v3269, 0.0
    %v3334 = vmax.f32 %v3270, 0.0
    %v3335 = vmax.f32 %v3271, 0.0
    %v3336 = vmax.f32 %v3272, 0.0
    %v3337 = vmax.f32 %v3273, 0.0
    %v3338 = vmax.f32 %v3274, 0.0
    %v3339 = vmax.f32 %v3275, 0.0
    %v3340 = vmax.f32 %v3276, 0.0
    %v3341 = vmax.f32 %v3277, 0.0
    %v3342 = vmax.f32 %v3278, 0.0
    %v3343 = vmax.f32 %v3279, 0.0
    %v3344 = vmax.f32 %v3280, 0.0
    %v3345 = vmax.f32 %v3281, 0.0
    %v3346 = vmax.f32 %v3282, 0.0
    %v3347 = vmax.f32 %v3283, 0.0
    %v3348 = vmax.f32 %v3284, 0.0
    %v3349 = vmax.f32 %v3285, 0.0
    %v3350 = vmax.f32 %v3286, 0.0
    %v3351 = vmax.f32 %v3287, 0.0
    %v3352 = vmax.f32 %v3288, 0.0
    %v3353 = vmax.f32 %v3289, 0.0
    %v3354 = vmax.f32 %v3290, 0.0
    %v3355 = vmax.f32 %v3291, 0.0
    %v3356 = vmax.f32 %v3292, 0.0
    %v3357 = vmax.f32 %v3293, 0.0
    %v3358 = vmax.f32 %v3294, 0.0
    %v3359 = vmax.f32 %v3295, 0.0
    %v3360 = vmax.f32 %v3296, 0.0
    %v3361 = vmax.f32 %v3297, 0.0
    %v3362 = vmax.f32 %v3298, 0.0
    %v3363 = vmax.f32 %v3299, 0.0
    %v3364 = vmax.f32 %v3300, 0.0
    %v3365 = vmax.f32 %v3301, 0.0
    %v3366 = vmax.f32 %v3302, 0.0
    %v3367 = vmax.f32 %v3303, 0.0
    %v3368 = vmax.f32 %v3304, 0.0
    %v3369 = vmax.f32 %v3305, 0.0
    %v3370 = vmax.f32 %v3306, 0.0
    %v3371 = vmax.f32 %v3307, 0.0
    %v3372 = vmax.f32 %v3308, 0.0
    %v3373 = vmax.f32 %v3309, 0.0
    %v3374 = vmax.f32 %v3310, 0.0
    %v3375 = vmax.f32 %v3311, 0.0
    %v3376 = vmax.f32 %v3312, 0.0
    %v3377 = vmax.f32 %v3313, 0.0
    %v3378 = vmax.f32 %v3314, 0.0
    %v3379 = vmax.f32 %v3315, 0.0
    %v3380 = vmax.f32 %v3316, 0.0
    %v3381 = vmax.f32 %v3317, 0.0
    %v3382 = vmax.f32 %v3318, 0.0
    %v3383 = vmax.f32 %v3319, 0.0
    %v3384 = vmax.f32 %v3320, 0.0
    %v3385 = vmax.f32 %v3321, 0.0
    %v3386 = vmax.f32 %v3322, 0.0
    %v3387 = vmax.f32 %v3323, 0.0
    %v3388 = vmax.f32 %v3324, 0.0
    %v3389 = vmax.f32 %v3325, 0.0
    %v3390 = vmax.f32 %v3326, 0.0
    %v3391 = vmax.f32 %v3327, 0.0
    %v3392 = vmax.f32 %v3328, 0.0
    %v3393 = vmax.f32 %v3329, 0.0
    %v3394 = vmax.f32 %v3330, 0.0
    %v3395 = vmax.f32 %v3331, 0.0
    %v3396 = vpack.c.bf16 %v3333, %v3332
    %v3397 = vpack.c.bf16 %v3335, %v3334
    %v3398 = vpack.c.bf16 %v3337, %v3336
    %v3399 = vpack.c.bf16 %v3339, %v3338
    %v3400 = vpack.c.bf16 %v3341, %v3340
    %v3401 = vpack.c.bf16 %v3343, %v3342
    %v3402 = vpack.c.bf16 %v3345, %v3344
    %v3403 = vpack.c.bf16 %v3347, %v3346
    %v3404 = vpack.c.bf16 %v3349, %v3348
    %v3405 = vpack.c.bf16 %v3351, %v3350
    %v3406 = vpack.c.bf16 %v3353, %v3352
    %v3407 = vpack.c.bf16 %v3355, %v3354
    %v3408 = vpack.c.bf16 %v3357, %v3356
    %v3409 = vpack.c.bf16 %v3359, %v3358
    %v3410 = vpack.c.bf16 %v3361, %v3360
    %v3411 = vpack.c.bf16 %v3363, %v3362
    %v3412 = vpack.c.bf16 %v3365, %v3364
    %v3413 = vpack.c.bf16 %v3367, %v3366
    %v3414 = vpack.c.bf16 %v3369, %v3368
    %v3415 = vpack.c.bf16 %v3371, %v3370
    %v3416 = vpack.c.bf16 %v3373, %v3372
    %v3417 = vpack.c.bf16 %v3375, %v3374
    %v3418 = vpack.c.bf16 %v3377, %v3376
    %v3419 = vpack.c.bf16 %v3379, %v3378
    %v3420 = vpack.c.bf16 %v3381, %v3380
    %v3421 = vpack.c.bf16 %v3383, %v3382
    %v3422 = vpack.c.bf16 %v3385, %v3384
    %v3423 = vpack.c.bf16 %v3387, %v3386
    %v3424 = vpack.c.bf16 %v3389, %v3388
    %v3425 = vpack.c.bf16 %v3391, %v3390
    %v3426 = vpack.c.bf16 %v3393, %v3392
    %v3427 = vpack.c.bf16 %v3395, %v3394
    %v3428 = vrot.slane %v3332, 7
    %v3429 = vrot.slane %v3333, 7
    %v3430 = vrot.slane %v3334, 7
    %v3431 = vrot.slane %v3335, 7
    %v3432 = vrot.slane %v3336, 7
    %v3433 = vrot.slane %v3337, 7
    %v3434 = vrot.slane %v3338, 7
    %v3435 = vrot.slane %v3339, 7
    %v3436 = vrot.slane %v3340, 7
    %v3437 = vrot.slane %v3341, 7
    %v3438 = vrot.slane %v3342, 7
    %v3439 = vrot.slane %v3343, 7
    %v3440 = vrot.slane %v3344, 7
    %v3441 = vrot.slane %v3345, 7
    %v3442 = vrot.slane %v3346, 7
    %v3443 = vrot.slane %v3347, 7
    %v3444 = vrot.slane %v3348, 7
    %v3445 = vrot.slane %v3349, 7
    %v3446 = vrot.slane %v3350, 7
    %v3447 = vrot.slane %v3351, 7
    %v3448 = vrot.slane %v3352, 7
    %v3449 = vrot.slane %v3353, 7
    %v3450 = vrot.slane %v3354, 7
    %v3451 = vrot.slane %v3355, 7
    %v3452 = vrot.slane %v3356, 7
    %v3453 = vrot.slane %v3357, 7
    %v3454 = vrot.slane %v3358, 7
    %v3455 = vrot.slane %v3359, 7
    %v3456 = vrot.slane %v3360, 7
    %v3457 = vrot.slane %v3361, 7
    %v3458 = vrot.slane %v3362, 7
    %v3459 = vrot.slane %v3363, 7
    %v3460 = vrot.slane %v3364, 7
    %v3461 = vrot.slane %v3365, 7
    %v3462 = vrot.slane %v3366, 7
    %v3463 = vrot.slane %v3367, 7
    %v3464 = vrot.slane %v3368, 7
    %v3465 = vrot.slane %v3369, 7
    %v3466 = vrot.slane %v3370, 7
    %v3467 = vrot.slane %v3371, 7
    %v3468 = vrot.slane %v3372, 7
    %v3469 = vrot.slane %v3373, 7
    %v3470 = vrot.slane %v3374, 7
    %v3471 = vrot.slane %v3375, 7
    %v3472 = vrot.slane %v3376, 7
    %v3473 = vrot.slane %v3377, 7
    %v3474 = vrot.slane %v3378, 7
    %v3475 = vrot.slane %v3379, 7
    %v3476 = vrot.slane %v3380, 7
    %v3477 = vrot.slane %v3381, 7
    %v3478 = vrot.slane %v3382, 7
    %v3479 = vrot.slane %v3383, 7
    %v3480 = vrot.slane %v3384, 7
    %v3481 = vrot.slane %v3385, 7
    %v3482 = vrot.slane %v3386, 7
    %v3483 = vrot.slane %v3387, 7
    %v3484 = vrot.slane %v3388, 7
    %v3485 = vrot.slane %v3389, 7
    %v3486 = vrot.slane %v3390, 7
    %v3487 = vrot.slane %v3391, 7
    %v3488 = vrot.slane %v3392, 7
    %v3489 = vrot.slane %v3393, 7
    %v3490 = vrot.slane %v3394, 7
    %v3491 = vrot.slane %v3395, 7
    %v3492 = vsel %vm1664, %v3490, %v3491
    %v3493 = vsel %vm1664, %v3489, %v3490
    %v3494 = vsel %vm1664, %v3488, %v3489
    %v3495 = vsel %vm1664, %v3487, %v3488
    %v3496 = vsel %vm1664, %v3486, %v3487
    %v3497 = vsel %vm1664, %v3485, %v3486
    %v3498 = vsel %vm1664, %v3484, %v3485
    %v3499 = vsel %vm1664, %v3483, %v3484
    %v3500 = vsel %vm1664, %v3482, %v3483
    %v3501 = vsel %vm1664, %v3481, %v3482
    %v3502 = vsel %vm1664, %v3480, %v3481
    %v3503 = vsel %vm1664, %v3479, %v3480
    %v3504 = vsel %vm1664, %v3478, %v3479
    %v3505 = vsel %vm1664, %v3477, %v3478
    %v3506 = vsel %vm1664, %v3476, %v3477
    %v3507 = vsel %vm1664, %v3475, %v3476
    %v3508 = vsel %vm1664, %v3474, %v3475
    %v3509 = vsel %vm1664, %v3473, %v3474
    %v3510 = vsel %vm1664, %v3472, %v3473
    %v3511 = vsel %vm1664, %v3471, %v3472
    %v3512 = vsel %vm1664, %v3470, %v3471
    %v3513 = vsel %vm1664, %v3469, %v3470
    %v3514 = vsel %vm1664, %v3468, %v3469
    %v3515 = vsel %vm1664, %v3467, %v3468
    %v3516 = vsel %vm1664, %v3466, %v3467
    %v3517 = vsel %vm1664, %v3465, %v3466
    %v3518 = vsel %vm1664, %v3464, %v3465
    %v3519 = vsel %vm1664, %v3463, %v3464
    %v3520 = vsel %vm1664, %v3462, %v3463
    %v3521 = vsel %vm1664, %v3461, %v3462
    %v3522 = vsel %vm1664, %v3460, %v3461
    %v3523 = vsel %vm1664, %v3459, %v3460
    %v3524 = vsel %vm1664, %v3458, %v3459
    %v3525 = vsel %vm1664, %v3457, %v3458
    %v3526 = vsel %vm1664, %v3456, %v3457
    %v3527 = vsel %vm1664, %v3455, %v3456
    %v3528 = vsel %vm1664, %v3454, %v3455
    %v3529 = vsel %vm1664, %v3453, %v3454
    %v3530 = vsel %vm1664, %v3452, %v3453
    %v3531 = vsel %vm1664, %v3451, %v3452
    %v3532 = vsel %vm1664, %v3450, %v3451
    %v3533 = vsel %vm1664, %v3449, %v3450
    %v3534 = vsel %vm1664, %v3448, %v3449
    %v3535 = vsel %vm1664, %v3447, %v3448
    %v3536 = vsel %vm1664, %v3446, %v3447
    %v3537 = vsel %vm1664, %v3445, %v3446
    %v3538 = vsel %vm1664, %v3444, %v3445
    %v3539 = vsel %vm1664, %v3443, %v3444
    %v3540 = vsel %vm1664, %v3442, %v3443
    %v3541 = vsel %vm1664, %v3441, %v3442
    %v3542 = vsel %vm1664, %v3440, %v3441
    %v3543 = vsel %vm1664, %v3439, %v3440
    %v3544 = vsel %vm1664, %v3438, %v3439
    %v3545 = vsel %vm1664, %v3437, %v3438
    %v3546 = vsel %vm1664, %v3436, %v3437
    %v3547 = vsel %vm1664, %v3435, %v3436
    %v3548 = vsel %vm1664, %v3434, %v3435
    %v3549 = vsel %vm1664, %v3433, %v3434
    %v3550 = vsel %vm1664, %v3432, %v3433
    %v3551 = vsel %vm1664, %v3431, %v3432
    %v3552 = vsel %vm1664, %v3430, %v3431
    %v3553 = vsel %vm1664, %v3429, %v3430
    %v3554 = vsel %vm1664, %v3428, %v3429
    %v3555 = vsel %vm1664, %v3491, %v3428
    %v3556 = vsel %vm1793, 0.0, %v3555
    %v3557 = vsel %vm1794, 0.0, %v3554
    %v3558 = vsel %vm1795, 0.0, %v3553
    %v3559 = vsel %vm1796, 0.0, %v3552
    %v3560 = vsel %vm1797, 0.0, %v3551
    %v3561 = vsel %vm1798, 0.0, %v3550
    %v3562 = vsel %vm1799, 0.0, %v3549
    %v3563 = vsel %vm1800, 0.0, %v3548
    %v3564 = vsel %vm1801, 0.0, %v3547
    %v3565 = vsel %vm1802, 0.0, %v3546
    %v3566 = vsel %vm1803, 0.0, %v3545
    %v3567 = vsel %vm1804, 0.0, %v3544
    %v3568 = vsel %vm1805, 0.0, %v3543
    %v3569 = vsel %vm1806, 0.0, %v3542
    %v3570 = vsel %vm1807, 0.0, %v3541
    %v3571 = vsel %vm1808, 0.0, %v3540
    %v3572 = vsel %vm1809, 0.0, %v3539
    %v3573 = vsel %vm1810, 0.0, %v3538
    %v3574 = vsel %vm1811, 0.0, %v3537
    %v3575 = vsel %vm1812, 0.0, %v3536
    %v3576 = vsel %vm1813, 0.0, %v3535
    %v3577 = vsel %vm1814, 0.0, %v3534
    %v3578 = vsel %vm1815, 0.0, %v3533
    %v3579 = vsel %vm1816, 0.0, %v3532
    %v3580 = vsel %vm1817, 0.0, %v3531
    %v3581 = vsel %vm1818, 0.0, %v3530
    %v3582 = vsel %vm1819, 0.0, %v3529
    %v3583 = vsel %vm1820, 0.0, %v3528
    %v3584 = vsel %vm1821, 0.0, %v3527
    %v3585 = vsel %vm1822, 0.0, %v3526
    %v3586 = vsel %vm1823, 0.0, %v3525
    %v3587 = vsel %vm1824, 0.0, %v3524
    %v3588 = vsel %vm1825, 0.0, %v3523
    %v3589 = vsel %vm1826, 0.0, %v3522
    %v3590 = vsel %vm1827, 0.0, %v3521
    %v3591 = vsel %vm1828, 0.0, %v3520
    %v3592 = vsel %vm1829, 0.0, %v3519
    %v3593 = vsel %vm1830, 0.0, %v3518
    %v3594 = vsel %vm1831, 0.0, %v3517
    %v3595 = vsel %vm1832, 0.0, %v3516
    %v3596 = vsel %vm1833, 0.0, %v3515
    %v3597 = vsel %vm1834, 0.0, %v3514
    %v3598 = vsel %vm1835, 0.0, %v3513
    %v3599 = vsel %vm1836, 0.0, %v3512
    %v3600 = vsel %vm1837, 0.0, %v3511
    %v3601 = vsel %vm1838, 0.0, %v3510
    %v3602 = vsel %vm1839, 0.0, %v3509
    %v3603 = vsel %vm1840, 0.0, %v3508
    %v3604 = vsel %vm1841, 0.0, %v3507
    %v3605 = vsel %vm1842, 0.0, %v3506
    %v3606 = vsel %vm1843, 0.0, %v3505
    %v3607 = vsel %vm1844, 0.0, %v3504
    %v3608 = vsel %vm1845, 0.0, %v3503
    %v3609 = vsel %vm1846, 0.0, %v3502
    %v3610 = vsel %vm1847, 0.0, %v3501
    %v3611 = vsel %vm1848, 0.0, %v3500
    %v3612 = vsel %vm1849, 0.0, %v3499
    %v3613 = vsel %vm1850, 0.0, %v3498
    %v3614 = vsel %vm1851, 0.0, %v3497
    %v3615 = vsel %vm1852, 0.0, %v3496
    %v3616 = vsel %vm1853, 0.0, %v3495
    %v3617 = vsel %vm1854, 0.0, %v3494
    %v3618 = vsel %vm1855, 0.0, %v3493
    %v3619 = vsel %vm1856, 0.0, %v3492
    %v3620 = vpack.c.bf16 %v3557, %v3556
    %v3621 = vpack.c.bf16 %v3559, %v3558
    %v3622 = vpack.c.bf16 %v3561, %v3560
    %v3623 = vpack.c.bf16 %v3563, %v3562
    %v3624 = vpack.c.bf16 %v3565, %v3564
    %v3625 = vpack.c.bf16 %v3567, %v3566
    %v3626 = vpack.c.bf16 %v3569, %v3568
    %v3627 = vpack.c.bf16 %v3571, %v3570
    %v3628 = vpack.c.bf16 %v3573, %v3572
    %v3629 = vpack.c.bf16 %v3575, %v3574
    %v3630 = vpack.c.bf16 %v3577, %v3576
    %v3631 = vpack.c.bf16 %v3579, %v3578
    %v3632 = vpack.c.bf16 %v3581, %v3580
    %v3633 = vpack.c.bf16 %v3583, %v3582
    %v3634 = vpack.c.bf16 %v3585, %v3584
    %v3635 = vpack.c.bf16 %v3587, %v3586
    %v3636 = vpack.c.bf16 %v3589, %v3588
    %v3637 = vpack.c.bf16 %v3591, %v3590
    %v3638 = vpack.c.bf16 %v3593, %v3592
    %v3639 = vpack.c.bf16 %v3595, %v3594
    %v3640 = vpack.c.bf16 %v3597, %v3596
    %v3641 = vpack.c.bf16 %v3599, %v3598
    %v3642 = vpack.c.bf16 %v3601, %v3600
    %v3643 = vpack.c.bf16 %v3603, %v3602
    %v3644 = vpack.c.bf16 %v3605, %v3604
    %v3645 = vpack.c.bf16 %v3607, %v3606
    %v3646 = vpack.c.bf16 %v3609, %v3608
    %v3647 = vpack.c.bf16 %v3611, %v3610
    %v3648 = vpack.c.bf16 %v3613, %v3612
    %v3649 = vpack.c.bf16 %v3615, %v3614
    %v3650 = vpack.c.bf16 %v3617, %v3616
    %v3651 = vpack.c.bf16 %v3619, %v3618
    %v3652 = vrot.slane %v3332, 1
    %v3653 = vrot.slane %v3333, 1
    %v3654 = vrot.slane %v3334, 1
    %v3655 = vrot.slane %v3335, 1
    %v3656 = vrot.slane %v3336, 1
    %v3657 = vrot.slane %v3337, 1
    %v3658 = vrot.slane %v3338, 1
    %v3659 = vrot.slane %v3339, 1
    %v3660 = vrot.slane %v3340, 1
    %v3661 = vrot.slane %v3341, 1
    %v3662 = vrot.slane %v3342, 1
    %v3663 = vrot.slane %v3343, 1
    %v3664 = vrot.slane %v3344, 1
    %v3665 = vrot.slane %v3345, 1
    %v3666 = vrot.slane %v3346, 1
    %v3667 = vrot.slane %v3347, 1
    %v3668 = vrot.slane %v3348, 1
    %v3669 = vrot.slane %v3349, 1
    %v3670 = vrot.slane %v3350, 1
    %v3671 = vrot.slane %v3351, 1
    %v3672 = vrot.slane %v3352, 1
    %v3673 = vrot.slane %v3353, 1
    %v3674 = vrot.slane %v3354, 1
    %v3675 = vrot.slane %v3355, 1
    %v3676 = vrot.slane %v3356, 1
    %v3677 = vrot.slane %v3357, 1
    %v3678 = vrot.slane %v3358, 1
    %v3679 = vrot.slane %v3359, 1
    %v3680 = vrot.slane %v3360, 1
    %v3681 = vrot.slane %v3361, 1
    %v3682 = vrot.slane %v3362, 1
    %v3683 = vrot.slane %v3363, 1
    %v3684 = vrot.slane %v3364, 1
    %v3685 = vrot.slane %v3365, 1
    %v3686 = vrot.slane %v3366, 1
    %v3687 = vrot.slane %v3367, 1
    %v3688 = vrot.slane %v3368, 1
    %v3689 = vrot.slane %v3369, 1
    %v3690 = vrot.slane %v3370, 1
    %v3691 = vrot.slane %v3371, 1
    %v3692 = vrot.slane %v3372, 1
    %v3693 = vrot.slane %v3373, 1
    %v3694 = vrot.slane %v3374, 1
    %v3695 = vrot.slane %v3375, 1
    %v3696 = vrot.slane %v3376, 1
    %v3697 = vrot.slane %v3377, 1
    %v3698 = vrot.slane %v3378, 1
    %v3699 = vrot.slane %v3379, 1
    %v3700 = vrot.slane %v3380, 1
    %v3701 = vrot.slane %v3381, 1
    %v3702 = vrot.slane %v3382, 1
    %v3703 = vrot.slane %v3383, 1
    %v3704 = vrot.slane %v3384, 1
    %v3705 = vrot.slane %v3385, 1
    %v3706 = vrot.slane %v3386, 1
    %v3707 = vrot.slane %v3387, 1
    %v3708 = vrot.slane %v3388, 1
    %v3709 = vrot.slane %v3389, 1
    %v3710 = vrot.slane %v3390, 1
    %v3711 = vrot.slane %v3391, 1
    %v3712 = vrot.slane %v3392, 1
    %v3713 = vrot.slane %v3393, 1
    %v3714 = vrot.slane %v3394, 1
    %v3715 = vrot.slane %v3395, 1
    %v3716 = vsel %vm2017, %v3714, %v3715
    %v3717 = vsel %vm2017, %v3713, %v3714
    %v3718 = vsel %vm2017, %v3712, %v3713
    %v3719 = vsel %vm2017, %v3711, %v3712
    %v3720 = vsel %vm2017, %v3710, %v3711
    %v3721 = vsel %vm2017, %v3709, %v3710
    %v3722 = vsel %vm2017, %v3708, %v3709
    %v3723 = vsel %vm2017, %v3707, %v3708
    %v3724 = vsel %vm2017, %v3706, %v3707
    %v3725 = vsel %vm2017, %v3705, %v3706
    %v3726 = vsel %vm2017, %v3704, %v3705
    %v3727 = vsel %vm2017, %v3703, %v3704
    %v3728 = vsel %vm2017, %v3702, %v3703
    %v3729 = vsel %vm2017, %v3701, %v3702
    %v3730 = vsel %vm2017, %v3700, %v3701
    %v3731 = vsel %vm2017, %v3699, %v3700
    %v3732 = vsel %vm2017, %v3698, %v3699
    %v3733 = vsel %vm2017, %v3697, %v3698
    %v3734 = vsel %vm2017, %v3696, %v3697
    %v3735 = vsel %vm2017, %v3695, %v3696
    %v3736 = vsel %vm2017, %v3694, %v3695
    %v3737 = vsel %vm2017, %v3693, %v3694
    %v3738 = vsel %vm2017, %v3692, %v3693
    %v3739 = vsel %vm2017, %v3691, %v3692
    %v3740 = vsel %vm2017, %v3690, %v3691
    %v3741 = vsel %vm2017, %v3689, %v3690
    %v3742 = vsel %vm2017, %v3688, %v3689
    %v3743 = vsel %vm2017, %v3687, %v3688
    %v3744 = vsel %vm2017, %v3686, %v3687
    %v3745 = vsel %vm2017, %v3685, %v3686
    %v3746 = vsel %vm2017, %v3684, %v3685
    %v3747 = vsel %vm2017, %v3683, %v3684
    %v3748 = vsel %vm2017, %v3682, %v3683
    %v3749 = vsel %vm2017, %v3681, %v3682
    %v3750 = vsel %vm2017, %v3680, %v3681
    %v3751 = vsel %vm2017, %v3679, %v3680
    %v3752 = vsel %vm2017, %v3678, %v3679
    %v3753 = vsel %vm2017, %v3677, %v3678
    %v3754 = vsel %vm2017, %v3676, %v3677
    %v3755 = vsel %vm2017, %v3675, %v3676
    %v3756 = vsel %vm2017, %v3674, %v3675
    %v3757 = vsel %vm2017, %v3673, %v3674
    %v3758 = vsel %vm2017, %v3672, %v3673
    %v3759 = vsel %vm2017, %v3671, %v3672
    %v3760 = vsel %vm2017, %v3670, %v3671
    %v3761 = vsel %vm2017, %v3669, %v3670
    %v3762 = vsel %vm2017, %v3668, %v3669
    %v3763 = vsel %vm2017, %v3667, %v3668
    %v3764 = vsel %vm2017, %v3666, %v3667
    %v3765 = vsel %vm2017, %v3665, %v3666
    %v3766 = vsel %vm2017, %v3664, %v3665
    %v3767 = vsel %vm2017, %v3663, %v3664
    %v3768 = vsel %vm2017, %v3662, %v3663
    %v3769 = vsel %vm2017, %v3661, %v3662
    %v3770 = vsel %vm2017, %v3660, %v3661
    %v3771 = vsel %vm2017, %v3659, %v3660
    %v3772 = vsel %vm2017, %v3658, %v3659
    %v3773 = vsel %vm2017, %v3657, %v3658
    %v3774 = vsel %vm2017, %v3656, %v3657
    %v3775 = vsel %vm2017, %v3655, %v3656
    %v3776 = vsel %vm2017, %v3654, %v3655
    %v3777 = vsel %vm2017, %v3653, %v3654
    %v3778 = vsel %vm2017, %v3652, %v3653
    %v3779 = vsel %vm2017, %v3715, %v3652
    %v3780 = vsel %vm2146, 0.0, %v3778
    %v3781 = vsel %vm2147, 0.0, %v3777
    %v3782 = vsel %vm2148, 0.0, %v3776
    %v3783 = vsel %vm2149, 0.0, %v3775
    %v3784 = vsel %vm2150, 0.0, %v3774
    %v3785 = vsel %vm2151, 0.0, %v3773
    %v3786 = vsel %vm2152, 0.0, %v3772
    %v3787 = vsel %vm2153, 0.0, %v3771
    %v3788 = vsel %vm2154, 0.0, %v3770
    %v3789 = vsel %vm2155, 0.0, %v3769
    %v3790 = vsel %vm2156, 0.0, %v3768
    %v3791 = vsel %vm2157, 0.0, %v3767
    %v3792 = vsel %vm2158, 0.0, %v3766
    %v3793 = vsel %vm2159, 0.0, %v3765
    %v3794 = vsel %vm2160, 0.0, %v3764
    %v3795 = vsel %vm2161, 0.0, %v3763
    %v3796 = vsel %vm2162, 0.0, %v3762
    %v3797 = vsel %vm2163, 0.0, %v3761
    %v3798 = vsel %vm2164, 0.0, %v3760
    %v3799 = vsel %vm2165, 0.0, %v3759
    %v3800 = vsel %vm2166, 0.0, %v3758
    %v3801 = vsel %vm2167, 0.0, %v3757
    %v3802 = vsel %vm2168, 0.0, %v3756
    %v3803 = vsel %vm2169, 0.0, %v3755
    %v3804 = vsel %vm2170, 0.0, %v3754
    %v3805 = vsel %vm2171, 0.0, %v3753
    %v3806 = vsel %vm2172, 0.0, %v3752
    %v3807 = vsel %vm2173, 0.0, %v3751
    %v3808 = vsel %vm2174, 0.0, %v3750
    %v3809 = vsel %vm2175, 0.0, %v3749
    %v3810 = vsel %vm2176, 0.0, %v3748
    %v3811 = vsel %vm2177, 0.0, %v3747
    %v3812 = vsel %vm2178, 0.0, %v3746
    %v3813 = vsel %vm2179, 0.0, %v3745
    %v3814 = vsel %vm2180, 0.0, %v3744
    %v3815 = vsel %vm2181, 0.0, %v3743
    %v3816 = vsel %vm2182, 0.0, %v3742
    %v3817 = vsel %vm2183, 0.0, %v3741
    %v3818 = vsel %vm2184, 0.0, %v3740
    %v3819 = vsel %vm2185, 0.0, %v3739
    %v3820 = vsel %vm2186, 0.0, %v3738
    %v3821 = vsel %vm2187, 0.0, %v3737
    %v3822 = vsel %vm2188, 0.0, %v3736
    %v3823 = vsel %vm2189, 0.0, %v3735
    %v3824 = vsel %vm2190, 0.0, %v3734
    %v3825 = vsel %vm2191, 0.0, %v3733
    %v3826 = vsel %vm2192, 0.0, %v3732
    %v3827 = vsel %vm2193, 0.0, %v3731
    %v3828 = vsel %vm2194, 0.0, %v3730
    %v3829 = vsel %vm2195, 0.0, %v3729
    %v3830 = vsel %vm2196, 0.0, %v3728
    %v3831 = vsel %vm2197, 0.0, %v3727
    %v3832 = vsel %vm2198, 0.0, %v3726
    %v3833 = vsel %vm2199, 0.0, %v3725
    %v3834 = vsel %vm2200, 0.0, %v3724
    %v3835 = vsel %vm2201, 0.0, %v3723
    %v3836 = vsel %vm2202, 0.0, %v3722
    %v3837 = vsel %vm2203, 0.0, %v3721
    %v3838 = vsel %vm2204, 0.0, %v3720
    %v3839 = vsel %vm2205, 0.0, %v3719
    %v3840 = vsel %vm2206, 0.0, %v3718
    %v3841 = vsel %vm2207, 0.0, %v3717
    %v3842 = vsel %vm2208, 0.0, %v3716
    %v3843 = vsel %vm2209, 0.0, %v3779
    %v3844 = vpack.c.bf16 %v3781, %v3780
    %v3845 = vpack.c.bf16 %v3783, %v3782
    %v3846 = vpack.c.bf16 %v3785, %v3784
    %v3847 = vpack.c.bf16 %v3787, %v3786
    %v3848 = vpack.c.bf16 %v3789, %v3788
    %v3849 = vpack.c.bf16 %v3791, %v3790
    %v3850 = vpack.c.bf16 %v3793, %v3792
    %v3851 = vpack.c.bf16 %v3795, %v3794
    %v3852 = vpack.c.bf16 %v3797, %v3796
    %v3853 = vpack.c.bf16 %v3799, %v3798
    %v3854 = vpack.c.bf16 %v3801, %v3800
    %v3855 = vpack.c.bf16 %v3803, %v3802
    %v3856 = vpack.c.bf16 %v3805, %v3804
    %v3857 = vpack.c.bf16 %v3807, %v3806
    %v3858 = vpack.c.bf16 %v3809, %v3808
    %v3859 = vpack.c.bf16 %v3811, %v3810
    %v3860 = vpack.c.bf16 %v3813, %v3812
    %v3861 = vpack.c.bf16 %v3815, %v3814
    %v3862 = vpack.c.bf16 %v3817, %v3816
    %v3863 = vpack.c.bf16 %v3819, %v3818
    %v3864 = vpack.c.bf16 %v3821, %v3820
    %v3865 = vpack.c.bf16 %v3823, %v3822
    %v3866 = vpack.c.bf16 %v3825, %v3824
    %v3867 = vpack.c.bf16 %v3827, %v3826
    %v3868 = vpack.c.bf16 %v3829, %v3828
    %v3869 = vpack.c.bf16 %v3831, %v3830
    %v3870 = vpack.c.bf16 %v3833, %v3832
    %v3871 = vpack.c.bf16 %v3835, %v3834
    %v3872 = vpack.c.bf16 %v3837, %v3836
    %v3873 = vpack.c.bf16 %v3839, %v3838
    %v3874 = vpack.c.bf16 %v3841, %v3840
    %v3875 = vpack.c.bf16 %v3843, %v3842
    %s3876 = scalar_lea.vmem [#allocation2], 96
    %v3877 = vld [vmem:[%s3876] sm:$0xf]
    %v3878 = vld [vmem:[%s3876 + $0x4] sm:$0xf]
    %v3879 = vld [vmem:[%s3876 + $0x8] sm:$0xf]
    %v3880 = vld [vmem:[%s3876 + $0xc] sm:$0xf]
    %v3881 = vld [vmem:[%s3876 + $0x10] sm:$0xf]
    %v3882 = vld [vmem:[%s3876 + $0x14] sm:$0xf]
    %v3883 = vld [vmem:[%s3876 + $0x18] sm:$0xf]
    %v3884 = vld [vmem:[%s3876 + $0x1c] sm:$0xf]
    %s3885 = scalar_lea.vmem [#allocation2], 128
    %v3886 = vld [vmem:[%s3885] sm:$0xf]
    %v3887 = vld [vmem:[%s3885 + $0x4] sm:$0xf]
    %v3888 = vld [vmem:[%s3885 + $0x8] sm:$0xf]
    %v3889 = vld [vmem:[%s3885 + $0xc] sm:$0xf]
    %v3890 = vld [vmem:[%s3885 + $0x10] sm:$0xf]
    %v3891 = vld [vmem:[%s3885 + $0x14] sm:$0xf]
    %v3892 = vld [vmem:[%s3885 + $0x18] sm:$0xf]
    %v3893 = vld [vmem:[%s3885 + $0x1c] sm:$0xf]
    %v3902 = vunpack.c.l.b16 %v3886
    %v3903 = vunpack.c.l.b16 %v3887
    %v3904 = vunpack.c.l.b16 %v3888
    %v3905 = vunpack.c.l.b16 %v3889
    %v3906 = vunpack.c.l.b16 %v3890
    %v3907 = vunpack.c.l.b16 %v3891
    %v3908 = vunpack.c.l.b16 %v3892
    %v3909 = vunpack.c.l.b16 %v3893
    %v3910 = vpack.c.b16 %v3903, %v3902
    %v3911 = vpack.c.b16 %v3905, %v3904
    %v3912 = vpack.c.b16 %v3907, %v3906
    %v3913 = vpack.c.b16 %v3909, %v3908
    %v3919 = vsel %vm2347, %v3396, 0
    %v3922 = vsel %vm2347, %v3397, 0
    %v3925 = vsel %vm2347, %v3398, 0
    %v3928 = vsel %vm2347, %v3399, 0
    %v3931 = vsel %vm2347, %v3400, 0
    %v3934 = vsel %vm2347, %v3401, 0
    %v3937 = vsel %vm2347, %v3402, 0
    %v3940 = vsel %vm2347, %v3403, 0
    %v3943 = vsel %vm2347, %v3404, 0
    %v3946 = vsel %vm2347, %v3405, 0
    %v3949 = vsel %vm2347, %v3406, 0
    %v3952 = vsel %vm2347, %v3407, 0
    %v3955 = vsel %vm2347, %v3408, 0
    %v3958 = vsel %vm2347, %v3409, 0
    %v3961 = vsel %vm2347, %v3410, 0
    %v3964 = vsel %vm2347, %v3411, 0
    %v3967 = vsel %vm2347, %v3412, 0
    %v3970 = vsel %vm2347, %v3413, 0
    %v3973 = vsel %vm2347, %v3414, 0
    %v3976 = vsel %vm2347, %v3415, 0
    %v3979 = vsel %vm2347, %v3416, 0
    %v3982 = vsel %vm2347, %v3417, 0
    %v3985 = vsel %vm2347, %v3418, 0
    %v3988 = vsel %vm2347, %v3419, 0
    %v3991 = vsel %vm2347, %v3420, 0
    %v3994 = vsel %vm2347, %v3421, 0
    %v3997 = vsel %vm2347, %v3422, 0
    %v4000 = vsel %vm2347, %v3423, 0
    %v4003 = vsel %vm2347, %v3424, 0
    %v4006 = vsel %vm2347, %v3425, 0
    %v4009 = vsel %vm2347, %v3426, 0
    %v4012 = vsel %vm2347, %v3427, 0
    %4014 = vmatpush.bf16.msra.mxu0 0
    %4015 = vmatpush.bf16.msra.mxu0 0
    %4016 = vmatpush.bf16.msra.mxu0 0
    %4017 = vmatpush.bf16.msra.mxu0 0
    %4018 = vmatpush.bf16.msra.mxu0 %v3913
    %4019 = vmatpush.bf16.msra.mxu0 %v3912
    %4020 = vmatpush.bf16.msra.mxu0 %v3911
    %4021 = vmatpush.bf16.msra.mxu0 %v3910
    %4022 = vmatmul.bf16.gmra.mxu0 %v3919
    %v4023 = vpop.f32.mrf.mxu0
    %v4024 = vadd.f32 0.0, %v4023
    %v4025 = vpop.f32.mrf.mxu0
    %v4026 = vadd.f32 0.0, %v4025
    %4027 = vmatmul.bf16.gmra.mxu0 %v3922
    %v4028 = vpop.f32.mrf.mxu0
    %v4029 = vadd.f32 0.0, %v4028
    %v4030 = vpop.f32.mrf.mxu0
    %v4031 = vadd.f32 0.0, %v4030
    %4032 = vmatmul.bf16.gmra.mxu0 %v3925
    %v4033 = vpop.f32.mrf.mxu0
    %v4034 = vadd.f32 0.0, %v4033
    %v4035 = vpop.f32.mrf.mxu0
    %v4036 = vadd.f32 0.0, %v4035
    %4037 = vmatmul.bf16.gmra.mxu0 %v3928
    %v4038 = vpop.f32.mrf.mxu0
    %v4039 = vadd.f32 0.0, %v4038
    %v4040 = vpop.f32.mrf.mxu0
    %v4041 = vadd.f32 0.0, %v4040
    %4042 = vmatmul.bf16.gmra.mxu0 %v3931
    %v4043 = vpop.f32.mrf.mxu0
    %v4044 = vadd.f32 0.0, %v4043
    %v4045 = vpop.f32.mrf.mxu0
    %v4046 = vadd.f32 0.0, %v4045
    %4047 = vmatmul.bf16.gmra.mxu0 %v3934
    %v4048 = vpop.f32.mrf.mxu0
    %v4049 = vadd.f32 0.0, %v4048
    %v4050 = vpop.f32.mrf.mxu0
    %v4051 = vadd.f32 0.0, %v4050
    %4052 = vmatmul.bf16.gmra.mxu0 %v3937
    %v4053 = vpop.f32.mrf.mxu0
    %v4054 = vadd.f32 0.0, %v4053
    %v4055 = vpop.f32.mrf.mxu0
    %v4056 = vadd.f32 0.0, %v4055
    %4057 = vmatmul.bf16.gmra.mxu0 %v3940
    %v4058 = vpop.f32.mrf.mxu0
    %v4059 = vadd.f32 0.0, %v4058
    %v4060 = vpop.f32.mrf.mxu0
    %v4061 = vadd.f32 0.0, %v4060
    %4062 = vmatmul.bf16.gmra.mxu0 %v3943
    %v4063 = vpop.f32.mrf.mxu0
    %v4064 = vadd.f32 0.0, %v4063
    %v4065 = vpop.f32.mrf.mxu0
    %v4066 = vadd.f32 0.0, %v4065
    %4067 = vmatmul.bf16.gmra.mxu0 %v3946
    %v4068 = vpop.f32.mrf.mxu0
    %v4069 = vadd.f32 0.0, %v4068
    %v4070 = vpop.f32.mrf.mxu0
    %v4071 = vadd.f32 0.0, %v4070
    %4072 = vmatmul.bf16.gmra.mxu0 %v3949
    %v4073 = vpop.f32.mrf.mxu0
    %v4074 = vadd.f32 0.0, %v4073
    %v4075 = vpop.f32.mrf.mxu0
    %v4076 = vadd.f32 0.0, %v4075
    %4077 = vmatmul.bf16.gmra.mxu0 %v3952
    %v4078 = vpop.f32.mrf.mxu0
    %v4079 = vadd.f32 0.0, %v4078
    %v4080 = vpop.f32.mrf.mxu0
    %v4081 = vadd.f32 0.0, %v4080
    %4082 = vmatmul.bf16.gmra.mxu0 %v3955
    %v4083 = vpop.f32.mrf.mxu0
    %v4084 = vadd.f32 0.0, %v4083
    %v4085 = vpop.f32.mrf.mxu0
    %v4086 = vadd.f32 0.0, %v4085
    %4087 = vmatmul.bf16.gmra.mxu0 %v3958
    %v4088 = vpop.f32.mrf.mxu0
    %v4089 = vadd.f32 0.0, %v4088
    %v4090 = vpop.f32.mrf.mxu0
    %v4091 = vadd.f32 0.0, %v4090
    %4092 = vmatmul.bf16.gmra.mxu0 %v3961
    %v4093 = vpop.f32.mrf.mxu0
    %v4094 = vadd.f32 0.0, %v4093
    %v4095 = vpop.f32.mrf.mxu0
    %v4096 = vadd.f32 0.0, %v4095
    %4097 = vmatmul.bf16.gmra.mxu0 %v3964
    %v4098 = vpop.f32.mrf.mxu0
    %v4099 = vadd.f32 0.0, %v4098
    %v4100 = vpop.f32.mrf.mxu0
    %v4101 = vadd.f32 0.0, %v4100
    %4102 = vmatmul.bf16.gmra.mxu0 %v3967
    %v4103 = vpop.f32.mrf.mxu0
    %v4104 = vadd.f32 0.0, %v4103
    %v4105 = vpop.f32.mrf.mxu0
    %v4106 = vadd.f32 0.0, %v4105
    %4107 = vmatmul.bf16.gmra.mxu0 %v3970
    %v4108 = vpop.f32.mrf.mxu0
    %v4109 = vadd.f32 0.0, %v4108
    %v4110 = vpop.f32.mrf.mxu0
    %v4111 = vadd.f32 0.0, %v4110
    %4112 = vmatmul.bf16.gmra.mxu0 %v3973
    %v4113 = vpop.f32.mrf.mxu0
    %v4114 = vadd.f32 0.0, %v4113
    %v4115 = vpop.f32.mrf.mxu0
    %v4116 = vadd.f32 0.0, %v4115
    %4117 = vmatmul.bf16.gmra.mxu0 %v3976
    %v4118 = vpop.f32.mrf.mxu0
    %v4119 = vadd.f32 0.0, %v4118
    %v4120 = vpop.f32.mrf.mxu0
    %v4121 = vadd.f32 0.0, %v4120
    %4122 = vmatmul.bf16.gmra.mxu0 %v3979
    %v4123 = vpop.f32.mrf.mxu0
    %v4124 = vadd.f32 0.0, %v4123
    %v4125 = vpop.f32.mrf.mxu0
    %v4126 = vadd.f32 0.0, %v4125
    %4127 = vmatmul.bf16.gmra.mxu0 %v3982
    %v4128 = vpop.f32.mrf.mxu0
    %v4129 = vadd.f32 0.0, %v4128
    %v4130 = vpop.f32.mrf.mxu0
    %v4131 = vadd.f32 0.0, %v4130
    %4132 = vmatmul.bf16.gmra.mxu0 %v3985
    %v4133 = vpop.f32.mrf.mxu0
    %v4134 = vadd.f32 0.0, %v4133
    %v4135 = vpop.f32.mrf.mxu0
    %v4136 = vadd.f32 0.0, %v4135
    %4137 = vmatmul.bf16.gmra.mxu0 %v3988
    %v4138 = vpop.f32.mrf.mxu0
    %v4139 = vadd.f32 0.0, %v4138
    %v4140 = vpop.f32.mrf.mxu0
    %v4141 = vadd.f32 0.0, %v4140
    %4142 = vmatmul.bf16.gmra.mxu0 %v3991
    %v4143 = vpop.f32.mrf.mxu0
    %v4144 = vadd.f32 0.0, %v4143
    %v4145 = vpop.f32.mrf.mxu0
    %v4146 = vadd.f32 0.0, %v4145
    %4147 = vmatmul.bf16.gmra.mxu0 %v3994
    %v4148 = vpop.f32.mrf.mxu0
    %v4149 = vadd.f32 0.0, %v4148
    %v4150 = vpop.f32.mrf.mxu0
    %v4151 = vadd.f32 0.0, %v4150
    %4152 = vmatmul.bf16.gmra.mxu0 %v3997
    %v4153 = vpop.f32.mrf.mxu0
    %v4154 = vadd.f32 0.0, %v4153
    %v4155 = vpop.f32.mrf.mxu0
    %v4156 = vadd.f32 0.0, %v4155
    %4157 = vmatmul.bf16.gmra.mxu0 %v4000
    %v4158 = vpop.f32.mrf.mxu0
    %v4159 = vadd.f32 0.0, %v4158
    %v4160 = vpop.f32.mrf.mxu0
    %v4161 = vadd.f32 0.0, %v4160
    %4162 = vmatmul.bf16.gmra.mxu0 %v4003
    %v4163 = vpop.f32.mrf.mxu0
    %v4164 = vadd.f32 0.0, %v4163
    %v4165 = vpop.f32.mrf.mxu0
    %v4166 = vadd.f32 0.0, %v4165
    %4167 = vmatmul.bf16.gmra.mxu0 %v4006
    %v4168 = vpop.f32.mrf.mxu0
    %v4169 = vadd.f32 0.0, %v4168
    %v4170 = vpop.f32.mrf.mxu0
    %v4171 = vadd.f32 0.0, %v4170
    %4172 = vmatmul.bf16.gmra.mxu0 %v4009
    %v4173 = vpop.f32.mrf.mxu0
    %v4174 = vadd.f32 0.0, %v4173
    %v4175 = vpop.f32.mrf.mxu0
    %v4176 = vadd.f32 0.0, %v4175
    %4177 = vmatmul.bf16.gmra.mxu0 %v4012
    %v4178 = vpop.f32.mrf.mxu0
    %v4179 = vadd.f32 0.0, %v4178
    %v4180 = vpop.f32.mrf.mxu0
    %v4181 = vadd.f32 0.0, %v4180
    %4182 = vdwg.mxu0
    %v4191 = vunpack.c.l.b16 %v3877
    %v4192 = vunpack.c.l.b16 %v3878
    %v4193 = vunpack.c.l.b16 %v3879
    %v4194 = vunpack.c.l.b16 %v3880
    %v4195 = vunpack.c.l.b16 %v3881
    %v4196 = vunpack.c.l.b16 %v3882
    %v4197 = vunpack.c.l.b16 %v3883
    %v4198 = vunpack.c.l.b16 %v3884
    %v4199 = vpack.c.b16 %v4192, %v4191
    %v4200 = vpack.c.b16 %v4194, %v4193
    %v4201 = vpack.c.b16 %v4196, %v4195
    %v4202 = vpack.c.b16 %v4198, %v4197
    %v4208 = vsel %vm2347, %v3620, 0
    %v4211 = vsel %vm2347, %v3621, 0
    %v4214 = vsel %vm2347, %v3622, 0
    %v4217 = vsel %vm2347, %v3623, 0
    %v4220 = vsel %vm2347, %v3624, 0
    %v4223 = vsel %vm2347, %v3625, 0
    %v4226 = vsel %vm2347, %v3626, 0
    %v4229 = vsel %vm2347, %v3627, 0
    %v4232 = vsel %vm2347, %v3628, 0
    %v4235 = vsel %vm2347, %v3629, 0
    %v4238 = vsel %vm2347, %v3630, 0
    %v4241 = vsel %vm2347, %v3631, 0
    %v4244 = vsel %vm2347, %v3632, 0
    %v4247 = vsel %vm2347, %v3633, 0
    %v4250 = vsel %vm2347, %v3634, 0
    %v4253 = vsel %vm2347, %v3635, 0
    %v4256 = vsel %vm2347, %v3636, 0
    %v4259 = vsel %vm2347, %v3637, 0
    %v4262 = vsel %vm2347, %v3638, 0
    %v4265 = vsel %vm2347, %v3639, 0
    %v4268 = vsel %vm2347, %v3640, 0
    %v4271 = vsel %vm2347, %v3641, 0
    %v4274 = vsel %vm2347, %v3642, 0
    %v4277 = vsel %vm2347, %v3643, 0
    %v4280 = vsel %vm2347, %v3644, 0
    %v4283 = vsel %vm2347, %v3645, 0
    %v4286 = vsel %vm2347, %v3646, 0
    %v4289 = vsel %vm2347, %v3647, 0
    %v4292 = vsel %vm2347, %v3648, 0
    %v4295 = vsel %vm2347, %v3649, 0
    %v4298 = vsel %vm2347, %v3650, 0
    %v4301 = vsel %vm2347, %v3651, 0
    %4303 = vmatpush.bf16.msra.mxu0 0
    %4304 = vmatpush.bf16.msra.mxu0 0
    %4305 = vmatpush.bf16.msra.mxu0 0
    %4306 = vmatpush.bf16.msra.mxu0 0
    %4307 = vmatpush.bf16.msra.mxu0 %v4202
    %4308 = vmatpush.bf16.msra.mxu0 %v4201
    %4309 = vmatpush.bf16.msra.mxu0 %v4200
    %4310 = vmatpush.bf16.msra.mxu0 %v4199
    %4311 = vmatmul.bf16.gmra.mxu0 %v4208
    %v4312 = vpop.f32.mrf.mxu0
    %v4313 = vadd.f32 %v4024, %v4312
    %v4314 = vpop.f32.mrf.mxu0
    %v4315 = vadd.f32 %v4026, %v4314
    %4316 = vmatmul.bf16.gmra.mxu0 %v4211
    %v4317 = vpop.f32.mrf.mxu0
    %v4318 = vadd.f32 %v4029, %v4317
    %v4319 = vpop.f32.mrf.mxu0
    %v4320 = vadd.f32 %v4031, %v4319
    %4321 = vmatmul.bf16.gmra.mxu0 %v4214
    %v4322 = vpop.f32.mrf.mxu0
    %v4323 = vadd.f32 %v4034, %v4322
    %v4324 = vpop.f32.mrf.mxu0
    %v4325 = vadd.f32 %v4036, %v4324
    %4326 = vmatmul.bf16.gmra.mxu0 %v4217
    %v4327 = vpop.f32.mrf.mxu0
    %v4328 = vadd.f32 %v4039, %v4327
    %v4329 = vpop.f32.mrf.mxu0
    %v4330 = vadd.f32 %v4041, %v4329
    %4331 = vmatmul.bf16.gmra.mxu0 %v4220
    %v4332 = vpop.f32.mrf.mxu0
    %v4333 = vadd.f32 %v4044, %v4332
    %v4334 = vpop.f32.mrf.mxu0
    %v4335 = vadd.f32 %v4046, %v4334
    %4336 = vmatmul.bf16.gmra.mxu0 %v4223
    %v4337 = vpop.f32.mrf.mxu0
    %v4338 = vadd.f32 %v4049, %v4337
    %v4339 = vpop.f32.mrf.mxu0
    %v4340 = vadd.f32 %v4051, %v4339
    %4341 = vmatmul.bf16.gmra.mxu0 %v4226
    %v4342 = vpop.f32.mrf.mxu0
    %v4343 = vadd.f32 %v4054, %v4342
    %v4344 = vpop.f32.mrf.mxu0
    %v4345 = vadd.f32 %v4056, %v4344
    %4346 = vmatmul.bf16.gmra.mxu0 %v4229
    %v4347 = vpop.f32.mrf.mxu0
    %v4348 = vadd.f32 %v4059, %v4347
    %v4349 = vpop.f32.mrf.mxu0
    %v4350 = vadd.f32 %v4061, %v4349
    %4351 = vmatmul.bf16.gmra.mxu0 %v4232
    %v4352 = vpop.f32.mrf.mxu0
    %v4353 = vadd.f32 %v4064, %v4352
    %v4354 = vpop.f32.mrf.mxu0
    %v4355 = vadd.f32 %v4066, %v4354
    %4356 = vmatmul.bf16.gmra.mxu0 %v4235
    %v4357 = vpop.f32.mrf.mxu0
    %v4358 = vadd.f32 %v4069, %v4357
    %v4359 = vpop.f32.mrf.mxu0
    %v4360 = vadd.f32 %v4071, %v4359
    %4361 = vmatmul.bf16.gmra.mxu0 %v4238
    %v4362 = vpop.f32.mrf.mxu0
    %v4363 = vadd.f32 %v4074, %v4362
    %v4364 = vpop.f32.mrf.mxu0
    %v4365 = vadd.f32 %v4076, %v4364
    %4366 = vmatmul.bf16.gmra.mxu0 %v4241
    %v4367 = vpop.f32.mrf.mxu0
    %v4368 = vadd.f32 %v4079, %v4367
    %v4369 = vpop.f32.mrf.mxu0
    %v4370 = vadd.f32 %v4081, %v4369
    %4371 = vmatmul.bf16.gmra.mxu0 %v4244
    %v4372 = vpop.f32.mrf.mxu0
    %v4373 = vadd.f32 %v4084, %v4372
    %v4374 = vpop.f32.mrf.mxu0
    %v4375 = vadd.f32 %v4086, %v4374
    %4376 = vmatmul.bf16.gmra.mxu0 %v4247
    %v4377 = vpop.f32.mrf.mxu0
    %v4378 = vadd.f32 %v4089, %v4377
    %v4379 = vpop.f32.mrf.mxu0
    %v4380 = vadd.f32 %v4091, %v4379
    %4381 = vmatmul.bf16.gmra.mxu0 %v4250
    %v4382 = vpop.f32.mrf.mxu0
    %v4383 = vadd.f32 %v4094, %v4382
    %v4384 = vpop.f32.mrf.mxu0
    %v4385 = vadd.f32 %v4096, %v4384
    %4386 = vmatmul.bf16.gmra.mxu0 %v4253
    %v4387 = vpop.f32.mrf.mxu0
    %v4388 = vadd.f32 %v4099, %v4387
    %v4389 = vpop.f32.mrf.mxu0
    %v4390 = vadd.f32 %v4101, %v4389
    %4391 = vmatmul.bf16.gmra.mxu0 %v4256
    %v4392 = vpop.f32.mrf.mxu0
    %v4393 = vadd.f32 %v4104, %v4392
    %v4394 = vpop.f32.mrf.mxu0
    %v4395 = vadd.f32 %v4106, %v4394
    %4396 = vmatmul.bf16.gmra.mxu0 %v4259
    %v4397 = vpop.f32.mrf.mxu0
    %v4398 = vadd.f32 %v4109, %v4397
    %v4399 = vpop.f32.mrf.mxu0
    %v4400 = vadd.f32 %v4111, %v4399
    %4401 = vmatmul.bf16.gmra.mxu0 %v4262
    %v4402 = vpop.f32.mrf.mxu0
    %v4403 = vadd.f32 %v4114, %v4402
    %v4404 = vpop.f32.mrf.mxu0
    %v4405 = vadd.f32 %v4116, %v4404
    %4406 = vmatmul.bf16.gmra.mxu0 %v4265
    %v4407 = vpop.f32.mrf.mxu0
    %v4408 = vadd.f32 %v4119, %v4407
    %v4409 = vpop.f32.mrf.mxu0
    %v4410 = vadd.f32 %v4121, %v4409
    %4411 = vmatmul.bf16.gmra.mxu0 %v4268
    %v4412 = vpop.f32.mrf.mxu0
    %v4413 = vadd.f32 %v4124, %v4412
    %v4414 = vpop.f32.mrf.mxu0
    %v4415 = vadd.f32 %v4126, %v4414
    %4416 = vmatmul.bf16.gmra.mxu0 %v4271
    %v4417 = vpop.f32.mrf.mxu0
    %v4418 = vadd.f32 %v4129, %v4417
    %v4419 = vpop.f32.mrf.mxu0
    %v4420 = vadd.f32 %v4131, %v4419
    %4421 = vmatmul.bf16.gmra.mxu0 %v4274
    %v4422 = vpop.f32.mrf.mxu0
    %v4423 = vadd.f32 %v4134, %v4422
    %v4424 = vpop.f32.mrf.mxu0
    %v4425 = vadd.f32 %v4136, %v4424
    %4426 = vmatmul.bf16.gmra.mxu0 %v4277
    %v4427 = vpop.f32.mrf.mxu0
    %v4428 = vadd.f32 %v4139, %v4427
    %v4429 = vpop.f32.mrf.mxu0
    %v4430 = vadd.f32 %v4141, %v4429
    %4431 = vmatmul.bf16.gmra.mxu0 %v4280
    %v4432 = vpop.f32.mrf.mxu0
    %v4433 = vadd.f32 %v4144, %v4432
    %v4434 = vpop.f32.mrf.mxu0
    %v4435 = vadd.f32 %v4146, %v4434
    %4436 = vmatmul.bf16.gmra.mxu0 %v4283
    %v4437 = vpop.f32.mrf.mxu0
    %v4438 = vadd.f32 %v4149, %v4437
    %v4439 = vpop.f32.mrf.mxu0
    %v4440 = vadd.f32 %v4151, %v4439
    %4441 = vmatmul.bf16.gmra.mxu0 %v4286
    %v4442 = vpop.f32.mrf.mxu0
    %v4443 = vadd.f32 %v4154, %v4442
    %v4444 = vpop.f32.mrf.mxu0
    %v4445 = vadd.f32 %v4156, %v4444
    %4446 = vmatmul.bf16.gmra.mxu0 %v4289
    %v4447 = vpop.f32.mrf.mxu0
    %v4448 = vadd.f32 %v4159, %v4447
    %v4449 = vpop.f32.mrf.mxu0
    %v4450 = vadd.f32 %v4161, %v4449
    %4451 = vmatmul.bf16.gmra.mxu0 %v4292
    %v4452 = vpop.f32.mrf.mxu0
    %v4453 = vadd.f32 %v4164, %v4452
    %v4454 = vpop.f32.mrf.mxu0
    %v4455 = vadd.f32 %v4166, %v4454
    %4456 = vmatmul.bf16.gmra.mxu0 %v4295
    %v4457 = vpop.f32.mrf.mxu0
    %v4458 = vadd.f32 %v4169, %v4457
    %v4459 = vpop.f32.mrf.mxu0
    %v4460 = vadd.f32 %v4171, %v4459
    %4461 = vmatmul.bf16.gmra.mxu0 %v4298
    %v4462 = vpop.f32.mrf.mxu0
    %v4463 = vadd.f32 %v4174, %v4462
    %v4464 = vpop.f32.mrf.mxu0
    %v4465 = vadd.f32 %v4176, %v4464
    %4466 = vmatmul.bf16.gmra.mxu0 %v4301
    %v4467 = vpop.f32.mrf.mxu0
    %v4468 = vadd.f32 %v4179, %v4467
    %v4469 = vpop.f32.mrf.mxu0
    %v4470 = vadd.f32 %v4181, %v4469
    %4471 = vdwg.mxu0
    %s4472 = scalar_lea.vmem [#allocation2], 160
    %v4473 = vld [vmem:[%s4472] sm:$0xf]
    %v4474 = vld [vmem:[%s4472 + $0x4] sm:$0xf]
    %v4475 = vld [vmem:[%s4472 + $0x8] sm:$0xf]
    %v4476 = vld [vmem:[%s4472 + $0xc] sm:$0xf]
    %v4477 = vld [vmem:[%s4472 + $0x10] sm:$0xf]
    %v4478 = vld [vmem:[%s4472 + $0x14] sm:$0xf]
    %v4479 = vld [vmem:[%s4472 + $0x18] sm:$0xf]
    %v4480 = vld [vmem:[%s4472 + $0x1c] sm:$0xf]
    %v4489 = vunpack.c.l.b16 %v4473
    %v4490 = vunpack.c.l.b16 %v4474
    %v4491 = vunpack.c.l.b16 %v4475
    %v4492 = vunpack.c.l.b16 %v4476
    %v4493 = vunpack.c.l.b16 %v4477
    %v4494 = vunpack.c.l.b16 %v4478
    %v4495 = vunpack.c.l.b16 %v4479
    %v4496 = vunpack.c.l.b16 %v4480
    %v4497 = vpack.c.b16 %v4490, %v4489
    %v4498 = vpack.c.b16 %v4492, %v4491
    %v4499 = vpack.c.b16 %v4494, %v4493
    %v4500 = vpack.c.b16 %v4496, %v4495
    %v4506 = vsel %vm2347, %v3844, 0
    %v4509 = vsel %vm2347, %v3845, 0
    %v4512 = vsel %vm2347, %v3846, 0
    %v4515 = vsel %vm2347, %v3847, 0
    %v4518 = vsel %vm2347, %v3848, 0
    %v4521 = vsel %vm2347, %v3849, 0
    %v4524 = vsel %vm2347, %v3850, 0
    %v4527 = vsel %vm2347, %v3851, 0
    %v4530 = vsel %vm2347, %v3852, 0
    %v4533 = vsel %vm2347, %v3853, 0
    %v4536 = vsel %vm2347, %v3854, 0
    %v4539 = vsel %vm2347, %v3855, 0
    %v4542 = vsel %vm2347, %v3856, 0
    %v4545 = vsel %vm2347, %v3857, 0
    %v4548 = vsel %vm2347, %v3858, 0
    %v4551 = vsel %vm2347, %v3859, 0
    %v4554 = vsel %vm2347, %v3860, 0
    %v4557 = vsel %vm2347, %v3861, 0
    %v4560 = vsel %vm2347, %v3862, 0
    %v4563 = vsel %vm2347, %v3863, 0
    %v4566 = vsel %vm2347, %v3864, 0
    %v4569 = vsel %vm2347, %v3865, 0
    %v4572 = vsel %vm2347, %v3866, 0
    %v4575 = vsel %vm2347, %v3867, 0
    %v4578 = vsel %vm2347, %v3868, 0
    %v4581 = vsel %vm2347, %v3869, 0
    %v4584 = vsel %vm2347, %v3870, 0
    %v4587 = vsel %vm2347, %v3871, 0
    %v4590 = vsel %vm2347, %v3872, 0
    %v4593 = vsel %vm2347, %v3873, 0
    %v4596 = vsel %vm2347, %v3874, 0
    %v4599 = vsel %vm2347, %v3875, 0
    %4601 = vmatpush.bf16.msra.mxu0 0
    %4602 = vmatpush.bf16.msra.mxu0 0
    %4603 = vmatpush.bf16.msra.mxu0 0
    %4604 = vmatpush.bf16.msra.mxu0 0
    %4605 = vmatpush.bf16.msra.mxu0 %v4500
    %4606 = vmatpush.bf16.msra.mxu0 %v4499
    %4607 = vmatpush.bf16.msra.mxu0 %v4498
    %4608 = vmatpush.bf16.msra.mxu0 %v4497
    %4609 = vmatmul.bf16.gmra.mxu0 %v4506
    %v4610 = vpop.f32.mrf.mxu0
    %v4611 = vadd.f32 0.0, %v4610
    %v4612 = vpop.f32.mrf.mxu0
    %v4613 = vadd.f32 0.0, %v4612
    %4614 = vmatmul.bf16.gmra.mxu0 %v4509
    %v4615 = vpop.f32.mrf.mxu0
    %v4616 = vadd.f32 0.0, %v4615
    %v4617 = vpop.f32.mrf.mxu0
    %v4618 = vadd.f32 0.0, %v4617
    %4619 = vmatmul.bf16.gmra.mxu0 %v4512
    %v4620 = vpop.f32.mrf.mxu0
    %v4621 = vadd.f32 0.0, %v4620
    %v4622 = vpop.f32.mrf.mxu0
    %v4623 = vadd.f32 0.0, %v4622
    %4624 = vmatmul.bf16.gmra.mxu0 %v4515
    %v4625 = vpop.f32.mrf.mxu0
    %v4626 = vadd.f32 0.0, %v4625
    %v4627 = vpop.f32.mrf.mxu0
    %v4628 = vadd.f32 0.0, %v4627
    %4629 = vmatmul.bf16.gmra.mxu0 %v4518
    %v4630 = vpop.f32.mrf.mxu0
    %v4631 = vadd.f32 0.0, %v4630
    %v4632 = vpop.f32.mrf.mxu0
    %v4633 = vadd.f32 0.0, %v4632
    %4634 = vmatmul.bf16.gmra.mxu0 %v4521
    %v4635 = vpop.f32.mrf.mxu0
    %v4636 = vadd.f32 0.0, %v4635
    %v4637 = vpop.f32.mrf.mxu0
    %v4638 = vadd.f32 0.0, %v4637
    %4639 = vmatmul.bf16.gmra.mxu0 %v4524
    %v4640 = vpop.f32.mrf.mxu0
    %v4641 = vadd.f32 0.0, %v4640
    %v4642 = vpop.f32.mrf.mxu0
    %v4643 = vadd.f32 0.0, %v4642
    %4644 = vmatmul.bf16.gmra.mxu0 %v4527
    %v4645 = vpop.f32.mrf.mxu0
    %v4646 = vadd.f32 0.0, %v4645
    %v4647 = vpop.f32.mrf.mxu0
    %v4648 = vadd.f32 0.0, %v4647
    %4649 = vmatmul.bf16.gmra.mxu0 %v4530
    %v4650 = vpop.f32.mrf.mxu0
    %v4651 = vadd.f32 0.0, %v4650
    %v4652 = vpop.f32.mrf.mxu0
    %v4653 = vadd.f32 0.0, %v4652
    %4654 = vmatmul.bf16.gmra.mxu0 %v4533
    %v4655 = vpop.f32.mrf.mxu0
    %v4656 = vadd.f32 0.0, %v4655
    %v4657 = vpop.f32.mrf.mxu0
    %v4658 = vadd.f32 0.0, %v4657
    %4659 = vmatmul.bf16.gmra.mxu0 %v4536
    %v4660 = vpop.f32.mrf.mxu0
    %v4661 = vadd.f32 0.0, %v4660
    %v4662 = vpop.f32.mrf.mxu0
    %v4663 = vadd.f32 0.0, %v4662
    %4664 = vmatmul.bf16.gmra.mxu0 %v4539
    %v4665 = vpop.f32.mrf.mxu0
    %v4666 = vadd.f32 0.0, %v4665
    %v4667 = vpop.f32.mrf.mxu0
    %v4668 = vadd.f32 0.0, %v4667
    %4669 = vmatmul.bf16.gmra.mxu0 %v4542
    %v4670 = vpop.f32.mrf.mxu0
    %v4671 = vadd.f32 0.0, %v4670
    %v4672 = vpop.f32.mrf.mxu0
    %v4673 = vadd.f32 0.0, %v4672
    %4674 = vmatmul.bf16.gmra.mxu0 %v4545
    %v4675 = vpop.f32.mrf.mxu0
    %v4676 = vadd.f32 0.0, %v4675
    %v4677 = vpop.f32.mrf.mxu0
    %v4678 = vadd.f32 0.0, %v4677
    %4679 = vmatmul.bf16.gmra.mxu0 %v4548
    %v4680 = vpop.f32.mrf.mxu0
    %v4681 = vadd.f32 0.0, %v4680
    %v4682 = vpop.f32.mrf.mxu0
    %v4683 = vadd.f32 0.0, %v4682
    %4684 = vmatmul.bf16.gmra.mxu0 %v4551
    %v4685 = vpop.f32.mrf.mxu0
    %v4686 = vadd.f32 0.0, %v4685
    %v4687 = vpop.f32.mrf.mxu0
    %v4688 = vadd.f32 0.0, %v4687
    %4689 = vmatmul.bf16.gmra.mxu0 %v4554
    %v4690 = vpop.f32.mrf.mxu0
    %v4691 = vadd.f32 0.0, %v4690
    %v4692 = vpop.f32.mrf.mxu0
    %v4693 = vadd.f32 0.0, %v4692
    %4694 = vmatmul.bf16.gmra.mxu0 %v4557
    %v4695 = vpop.f32.mrf.mxu0
    %v4696 = vadd.f32 0.0, %v4695
    %v4697 = vpop.f32.mrf.mxu0
    %v4698 = vadd.f32 0.0, %v4697
    %4699 = vmatmul.bf16.gmra.mxu0 %v4560
    %v4700 = vpop.f32.mrf.mxu0
    %v4701 = vadd.f32 0.0, %v4700
    %v4702 = vpop.f32.mrf.mxu0
    %v4703 = vadd.f32 0.0, %v4702
    %4704 = vmatmul.bf16.gmra.mxu0 %v4563
    %v4705 = vpop.f32.mrf.mxu0
    %v4706 = vadd.f32 0.0, %v4705
    %v4707 = vpop.f32.mrf.mxu0
    %v4708 = vadd.f32 0.0, %v4707
    %4709 = vmatmul.bf16.gmra.mxu0 %v4566
    %v4710 = vpop.f32.mrf.mxu0
    %v4711 = vadd.f32 0.0, %v4710
    %v4712 = vpop.f32.mrf.mxu0
    %v4713 = vadd.f32 0.0, %v4712
    %4714 = vmatmul.bf16.gmra.mxu0 %v4569
    %v4715 = vpop.f32.mrf.mxu0
    %v4716 = vadd.f32 0.0, %v4715
    %v4717 = vpop.f32.mrf.mxu0
    %v4718 = vadd.f32 0.0, %v4717
    %4719 = vmatmul.bf16.gmra.mxu0 %v4572
    %v4720 = vpop.f32.mrf.mxu0
    %v4721 = vadd.f32 0.0, %v4720
    %v4722 = vpop.f32.mrf.mxu0
    %v4723 = vadd.f32 0.0, %v4722
    %4724 = vmatmul.bf16.gmra.mxu0 %v4575
    %v4725 = vpop.f32.mrf.mxu0
    %v4726 = vadd.f32 0.0, %v4725
    %v4727 = vpop.f32.mrf.mxu0
    %v4728 = vadd.f32 0.0, %v4727
    %4729 = vmatmul.bf16.gmra.mxu0 %v4578
    %v4730 = vpop.f32.mrf.mxu0
    %v4731 = vadd.f32 0.0, %v4730
    %v4732 = vpop.f32.mrf.mxu0
    %v4733 = vadd.f32 0.0, %v4732
    %4734 = vmatmul.bf16.gmra.mxu0 %v4581
    %v4735 = vpop.f32.mrf.mxu0
    %v4736 = vadd.f32 0.0, %v4735
    %v4737 = vpop.f32.mrf.mxu0
    %v4738 = vadd.f32 0.0, %v4737
    %4739 = vmatmul.bf16.gmra.mxu0 %v4584
    %v4740 = vpop.f32.mrf.mxu0
    %v4741 = vadd.f32 0.0, %v4740
    %v4742 = vpop.f32.mrf.mxu0
    %v4743 = vadd.f32 0.0, %v4742
    %4744 = vmatmul.bf16.gmra.mxu0 %v4587
    %v4745 = vpop.f32.mrf.mxu0
    %v4746 = vadd.f32 0.0, %v4745
    %v4747 = vpop.f32.mrf.mxu0
    %v4748 = vadd.f32 0.0, %v4747
    %4749 = vmatmul.bf16.gmra.mxu0 %v4590
    %v4750 = vpop.f32.mrf.mxu0
    %v4751 = vadd.f32 0.0, %v4750
    %v4752 = vpop.f32.mrf.mxu0
    %v4753 = vadd.f32 0.0, %v4752
    %4754 = vmatmul.bf16.gmra.mxu0 %v4593
    %v4755 = vpop.f32.mrf.mxu0
    %v4756 = vadd.f32 0.0, %v4755
    %v4757 = vpop.f32.mrf.mxu0
    %v4758 = vadd.f32 0.0, %v4757
    %4759 = vmatmul.bf16.gmra.mxu0 %v4596
    %v4760 = vpop.f32.mrf.mxu0
    %v4761 = vadd.f32 0.0, %v4760
    %v4762 = vpop.f32.mrf.mxu0
    %v4763 = vadd.f32 0.0, %v4762
    %4764 = vmatmul.bf16.gmra.mxu0 %v4599
    %v4765 = vpop.f32.mrf.mxu0
    %v4766 = vadd.f32 0.0, %v4765
    %v4767 = vpop.f32.mrf.mxu0
    %v4768 = vadd.f32 0.0, %v4767
    %4769 = vdwg.mxu0
    %v4770 = vadd.f32 %v4313, %v4611
    %v4771 = vadd.f32 %v4315, %v4613
    %v4772 = vadd.f32 %v4318, %v4616
    %v4773 = vadd.f32 %v4320, %v4618
    %v4774 = vadd.f32 %v4323, %v4621
    %v4775 = vadd.f32 %v4325, %v4623
    %v4776 = vadd.f32 %v4328, %v4626
    %v4777 = vadd.f32 %v4330, %v4628
    %v4778 = vadd.f32 %v4333, %v4631
    %v4779 = vadd.f32 %v4335, %v4633
    %v4780 = vadd.f32 %v4338, %v4636
    %v4781 = vadd.f32 %v4340, %v4638
    %v4782 = vadd.f32 %v4343, %v4641
    %v4783 = vadd.f32 %v4345, %v4643
    %v4784 = vadd.f32 %v4348, %v4646
    %v4785 = vadd.f32 %v4350, %v4648
    %v4786 = vadd.f32 %v4353, %v4651
    %v4787 = vadd.f32 %v4355, %v4653
    %v4788 = vadd.f32 %v4358, %v4656
    %v4789 = vadd.f32 %v4360, %v4658
    %v4790 = vadd.f32 %v4363, %v4661
    %v4791 = vadd.f32 %v4365, %v4663
    %v4792 = vadd.f32 %v4368, %v4666
    %v4793 = vadd.f32 %v4370, %v4668
    %v4794 = vadd.f32 %v4373, %v4671
    %v4795 = vadd.f32 %v4375, %v4673
    %v4796 = vadd.f32 %v4378, %v4676
    %v4797 = vadd.f32 %v4380, %v4678
    %v4798 = vadd.f32 %v4383, %v4681
    %v4799 = vadd.f32 %v4385, %v4683
    %v4800 = vadd.f32 %v4388, %v4686
    %v4801 = vadd.f32 %v4390, %v4688
    %v4802 = vadd.f32 %v4393, %v4691
    %v4803 = vadd.f32 %v4395, %v4693
    %v4804 = vadd.f32 %v4398, %v4696
    %v4805 = vadd.f32 %v4400, %v4698
    %v4806 = vadd.f32 %v4403, %v4701
    %v4807 = vadd.f32 %v4405, %v4703
    %v4808 = vadd.f32 %v4408, %v4706
    %v4809 = vadd.f32 %v4410, %v4708
    %v4810 = vadd.f32 %v4413, %v4711
    %v4811 = vadd.f32 %v4415, %v4713
    %v4812 = vadd.f32 %v4418, %v4716
    %v4813 = vadd.f32 %v4420, %v4718
    %v4814 = vadd.f32 %v4423, %v4721
    %v4815 = vadd.f32 %v4425, %v4723
    %v4816 = vadd.f32 %v4428, %v4726
    %v4817 = vadd.f32 %v4430, %v4728
    %v4818 = vadd.f32 %v4433, %v4731
    %v4819 = vadd.f32 %v4435, %v4733
    %v4820 = vadd.f32 %v4438, %v4736
    %v4821 = vadd.f32 %v4440, %v4738
    %v4822 = vadd.f32 %v4443, %v4741
    %v4823 = vadd.f32 %v4445, %v4743
    %v4824 = vadd.f32 %v4448, %v4746
    %v4825 = vadd.f32 %v4450, %v4748
    %v4826 = vadd.f32 %v4453, %v4751
    %v4827 = vadd.f32 %v4455, %v4753
    %v4828 = vadd.f32 %v4458, %v4756
    %v4829 = vadd.f32 %v4460, %v4758
    %v4830 = vadd.f32 %v4463, %v4761
    %v4831 = vadd.f32 %v4465, %v4763
    %v4832 = vadd.f32 %v4468, %v4766
    %v4833 = vadd.f32 %v4470, %v4768
    %s4834 = scalar_lea.vmem %s4, 1
    %v4835 = vld [vmem:[%s4834] sm:$0x1]
    %v4837 = vperm.slane %v4835, 0
    %v4839 = vadd.f32 %v4770, %v4837
    %v4840 = vadd.f32 %v4771, %v4837
    %v4841 = vadd.f32 %v4772, %v4837
    %v4842 = vadd.f32 %v4773, %v4837
    %v4843 = vadd.f32 %v4774, %v4837
    %v4844 = vadd.f32 %v4775, %v4837
    %v4845 = vadd.f32 %v4776, %v4837
    %v4846 = vadd.f32 %v4777, %v4837
    %v4847 = vadd.f32 %v4778, %v4837
    %v4848 = vadd.f32 %v4779, %v4837
    %v4849 = vadd.f32 %v4780, %v4837
    %v4850 = vadd.f32 %v4781, %v4837
    %v4851 = vadd.f32 %v4782, %v4837
    %v4852 = vadd.f32 %v4783, %v4837
    %v4853 = vadd.f32 %v4784, %v4837
    %v4854 = vadd.f32 %v4785, %v4837
    %v4855 = vadd.f32 %v4786, %v4837
    %v4856 = vadd.f32 %v4787, %v4837
    %v4857 = vadd.f32 %v4788, %v4837
    %v4858 = vadd.f32 %v4789, %v4837
    %v4859 = vadd.f32 %v4790, %v4837
    %v4860 = vadd.f32 %v4791, %v4837
    %v4861 = vadd.f32 %v4792, %v4837
    %v4862 = vadd.f32 %v4793, %v4837
    %v4863 = vadd.f32 %v4794, %v4837
    %v4864 = vadd.f32 %v4795, %v4837
    %v4865 = vadd.f32 %v4796, %v4837
    %v4866 = vadd.f32 %v4797, %v4837
    %v4867 = vadd.f32 %v4798, %v4837
    %v4868 = vadd.f32 %v4799, %v4837
    %v4869 = vadd.f32 %v4800, %v4837
    %v4870 = vadd.f32 %v4801, %v4837
    %v4871 = vadd.f32 %v4802, %v4837
    %v4872 = vadd.f32 %v4803, %v4837
    %v4873 = vadd.f32 %v4804, %v4837
    %v4874 = vadd.f32 %v4805, %v4837
    %v4875 = vadd.f32 %v4806, %v4837
    %v4876 = vadd.f32 %v4807, %v4837
    %v4877 = vadd.f32 %v4808, %v4837
    %v4878 = vadd.f32 %v4809, %v4837
    %v4879 = vadd.f32 %v4810, %v4837
    %v4880 = vadd.f32 %v4811, %v4837
    %v4881 = vadd.f32 %v4812, %v4837
    %v4882 = vadd.f32 %v4813, %v4837
    %v4883 = vadd.f32 %v4814, %v4837
    %v4884 = vadd.f32 %v4815, %v4837
    %v4885 = vadd.f32 %v4816, %v4837
    %v4886 = vadd.f32 %v4817, %v4837
    %v4887 = vadd.f32 %v4818, %v4837
    %v4888 = vadd.f32 %v4819, %v4837
    %v4889 = vadd.f32 %v4820, %v4837
    %v4890 = vadd.f32 %v4821, %v4837
    %v4891 = vadd.f32 %v4822, %v4837
    %v4892 = vadd.f32 %v4823, %v4837
    %v4893 = vadd.f32 %v4824, %v4837
    %v4894 = vadd.f32 %v4825, %v4837
    %v4895 = vadd.f32 %v4826, %v4837
    %v4896 = vadd.f32 %v4827, %v4837
    %v4897 = vadd.f32 %v4828, %v4837
    %v4898 = vadd.f32 %v4829, %v4837
    %v4899 = vadd.f32 %v4830, %v4837
    %v4900 = vadd.f32 %v4831, %v4837
    %v4901 = vadd.f32 %v4832, %v4837
    %v4902 = vadd.f32 %v4833, %v4837
    %v4903 = vadd.f32 %v4839, %v543
    %v4904 = vadd.f32 %v4840, %v544
    %v4905 = vadd.f32 %v4841, %v545
    %v4906 = vadd.f32 %v4842, %v546
    %v4907 = vadd.f32 %v4843, %v547
    %v4908 = vadd.f32 %v4844, %v548
    %v4909 = vadd.f32 %v4845, %v549
    %v4910 = vadd.f32 %v4846, %v550
    %v4911 = vadd.f32 %v4847, %v551
    %v4912 = vadd.f32 %v4848, %v552
    %v4913 = vadd.f32 %v4849, %v553
    %v4914 = vadd.f32 %v4850, %v554
    %v4915 = vadd.f32 %v4851, %v555
    %v4916 = vadd.f32 %v4852, %v556
    %v4917 = vadd.f32 %v4853, %v557
    %v4918 = vadd.f32 %v4854, %v558
    %v4919 = vadd.f32 %v4855, %v559
    %v4920 = vadd.f32 %v4856, %v560
    %v4921 = vadd.f32 %v4857, %v561
    %v4922 = vadd.f32 %v4858, %v562
    %v4923 = vadd.f32 %v4859, %v563
    %v4924 = vadd.f32 %v4860, %v564
    %v4925 = vadd.f32 %v4861, %v565
    %v4926 = vadd.f32 %v4862, %v566
    %v4927 = vadd.f32 %v4863, %v567
    %v4928 = vadd.f32 %v4864, %v568
    %v4929 = vadd.f32 %v4865, %v569
    %v4930 = vadd.f32 %v4866, %v570
    %v4931 = vadd.f32 %v4867, %v571
    %v4932 = vadd.f32 %v4868, %v572
    %v4933 = vadd.f32 %v4869, %v573
    %v4934 = vadd.f32 %v4870, %v574
    %v4935 = vadd.f32 %v4871, %v575
    %v4936 = vadd.f32 %v4872, %v576
    %v4937 = vadd.f32 %v4873, %v577
    %v4938 = vadd.f32 %v4874, %v578
    %v4939 = vadd.f32 %v4875, %v579
    %v4940 = vadd.f32 %v4876, %v580
    %v4941 = vadd.f32 %v4877, %v581
    %v4942 = vadd.f32 %v4878, %v582
    %v4943 = vadd.f32 %v4879, %v583
    %v4944 = vadd.f32 %v4880, %v584
    %v4945 = vadd.f32 %v4881, %v585
    %v4946 = vadd.f32 %v4882, %v586
    %v4947 = vadd.f32 %v4883, %v587
    %v4948 = vadd.f32 %v4884, %v588
    %v4949 = vadd.f32 %v4885, %v589
    %v4950 = vadd.f32 %v4886, %v590
    %v4951 = vadd.f32 %v4887, %v591
    %v4952 = vadd.f32 %v4888, %v592
    %v4953 = vadd.f32 %v4889, %v593
    %v4954 = vadd.f32 %v4890, %v594
    %v4955 = vadd.f32 %v4891, %v595
    %v4956 = vadd.f32 %v4892, %v596
    %v4957 = vadd.f32 %v4893, %v597
    %v4958 = vadd.f32 %v4894, %v598
    %v4959 = vadd.f32 %v4895, %v599
    %v4960 = vadd.f32 %v4896, %v600
    %v4961 = vadd.f32 %v4897, %v601
    %v4962 = vadd.f32 %v4898, %v602
    %v4963 = vadd.f32 %v4899, %v603
    %v4964 = vadd.f32 %v4900, %v604
    %v4965 = vadd.f32 %v4901, %v605
    %v4966 = vadd.f32 %v4902, %v606
    %v4967 = vmax.f32 %v4903, 0.0
    %v4968 = vmax.f32 %v4904, 0.0
    %v4969 = vmax.f32 %v4905, 0.0
    %v4970 = vmax.f32 %v4906, 0.0
    %v4971 = vmax.f32 %v4907, 0.0
    %v4972 = vmax.f32 %v4908, 0.0
    %v4973 = vmax.f32 %v4909, 0.0
    %v4974 = vmax.f32 %v4910, 0.0
    %v4975 = vmax.f32 %v4911, 0.0
    %v4976 = vmax.f32 %v4912, 0.0
    %v4977 = vmax.f32 %v4913, 0.0
    %v4978 = vmax.f32 %v4914, 0.0
    %v4979 = vmax.f32 %v4915, 0.0
    %v4980 = vmax.f32 %v4916, 0.0
    %v4981 = vmax.f32 %v4917, 0.0
    %v4982 = vmax.f32 %v4918, 0.0
    %v4983 = vmax.f32 %v4919, 0.0
    %v4984 = vmax.f32 %v4920, 0.0
    %v4985 = vmax.f32 %v4921, 0.0
    %v4986 = vmax.f32 %v4922, 0.0
    %v4987 = vmax.f32 %v4923, 0.0
    %v4988 = vmax.f32 %v4924, 0.0
    %v4989 = vmax.f32 %v4925, 0.0
    %v4990 = vmax.f32 %v4926, 0.0
    %v4991 = vmax.f32 %v4927, 0.0
    %v4992 = vmax.f32 %v4928, 0.0
    %v4993 = vmax.f32 %v4929, 0.0
    %v4994 = vmax.f32 %v4930, 0.0
    %v4995 = vmax.f32 %v4931, 0.0
    %v4996 = vmax.f32 %v4932, 0.0
    %v4997 = vmax.f32 %v4933, 0.0
    %v4998 = vmax.f32 %v4934, 0.0
    %v4999 = vmax.f32 %v4935, 0.0
    %v5000 = vmax.f32 %v4936, 0.0
    %v5001 = vmax.f32 %v4937, 0.0
    %v5002 = vmax.f32 %v4938, 0.0
    %v5003 = vmax.f32 %v4939, 0.0
    %v5004 = vmax.f32 %v4940, 0.0
    %v5005 = vmax.f32 %v4941, 0.0
    %v5006 = vmax.f32 %v4942, 0.0
    %v5007 = vmax.f32 %v4943, 0.0
    %v5008 = vmax.f32 %v4944, 0.0
    %v5009 = vmax.f32 %v4945, 0.0
    %v5010 = vmax.f32 %v4946, 0.0
    %v5011 = vmax.f32 %v4947, 0.0
    %v5012 = vmax.f32 %v4948, 0.0
    %v5013 = vmax.f32 %v4949, 0.0
    %v5014 = vmax.f32 %v4950, 0.0
    %v5015 = vmax.f32 %v4951, 0.0
    %v5016 = vmax.f32 %v4952, 0.0
    %v5017 = vmax.f32 %v4953, 0.0
    %v5018 = vmax.f32 %v4954, 0.0
    %v5019 = vmax.f32 %v4955, 0.0
    %v5020 = vmax.f32 %v4956, 0.0
    %v5021 = vmax.f32 %v4957, 0.0
    %v5022 = vmax.f32 %v4958, 0.0
    %v5023 = vmax.f32 %v4959, 0.0
    %v5024 = vmax.f32 %v4960, 0.0
    %v5025 = vmax.f32 %v4961, 0.0
    %v5026 = vmax.f32 %v4962, 0.0
    %v5027 = vmax.f32 %v4963, 0.0
    %v5028 = vmax.f32 %v4964, 0.0
    %v5029 = vmax.f32 %v4965, 0.0
    %v5030 = vmax.f32 %v4966, 0.0
    %v5031 = vpack.c.bf16 %v4968, %v4967
    %v5032 = vpack.c.bf16 %v4970, %v4969
    %v5033 = vpack.c.bf16 %v4972, %v4971
    %v5034 = vpack.c.bf16 %v4974, %v4973
    %v5035 = vpack.c.bf16 %v4976, %v4975
    %v5036 = vpack.c.bf16 %v4978, %v4977
    %v5037 = vpack.c.bf16 %v4980, %v4979
    %v5038 = vpack.c.bf16 %v4982, %v4981
    %v5039 = vpack.c.bf16 %v4984, %v4983
    %v5040 = vpack.c.bf16 %v4986, %v4985
    %v5041 = vpack.c.bf16 %v4988, %v4987
    %v5042 = vpack.c.bf16 %v4990, %v4989
    %v5043 = vpack.c.bf16 %v4992, %v4991
    %v5044 = vpack.c.bf16 %v4994, %v4993
    %v5045 = vpack.c.bf16 %v4996, %v4995
    %v5046 = vpack.c.bf16 %v4998, %v4997
    %v5047 = vpack.c.bf16 %v5000, %v4999
    %v5048 = vpack.c.bf16 %v5002, %v5001
    %v5049 = vpack.c.bf16 %v5004, %v5003
    %v5050 = vpack.c.bf16 %v5006, %v5005
    %v5051 = vpack.c.bf16 %v5008, %v5007
    %v5052 = vpack.c.bf16 %v5010, %v5009
    %v5053 = vpack.c.bf16 %v5012, %v5011
    %v5054 = vpack.c.bf16 %v5014, %v5013
    %v5055 = vpack.c.bf16 %v5016, %v5015
    %v5056 = vpack.c.bf16 %v5018, %v5017
    %v5057 = vpack.c.bf16 %v5020, %v5019
    %v5058 = vpack.c.bf16 %v5022, %v5021
    %v5059 = vpack.c.bf16 %v5024, %v5023
    %v5060 = vpack.c.bf16 %v5026, %v5025
    %v5061 = vpack.c.bf16 %v5028, %v5027
    %v5062 = vpack.c.bf16 %v5030, %v5029
    %v5063 = vrot.slane %v4967, 7
    %v5064 = vrot.slane %v4968, 7
    %v5065 = vrot.slane %v4969, 7
    %v5066 = vrot.slane %v4970, 7
    %v5067 = vrot.slane %v4971, 7
    %v5068 = vrot.slane %v4972, 7
    %v5069 = vrot.slane %v4973, 7
    %v5070 = vrot.slane %v4974, 7
    %v5071 = vrot.slane %v4975, 7
    %v5072 = vrot.slane %v4976, 7
    %v5073 = vrot.slane %v4977, 7
    %v5074 = vrot.slane %v4978, 7
    %v5075 = vrot.slane %v4979, 7
    %v5076 = vrot.slane %v4980, 7
    %v5077 = vrot.slane %v4981, 7
    %v5078 = vrot.slane %v4982, 7
    %v5079 = vrot.slane %v4983, 7
    %v5080 = vrot.slane %v4984, 7
    %v5081 = vrot.slane %v4985, 7
    %v5082 = vrot.slane %v4986, 7
    %v5083 = vrot.slane %v4987, 7
    %v5084 = vrot.slane %v4988, 7
    %v5085 = vrot.slane %v4989, 7
    %v5086 = vrot.slane %v4990, 7
    %v5087 = vrot.slane %v4991, 7
    %v5088 = vrot.slane %v4992, 7
    %v5089 = vrot.slane %v4993, 7
    %v5090 = vrot.slane %v4994, 7
    %v5091 = vrot.slane %v4995, 7
    %v5092 = vrot.slane %v4996, 7
    %v5093 = vrot.slane %v4997, 7
    %v5094 = vrot.slane %v4998, 7
    %v5095 = vrot.slane %v4999, 7
    %v5096 = vrot.slane %v5000, 7
    %v5097 = vrot.slane %v5001, 7
    %v5098 = vrot.slane %v5002, 7
    %v5099 = vrot.slane %v5003, 7
    %v5100 = vrot.slane %v5004, 7
    %v5101 = vrot.slane %v5005, 7
    %v5102 = vrot.slane %v5006, 7
    %v5103 = vrot.slane %v5007, 7
    %v5104 = vrot.slane %v5008, 7
    %v5105 = vrot.slane %v5009, 7
    %v5106 = vrot.slane %v5010, 7
    %v5107 = vrot.slane %v5011, 7
    %v5108 = vrot.slane %v5012, 7
    %v5109 = vrot.slane %v5013, 7
    %v5110 = vrot.slane %v5014, 7
    %v5111 = vrot.slane %v5015, 7
    %v5112 = vrot.slane %v5016, 7
    %v5113 = vrot.slane %v5017, 7
    %v5114 = vrot.slane %v5018, 7
    %v5115 = vrot.slane %v5019, 7
    %v5116 = vrot.slane %v5020, 7
    %v5117 = vrot.slane %v5021, 7
    %v5118 = vrot.slane %v5022, 7
    %v5119 = vrot.slane %v5023, 7
    %v5120 = vrot.slane %v5024, 7
    %v5121 = vrot.slane %v5025, 7
    %v5122 = vrot.slane %v5026, 7
    %v5123 = vrot.slane %v5027, 7
    %v5124 = vrot.slane %v5028, 7
    %v5125 = vrot.slane %v5029, 7
    %v5126 = vrot.slane %v5030, 7
    %v5127 = vsel %vm1664, %v5125, %v5126
    %v5128 = vsel %vm1664, %v5124, %v5125
    %v5129 = vsel %vm1664, %v5123, %v5124
    %v5130 = vsel %vm1664, %v5122, %v5123
    %v5131 = vsel %vm1664, %v5121, %v5122
    %v5132 = vsel %vm1664, %v5120, %v5121
    %v5133 = vsel %vm1664, %v5119, %v5120
    %v5134 = vsel %vm1664, %v5118, %v5119
    %v5135 = vsel %vm1664, %v5117, %v5118
    %v5136 = vsel %vm1664, %v5116, %v5117
    %v5137 = vsel %vm1664, %v5115, %v5116
    %v5138 = vsel %vm1664, %v5114, %v5115
    %v5139 = vsel %vm1664, %v5113, %v5114
    %v5140 = vsel %vm1664, %v5112, %v5113
    %v5141 = vsel %vm1664, %v5111, %v5112
    %v5142 = vsel %vm1664, %v5110, %v5111
    %v5143 = vsel %vm1664, %v5109, %v5110
    %v5144 = vsel %vm1664, %v5108, %v5109
    %v5145 = vsel %vm1664, %v5107, %v5108
    %v5146 = vsel %vm1664, %v5106, %v5107
    %v5147 = vsel %vm1664, %v5105, %v5106
    %v5148 = vsel %vm1664, %v5104, %v5105
    %v5149 = vsel %vm1664, %v5103, %v5104
    %v5150 = vsel %vm1664, %v5102, %v5103
    %v5151 = vsel %vm1664, %v5101, %v5102
    %v5152 = vsel %vm1664, %v5100, %v5101
    %v5153 = vsel %vm1664, %v5099, %v5100
    %v5154 = vsel %vm1664, %v5098, %v5099
    %v5155 = vsel %vm1664, %v5097, %v5098
    %v5156 = vsel %vm1664, %v5096, %v5097
    %v5157 = vsel %vm1664, %v5095, %v5096
    %v5158 = vsel %vm1664, %v5094, %v5095
    %v5159 = vsel %vm1664, %v5093, %v5094
    %v5160 = vsel %vm1664, %v5092, %v5093
    %v5161 = vsel %vm1664, %v5091, %v5092
    %v5162 = vsel %vm1664, %v5090, %v5091
    %v5163 = vsel %vm1664, %v5089, %v5090
    %v5164 = vsel %vm1664, %v5088, %v5089
    %v5165 = vsel %vm1664, %v5087, %v5088
    %v5166 = vsel %vm1664, %v5086, %v5087
    %v5167 = vsel %vm1664, %v5085, %v5086
    %v5168 = vsel %vm1664, %v5084, %v5085
    %v5169 = vsel %vm1664, %v5083, %v5084
    %v5170 = vsel %vm1664, %v5082, %v5083
    %v5171 = vsel %vm1664, %v5081, %v5082
    %v5172 = vsel %vm1664, %v5080, %v5081
    %v5173 = vsel %vm1664, %v5079, %v5080
    %v5174 = vsel %vm1664, %v5078, %v5079
    %v5175 = vsel %vm1664, %v5077, %v5078
    %v5176 = vsel %vm1664, %v5076, %v5077
    %v5177 = vsel %vm1664, %v5075, %v5076
    %v5178 = vsel %vm1664, %v5074, %v5075
    %v5179 = vsel %vm1664, %v5073, %v5074
    %v5180 = vsel %vm1664, %v5072, %v5073
    %v5181 = vsel %vm1664, %v5071, %v5072
    %v5182 = vsel %vm1664, %v5070, %v5071
    %v5183 = vsel %vm1664, %v5069, %v5070
    %v5184 = vsel %vm1664, %v5068, %v5069
    %v5185 = vsel %vm1664, %v5067, %v5068
    %v5186 = vsel %vm1664, %v5066, %v5067
    %v5187 = vsel %vm1664, %v5065, %v5066
    %v5188 = vsel %vm1664, %v5064, %v5065
    %v5189 = vsel %vm1664, %v5063, %v5064
    %v5190 = vsel %vm1664, %v5126, %v5063
    %v5191 = vsel %vm1793, 0.0, %v5190
    %v5192 = vsel %vm1794, 0.0, %v5189
    %v5193 = vsel %vm1795, 0.0, %v5188
    %v5194 = vsel %vm1796, 0.0, %v5187
    %v5195 = vsel %vm1797, 0.0, %v5186
    %v5196 = vsel %vm1798, 0.0, %v5185
    %v5197 = vsel %vm1799, 0.0, %v5184
    %v5198 = vsel %vm1800, 0.0, %v5183
    %v5199 = vsel %vm1801, 0.0, %v5182
    %v5200 = vsel %vm1802, 0.0, %v5181
    %v5201 = vsel %vm1803, 0.0, %v5180
    %v5202 = vsel %vm1804, 0.0, %v5179
    %v5203 = vsel %vm1805, 0.0, %v5178
    %v5204 = vsel %vm1806, 0.0, %v5177
    %v5205 = vsel %vm1807, 0.0, %v5176
    %v5206 = vsel %vm1808, 0.0, %v5175
    %v5207 = vsel %vm1809, 0.0, %v5174
    %v5208 = vsel %vm1810, 0.0, %v5173
    %v5209 = vsel %vm1811, 0.0, %v5172
    %v5210 = vsel %vm1812, 0.0, %v5171
    %v5211 = vsel %vm1813, 0.0, %v5170
    %v5212 = vsel %vm1814, 0.0, %v5169
    %v5213 = vsel %vm1815, 0.0, %v5168
    %v5214 = vsel %vm1816, 0.0, %v5167
    %v5215 = vsel %vm1817, 0.0, %v5166
    %v5216 = vsel %vm1818, 0.0, %v5165
    %v5217 = vsel %vm1819, 0.0, %v5164
    %v5218 = vsel %vm1820, 0.0, %v5163
    %v5219 = vsel %vm1821, 0.0, %v5162
    %v5220 = vsel %vm1822, 0.0, %v5161
    %v5221 = vsel %vm1823, 0.0, %v5160
    %v5222 = vsel %vm1824, 0.0, %v5159
    %v5223 = vsel %vm1825, 0.0, %v5158
    %v5224 = vsel %vm1826, 0.0, %v5157
    %v5225 = vsel %vm1827, 0.0, %v5156
    %v5226 = vsel %vm1828, 0.0, %v5155
    %v5227 = vsel %vm1829, 0.0, %v5154
    %v5228 = vsel %vm1830, 0.0, %v5153
    %v5229 = vsel %vm1831, 0.0, %v5152
    %v5230 = vsel %vm1832, 0.0, %v5151
    %v5231 = vsel %vm1833, 0.0, %v5150
    %v5232 = vsel %vm1834, 0.0, %v5149
    %v5233 = vsel %vm1835, 0.0, %v5148
    %v5234 = vsel %vm1836, 0.0, %v5147
    %v5235 = vsel %vm1837, 0.0, %v5146
    %v5236 = vsel %vm1838, 0.0, %v5145
    %v5237 = vsel %vm1839, 0.0, %v5144
    %v5238 = vsel %vm1840, 0.0, %v5143
    %v5239 = vsel %vm1841, 0.0, %v5142
    %v5240 = vsel %vm1842, 0.0, %v5141
    %v5241 = vsel %vm1843, 0.0, %v5140
    %v5242 = vsel %vm1844, 0.0, %v5139
    %v5243 = vsel %vm1845, 0.0, %v5138
    %v5244 = vsel %vm1846, 0.0, %v5137
    %v5245 = vsel %vm1847, 0.0, %v5136
    %v5246 = vsel %vm1848, 0.0, %v5135
    %v5247 = vsel %vm1849, 0.0, %v5134
    %v5248 = vsel %vm1850, 0.0, %v5133
    %v5249 = vsel %vm1851, 0.0, %v5132
    %v5250 = vsel %vm1852, 0.0, %v5131
    %v5251 = vsel %vm1853, 0.0, %v5130
    %v5252 = vsel %vm1854, 0.0, %v5129
    %v5253 = vsel %vm1855, 0.0, %v5128
    %v5254 = vsel %vm1856, 0.0, %v5127
    %v5255 = vpack.c.bf16 %v5192, %v5191
    %v5256 = vpack.c.bf16 %v5194, %v5193
    %v5257 = vpack.c.bf16 %v5196, %v5195
    %v5258 = vpack.c.bf16 %v5198, %v5197
    %v5259 = vpack.c.bf16 %v5200, %v5199
    %v5260 = vpack.c.bf16 %v5202, %v5201
    %v5261 = vpack.c.bf16 %v5204, %v5203
    %v5262 = vpack.c.bf16 %v5206, %v5205
    %v5263 = vpack.c.bf16 %v5208, %v5207
    %v5264 = vpack.c.bf16 %v5210, %v5209
    %v5265 = vpack.c.bf16 %v5212, %v5211
    %v5266 = vpack.c.bf16 %v5214, %v5213
    %v5267 = vpack.c.bf16 %v5216, %v5215
    %v5268 = vpack.c.bf16 %v5218, %v5217
    %v5269 = vpack.c.bf16 %v5220, %v5219
    %v5270 = vpack.c.bf16 %v5222, %v5221
    %v5271 = vpack.c.bf16 %v5224, %v5223
    %v5272 = vpack.c.bf16 %v5226, %v5225
    %v5273 = vpack.c.bf16 %v5228, %v5227
    %v5274 = vpack.c.bf16 %v5230, %v5229
    %v5275 = vpack.c.bf16 %v5232, %v5231
    %v5276 = vpack.c.bf16 %v5234, %v5233
    %v5277 = vpack.c.bf16 %v5236, %v5235
    %v5278 = vpack.c.bf16 %v5238, %v5237
    %v5279 = vpack.c.bf16 %v5240, %v5239
    %v5280 = vpack.c.bf16 %v5242, %v5241
    %v5281 = vpack.c.bf16 %v5244, %v5243
    %v5282 = vpack.c.bf16 %v5246, %v5245
    %v5283 = vpack.c.bf16 %v5248, %v5247
    %v5284 = vpack.c.bf16 %v5250, %v5249
    %v5285 = vpack.c.bf16 %v5252, %v5251
    %v5286 = vpack.c.bf16 %v5254, %v5253
    %v5287 = vrot.slane %v4967, 1
    %v5288 = vrot.slane %v4968, 1
    %v5289 = vrot.slane %v4969, 1
    %v5290 = vrot.slane %v4970, 1
    %v5291 = vrot.slane %v4971, 1
    %v5292 = vrot.slane %v4972, 1
    %v5293 = vrot.slane %v4973, 1
    %v5294 = vrot.slane %v4974, 1
    %v5295 = vrot.slane %v4975, 1
    %v5296 = vrot.slane %v4976, 1
    %v5297 = vrot.slane %v4977, 1
    %v5298 = vrot.slane %v4978, 1
    %v5299 = vrot.slane %v4979, 1
    %v5300 = vrot.slane %v4980, 1
    %v5301 = vrot.slane %v4981, 1
    %v5302 = vrot.slane %v4982, 1
    %v5303 = vrot.slane %v4983, 1
    %v5304 = vrot.slane %v4984, 1
    %v5305 = vrot.slane %v4985, 1
    %v5306 = vrot.slane %v4986, 1
    %v5307 = vrot.slane %v4987, 1
    %v5308 = vrot.slane %v4988, 1
    %v5309 = vrot.slane %v4989, 1
    %v5310 = vrot.slane %v4990, 1
    %v5311 = vrot.slane %v4991, 1
    %v5312 = vrot.slane %v4992, 1
    %v5313 = vrot.slane %v4993, 1
    %v5314 = vrot.slane %v4994, 1
    %v5315 = vrot.slane %v4995, 1
    %v5316 = vrot.slane %v4996, 1
    %v5317 = vrot.slane %v4997, 1
    %v5318 = vrot.slane %v4998, 1
    %v5319 = vrot.slane %v4999, 1
    %v5320 = vrot.slane %v5000, 1
    %v5321 = vrot.slane %v5001, 1
    %v5322 = vrot.slane %v5002, 1
    %v5323 = vrot.slane %v5003, 1
    %v5324 = vrot.slane %v5004, 1
    %v5325 = vrot.slane %v5005, 1
    %v5326 = vrot.slane %v5006, 1
    %v5327 = vrot.slane %v5007, 1
    %v5328 = vrot.slane %v5008, 1
    %v5329 = vrot.slane %v5009, 1
    %v5330 = vrot.slane %v5010, 1
    %v5331 = vrot.slane %v5011, 1
    %v5332 = vrot.slane %v5012, 1
    %v5333 = vrot.slane %v5013, 1
    %v5334 = vrot.slane %v5014, 1
    %v5335 = vrot.slane %v5015, 1
    %v5336 = vrot.slane %v5016, 1
    %v5337 = vrot.slane %v5017, 1
    %v5338 = vrot.slane %v5018, 1
    %v5339 = vrot.slane %v5019, 1
    %v5340 = vrot.slane %v5020, 1
    %v5341 = vrot.slane %v5021, 1
    %v5342 = vrot.slane %v5022, 1
    %v5343 = vrot.slane %v5023, 1
    %v5344 = vrot.slane %v5024, 1
    %v5345 = vrot.slane %v5025, 1
    %v5346 = vrot.slane %v5026, 1
    %v5347 = vrot.slane %v5027, 1
    %v5348 = vrot.slane %v5028, 1
    %v5349 = vrot.slane %v5029, 1
    %v5350 = vrot.slane %v5030, 1
    %v5351 = vsel %vm2017, %v5349, %v5350
    %v5352 = vsel %vm2017, %v5348, %v5349
    %v5353 = vsel %vm2017, %v5347, %v5348
    %v5354 = vsel %vm2017, %v5346, %v5347
    %v5355 = vsel %vm2017, %v5345, %v5346
    %v5356 = vsel %vm2017, %v5344, %v5345
    %v5357 = vsel %vm2017, %v5343, %v5344
    %v5358 = vsel %vm2017, %v5342, %v5343
    %v5359 = vsel %vm2017, %v5341, %v5342
    %v5360 = vsel %vm2017, %v5340, %v5341
    %v5361 = vsel %vm2017, %v5339, %v5340
    %v5362 = vsel %vm2017, %v5338, %v5339
    %v5363 = vsel %vm2017, %v5337, %v5338
    %v5364 = vsel %vm2017, %v5336, %v5337
    %v5365 = vsel %vm2017, %v5335, %v5336
    %v5366 = vsel %vm2017, %v5334, %v5335
    %v5367 = vsel %vm2017, %v5333, %v5334
    %v5368 = vsel %vm2017, %v5332, %v5333
    %v5369 = vsel %vm2017, %v5331, %v5332
    %v5370 = vsel %vm2017, %v5330, %v5331
    %v5371 = vsel %vm2017, %v5329, %v5330
    %v5372 = vsel %vm2017, %v5328, %v5329
    %v5373 = vsel %vm2017, %v5327, %v5328
    %v5374 = vsel %vm2017, %v5326, %v5327
    %v5375 = vsel %vm2017, %v5325, %v5326
    %v5376 = vsel %vm2017, %v5324, %v5325
    %v5377 = vsel %vm2017, %v5323, %v5324
    %v5378 = vsel %vm2017, %v5322, %v5323
    %v5379 = vsel %vm2017, %v5321, %v5322
    %v5380 = vsel %vm2017, %v5320, %v5321
    %v5381 = vsel %vm2017, %v5319, %v5320
    %v5382 = vsel %vm2017, %v5318, %v5319
    %v5383 = vsel %vm2017, %v5317, %v5318
    %v5384 = vsel %vm2017, %v5316, %v5317
    %v5385 = vsel %vm2017, %v5315, %v5316
    %v5386 = vsel %vm2017, %v5314, %v5315
    %v5387 = vsel %vm2017, %v5313, %v5314
    %v5388 = vsel %vm2017, %v5312, %v5313
    %v5389 = vsel %vm2017, %v5311, %v5312
    %v5390 = vsel %vm2017, %v5310, %v5311
    %v5391 = vsel %vm2017, %v5309, %v5310
    %v5392 = vsel %vm2017, %v5308, %v5309
    %v5393 = vsel %vm2017, %v5307, %v5308
    %v5394 = vsel %vm2017, %v5306, %v5307
    %v5395 = vsel %vm2017, %v5305, %v5306
    %v5396 = vsel %vm2017, %v5304, %v5305
    %v5397 = vsel %vm2017, %v5303, %v5304
    %v5398 = vsel %vm2017, %v5302, %v5303
    %v5399 = vsel %vm2017, %v5301, %v5302
    %v5400 = vsel %vm2017, %v5300, %v5301
    %v5401 = vsel %vm2017, %v5299, %v5300
    %v5402 = vsel %vm2017, %v5298, %v5299
    %v5403 = vsel %vm2017, %v5297, %v5298
    %v5404 = vsel %vm2017, %v5296, %v5297
    %v5405 = vsel %vm2017, %v5295, %v5296
    %v5406 = vsel %vm2017, %v5294, %v5295
    %v5407 = vsel %vm2017, %v5293, %v5294
    %v5408 = vsel %vm2017, %v5292, %v5293
    %v5409 = vsel %vm2017, %v5291, %v5292
    %v5410 = vsel %vm2017, %v5290, %v5291
    %v5411 = vsel %vm2017, %v5289, %v5290
    %v5412 = vsel %vm2017, %v5288, %v5289
    %v5413 = vsel %vm2017, %v5287, %v5288
    %v5414 = vsel %vm2017, %v5350, %v5287
    %v5415 = vsel %vm2146, 0.0, %v5413
    %v5416 = vsel %vm2147, 0.0, %v5412
    %v5417 = vsel %vm2148, 0.0, %v5411
    %v5418 = vsel %vm2149, 0.0, %v5410
    %v5419 = vsel %vm2150, 0.0, %v5409
    %v5420 = vsel %vm2151, 0.0, %v5408
    %v5421 = vsel %vm2152, 0.0, %v5407
    %v5422 = vsel %vm2153, 0.0, %v5406
    %v5423 = vsel %vm2154, 0.0, %v5405
    %v5424 = vsel %vm2155, 0.0, %v5404
    %v5425 = vsel %vm2156, 0.0, %v5403
    %v5426 = vsel %vm2157, 0.0, %v5402
    %v5427 = vsel %vm2158, 0.0, %v5401
    %v5428 = vsel %vm2159, 0.0, %v5400
    %v5429 = vsel %vm2160, 0.0, %v5399
    %v5430 = vsel %vm2161, 0.0, %v5398
    %v5431 = vsel %vm2162, 0.0, %v5397
    %v5432 = vsel %vm2163, 0.0, %v5396
    %v5433 = vsel %vm2164, 0.0, %v5395
    %v5434 = vsel %vm2165, 0.0, %v5394
    %v5435 = vsel %vm2166, 0.0, %v5393
    %v5436 = vsel %vm2167, 0.0, %v5392
    %v5437 = vsel %vm2168, 0.0, %v5391
    %v5438 = vsel %vm2169, 0.0, %v5390
    %v5439 = vsel %vm2170, 0.0, %v5389
    %v5440 = vsel %vm2171, 0.0, %v5388
    %v5441 = vsel %vm2172, 0.0, %v5387
    %v5442 = vsel %vm2173, 0.0, %v5386
    %v5443 = vsel %vm2174, 0.0, %v5385
    %v5444 = vsel %vm2175, 0.0, %v5384
    %v5445 = vsel %vm2176, 0.0, %v5383
    %v5446 = vsel %vm2177, 0.0, %v5382
    %v5447 = vsel %vm2178, 0.0, %v5381
    %v5448 = vsel %vm2179, 0.0, %v5380
    %v5449 = vsel %vm2180, 0.0, %v5379
    %v5450 = vsel %vm2181, 0.0, %v5378
    %v5451 = vsel %vm2182, 0.0, %v5377
    %v5452 = vsel %vm2183, 0.0, %v5376
    %v5453 = vsel %vm2184, 0.0, %v5375
    %v5454 = vsel %vm2185, 0.0, %v5374
    %v5455 = vsel %vm2186, 0.0, %v5373
    %v5456 = vsel %vm2187, 0.0, %v5372
    %v5457 = vsel %vm2188, 0.0, %v5371
    %v5458 = vsel %vm2189, 0.0, %v5370
    %v5459 = vsel %vm2190, 0.0, %v5369
    %v5460 = vsel %vm2191, 0.0, %v5368
    %v5461 = vsel %vm2192, 0.0, %v5367
    %v5462 = vsel %vm2193, 0.0, %v5366
    %v5463 = vsel %vm2194, 0.0, %v5365
    %v5464 = vsel %vm2195, 0.0, %v5364
    %v5465 = vsel %vm2196, 0.0, %v5363
    %v5466 = vsel %vm2197, 0.0, %v5362
    %v5467 = vsel %vm2198, 0.0, %v5361
    %v5468 = vsel %vm2199, 0.0, %v5360
    %v5469 = vsel %vm2200, 0.0, %v5359
    %v5470 = vsel %vm2201, 0.0, %v5358
    %v5471 = vsel %vm2202, 0.0, %v5357
    %v5472 = vsel %vm2203, 0.0, %v5356
    %v5473 = vsel %vm2204, 0.0, %v5355
    %v5474 = vsel %vm2205, 0.0, %v5354
    %v5475 = vsel %vm2206, 0.0, %v5353
    %v5476 = vsel %vm2207, 0.0, %v5352
    %v5477 = vsel %vm2208, 0.0, %v5351
    %v5478 = vsel %vm2209, 0.0, %v5414
    %v5479 = vpack.c.bf16 %v5416, %v5415
    %v5480 = vpack.c.bf16 %v5418, %v5417
    %v5481 = vpack.c.bf16 %v5420, %v5419
    %v5482 = vpack.c.bf16 %v5422, %v5421
    %v5483 = vpack.c.bf16 %v5424, %v5423
    %v5484 = vpack.c.bf16 %v5426, %v5425
    %v5485 = vpack.c.bf16 %v5428, %v5427
    %v5486 = vpack.c.bf16 %v5430, %v5429
    %v5487 = vpack.c.bf16 %v5432, %v5431
    %v5488 = vpack.c.bf16 %v5434, %v5433
    %v5489 = vpack.c.bf16 %v5436, %v5435
    %v5490 = vpack.c.bf16 %v5438, %v5437
    %v5491 = vpack.c.bf16 %v5440, %v5439
    %v5492 = vpack.c.bf16 %v5442, %v5441
    %v5493 = vpack.c.bf16 %v5444, %v5443
    %v5494 = vpack.c.bf16 %v5446, %v5445
    %v5495 = vpack.c.bf16 %v5448, %v5447
    %v5496 = vpack.c.bf16 %v5450, %v5449
    %v5497 = vpack.c.bf16 %v5452, %v5451
    %v5498 = vpack.c.bf16 %v5454, %v5453
    %v5499 = vpack.c.bf16 %v5456, %v5455
    %v5500 = vpack.c.bf16 %v5458, %v5457
    %v5501 = vpack.c.bf16 %v5460, %v5459
    %v5502 = vpack.c.bf16 %v5462, %v5461
    %v5503 = vpack.c.bf16 %v5464, %v5463
    %v5504 = vpack.c.bf16 %v5466, %v5465
    %v5505 = vpack.c.bf16 %v5468, %v5467
    %v5506 = vpack.c.bf16 %v5470, %v5469
    %v5507 = vpack.c.bf16 %v5472, %v5471
    %v5508 = vpack.c.bf16 %v5474, %v5473
    %v5509 = vpack.c.bf16 %v5476, %v5475
    %v5510 = vpack.c.bf16 %v5478, %v5477
    %s5511 = scalar_lea.vmem [#allocation2], 192
    %v5512 = vld [vmem:[%s5511] sm:$0xf]
    %v5513 = vld [vmem:[%s5511 + $0x4] sm:$0xf]
    %v5514 = vld [vmem:[%s5511 + $0x8] sm:$0xf]
    %v5515 = vld [vmem:[%s5511 + $0xc] sm:$0xf]
    %v5516 = vld [vmem:[%s5511 + $0x10] sm:$0xf]
    %v5517 = vld [vmem:[%s5511 + $0x14] sm:$0xf]
    %v5518 = vld [vmem:[%s5511 + $0x18] sm:$0xf]
    %v5519 = vld [vmem:[%s5511 + $0x1c] sm:$0xf]
    %s5520 = scalar_lea.vmem [#allocation2], 224
    %v5521 = vld [vmem:[%s5520] sm:$0xf]
    %v5522 = vld [vmem:[%s5520 + $0x4] sm:$0xf]
    %v5523 = vld [vmem:[%s5520 + $0x8] sm:$0xf]
    %v5524 = vld [vmem:[%s5520 + $0xc] sm:$0xf]
    %v5525 = vld [vmem:[%s5520 + $0x10] sm:$0xf]
    %v5526 = vld [vmem:[%s5520 + $0x14] sm:$0xf]
    %v5527 = vld [vmem:[%s5520 + $0x18] sm:$0xf]
    %v5528 = vld [vmem:[%s5520 + $0x1c] sm:$0xf]
    %v5537 = vunpack.c.l.b16 %v5521
    %v5538 = vunpack.c.l.b16 %v5522
    %v5539 = vunpack.c.l.b16 %v5523
    %v5540 = vunpack.c.l.b16 %v5524
    %v5541 = vunpack.c.l.b16 %v5525
    %v5542 = vunpack.c.l.b16 %v5526
    %v5543 = vunpack.c.l.b16 %v5527
    %v5544 = vunpack.c.l.b16 %v5528
    %v5545 = vpack.c.b16 %v5538, %v5537
    %v5546 = vpack.c.b16 %v5540, %v5539
    %v5547 = vpack.c.b16 %v5542, %v5541
    %v5548 = vpack.c.b16 %v5544, %v5543
    %v5554 = vsel %vm2347, %v5031, 0
    %v5557 = vsel %vm2347, %v5032, 0
    %v5560 = vsel %vm2347, %v5033, 0
    %v5563 = vsel %vm2347, %v5034, 0
    %v5566 = vsel %vm2347, %v5035, 0
    %v5569 = vsel %vm2347, %v5036, 0
    %v5572 = vsel %vm2347, %v5037, 0
    %v5575 = vsel %vm2347, %v5038, 0
    %v5578 = vsel %vm2347, %v5039, 0
    %v5581 = vsel %vm2347, %v5040, 0
    %v5584 = vsel %vm2347, %v5041, 0
    %v5587 = vsel %vm2347, %v5042, 0
    %v5590 = vsel %vm2347, %v5043, 0
    %v5593 = vsel %vm2347, %v5044, 0
    %v5596 = vsel %vm2347, %v5045, 0
    %v5599 = vsel %vm2347, %v5046, 0
    %v5602 = vsel %vm2347, %v5047, 0
    %v5605 = vsel %vm2347, %v5048, 0
    %v5608 = vsel %vm2347, %v5049, 0
    %v5611 = vsel %vm2347, %v5050, 0
    %v5614 = vsel %vm2347, %v5051, 0
    %v5617 = vsel %vm2347, %v5052, 0
    %v5620 = vsel %vm2347, %v5053, 0
    %v5623 = vsel %vm2347, %v5054, 0
    %v5626 = vsel %vm2347, %v5055, 0
    %v5629 = vsel %vm2347, %v5056, 0
    %v5632 = vsel %vm2347, %v5057, 0
    %v5635 = vsel %vm2347, %v5058, 0
    %v5638 = vsel %vm2347, %v5059, 0
    %v5641 = vsel %vm2347, %v5060, 0
    %v5644 = vsel %vm2347, %v5061, 0
    %v5647 = vsel %vm2347, %v5062, 0
    %5649 = vmatpush.bf16.msra.mxu0 0
    %5650 = vmatpush.bf16.msra.mxu0 0
    %5651 = vmatpush.bf16.msra.mxu0 0
    %5652 = vmatpush.bf16.msra.mxu0 0
    %5653 = vmatpush.bf16.msra.mxu0 %v5548
    %5654 = vmatpush.bf16.msra.mxu0 %v5547
    %5655 = vmatpush.bf16.msra.mxu0 %v5546
    %5656 = vmatpush.bf16.msra.mxu0 %v5545
    %5657 = vmatmul.bf16.gmra.mxu0 %v5554
    %v5658 = vpop.f32.mrf.mxu0
    %v5659 = vadd.f32 0.0, %v5658
    %v5660 = vpop.f32.mrf.mxu0
    %v5661 = vadd.f32 0.0, %v5660
    %5662 = vmatmul.bf16.gmra.mxu0 %v5557
    %v5663 = vpop.f32.mrf.mxu0
    %v5664 = vadd.f32 0.0, %v5663
    %v5665 = vpop.f32.mrf.mxu0
    %v5666 = vadd.f32 0.0, %v5665
    %5667 = vmatmul.bf16.gmra.mxu0 %v5560
    %v5668 = vpop.f32.mrf.mxu0
    %v5669 = vadd.f32 0.0, %v5668
    %v5670 = vpop.f32.mrf.mxu0
    %v5671 = vadd.f32 0.0, %v5670
    %5672 = vmatmul.bf16.gmra.mxu0 %v5563
    %v5673 = vpop.f32.mrf.mxu0
    %v5674 = vadd.f32 0.0, %v5673
    %v5675 = vpop.f32.mrf.mxu0
    %v5676 = vadd.f32 0.0, %v5675
    %5677 = vmatmul.bf16.gmra.mxu0 %v5566
    %v5678 = vpop.f32.mrf.mxu0
    %v5679 = vadd.f32 0.0, %v5678
    %v5680 = vpop.f32.mrf.mxu0
    %v5681 = vadd.f32 0.0, %v5680
    %5682 = vmatmul.bf16.gmra.mxu0 %v5569
    %v5683 = vpop.f32.mrf.mxu0
    %v5684 = vadd.f32 0.0, %v5683
    %v5685 = vpop.f32.mrf.mxu0
    %v5686 = vadd.f32 0.0, %v5685
    %5687 = vmatmul.bf16.gmra.mxu0 %v5572
    %v5688 = vpop.f32.mrf.mxu0
    %v5689 = vadd.f32 0.0, %v5688
    %v5690 = vpop.f32.mrf.mxu0
    %v5691 = vadd.f32 0.0, %v5690
    %5692 = vmatmul.bf16.gmra.mxu0 %v5575
    %v5693 = vpop.f32.mrf.mxu0
    %v5694 = vadd.f32 0.0, %v5693
    %v5695 = vpop.f32.mrf.mxu0
    %v5696 = vadd.f32 0.0, %v5695
    %5697 = vmatmul.bf16.gmra.mxu0 %v5578
    %v5698 = vpop.f32.mrf.mxu0
    %v5699 = vadd.f32 0.0, %v5698
    %v5700 = vpop.f32.mrf.mxu0
    %v5701 = vadd.f32 0.0, %v5700
    %5702 = vmatmul.bf16.gmra.mxu0 %v5581
    %v5703 = vpop.f32.mrf.mxu0
    %v5704 = vadd.f32 0.0, %v5703
    %v5705 = vpop.f32.mrf.mxu0
    %v5706 = vadd.f32 0.0, %v5705
    %5707 = vmatmul.bf16.gmra.mxu0 %v5584
    %v5708 = vpop.f32.mrf.mxu0
    %v5709 = vadd.f32 0.0, %v5708
    %v5710 = vpop.f32.mrf.mxu0
    %v5711 = vadd.f32 0.0, %v5710
    %5712 = vmatmul.bf16.gmra.mxu0 %v5587
    %v5713 = vpop.f32.mrf.mxu0
    %v5714 = vadd.f32 0.0, %v5713
    %v5715 = vpop.f32.mrf.mxu0
    %v5716 = vadd.f32 0.0, %v5715
    %5717 = vmatmul.bf16.gmra.mxu0 %v5590
    %v5718 = vpop.f32.mrf.mxu0
    %v5719 = vadd.f32 0.0, %v5718
    %v5720 = vpop.f32.mrf.mxu0
    %v5721 = vadd.f32 0.0, %v5720
    %5722 = vmatmul.bf16.gmra.mxu0 %v5593
    %v5723 = vpop.f32.mrf.mxu0
    %v5724 = vadd.f32 0.0, %v5723
    %v5725 = vpop.f32.mrf.mxu0
    %v5726 = vadd.f32 0.0, %v5725
    %5727 = vmatmul.bf16.gmra.mxu0 %v5596
    %v5728 = vpop.f32.mrf.mxu0
    %v5729 = vadd.f32 0.0, %v5728
    %v5730 = vpop.f32.mrf.mxu0
    %v5731 = vadd.f32 0.0, %v5730
    %5732 = vmatmul.bf16.gmra.mxu0 %v5599
    %v5733 = vpop.f32.mrf.mxu0
    %v5734 = vadd.f32 0.0, %v5733
    %v5735 = vpop.f32.mrf.mxu0
    %v5736 = vadd.f32 0.0, %v5735
    %5737 = vmatmul.bf16.gmra.mxu0 %v5602
    %v5738 = vpop.f32.mrf.mxu0
    %v5739 = vadd.f32 0.0, %v5738
    %v5740 = vpop.f32.mrf.mxu0
    %v5741 = vadd.f32 0.0, %v5740
    %5742 = vmatmul.bf16.gmra.mxu0 %v5605
    %v5743 = vpop.f32.mrf.mxu0
    %v5744 = vadd.f32 0.0, %v5743
    %v5745 = vpop.f32.mrf.mxu0
    %v5746 = vadd.f32 0.0, %v5745
    %5747 = vmatmul.bf16.gmra.mxu0 %v5608
    %v5748 = vpop.f32.mrf.mxu0
    %v5749 = vadd.f32 0.0, %v5748
    %v5750 = vpop.f32.mrf.mxu0
    %v5751 = vadd.f32 0.0, %v5750
    %5752 = vmatmul.bf16.gmra.mxu0 %v5611
    %v5753 = vpop.f32.mrf.mxu0
    %v5754 = vadd.f32 0.0, %v5753
    %v5755 = vpop.f32.mrf.mxu0
    %v5756 = vadd.f32 0.0, %v5755
    %5757 = vmatmul.bf16.gmra.mxu0 %v5614
    %v5758 = vpop.f32.mrf.mxu0
    %v5759 = vadd.f32 0.0, %v5758
    %v5760 = vpop.f32.mrf.mxu0
    %v5761 = vadd.f32 0.0, %v5760
    %5762 = vmatmul.bf16.gmra.mxu0 %v5617
    %v5763 = vpop.f32.mrf.mxu0
    %v5764 = vadd.f32 0.0, %v5763
    %v5765 = vpop.f32.mrf.mxu0
    %v5766 = vadd.f32 0.0, %v5765
    %5767 = vmatmul.bf16.gmra.mxu0 %v5620
    %v5768 = vpop.f32.mrf.mxu0
    %v5769 = vadd.f32 0.0, %v5768
    %v5770 = vpop.f32.mrf.mxu0
    %v5771 = vadd.f32 0.0, %v5770
    %5772 = vmatmul.bf16.gmra.mxu0 %v5623
    %v5773 = vpop.f32.mrf.mxu0
    %v5774 = vadd.f32 0.0, %v5773
    %v5775 = vpop.f32.mrf.mxu0
    %v5776 = vadd.f32 0.0, %v5775
    %5777 = vmatmul.bf16.gmra.mxu0 %v5626
    %v5778 = vpop.f32.mrf.mxu0
    %v5779 = vadd.f32 0.0, %v5778
    %v5780 = vpop.f32.mrf.mxu0
    %v5781 = vadd.f32 0.0, %v5780
    %5782 = vmatmul.bf16.gmra.mxu0 %v5629
    %v5783 = vpop.f32.mrf.mxu0
    %v5784 = vadd.f32 0.0, %v5783
    %v5785 = vpop.f32.mrf.mxu0
    %v5786 = vadd.f32 0.0, %v5785
    %5787 = vmatmul.bf16.gmra.mxu0 %v5632
    %v5788 = vpop.f32.mrf.mxu0
    %v5789 = vadd.f32 0.0, %v5788
    %v5790 = vpop.f32.mrf.mxu0
    %v5791 = vadd.f32 0.0, %v5790
    %5792 = vmatmul.bf16.gmra.mxu0 %v5635
    %v5793 = vpop.f32.mrf.mxu0
    %v5794 = vadd.f32 0.0, %v5793
    %v5795 = vpop.f32.mrf.mxu0
    %v5796 = vadd.f32 0.0, %v5795
    %5797 = vmatmul.bf16.gmra.mxu0 %v5638
    %v5798 = vpop.f32.mrf.mxu0
    %v5799 = vadd.f32 0.0, %v5798
    %v5800 = vpop.f32.mrf.mxu0
    %v5801 = vadd.f32 0.0, %v5800
    %5802 = vmatmul.bf16.gmra.mxu0 %v5641
    %v5803 = vpop.f32.mrf.mxu0
    %v5804 = vadd.f32 0.0, %v5803
    %v5805 = vpop.f32.mrf.mxu0
    %v5806 = vadd.f32 0.0, %v5805
    %5807 = vmatmul.bf16.gmra.mxu0 %v5644
    %v5808 = vpop.f32.mrf.mxu0
    %v5809 = vadd.f32 0.0, %v5808
    %v5810 = vpop.f32.mrf.mxu0
    %v5811 = vadd.f32 0.0, %v5810
    %5812 = vmatmul.bf16.gmra.mxu0 %v5647
    %v5813 = vpop.f32.mrf.mxu0
    %v5814 = vadd.f32 0.0, %v5813
    %v5815 = vpop.f32.mrf.mxu0
    %v5816 = vadd.f32 0.0, %v5815
    %5817 = vdwg.mxu0
    %v5826 = vunpack.c.l.b16 %v5512
    %v5827 = vunpack.c.l.b16 %v5513
    %v5828 = vunpack.c.l.b16 %v5514
    %v5829 = vunpack.c.l.b16 %v5515
    %v5830 = vunpack.c.l.b16 %v5516
    %v5831 = vunpack.c.l.b16 %v5517
    %v5832 = vunpack.c.l.b16 %v5518
    %v5833 = vunpack.c.l.b16 %v5519
    %v5834 = vpack.c.b16 %v5827, %v5826
    %v5835 = vpack.c.b16 %v5829, %v5828
    %v5836 = vpack.c.b16 %v5831, %v5830
    %v5837 = vpack.c.b16 %v5833, %v5832
    %v5843 = vsel %vm2347, %v5255, 0
    %v5846 = vsel %vm2347, %v5256, 0
    %v5849 = vsel %vm2347, %v5257, 0
    %v5852 = vsel %vm2347, %v5258, 0
    %v5855 = vsel %vm2347, %v5259, 0
    %v5858 = vsel %vm2347, %v5260, 0
    %v5861 = vsel %vm2347, %v5261, 0
    %v5864 = vsel %vm2347, %v5262, 0
    %v5867 = vsel %vm2347, %v5263, 0
    %v5870 = vsel %vm2347, %v5264, 0
    %v5873 = vsel %vm2347, %v5265, 0
    %v5876 = vsel %vm2347, %v5266, 0
    %v5879 = vsel %vm2347, %v5267, 0
    %v5882 = vsel %vm2347, %v5268, 0
    %v5885 = vsel %vm2347, %v5269, 0
    %v5888 = vsel %vm2347, %v5270, 0
    %v5891 = vsel %vm2347, %v5271, 0
    %v5894 = vsel %vm2347, %v5272, 0
    %v5897 = vsel %vm2347, %v5273, 0
    %v5900 = vsel %vm2347, %v5274, 0
    %v5903 = vsel %vm2347, %v5275, 0
    %v5906 = vsel %vm2347, %v5276, 0
    %v5909 = vsel %vm2347, %v5277, 0
    %v5912 = vsel %vm2347, %v5278, 0
    %v5915 = vsel %vm2347, %v5279, 0
    %v5918 = vsel %vm2347, %v5280, 0
    %v5921 = vsel %vm2347, %v5281, 0
    %v5924 = vsel %vm2347, %v5282, 0
    %v5927 = vsel %vm2347, %v5283, 0
    %v5930 = vsel %vm2347, %v5284, 0
    %v5933 = vsel %vm2347, %v5285, 0
    %v5936 = vsel %vm2347, %v5286, 0
    %5938 = vmatpush.bf16.msra.mxu0 0
    %5939 = vmatpush.bf16.msra.mxu0 0
    %5940 = vmatpush.bf16.msra.mxu0 0
    %5941 = vmatpush.bf16.msra.mxu0 0
    %5942 = vmatpush.bf16.msra.mxu0 %v5837
    %5943 = vmatpush.bf16.msra.mxu0 %v5836
    %5944 = vmatpush.bf16.msra.mxu0 %v5835
    %5945 = vmatpush.bf16.msra.mxu0 %v5834
    %5946 = vmatmul.bf16.gmra.mxu0 %v5843
    %v5947 = vpop.f32.mrf.mxu0
    %v5948 = vadd.f32 %v5659, %v5947
    %v5949 = vpop.f32.mrf.mxu0
    %v5950 = vadd.f32 %v5661, %v5949
    %5951 = vmatmul.bf16.gmra.mxu0 %v5846
    %v5952 = vpop.f32.mrf.mxu0
    %v5953 = vadd.f32 %v5664, %v5952
    %v5954 = vpop.f32.mrf.mxu0
    %v5955 = vadd.f32 %v5666, %v5954
    %5956 = vmatmul.bf16.gmra.mxu0 %v5849
    %v5957 = vpop.f32.mrf.mxu0
    %v5958 = vadd.f32 %v5669, %v5957
    %v5959 = vpop.f32.mrf.mxu0
    %v5960 = vadd.f32 %v5671, %v5959
    %5961 = vmatmul.bf16.gmra.mxu0 %v5852
    %v5962 = vpop.f32.mrf.mxu0
    %v5963 = vadd.f32 %v5674, %v5962
    %v5964 = vpop.f32.mrf.mxu0
    %v5965 = vadd.f32 %v5676, %v5964
    %5966 = vmatmul.bf16.gmra.mxu0 %v5855
    %v5967 = vpop.f32.mrf.mxu0
    %v5968 = vadd.f32 %v5679, %v5967
    %v5969 = vpop.f32.mrf.mxu0
    %v5970 = vadd.f32 %v5681, %v5969
    %5971 = vmatmul.bf16.gmra.mxu0 %v5858
    %v5972 = vpop.f32.mrf.mxu0
    %v5973 = vadd.f32 %v5684, %v5972
    %v5974 = vpop.f32.mrf.mxu0
    %v5975 = vadd.f32 %v5686, %v5974
    %5976 = vmatmul.bf16.gmra.mxu0 %v5861
    %v5977 = vpop.f32.mrf.mxu0
    %v5978 = vadd.f32 %v5689, %v5977
    %v5979 = vpop.f32.mrf.mxu0
    %v5980 = vadd.f32 %v5691, %v5979
    %5981 = vmatmul.bf16.gmra.mxu0 %v5864
    %v5982 = vpop.f32.mrf.mxu0
    %v5983 = vadd.f32 %v5694, %v5982
    %v5984 = vpop.f32.mrf.mxu0
    %v5985 = vadd.f32 %v5696, %v5984
    %5986 = vmatmul.bf16.gmra.mxu0 %v5867
    %v5987 = vpop.f32.mrf.mxu0
    %v5988 = vadd.f32 %v5699, %v5987
    %v5989 = vpop.f32.mrf.mxu0
    %v5990 = vadd.f32 %v5701, %v5989
    %5991 = vmatmul.bf16.gmra.mxu0 %v5870
    %v5992 = vpop.f32.mrf.mxu0
    %v5993 = vadd.f32 %v5704, %v5992
    %v5994 = vpop.f32.mrf.mxu0
    %v5995 = vadd.f32 %v5706, %v5994
    %5996 = vmatmul.bf16.gmra.mxu0 %v5873
    %v5997 = vpop.f32.mrf.mxu0
    %v5998 = vadd.f32 %v5709, %v5997
    %v5999 = vpop.f32.mrf.mxu0
    %v6000 = vadd.f32 %v5711, %v5999
    %6001 = vmatmul.bf16.gmra.mxu0 %v5876
    %v6002 = vpop.f32.mrf.mxu0
    %v6003 = vadd.f32 %v5714, %v6002
    %v6004 = vpop.f32.mrf.mxu0
    %v6005 = vadd.f32 %v5716, %v6004
    %6006 = vmatmul.bf16.gmra.mxu0 %v5879
    %v6007 = vpop.f32.mrf.mxu0
    %v6008 = vadd.f32 %v5719, %v6007
    %v6009 = vpop.f32.mrf.mxu0
    %v6010 = vadd.f32 %v5721, %v6009
    %6011 = vmatmul.bf16.gmra.mxu0 %v5882
    %v6012 = vpop.f32.mrf.mxu0
    %v6013 = vadd.f32 %v5724, %v6012
    %v6014 = vpop.f32.mrf.mxu0
    %v6015 = vadd.f32 %v5726, %v6014
    %6016 = vmatmul.bf16.gmra.mxu0 %v5885
    %v6017 = vpop.f32.mrf.mxu0
    %v6018 = vadd.f32 %v5729, %v6017
    %v6019 = vpop.f32.mrf.mxu0
    %v6020 = vadd.f32 %v5731, %v6019
    %6021 = vmatmul.bf16.gmra.mxu0 %v5888
    %v6022 = vpop.f32.mrf.mxu0
    %v6023 = vadd.f32 %v5734, %v6022
    %v6024 = vpop.f32.mrf.mxu0
    %v6025 = vadd.f32 %v5736, %v6024
    %6026 = vmatmul.bf16.gmra.mxu0 %v5891
    %v6027 = vpop.f32.mrf.mxu0
    %v6028 = vadd.f32 %v5739, %v6027
    %v6029 = vpop.f32.mrf.mxu0
    %v6030 = vadd.f32 %v5741, %v6029
    %6031 = vmatmul.bf16.gmra.mxu0 %v5894
    %v6032 = vpop.f32.mrf.mxu0
    %v6033 = vadd.f32 %v5744, %v6032
    %v6034 = vpop.f32.mrf.mxu0
    %v6035 = vadd.f32 %v5746, %v6034
    %6036 = vmatmul.bf16.gmra.mxu0 %v5897
    %v6037 = vpop.f32.mrf.mxu0
    %v6038 = vadd.f32 %v5749, %v6037
    %v6039 = vpop.f32.mrf.mxu0
    %v6040 = vadd.f32 %v5751, %v6039
    %6041 = vmatmul.bf16.gmra.mxu0 %v5900
    %v6042 = vpop.f32.mrf.mxu0
    %v6043 = vadd.f32 %v5754, %v6042
    %v6044 = vpop.f32.mrf.mxu0
    %v6045 = vadd.f32 %v5756, %v6044
    %6046 = vmatmul.bf16.gmra.mxu0 %v5903
    %v6047 = vpop.f32.mrf.mxu0
    %v6048 = vadd.f32 %v5759, %v6047
    %v6049 = vpop.f32.mrf.mxu0
    %v6050 = vadd.f32 %v5761, %v6049
    %6051 = vmatmul.bf16.gmra.mxu0 %v5906
    %v6052 = vpop.f32.mrf.mxu0
    %v6053 = vadd.f32 %v5764, %v6052
    %v6054 = vpop.f32.mrf.mxu0
    %v6055 = vadd.f32 %v5766, %v6054
    %6056 = vmatmul.bf16.gmra.mxu0 %v5909
    %v6057 = vpop.f32.mrf.mxu0
    %v6058 = vadd.f32 %v5769, %v6057
    %v6059 = vpop.f32.mrf.mxu0
    %v6060 = vadd.f32 %v5771, %v6059
    %6061 = vmatmul.bf16.gmra.mxu0 %v5912
    %v6062 = vpop.f32.mrf.mxu0
    %v6063 = vadd.f32 %v5774, %v6062
    %v6064 = vpop.f32.mrf.mxu0
    %v6065 = vadd.f32 %v5776, %v6064
    %6066 = vmatmul.bf16.gmra.mxu0 %v5915
    %v6067 = vpop.f32.mrf.mxu0
    %v6068 = vadd.f32 %v5779, %v6067
    %v6069 = vpop.f32.mrf.mxu0
    %v6070 = vadd.f32 %v5781, %v6069
    %6071 = vmatmul.bf16.gmra.mxu0 %v5918
    %v6072 = vpop.f32.mrf.mxu0
    %v6073 = vadd.f32 %v5784, %v6072
    %v6074 = vpop.f32.mrf.mxu0
    %v6075 = vadd.f32 %v5786, %v6074
    %6076 = vmatmul.bf16.gmra.mxu0 %v5921
    %v6077 = vpop.f32.mrf.mxu0
    %v6078 = vadd.f32 %v5789, %v6077
    %v6079 = vpop.f32.mrf.mxu0
    %v6080 = vadd.f32 %v5791, %v6079
    %6081 = vmatmul.bf16.gmra.mxu0 %v5924
    %v6082 = vpop.f32.mrf.mxu0
    %v6083 = vadd.f32 %v5794, %v6082
    %v6084 = vpop.f32.mrf.mxu0
    %v6085 = vadd.f32 %v5796, %v6084
    %6086 = vmatmul.bf16.gmra.mxu0 %v5927
    %v6087 = vpop.f32.mrf.mxu0
    %v6088 = vadd.f32 %v5799, %v6087
    %v6089 = vpop.f32.mrf.mxu0
    %v6090 = vadd.f32 %v5801, %v6089
    %6091 = vmatmul.bf16.gmra.mxu0 %v5930
    %v6092 = vpop.f32.mrf.mxu0
    %v6093 = vadd.f32 %v5804, %v6092
    %v6094 = vpop.f32.mrf.mxu0
    %v6095 = vadd.f32 %v5806, %v6094
    %6096 = vmatmul.bf16.gmra.mxu0 %v5933
    %v6097 = vpop.f32.mrf.mxu0
    %v6098 = vadd.f32 %v5809, %v6097
    %v6099 = vpop.f32.mrf.mxu0
    %v6100 = vadd.f32 %v5811, %v6099
    %6101 = vmatmul.bf16.gmra.mxu0 %v5936
    %v6102 = vpop.f32.mrf.mxu0
    %v6103 = vadd.f32 %v5814, %v6102
    %v6104 = vpop.f32.mrf.mxu0
    %v6105 = vadd.f32 %v5816, %v6104
    %6106 = vdwg.mxu0
    %s6107 = scalar_lea.vmem [#allocation2], 256
    %v6108 = vld [vmem:[%s6107] sm:$0xf]
    %v6109 = vld [vmem:[%s6107 + $0x4] sm:$0xf]
    %v6110 = vld [vmem:[%s6107 + $0x8] sm:$0xf]
    %v6111 = vld [vmem:[%s6107 + $0xc] sm:$0xf]
    %v6112 = vld [vmem:[%s6107 + $0x10] sm:$0xf]
    %v6113 = vld [vmem:[%s6107 + $0x14] sm:$0xf]
    %v6114 = vld [vmem:[%s6107 + $0x18] sm:$0xf]
    %v6115 = vld [vmem:[%s6107 + $0x1c] sm:$0xf]
    %v6124 = vunpack.c.l.b16 %v6108
    %v6125 = vunpack.c.l.b16 %v6109
    %v6126 = vunpack.c.l.b16 %v6110
    %v6127 = vunpack.c.l.b16 %v6111
    %v6128 = vunpack.c.l.b16 %v6112
    %v6129 = vunpack.c.l.b16 %v6113
    %v6130 = vunpack.c.l.b16 %v6114
    %v6131 = vunpack.c.l.b16 %v6115
    %v6132 = vpack.c.b16 %v6125, %v6124
    %v6133 = vpack.c.b16 %v6127, %v6126
    %v6134 = vpack.c.b16 %v6129, %v6128
    %v6135 = vpack.c.b16 %v6131, %v6130
    %v6141 = vsel %vm2347, %v5479, 0
    %v6144 = vsel %vm2347, %v5480, 0
    %v6147 = vsel %vm2347, %v5481, 0
    %v6150 = vsel %vm2347, %v5482, 0
    %v6153 = vsel %vm2347, %v5483, 0
    %v6156 = vsel %vm2347, %v5484, 0
    %v6159 = vsel %vm2347, %v5485, 0
    %v6162 = vsel %vm2347, %v5486, 0
    %v6165 = vsel %vm2347, %v5487, 0
    %v6168 = vsel %vm2347, %v5488, 0
    %v6171 = vsel %vm2347, %v5489, 0
    %v6174 = vsel %vm2347, %v5490, 0
    %v6177 = vsel %vm2347, %v5491, 0
    %v6180 = vsel %vm2347, %v5492, 0
    %v6183 = vsel %vm2347, %v5493, 0
    %v6186 = vsel %vm2347, %v5494, 0
    %v6189 = vsel %vm2347, %v5495, 0
    %v6192 = vsel %vm2347, %v5496, 0
    %v6195 = vsel %vm2347, %v5497, 0
    %v6198 = vsel %vm2347, %v5498, 0
    %v6201 = vsel %vm2347, %v5499, 0
    %v6204 = vsel %vm2347, %v5500, 0
    %v6207 = vsel %vm2347, %v5501, 0
    %v6210 = vsel %vm2347, %v5502, 0
    %v6213 = vsel %vm2347, %v5503, 0
    %v6216 = vsel %vm2347, %v5504, 0
    %v6219 = vsel %vm2347, %v5505, 0
    %v6222 = vsel %vm2347, %v5506, 0
    %v6225 = vsel %vm2347, %v5507, 0
    %v6228 = vsel %vm2347, %v5508, 0
    %v6231 = vsel %vm2347, %v5509, 0
    %v6234 = vsel %vm2347, %v5510, 0
    %6236 = vmatpush.bf16.msra.mxu0 0
    %6237 = vmatpush.bf16.msra.mxu0 0
    %6238 = vmatpush.bf16.msra.mxu0 0
    %6239 = vmatpush.bf16.msra.mxu0 0
    %6240 = vmatpush.bf16.msra.mxu0 %v6135
    %6241 = vmatpush.bf16.msra.mxu0 %v6134
    %6242 = vmatpush.bf16.msra.mxu0 %v6133
    %6243 = vmatpush.bf16.msra.mxu0 %v6132
    %6244 = vmatmul.bf16.gmra.mxu0 %v6141
    %v6245 = vpop.f32.mrf.mxu0
    %v6246 = vadd.f32 0.0, %v6245
    %v6247 = vpop.f32.mrf.mxu0
    %v6248 = vadd.f32 0.0, %v6247
    %6249 = vmatmul.bf16.gmra.mxu0 %v6144
    %v6250 = vpop.f32.mrf.mxu0
    %v6251 = vadd.f32 0.0, %v6250
    %v6252 = vpop.f32.mrf.mxu0
    %v6253 = vadd.f32 0.0, %v6252
    %6254 = vmatmul.bf16.gmra.mxu0 %v6147
    %v6255 = vpop.f32.mrf.mxu0
    %v6256 = vadd.f32 0.0, %v6255
    %v6257 = vpop.f32.mrf.mxu0
    %v6258 = vadd.f32 0.0, %v6257
    %6259 = vmatmul.bf16.gmra.mxu0 %v6150
    %v6260 = vpop.f32.mrf.mxu0
    %v6261 = vadd.f32 0.0, %v6260
    %v6262 = vpop.f32.mrf.mxu0
    %v6263 = vadd.f32 0.0, %v6262
    %6264 = vmatmul.bf16.gmra.mxu0 %v6153
    %v6265 = vpop.f32.mrf.mxu0
    %v6266 = vadd.f32 0.0, %v6265
    %v6267 = vpop.f32.mrf.mxu0
    %v6268 = vadd.f32 0.0, %v6267
    %6269 = vmatmul.bf16.gmra.mxu0 %v6156
    %v6270 = vpop.f32.mrf.mxu0
    %v6271 = vadd.f32 0.0, %v6270
    %v6272 = vpop.f32.mrf.mxu0
    %v6273 = vadd.f32 0.0, %v6272
    %6274 = vmatmul.bf16.gmra.mxu0 %v6159
    %v6275 = vpop.f32.mrf.mxu0
    %v6276 = vadd.f32 0.0, %v6275
    %v6277 = vpop.f32.mrf.mxu0
    %v6278 = vadd.f32 0.0, %v6277
    %6279 = vmatmul.bf16.gmra.mxu0 %v6162
    %v6280 = vpop.f32.mrf.mxu0
    %v6281 = vadd.f32 0.0, %v6280
    %v6282 = vpop.f32.mrf.mxu0
    %v6283 = vadd.f32 0.0, %v6282
    %6284 = vmatmul.bf16.gmra.mxu0 %v6165
    %v6285 = vpop.f32.mrf.mxu0
    %v6286 = vadd.f32 0.0, %v6285
    %v6287 = vpop.f32.mrf.mxu0
    %v6288 = vadd.f32 0.0, %v6287
    %6289 = vmatmul.bf16.gmra.mxu0 %v6168
    %v6290 = vpop.f32.mrf.mxu0
    %v6291 = vadd.f32 0.0, %v6290
    %v6292 = vpop.f32.mrf.mxu0
    %v6293 = vadd.f32 0.0, %v6292
    %6294 = vmatmul.bf16.gmra.mxu0 %v6171
    %v6295 = vpop.f32.mrf.mxu0
    %v6296 = vadd.f32 0.0, %v6295
    %v6297 = vpop.f32.mrf.mxu0
    %v6298 = vadd.f32 0.0, %v6297
    %6299 = vmatmul.bf16.gmra.mxu0 %v6174
    %v6300 = vpop.f32.mrf.mxu0
    %v6301 = vadd.f32 0.0, %v6300
    %v6302 = vpop.f32.mrf.mxu0
    %v6303 = vadd.f32 0.0, %v6302
    %6304 = vmatmul.bf16.gmra.mxu0 %v6177
    %v6305 = vpop.f32.mrf.mxu0
    %v6306 = vadd.f32 0.0, %v6305
    %v6307 = vpop.f32.mrf.mxu0
    %v6308 = vadd.f32 0.0, %v6307
    %6309 = vmatmul.bf16.gmra.mxu0 %v6180
    %v6310 = vpop.f32.mrf.mxu0
    %v6311 = vadd.f32 0.0, %v6310
    %v6312 = vpop.f32.mrf.mxu0
    %v6313 = vadd.f32 0.0, %v6312
    %6314 = vmatmul.bf16.gmra.mxu0 %v6183
    %v6315 = vpop.f32.mrf.mxu0
    %v6316 = vadd.f32 0.0, %v6315
    %v6317 = vpop.f32.mrf.mxu0
    %v6318 = vadd.f32 0.0, %v6317
    %6319 = vmatmul.bf16.gmra.mxu0 %v6186
    %v6320 = vpop.f32.mrf.mxu0
    %v6321 = vadd.f32 0.0, %v6320
    %v6322 = vpop.f32.mrf.mxu0
    %v6323 = vadd.f32 0.0, %v6322
    %6324 = vmatmul.bf16.gmra.mxu0 %v6189
    %v6325 = vpop.f32.mrf.mxu0
    %v6326 = vadd.f32 0.0, %v6325
    %v6327 = vpop.f32.mrf.mxu0
    %v6328 = vadd.f32 0.0, %v6327
    %6329 = vmatmul.bf16.gmra.mxu0 %v6192
    %v6330 = vpop.f32.mrf.mxu0
    %v6331 = vadd.f32 0.0, %v6330
    %v6332 = vpop.f32.mrf.mxu0
    %v6333 = vadd.f32 0.0, %v6332
    %6334 = vmatmul.bf16.gmra.mxu0 %v6195
    %v6335 = vpop.f32.mrf.mxu0
    %v6336 = vadd.f32 0.0, %v6335
    %v6337 = vpop.f32.mrf.mxu0
    %v6338 = vadd.f32 0.0, %v6337
    %6339 = vmatmul.bf16.gmra.mxu0 %v6198
    %v6340 = vpop.f32.mrf.mxu0
    %v6341 = vadd.f32 0.0, %v6340
    %v6342 = vpop.f32.mrf.mxu0
    %v6343 = vadd.f32 0.0, %v6342
    %6344 = vmatmul.bf16.gmra.mxu0 %v6201
    %v6345 = vpop.f32.mrf.mxu0
    %v6346 = vadd.f32 0.0, %v6345
    %v6347 = vpop.f32.mrf.mxu0
    %v6348 = vadd.f32 0.0, %v6347
    %6349 = vmatmul.bf16.gmra.mxu0 %v6204
    %v6350 = vpop.f32.mrf.mxu0
    %v6351 = vadd.f32 0.0, %v6350
    %v6352 = vpop.f32.mrf.mxu0
    %v6353 = vadd.f32 0.0, %v6352
    %6354 = vmatmul.bf16.gmra.mxu0 %v6207
    %v6355 = vpop.f32.mrf.mxu0
    %v6356 = vadd.f32 0.0, %v6355
    %v6357 = vpop.f32.mrf.mxu0
    %v6358 = vadd.f32 0.0, %v6357
    %6359 = vmatmul.bf16.gmra.mxu0 %v6210
    %v6360 = vpop.f32.mrf.mxu0
    %v6361 = vadd.f32 0.0, %v6360
    %v6362 = vpop.f32.mrf.mxu0
    %v6363 = vadd.f32 0.0, %v6362
    %6364 = vmatmul.bf16.gmra.mxu0 %v6213
    %v6365 = vpop.f32.mrf.mxu0
    %v6366 = vadd.f32 0.0, %v6365
    %v6367 = vpop.f32.mrf.mxu0
    %v6368 = vadd.f32 0.0, %v6367
    %6369 = vmatmul.bf16.gmra.mxu0 %v6216
    %v6370 = vpop.f32.mrf.mxu0
    %v6371 = vadd.f32 0.0, %v6370
    %v6372 = vpop.f32.mrf.mxu0
    %v6373 = vadd.f32 0.0, %v6372
    %6374 = vmatmul.bf16.gmra.mxu0 %v6219
    %v6375 = vpop.f32.mrf.mxu0
    %v6376 = vadd.f32 0.0, %v6375
    %v6377 = vpop.f32.mrf.mxu0
    %v6378 = vadd.f32 0.0, %v6377
    %6379 = vmatmul.bf16.gmra.mxu0 %v6222
    %v6380 = vpop.f32.mrf.mxu0
    %v6381 = vadd.f32 0.0, %v6380
    %v6382 = vpop.f32.mrf.mxu0
    %v6383 = vadd.f32 0.0, %v6382
    %6384 = vmatmul.bf16.gmra.mxu0 %v6225
    %v6385 = vpop.f32.mrf.mxu0
    %v6386 = vadd.f32 0.0, %v6385
    %v6387 = vpop.f32.mrf.mxu0
    %v6388 = vadd.f32 0.0, %v6387
    %6389 = vmatmul.bf16.gmra.mxu0 %v6228
    %v6390 = vpop.f32.mrf.mxu0
    %v6391 = vadd.f32 0.0, %v6390
    %v6392 = vpop.f32.mrf.mxu0
    %v6393 = vadd.f32 0.0, %v6392
    %6394 = vmatmul.bf16.gmra.mxu0 %v6231
    %v6395 = vpop.f32.mrf.mxu0
    %v6396 = vadd.f32 0.0, %v6395
    %v6397 = vpop.f32.mrf.mxu0
    %v6398 = vadd.f32 0.0, %v6397
    %6399 = vmatmul.bf16.gmra.mxu0 %v6234
    %v6400 = vpop.f32.mrf.mxu0
    %v6401 = vadd.f32 0.0, %v6400
    %v6402 = vpop.f32.mrf.mxu0
    %v6403 = vadd.f32 0.0, %v6402
    %6404 = vdwg.mxu0
    %v6405 = vadd.f32 %v5948, %v6246
    %v6406 = vadd.f32 %v5950, %v6248
    %v6407 = vadd.f32 %v5953, %v6251
    %v6408 = vadd.f32 %v5955, %v6253
    %v6409 = vadd.f32 %v5958, %v6256
    %v6410 = vadd.f32 %v5960, %v6258
    %v6411 = vadd.f32 %v5963, %v6261
    %v6412 = vadd.f32 %v5965, %v6263
    %v6413 = vadd.f32 %v5968, %v6266
    %v6414 = vadd.f32 %v5970, %v6268
    %v6415 = vadd.f32 %v5973, %v6271
    %v6416 = vadd.f32 %v5975, %v6273
    %v6417 = vadd.f32 %v5978, %v6276
    %v6418 = vadd.f32 %v5980, %v6278
    %v6419 = vadd.f32 %v5983, %v6281
    %v6420 = vadd.f32 %v5985, %v6283
    %v6421 = vadd.f32 %v5988, %v6286
    %v6422 = vadd.f32 %v5990, %v6288
    %v6423 = vadd.f32 %v5993, %v6291
    %v6424 = vadd.f32 %v5995, %v6293
    %v6425 = vadd.f32 %v5998, %v6296
    %v6426 = vadd.f32 %v6000, %v6298
    %v6427 = vadd.f32 %v6003, %v6301
    %v6428 = vadd.f32 %v6005, %v6303
    %v6429 = vadd.f32 %v6008, %v6306
    %v6430 = vadd.f32 %v6010, %v6308
    %v6431 = vadd.f32 %v6013, %v6311
    %v6432 = vadd.f32 %v6015, %v6313
    %v6433 = vadd.f32 %v6018, %v6316
    %v6434 = vadd.f32 %v6020, %v6318
    %v6435 = vadd.f32 %v6023, %v6321
    %v6436 = vadd.f32 %v6025, %v6323
    %v6437 = vadd.f32 %v6028, %v6326
    %v6438 = vadd.f32 %v6030, %v6328
    %v6439 = vadd.f32 %v6033, %v6331
    %v6440 = vadd.f32 %v6035, %v6333
    %v6441 = vadd.f32 %v6038, %v6336
    %v6442 = vadd.f32 %v6040, %v6338
    %v6443 = vadd.f32 %v6043, %v6341
    %v6444 = vadd.f32 %v6045, %v6343
    %v6445 = vadd.f32 %v6048, %v6346
    %v6446 = vadd.f32 %v6050, %v6348
    %v6447 = vadd.f32 %v6053, %v6351
    %v6448 = vadd.f32 %v6055, %v6353
    %v6449 = vadd.f32 %v6058, %v6356
    %v6450 = vadd.f32 %v6060, %v6358
    %v6451 = vadd.f32 %v6063, %v6361
    %v6452 = vadd.f32 %v6065, %v6363
    %v6453 = vadd.f32 %v6068, %v6366
    %v6454 = vadd.f32 %v6070, %v6368
    %v6455 = vadd.f32 %v6073, %v6371
    %v6456 = vadd.f32 %v6075, %v6373
    %v6457 = vadd.f32 %v6078, %v6376
    %v6458 = vadd.f32 %v6080, %v6378
    %v6459 = vadd.f32 %v6083, %v6381
    %v6460 = vadd.f32 %v6085, %v6383
    %v6461 = vadd.f32 %v6088, %v6386
    %v6462 = vadd.f32 %v6090, %v6388
    %v6463 = vadd.f32 %v6093, %v6391
    %v6464 = vadd.f32 %v6095, %v6393
    %v6465 = vadd.f32 %v6098, %v6396
    %v6466 = vadd.f32 %v6100, %v6398
    %v6467 = vadd.f32 %v6103, %v6401
    %v6468 = vadd.f32 %v6105, %v6403
    %s6469 = scalar_lea.vmem %s4, 2
    %v6470 = vld [vmem:[%s6469] sm:$0x1]
    %v6472 = vperm.slane %v6470, 0
    %v6474 = vadd.f32 %v6405, %v6472
    %v6475 = vadd.f32 %v6406, %v6472
    %v6476 = vadd.f32 %v6407, %v6472
    %v6477 = vadd.f32 %v6408, %v6472
    %v6478 = vadd.f32 %v6409, %v6472
    %v6479 = vadd.f32 %v6410, %v6472
    %v6480 = vadd.f32 %v6411, %v6472
    %v6481 = vadd.f32 %v6412, %v6472
    %v6482 = vadd.f32 %v6413, %v6472
    %v6483 = vadd.f32 %v6414, %v6472
    %v6484 = vadd.f32 %v6415, %v6472
    %v6485 = vadd.f32 %v6416, %v6472
    %v6486 = vadd.f32 %v6417, %v6472
    %v6487 = vadd.f32 %v6418, %v6472
    %v6488 = vadd.f32 %v6419, %v6472
    %v6489 = vadd.f32 %v6420, %v6472
    %v6490 = vadd.f32 %v6421, %v6472
    %v6491 = vadd.f32 %v6422, %v6472
    %v6492 = vadd.f32 %v6423, %v6472
    %v6493 = vadd.f32 %v6424, %v6472
    %v6494 = vadd.f32 %v6425, %v6472
    %v6495 = vadd.f32 %v6426, %v6472
    %v6496 = vadd.f32 %v6427, %v6472
    %v6497 = vadd.f32 %v6428, %v6472
    %v6498 = vadd.f32 %v6429, %v6472
    %v6499 = vadd.f32 %v6430, %v6472
    %v6500 = vadd.f32 %v6431, %v6472
    %v6501 = vadd.f32 %v6432, %v6472
    %v6502 = vadd.f32 %v6433, %v6472
    %v6503 = vadd.f32 %v6434, %v6472
    %v6504 = vadd.f32 %v6435, %v6472
    %v6505 = vadd.f32 %v6436, %v6472
    %v6506 = vadd.f32 %v6437, %v6472
    %v6507 = vadd.f32 %v6438, %v6472
    %v6508 = vadd.f32 %v6439, %v6472
    %v6509 = vadd.f32 %v6440, %v6472
    %v6510 = vadd.f32 %v6441, %v6472
    %v6511 = vadd.f32 %v6442, %v6472
    %v6512 = vadd.f32 %v6443, %v6472
    %v6513 = vadd.f32 %v6444, %v6472
    %v6514 = vadd.f32 %v6445, %v6472
    %v6515 = vadd.f32 %v6446, %v6472
    %v6516 = vadd.f32 %v6447, %v6472
    %v6517 = vadd.f32 %v6448, %v6472
    %v6518 = vadd.f32 %v6449, %v6472
    %v6519 = vadd.f32 %v6450, %v6472
    %v6520 = vadd.f32 %v6451, %v6472
    %v6521 = vadd.f32 %v6452, %v6472
    %v6522 = vadd.f32 %v6453, %v6472
    %v6523 = vadd.f32 %v6454, %v6472
    %v6524 = vadd.f32 %v6455, %v6472
    %v6525 = vadd.f32 %v6456, %v6472
    %v6526 = vadd.f32 %v6457, %v6472
    %v6527 = vadd.f32 %v6458, %v6472
    %v6528 = vadd.f32 %v6459, %v6472
    %v6529 = vadd.f32 %v6460, %v6472
    %v6530 = vadd.f32 %v6461, %v6472
    %v6531 = vadd.f32 %v6462, %v6472
    %v6532 = vadd.f32 %v6463, %v6472
    %v6533 = vadd.f32 %v6464, %v6472
    %v6534 = vadd.f32 %v6465, %v6472
    %v6535 = vadd.f32 %v6466, %v6472
    %v6536 = vadd.f32 %v6467, %v6472
    %v6537 = vadd.f32 %v6468, %v6472
    %v6538 = vmax.f32 %v6474, 0.0
    %v6539 = vmax.f32 %v6475, 0.0
    %v6540 = vmax.f32 %v6476, 0.0
    %v6541 = vmax.f32 %v6477, 0.0
    %v6542 = vmax.f32 %v6478, 0.0
    %v6543 = vmax.f32 %v6479, 0.0
    %v6544 = vmax.f32 %v6480, 0.0
    %v6545 = vmax.f32 %v6481, 0.0
    %v6546 = vmax.f32 %v6482, 0.0
    %v6547 = vmax.f32 %v6483, 0.0
    %v6548 = vmax.f32 %v6484, 0.0
    %v6549 = vmax.f32 %v6485, 0.0
    %v6550 = vmax.f32 %v6486, 0.0
    %v6551 = vmax.f32 %v6487, 0.0
    %v6552 = vmax.f32 %v6488, 0.0
    %v6553 = vmax.f32 %v6489, 0.0
    %v6554 = vmax.f32 %v6490, 0.0
    %v6555 = vmax.f32 %v6491, 0.0
    %v6556 = vmax.f32 %v6492, 0.0
    %v6557 = vmax.f32 %v6493, 0.0
    %v6558 = vmax.f32 %v6494, 0.0
    %v6559 = vmax.f32 %v6495, 0.0
    %v6560 = vmax.f32 %v6496, 0.0
    %v6561 = vmax.f32 %v6497, 0.0
    %v6562 = vmax.f32 %v6498, 0.0
    %v6563 = vmax.f32 %v6499, 0.0
    %v6564 = vmax.f32 %v6500, 0.0
    %v6565 = vmax.f32 %v6501, 0.0
    %v6566 = vmax.f32 %v6502, 0.0
    %v6567 = vmax.f32 %v6503, 0.0
    %v6568 = vmax.f32 %v6504, 0.0
    %v6569 = vmax.f32 %v6505, 0.0
    %v6570 = vmax.f32 %v6506, 0.0
    %v6571 = vmax.f32 %v6507, 0.0
    %v6572 = vmax.f32 %v6508, 0.0
    %v6573 = vmax.f32 %v6509, 0.0
    %v6574 = vmax.f32 %v6510, 0.0
    %v6575 = vmax.f32 %v6511, 0.0
    %v6576 = vmax.f32 %v6512, 0.0
    %v6577 = vmax.f32 %v6513, 0.0
    %v6578 = vmax.f32 %v6514, 0.0
    %v6579 = vmax.f32 %v6515, 0.0
    %v6580 = vmax.f32 %v6516, 0.0
    %v6581 = vmax.f32 %v6517, 0.0
    %v6582 = vmax.f32 %v6518, 0.0
    %v6583 = vmax.f32 %v6519, 0.0
    %v6584 = vmax.f32 %v6520, 0.0
    %v6585 = vmax.f32 %v6521, 0.0
    %v6586 = vmax.f32 %v6522, 0.0
    %v6587 = vmax.f32 %v6523, 0.0
    %v6588 = vmax.f32 %v6524, 0.0
    %v6589 = vmax.f32 %v6525, 0.0
    %v6590 = vmax.f32 %v6526, 0.0
    %v6591 = vmax.f32 %v6527, 0.0
    %v6592 = vmax.f32 %v6528, 0.0
    %v6593 = vmax.f32 %v6529, 0.0
    %v6594 = vmax.f32 %v6530, 0.0
    %v6595 = vmax.f32 %v6531, 0.0
    %v6596 = vmax.f32 %v6532, 0.0
    %v6597 = vmax.f32 %v6533, 0.0
    %v6598 = vmax.f32 %v6534, 0.0
    %v6599 = vmax.f32 %v6535, 0.0
    %v6600 = vmax.f32 %v6536, 0.0
    %v6601 = vmax.f32 %v6537, 0.0
    %v6602 = vpack.c.bf16 %v6539, %v6538
    %v6603 = vpack.c.bf16 %v6541, %v6540
    %v6604 = vpack.c.bf16 %v6543, %v6542
    %v6605 = vpack.c.bf16 %v6545, %v6544
    %v6606 = vpack.c.bf16 %v6547, %v6546
    %v6607 = vpack.c.bf16 %v6549, %v6548
    %v6608 = vpack.c.bf16 %v6551, %v6550
    %v6609 = vpack.c.bf16 %v6553, %v6552
    %v6610 = vpack.c.bf16 %v6555, %v6554
    %v6611 = vpack.c.bf16 %v6557, %v6556
    %v6612 = vpack.c.bf16 %v6559, %v6558
    %v6613 = vpack.c.bf16 %v6561, %v6560
    %v6614 = vpack.c.bf16 %v6563, %v6562
    %v6615 = vpack.c.bf16 %v6565, %v6564
    %v6616 = vpack.c.bf16 %v6567, %v6566
    %v6617 = vpack.c.bf16 %v6569, %v6568
    %v6618 = vpack.c.bf16 %v6571, %v6570
    %v6619 = vpack.c.bf16 %v6573, %v6572
    %v6620 = vpack.c.bf16 %v6575, %v6574
    %v6621 = vpack.c.bf16 %v6577, %v6576
    %v6622 = vpack.c.bf16 %v6579, %v6578
    %v6623 = vpack.c.bf16 %v6581, %v6580
    %v6624 = vpack.c.bf16 %v6583, %v6582
    %v6625 = vpack.c.bf16 %v6585, %v6584
    %v6626 = vpack.c.bf16 %v6587, %v6586
    %v6627 = vpack.c.bf16 %v6589, %v6588
    %v6628 = vpack.c.bf16 %v6591, %v6590
    %v6629 = vpack.c.bf16 %v6593, %v6592
    %v6630 = vpack.c.bf16 %v6595, %v6594
    %v6631 = vpack.c.bf16 %v6597, %v6596
    %v6632 = vpack.c.bf16 %v6599, %v6598
    %v6633 = vpack.c.bf16 %v6601, %v6600
    %v6634 = vrot.slane %v6538, 7
    %v6635 = vrot.slane %v6539, 7
    %v6636 = vrot.slane %v6540, 7
    %v6637 = vrot.slane %v6541, 7
    %v6638 = vrot.slane %v6542, 7
    %v6639 = vrot.slane %v6543, 7
    %v6640 = vrot.slane %v6544, 7
    %v6641 = vrot.slane %v6545, 7
    %v6642 = vrot.slane %v6546, 7
    %v6643 = vrot.slane %v6547, 7
    %v6644 = vrot.slane %v6548, 7
    %v6645 = vrot.slane %v6549, 7
    %v6646 = vrot.slane %v6550, 7
    %v6647 = vrot.slane %v6551, 7
    %v6648 = vrot.slane %v6552, 7
    %v6649 = vrot.slane %v6553, 7
    %v6650 = vrot.slane %v6554, 7
    %v6651 = vrot.slane %v6555, 7
    %v6652 = vrot.slane %v6556, 7
    %v6653 = vrot.slane %v6557, 7
    %v6654 = vrot.slane %v6558, 7
    %v6655 = vrot.slane %v6559, 7
    %v6656 = vrot.slane %v6560, 7
    %v6657 = vrot.slane %v6561, 7
    %v6658 = vrot.slane %v6562, 7
    %v6659 = vrot.slane %v6563, 7
    %v6660 = vrot.slane %v6564, 7
    %v6661 = vrot.slane %v6565, 7
    %v6662 = vrot.slane %v6566, 7
    %v6663 = vrot.slane %v6567, 7
    %v6664 = vrot.slane %v6568, 7
    %v6665 = vrot.slane %v6569, 7
    %v6666 = vrot.slane %v6570, 7
    %v6667 = vrot.slane %v6571, 7
    %v6668 = vrot.slane %v6572, 7
    %v6669 = vrot.slane %v6573, 7
    %v6670 = vrot.slane %v6574, 7
    %v6671 = vrot.slane %v6575, 7
    %v6672 = vrot.slane %v6576, 7
    %v6673 = vrot.slane %v6577, 7
    %v6674 = vrot.slane %v6578, 7
    %v6675 = vrot.slane %v6579, 7
    %v6676 = vrot.slane %v6580, 7
    %v6677 = vrot.slane %v6581, 7
    %v6678 = vrot.slane %v6582, 7
    %v6679 = vrot.slane %v6583, 7
    %v6680 = vrot.slane %v6584, 7
    %v6681 = vrot.slane %v6585, 7
    %v6682 = vrot.slane %v6586, 7
    %v6683 = vrot.slane %v6587, 7
    %v6684 = vrot.slane %v6588, 7
    %v6685 = vrot.slane %v6589, 7
    %v6686 = vrot.slane %v6590, 7
    %v6687 = vrot.slane %v6591, 7
    %v6688 = vrot.slane %v6592, 7
    %v6689 = vrot.slane %v6593, 7
    %v6690 = vrot.slane %v6594, 7
    %v6691 = vrot.slane %v6595, 7
    %v6692 = vrot.slane %v6596, 7
    %v6693 = vrot.slane %v6597, 7
    %v6694 = vrot.slane %v6598, 7
    %v6695 = vrot.slane %v6599, 7
    %v6696 = vrot.slane %v6600, 7
    %v6697 = vrot.slane %v6601, 7
    %v6698 = vsel %vm1664, %v6696, %v6697
    %v6699 = vsel %vm1664, %v6695, %v6696
    %v6700 = vsel %vm1664, %v6694, %v6695
    %v6701 = vsel %vm1664, %v6693, %v6694
    %v6702 = vsel %vm1664, %v6692, %v6693
    %v6703 = vsel %vm1664, %v6691, %v6692
    %v6704 = vsel %vm1664, %v6690, %v6691
    %v6705 = vsel %vm1664, %v6689, %v6690
    %v6706 = vsel %vm1664, %v6688, %v6689
    %v6707 = vsel %vm1664, %v6687, %v6688
    %v6708 = vsel %vm1664, %v6686, %v6687
    %v6709 = vsel %vm1664, %v6685, %v6686
    %v6710 = vsel %vm1664, %v6684, %v6685
    %v6711 = vsel %vm1664, %v6683, %v6684
    %v6712 = vsel %vm1664, %v6682, %v6683
    %v6713 = vsel %vm1664, %v6681, %v6682
    %v6714 = vsel %vm1664, %v6680, %v6681
    %v6715 = vsel %vm1664, %v6679, %v6680
    %v6716 = vsel %vm1664, %v6678, %v6679
    %v6717 = vsel %vm1664, %v6677, %v6678
    %v6718 = vsel %vm1664, %v6676, %v6677
    %v6719 = vsel %vm1664, %v6675, %v6676
    %v6720 = vsel %vm1664, %v6674, %v6675
    %v6721 = vsel %vm1664, %v6673, %v6674
    %v6722 = vsel %vm1664, %v6672, %v6673
    %v6723 = vsel %vm1664, %v6671, %v6672
    %v6724 = vsel %vm1664, %v6670, %v6671
    %v6725 = vsel %vm1664, %v6669, %v6670
    %v6726 = vsel %vm1664, %v6668, %v6669
    %v6727 = vsel %vm1664, %v6667, %v6668
    %v6728 = vsel %vm1664, %v6666, %v6667
    %v6729 = vsel %vm1664, %v6665, %v6666
    %v6730 = vsel %vm1664, %v6664, %v6665
    %v6731 = vsel %vm1664, %v6663, %v6664
    %v6732 = vsel %vm1664, %v6662, %v6663
    %v6733 = vsel %vm1664, %v6661, %v6662
    %v6734 = vsel %vm1664, %v6660, %v6661
    %v6735 = vsel %vm1664, %v6659, %v6660
    %v6736 = vsel %vm1664, %v6658, %v6659
    %v6737 = vsel %vm1664, %v6657, %v6658
    %v6738 = vsel %vm1664, %v6656, %v6657
    %v6739 = vsel %vm1664, %v6655, %v6656
    %v6740 = vsel %vm1664, %v6654, %v6655
    %v6741 = vsel %vm1664, %v6653, %v6654
    %v6742 = vsel %vm1664, %v6652, %v6653
    %v6743 = vsel %vm1664, %v6651, %v6652
    %v6744 = vsel %vm1664, %v6650, %v6651
    %v6745 = vsel %vm1664, %v6649, %v6650
    %v6746 = vsel %vm1664, %v6648, %v6649
    %v6747 = vsel %vm1664, %v6647, %v6648
    %v6748 = vsel %vm1664, %v6646, %v6647
    %v6749 = vsel %vm1664, %v6645, %v6646
    %v6750 = vsel %vm1664, %v6644, %v6645
    %v6751 = vsel %vm1664, %v6643, %v6644
    %v6752 = vsel %vm1664, %v6642, %v6643
    %v6753 = vsel %vm1664, %v6641, %v6642
    %v6754 = vsel %vm1664, %v6640, %v6641
    %v6755 = vsel %vm1664, %v6639, %v6640
    %v6756 = vsel %vm1664, %v6638, %v6639
    %v6757 = vsel %vm1664, %v6637, %v6638
    %v6758 = vsel %vm1664, %v6636, %v6637
    %v6759 = vsel %vm1664, %v6635, %v6636
    %v6760 = vsel %vm1664, %v6634, %v6635
    %v6761 = vsel %vm1664, %v6697, %v6634
    %v6762 = vsel %vm1793, 0.0, %v6761
    %v6763 = vsel %vm1794, 0.0, %v6760
    %v6764 = vsel %vm1795, 0.0, %v6759
    %v6765 = vsel %vm1796, 0.0, %v6758
    %v6766 = vsel %vm1797, 0.0, %v6757
    %v6767 = vsel %vm1798, 0.0, %v6756
    %v6768 = vsel %vm1799, 0.0, %v6755
    %v6769 = vsel %vm1800, 0.0, %v6754
    %v6770 = vsel %vm1801, 0.0, %v6753
    %v6771 = vsel %vm1802, 0.0, %v6752
    %v6772 = vsel %vm1803, 0.0, %v6751
    %v6773 = vsel %vm1804, 0.0, %v6750
    %v6774 = vsel %vm1805, 0.0, %v6749
    %v6775 = vsel %vm1806, 0.0, %v6748
    %v6776 = vsel %vm1807, 0.0, %v6747
    %v6777 = vsel %vm1808, 0.0, %v6746
    %v6778 = vsel %vm1809, 0.0, %v6745
    %v6779 = vsel %vm1810, 0.0, %v6744
    %v6780 = vsel %vm1811, 0.0, %v6743
    %v6781 = vsel %vm1812, 0.0, %v6742
    %v6782 = vsel %vm1813, 0.0, %v6741
    %v6783 = vsel %vm1814, 0.0, %v6740
    %v6784 = vsel %vm1815, 0.0, %v6739
    %v6785 = vsel %vm1816, 0.0, %v6738
    %v6786 = vsel %vm1817, 0.0, %v6737
    %v6787 = vsel %vm1818, 0.0, %v6736
    %v6788 = vsel %vm1819, 0.0, %v6735
    %v6789 = vsel %vm1820, 0.0, %v6734
    %v6790 = vsel %vm1821, 0.0, %v6733
    %v6791 = vsel %vm1822, 0.0, %v6732
    %v6792 = vsel %vm1823, 0.0, %v6731
    %v6793 = vsel %vm1824, 0.0, %v6730
    %v6794 = vsel %vm1825, 0.0, %v6729
    %v6795 = vsel %vm1826, 0.0, %v6728
    %v6796 = vsel %vm1827, 0.0, %v6727
    %v6797 = vsel %vm1828, 0.0, %v6726
    %v6798 = vsel %vm1829, 0.0, %v6725
    %v6799 = vsel %vm1830, 0.0, %v6724
    %v6800 = vsel %vm1831, 0.0, %v6723
    %v6801 = vsel %vm1832, 0.0, %v6722
    %v6802 = vsel %vm1833, 0.0, %v6721
    %v6803 = vsel %vm1834, 0.0, %v6720
    %v6804 = vsel %vm1835, 0.0, %v6719
    %v6805 = vsel %vm1836, 0.0, %v6718
    %v6806 = vsel %vm1837, 0.0, %v6717
    %v6807 = vsel %vm1838, 0.0, %v6716
    %v6808 = vsel %vm1839, 0.0, %v6715
    %v6809 = vsel %vm1840, 0.0, %v6714
    %v6810 = vsel %vm1841, 0.0, %v6713
    %v6811 = vsel %vm1842, 0.0, %v6712
    %v6812 = vsel %vm1843, 0.0, %v6711
    %v6813 = vsel %vm1844, 0.0, %v6710
    %v6814 = vsel %vm1845, 0.0, %v6709
    %v6815 = vsel %vm1846, 0.0, %v6708
    %v6816 = vsel %vm1847, 0.0, %v6707
    %v6817 = vsel %vm1848, 0.0, %v6706
    %v6818 = vsel %vm1849, 0.0, %v6705
    %v6819 = vsel %vm1850, 0.0, %v6704
    %v6820 = vsel %vm1851, 0.0, %v6703
    %v6821 = vsel %vm1852, 0.0, %v6702
    %v6822 = vsel %vm1853, 0.0, %v6701
    %v6823 = vsel %vm1854, 0.0, %v6700
    %v6824 = vsel %vm1855, 0.0, %v6699
    %v6825 = vsel %vm1856, 0.0, %v6698
    %v6826 = vpack.c.bf16 %v6763, %v6762
    %v6827 = vpack.c.bf16 %v6765, %v6764
    %v6828 = vpack.c.bf16 %v6767, %v6766
    %v6829 = vpack.c.bf16 %v6769, %v6768
    %v6830 = vpack.c.bf16 %v6771, %v6770
    %v6831 = vpack.c.bf16 %v6773, %v6772
    %v6832 = vpack.c.bf16 %v6775, %v6774
    %v6833 = vpack.c.bf16 %v6777, %v6776
    %v6834 = vpack.c.bf16 %v6779, %v6778
    %v6835 = vpack.c.bf16 %v6781, %v6780
    %v6836 = vpack.c.bf16 %v6783, %v6782
    %v6837 = vpack.c.bf16 %v6785, %v6784
    %v6838 = vpack.c.bf16 %v6787, %v6786
    %v6839 = vpack.c.bf16 %v6789, %v6788
    %v6840 = vpack.c.bf16 %v6791, %v6790
    %v6841 = vpack.c.bf16 %v6793, %v6792
    %v6842 = vpack.c.bf16 %v6795, %v6794
    %v6843 = vpack.c.bf16 %v6797, %v6796
    %v6844 = vpack.c.bf16 %v6799, %v6798
    %v6845 = vpack.c.bf16 %v6801, %v6800
    %v6846 = vpack.c.bf16 %v6803, %v6802
    %v6847 = vpack.c.bf16 %v6805, %v6804
    %v6848 = vpack.c.bf16 %v6807, %v6806
    %v6849 = vpack.c.bf16 %v6809, %v6808
    %v6850 = vpack.c.bf16 %v6811, %v6810
    %v6851 = vpack.c.bf16 %v6813, %v6812
    %v6852 = vpack.c.bf16 %v6815, %v6814
    %v6853 = vpack.c.bf16 %v6817, %v6816
    %v6854 = vpack.c.bf16 %v6819, %v6818
    %v6855 = vpack.c.bf16 %v6821, %v6820
    %v6856 = vpack.c.bf16 %v6823, %v6822
    %v6857 = vpack.c.bf16 %v6825, %v6824
    %v6858 = vrot.slane %v6538, 1
    %v6859 = vrot.slane %v6539, 1
    %v6860 = vrot.slane %v6540, 1
    %v6861 = vrot.slane %v6541, 1
    %v6862 = vrot.slane %v6542, 1
    %v6863 = vrot.slane %v6543, 1
    %v6864 = vrot.slane %v6544, 1
    %v6865 = vrot.slane %v6545, 1
    %v6866 = vrot.slane %v6546, 1
    %v6867 = vrot.slane %v6547, 1
    %v6868 = vrot.slane %v6548, 1
    %v6869 = vrot.slane %v6549, 1
    %v6870 = vrot.slane %v6550, 1
    %v6871 = vrot.slane %v6551, 1
    %v6872 = vrot.slane %v6552, 1
    %v6873 = vrot.slane %v6553, 1
    %v6874 = vrot.slane %v6554, 1
    %v6875 = vrot.slane %v6555, 1
    %v6876 = vrot.slane %v6556, 1
    %v6877 = vrot.slane %v6557, 1
    %v6878 = vrot.slane %v6558, 1
    %v6879 = vrot.slane %v6559, 1
    %v6880 = vrot.slane %v6560, 1
    %v6881 = vrot.slane %v6561, 1
    %v6882 = vrot.slane %v6562, 1
    %v6883 = vrot.slane %v6563, 1
    %v6884 = vrot.slane %v6564, 1
    %v6885 = vrot.slane %v6565, 1
    %v6886 = vrot.slane %v6566, 1
    %v6887 = vrot.slane %v6567, 1
    %v6888 = vrot.slane %v6568, 1
    %v6889 = vrot.slane %v6569, 1
    %v6890 = vrot.slane %v6570, 1
    %v6891 = vrot.slane %v6571, 1
    %v6892 = vrot.slane %v6572, 1
    %v6893 = vrot.slane %v6573, 1
    %v6894 = vrot.slane %v6574, 1
    %v6895 = vrot.slane %v6575, 1
    %v6896 = vrot.slane %v6576, 1
    %v6897 = vrot.slane %v6577, 1
    %v6898 = vrot.slane %v6578, 1
    %v6899 = vrot.slane %v6579, 1
    %v6900 = vrot.slane %v6580, 1
    %v6901 = vrot.slane %v6581, 1
    %v6902 = vrot.slane %v6582, 1
    %v6903 = vrot.slane %v6583, 1
    %v6904 = vrot.slane %v6584, 1
    %v6905 = vrot.slane %v6585, 1
    %v6906 = vrot.slane %v6586, 1
    %v6907 = vrot.slane %v6587, 1
    %v6908 = vrot.slane %v6588, 1
    %v6909 = vrot.slane %v6589, 1
    %v6910 = vrot.slane %v6590, 1
    %v6911 = vrot.slane %v6591, 1
    %v6912 = vrot.slane %v6592, 1
    %v6913 = vrot.slane %v6593, 1
    %v6914 = vrot.slane %v6594, 1
    %v6915 = vrot.slane %v6595, 1
    %v6916 = vrot.slane %v6596, 1
    %v6917 = vrot.slane %v6597, 1
    %v6918 = vrot.slane %v6598, 1
    %v6919 = vrot.slane %v6599, 1
    %v6920 = vrot.slane %v6600, 1
    %v6921 = vrot.slane %v6601, 1
    %v6922 = vsel %vm2017, %v6920, %v6921
    %v6923 = vsel %vm2017, %v6919, %v6920
    %v6924 = vsel %vm2017, %v6918, %v6919
    %v6925 = vsel %vm2017, %v6917, %v6918
    %v6926 = vsel %vm2017, %v6916, %v6917
    %v6927 = vsel %vm2017, %v6915, %v6916
    %v6928 = vsel %vm2017, %v6914, %v6915
    %v6929 = vsel %vm2017, %v6913, %v6914
    %v6930 = vsel %vm2017, %v6912, %v6913
    %v6931 = vsel %vm2017, %v6911, %v6912
    %v6932 = vsel %vm2017, %v6910, %v6911
    %v6933 = vsel %vm2017, %v6909, %v6910
    %v6934 = vsel %vm2017, %v6908, %v6909
    %v6935 = vsel %vm2017, %v6907, %v6908
    %v6936 = vsel %vm2017, %v6906, %v6907
    %v6937 = vsel %vm2017, %v6905, %v6906
    %v6938 = vsel %vm2017, %v6904, %v6905
    %v6939 = vsel %vm2017, %v6903, %v6904
    %v6940 = vsel %vm2017, %v6902, %v6903
    %v6941 = vsel %vm2017, %v6901, %v6902
    %v6942 = vsel %vm2017, %v6900, %v6901
    %v6943 = vsel %vm2017, %v6899, %v6900
    %v6944 = vsel %vm2017, %v6898, %v6899
    %v6945 = vsel %vm2017, %v6897, %v6898
    %v6946 = vsel %vm2017, %v6896, %v6897
    %v6947 = vsel %vm2017, %v6895, %v6896
    %v6948 = vsel %vm2017, %v6894, %v6895
    %v6949 = vsel %vm2017, %v6893, %v6894
    %v6950 = vsel %vm2017, %v6892, %v6893
    %v6951 = vsel %vm2017, %v6891, %v6892
    %v6952 = vsel %vm2017, %v6890, %v6891
    %v6953 = vsel %vm2017, %v6889, %v6890
    %v6954 = vsel %vm2017, %v6888, %v6889
    %v6955 = vsel %vm2017, %v6887, %v6888
    %v6956 = vsel %vm2017, %v6886, %v6887
    %v6957 = vsel %vm2017, %v6885, %v6886
    %v6958 = vsel %vm2017, %v6884, %v6885
    %v6959 = vsel %vm2017, %v6883, %v6884
    %v6960 = vsel %vm2017, %v6882, %v6883
    %v6961 = vsel %vm2017, %v6881, %v6882
    %v6962 = vsel %vm2017, %v6880, %v6881
    %v6963 = vsel %vm2017, %v6879, %v6880
    %v6964 = vsel %vm2017, %v6878, %v6879
    %v6965 = vsel %vm2017, %v6877, %v6878
    %v6966 = vsel %vm2017, %v6876, %v6877
    %v6967 = vsel %vm2017, %v6875, %v6876
    %v6968 = vsel %vm2017, %v6874, %v6875
    %v6969 = vsel %vm2017, %v6873, %v6874
    %v6970 = vsel %vm2017, %v6872, %v6873
    %v6971 = vsel %vm2017, %v6871, %v6872
    %v6972 = vsel %vm2017, %v6870, %v6871
    %v6973 = vsel %vm2017, %v6869, %v6870
    %v6974 = vsel %vm2017, %v6868, %v6869
    %v6975 = vsel %vm2017, %v6867, %v6868
    %v6976 = vsel %vm2017, %v6866, %v6867
    %v6977 = vsel %vm2017, %v6865, %v6866
    %v6978 = vsel %vm2017, %v6864, %v6865
    %v6979 = vsel %vm2017, %v6863, %v6864
    %v6980 = vsel %vm2017, %v6862, %v6863
    %v6981 = vsel %vm2017, %v6861, %v6862
    %v6982 = vsel %vm2017, %v6860, %v6861
    %v6983 = vsel %vm2017, %v6859, %v6860
    %v6984 = vsel %vm2017, %v6858, %v6859
    %v6985 = vsel %vm2017, %v6921, %v6858
    %v6986 = vsel %vm2146, 0.0, %v6984
    %v6987 = vsel %vm2147, 0.0, %v6983
    %v6988 = vsel %vm2148, 0.0, %v6982
    %v6989 = vsel %vm2149, 0.0, %v6981
    %v6990 = vsel %vm2150, 0.0, %v6980
    %v6991 = vsel %vm2151, 0.0, %v6979
    %v6992 = vsel %vm2152, 0.0, %v6978
    %v6993 = vsel %vm2153, 0.0, %v6977
    %v6994 = vsel %vm2154, 0.0, %v6976
    %v6995 = vsel %vm2155, 0.0, %v6975
    %v6996 = vsel %vm2156, 0.0, %v6974
    %v6997 = vsel %vm2157, 0.0, %v6973
    %v6998 = vsel %vm2158, 0.0, %v6972
    %v6999 = vsel %vm2159, 0.0, %v6971
    %v7000 = vsel %vm2160, 0.0, %v6970
    %v7001 = vsel %vm2161, 0.0, %v6969
    %v7002 = vsel %vm2162, 0.0, %v6968
    %v7003 = vsel %vm2163, 0.0, %v6967
    %v7004 = vsel %vm2164, 0.0, %v6966
    %v7005 = vsel %vm2165, 0.0, %v6965
    %v7006 = vsel %vm2166, 0.0, %v6964
    %v7007 = vsel %vm2167, 0.0, %v6963
    %v7008 = vsel %vm2168, 0.0, %v6962
    %v7009 = vsel %vm2169, 0.0, %v6961
    %v7010 = vsel %vm2170, 0.0, %v6960
    %v7011 = vsel %vm2171, 0.0, %v6959
    %v7012 = vsel %vm2172, 0.0, %v6958
    %v7013 = vsel %vm2173, 0.0, %v6957
    %v7014 = vsel %vm2174, 0.0, %v6956
    %v7015 = vsel %vm2175, 0.0, %v6955
    %v7016 = vsel %vm2176, 0.0, %v6954
    %v7017 = vsel %vm2177, 0.0, %v6953
    %v7018 = vsel %vm2178, 0.0, %v6952
    %v7019 = vsel %vm2179, 0.0, %v6951
    %v7020 = vsel %vm2180, 0.0, %v6950
    %v7021 = vsel %vm2181, 0.0, %v6949
    %v7022 = vsel %vm2182, 0.0, %v6948
    %v7023 = vsel %vm2183, 0.0, %v6947
    %v7024 = vsel %vm2184, 0.0, %v6946
    %v7025 = vsel %vm2185, 0.0, %v6945
    %v7026 = vsel %vm2186, 0.0, %v6944
    %v7027 = vsel %vm2187, 0.0, %v6943
    %v7028 = vsel %vm2188, 0.0, %v6942
    %v7029 = vsel %vm2189, 0.0, %v6941
    %v7030 = vsel %vm2190, 0.0, %v6940
    %v7031 = vsel %vm2191, 0.0, %v6939
    %v7032 = vsel %vm2192, 0.0, %v6938
    %v7033 = vsel %vm2193, 0.0, %v6937
    %v7034 = vsel %vm2194, 0.0, %v6936
    %v7035 = vsel %vm2195, 0.0, %v6935
    %v7036 = vsel %vm2196, 0.0, %v6934
    %v7037 = vsel %vm2197, 0.0, %v6933
    %v7038 = vsel %vm2198, 0.0, %v6932
    %v7039 = vsel %vm2199, 0.0, %v6931
    %v7040 = vsel %vm2200, 0.0, %v6930
    %v7041 = vsel %vm2201, 0.0, %v6929
    %v7042 = vsel %vm2202, 0.0, %v6928
    %v7043 = vsel %vm2203, 0.0, %v6927
    %v7044 = vsel %vm2204, 0.0, %v6926
    %v7045 = vsel %vm2205, 0.0, %v6925
    %v7046 = vsel %vm2206, 0.0, %v6924
    %v7047 = vsel %vm2207, 0.0, %v6923
    %v7048 = vsel %vm2208, 0.0, %v6922
    %v7049 = vsel %vm2209, 0.0, %v6985
    %v7050 = vpack.c.bf16 %v6987, %v6986
    %v7051 = vpack.c.bf16 %v6989, %v6988
    %v7052 = vpack.c.bf16 %v6991, %v6990
    %v7053 = vpack.c.bf16 %v6993, %v6992
    %v7054 = vpack.c.bf16 %v6995, %v6994
    %v7055 = vpack.c.bf16 %v6997, %v6996
    %v7056 = vpack.c.bf16 %v6999, %v6998
    %v7057 = vpack.c.bf16 %v7001, %v7000
    %v7058 = vpack.c.bf16 %v7003, %v7002
    %v7059 = vpack.c.bf16 %v7005, %v7004
    %v7060 = vpack.c.bf16 %v7007, %v7006
    %v7061 = vpack.c.bf16 %v7009, %v7008
    %v7062 = vpack.c.bf16 %v7011, %v7010
    %v7063 = vpack.c.bf16 %v7013, %v7012
    %v7064 = vpack.c.bf16 %v7015, %v7014
    %v7065 = vpack.c.bf16 %v7017, %v7016
    %v7066 = vpack.c.bf16 %v7019, %v7018
    %v7067 = vpack.c.bf16 %v7021, %v7020
    %v7068 = vpack.c.bf16 %v7023, %v7022
    %v7069 = vpack.c.bf16 %v7025, %v7024
    %v7070 = vpack.c.bf16 %v7027, %v7026
    %v7071 = vpack.c.bf16 %v7029, %v7028
    %v7072 = vpack.c.bf16 %v7031, %v7030
    %v7073 = vpack.c.bf16 %v7033, %v7032
    %v7074 = vpack.c.bf16 %v7035, %v7034
    %v7075 = vpack.c.bf16 %v7037, %v7036
    %v7076 = vpack.c.bf16 %v7039, %v7038
    %v7077 = vpack.c.bf16 %v7041, %v7040
    %v7078 = vpack.c.bf16 %v7043, %v7042
    %v7079 = vpack.c.bf16 %v7045, %v7044
    %v7080 = vpack.c.bf16 %v7047, %v7046
    %v7081 = vpack.c.bf16 %v7049, %v7048
    %s7082 = scalar_lea.vmem [#allocation2], 288
    %v7083 = vld [vmem:[%s7082] sm:$0xf]
    %v7084 = vld [vmem:[%s7082 + $0x4] sm:$0xf]
    %v7085 = vld [vmem:[%s7082 + $0x8] sm:$0xf]
    %v7086 = vld [vmem:[%s7082 + $0xc] sm:$0xf]
    %v7087 = vld [vmem:[%s7082 + $0x10] sm:$0xf]
    %v7088 = vld [vmem:[%s7082 + $0x14] sm:$0xf]
    %v7089 = vld [vmem:[%s7082 + $0x18] sm:$0xf]
    %v7090 = vld [vmem:[%s7082 + $0x1c] sm:$0xf]
    %s7091 = scalar_lea.vmem [#allocation2], 320
    %v7092 = vld [vmem:[%s7091] sm:$0xf]
    %v7093 = vld [vmem:[%s7091 + $0x4] sm:$0xf]
    %v7094 = vld [vmem:[%s7091 + $0x8] sm:$0xf]
    %v7095 = vld [vmem:[%s7091 + $0xc] sm:$0xf]
    %v7096 = vld [vmem:[%s7091 + $0x10] sm:$0xf]
    %v7097 = vld [vmem:[%s7091 + $0x14] sm:$0xf]
    %v7098 = vld [vmem:[%s7091 + $0x18] sm:$0xf]
    %v7099 = vld [vmem:[%s7091 + $0x1c] sm:$0xf]
    %v7108 = vunpack.c.l.b16 %v7092
    %v7109 = vunpack.c.l.b16 %v7093
    %v7110 = vunpack.c.l.b16 %v7094
    %v7111 = vunpack.c.l.b16 %v7095
    %v7112 = vunpack.c.l.b16 %v7096
    %v7113 = vunpack.c.l.b16 %v7097
    %v7114 = vunpack.c.l.b16 %v7098
    %v7115 = vunpack.c.l.b16 %v7099
    %v7116 = vpack.c.b16 %v7109, %v7108
    %v7117 = vpack.c.b16 %v7111, %v7110
    %v7118 = vpack.c.b16 %v7113, %v7112
    %v7119 = vpack.c.b16 %v7115, %v7114
    %v7125 = vsel %vm2347, %v6602, 0
    %v7128 = vsel %vm2347, %v6603, 0
    %v7131 = vsel %vm2347, %v6604, 0
    %v7134 = vsel %vm2347, %v6605, 0
    %v7137 = vsel %vm2347, %v6606, 0
    %v7140 = vsel %vm2347, %v6607, 0
    %v7143 = vsel %vm2347, %v6608, 0
    %v7146 = vsel %vm2347, %v6609, 0
    %v7149 = vsel %vm2347, %v6610, 0
    %v7152 = vsel %vm2347, %v6611, 0
    %v7155 = vsel %vm2347, %v6612, 0
    %v7158 = vsel %vm2347, %v6613, 0
    %v7161 = vsel %vm2347, %v6614, 0
    %v7164 = vsel %vm2347, %v6615, 0
    %v7167 = vsel %vm2347, %v6616, 0
    %v7170 = vsel %vm2347, %v6617, 0
    %v7173 = vsel %vm2347, %v6618, 0
    %v7176 = vsel %vm2347, %v6619, 0
    %v7179 = vsel %vm2347, %v6620, 0
    %v7182 = vsel %vm2347, %v6621, 0
    %v7185 = vsel %vm2347, %v6622, 0
    %v7188 = vsel %vm2347, %v6623, 0
    %v7191 = vsel %vm2347, %v6624, 0
    %v7194 = vsel %vm2347, %v6625, 0
    %v7197 = vsel %vm2347, %v6626, 0
    %v7200 = vsel %vm2347, %v6627, 0
    %v7203 = vsel %vm2347, %v6628, 0
    %v7206 = vsel %vm2347, %v6629, 0
    %v7209 = vsel %vm2347, %v6630, 0
    %v7212 = vsel %vm2347, %v6631, 0
    %v7215 = vsel %vm2347, %v6632, 0
    %v7218 = vsel %vm2347, %v6633, 0
    %7220 = vmatpush.bf16.msra.mxu0 0
    %7221 = vmatpush.bf16.msra.mxu0 0
    %7222 = vmatpush.bf16.msra.mxu0 0
    %7223 = vmatpush.bf16.msra.mxu0 0
    %7224 = vmatpush.bf16.msra.mxu0 %v7119
    %7225 = vmatpush.bf16.msra.mxu0 %v7118
    %7226 = vmatpush.bf16.msra.mxu0 %v7117
    %7227 = vmatpush.bf16.msra.mxu0 %v7116
    %7228 = vmatmul.bf16.gmra.mxu0 %v7125
    %v7229 = vpop.f32.mrf.mxu0
    %v7230 = vadd.f32 0.0, %v7229
    %v7231 = vpop.f32.mrf.mxu0
    %v7232 = vadd.f32 0.0, %v7231
    %7233 = vmatmul.bf16.gmra.mxu0 %v7128
    %v7234 = vpop.f32.mrf.mxu0
    %v7235 = vadd.f32 0.0, %v7234
    %v7236 = vpop.f32.mrf.mxu0
    %v7237 = vadd.f32 0.0, %v7236
    %7238 = vmatmul.bf16.gmra.mxu0 %v7131
    %v7239 = vpop.f32.mrf.mxu0
    %v7240 = vadd.f32 0.0, %v7239
    %v7241 = vpop.f32.mrf.mxu0
    %v7242 = vadd.f32 0.0, %v7241
    %7243 = vmatmul.bf16.gmra.mxu0 %v7134
    %v7244 = vpop.f32.mrf.mxu0
    %v7245 = vadd.f32 0.0, %v7244
    %v7246 = vpop.f32.mrf.mxu0
    %v7247 = vadd.f32 0.0, %v7246
    %7248 = vmatmul.bf16.gmra.mxu0 %v7137
    %v7249 = vpop.f32.mrf.mxu0
    %v7250 = vadd.f32 0.0, %v7249
    %v7251 = vpop.f32.mrf.mxu0
    %v7252 = vadd.f32 0.0, %v7251
    %7253 = vmatmul.bf16.gmra.mxu0 %v7140
    %v7254 = vpop.f32.mrf.mxu0
    %v7255 = vadd.f32 0.0, %v7254
    %v7256 = vpop.f32.mrf.mxu0
    %v7257 = vadd.f32 0.0, %v7256
    %7258 = vmatmul.bf16.gmra.mxu0 %v7143
    %v7259 = vpop.f32.mrf.mxu0
    %v7260 = vadd.f32 0.0, %v7259
    %v7261 = vpop.f32.mrf.mxu0
    %v7262 = vadd.f32 0.0, %v7261
    %7263 = vmatmul.bf16.gmra.mxu0 %v7146
    %v7264 = vpop.f32.mrf.mxu0
    %v7265 = vadd.f32 0.0, %v7264
    %v7266 = vpop.f32.mrf.mxu0
    %v7267 = vadd.f32 0.0, %v7266
    %7268 = vmatmul.bf16.gmra.mxu0 %v7149
    %v7269 = vpop.f32.mrf.mxu0
    %v7270 = vadd.f32 0.0, %v7269
    %v7271 = vpop.f32.mrf.mxu0
    %v7272 = vadd.f32 0.0, %v7271
    %7273 = vmatmul.bf16.gmra.mxu0 %v7152
    %v7274 = vpop.f32.mrf.mxu0
    %v7275 = vadd.f32 0.0, %v7274
    %v7276 = vpop.f32.mrf.mxu0
    %v7277 = vadd.f32 0.0, %v7276
    %7278 = vmatmul.bf16.gmra.mxu0 %v7155
    %v7279 = vpop.f32.mrf.mxu0
    %v7280 = vadd.f32 0.0, %v7279
    %v7281 = vpop.f32.mrf.mxu0
    %v7282 = vadd.f32 0.0, %v7281
    %7283 = vmatmul.bf16.gmra.mxu0 %v7158
    %v7284 = vpop.f32.mrf.mxu0
    %v7285 = vadd.f32 0.0, %v7284
    %v7286 = vpop.f32.mrf.mxu0
    %v7287 = vadd.f32 0.0, %v7286
    %7288 = vmatmul.bf16.gmra.mxu0 %v7161
    %v7289 = vpop.f32.mrf.mxu0
    %v7290 = vadd.f32 0.0, %v7289
    %v7291 = vpop.f32.mrf.mxu0
    %v7292 = vadd.f32 0.0, %v7291
    %7293 = vmatmul.bf16.gmra.mxu0 %v7164
    %v7294 = vpop.f32.mrf.mxu0
    %v7295 = vadd.f32 0.0, %v7294
    %v7296 = vpop.f32.mrf.mxu0
    %v7297 = vadd.f32 0.0, %v7296
    %7298 = vmatmul.bf16.gmra.mxu0 %v7167
    %v7299 = vpop.f32.mrf.mxu0
    %v7300 = vadd.f32 0.0, %v7299
    %v7301 = vpop.f32.mrf.mxu0
    %v7302 = vadd.f32 0.0, %v7301
    %7303 = vmatmul.bf16.gmra.mxu0 %v7170
    %v7304 = vpop.f32.mrf.mxu0
    %v7305 = vadd.f32 0.0, %v7304
    %v7306 = vpop.f32.mrf.mxu0
    %v7307 = vadd.f32 0.0, %v7306
    %7308 = vmatmul.bf16.gmra.mxu0 %v7173
    %v7309 = vpop.f32.mrf.mxu0
    %v7310 = vadd.f32 0.0, %v7309
    %v7311 = vpop.f32.mrf.mxu0
    %v7312 = vadd.f32 0.0, %v7311
    %7313 = vmatmul.bf16.gmra.mxu0 %v7176
    %v7314 = vpop.f32.mrf.mxu0
    %v7315 = vadd.f32 0.0, %v7314
    %v7316 = vpop.f32.mrf.mxu0
    %v7317 = vadd.f32 0.0, %v7316
    %7318 = vmatmul.bf16.gmra.mxu0 %v7179
    %v7319 = vpop.f32.mrf.mxu0
    %v7320 = vadd.f32 0.0, %v7319
    %v7321 = vpop.f32.mrf.mxu0
    %v7322 = vadd.f32 0.0, %v7321
    %7323 = vmatmul.bf16.gmra.mxu0 %v7182
    %v7324 = vpop.f32.mrf.mxu0
    %v7325 = vadd.f32 0.0, %v7324
    %v7326 = vpop.f32.mrf.mxu0
    %v7327 = vadd.f32 0.0, %v7326
    %7328 = vmatmul.bf16.gmra.mxu0 %v7185
    %v7329 = vpop.f32.mrf.mxu0
    %v7330 = vadd.f32 0.0, %v7329
    %v7331 = vpop.f32.mrf.mxu0
    %v7332 = vadd.f32 0.0, %v7331
    %7333 = vmatmul.bf16.gmra.mxu0 %v7188
    %v7334 = vpop.f32.mrf.mxu0
    %v7335 = vadd.f32 0.0, %v7334
    %v7336 = vpop.f32.mrf.mxu0
    %v7337 = vadd.f32 0.0, %v7336
    %7338 = vmatmul.bf16.gmra.mxu0 %v7191
    %v7339 = vpop.f32.mrf.mxu0
    %v7340 = vadd.f32 0.0, %v7339
    %v7341 = vpop.f32.mrf.mxu0
    %v7342 = vadd.f32 0.0, %v7341
    %7343 = vmatmul.bf16.gmra.mxu0 %v7194
    %v7344 = vpop.f32.mrf.mxu0
    %v7345 = vadd.f32 0.0, %v7344
    %v7346 = vpop.f32.mrf.mxu0
    %v7347 = vadd.f32 0.0, %v7346
    %7348 = vmatmul.bf16.gmra.mxu0 %v7197
    %v7349 = vpop.f32.mrf.mxu0
    %v7350 = vadd.f32 0.0, %v7349
    %v7351 = vpop.f32.mrf.mxu0
    %v7352 = vadd.f32 0.0, %v7351
    %7353 = vmatmul.bf16.gmra.mxu0 %v7200
    %v7354 = vpop.f32.mrf.mxu0
    %v7355 = vadd.f32 0.0, %v7354
    %v7356 = vpop.f32.mrf.mxu0
    %v7357 = vadd.f32 0.0, %v7356
    %7358 = vmatmul.bf16.gmra.mxu0 %v7203
    %v7359 = vpop.f32.mrf.mxu0
    %v7360 = vadd.f32 0.0, %v7359
    %v7361 = vpop.f32.mrf.mxu0
    %v7362 = vadd.f32 0.0, %v7361
    %7363 = vmatmul.bf16.gmra.mxu0 %v7206
    %v7364 = vpop.f32.mrf.mxu0
    %v7365 = vadd.f32 0.0, %v7364
    %v7366 = vpop.f32.mrf.mxu0
    %v7367 = vadd.f32 0.0, %v7366
    %7368 = vmatmul.bf16.gmra.mxu0 %v7209
    %v7369 = vpop.f32.mrf.mxu0
    %v7370 = vadd.f32 0.0, %v7369
    %v7371 = vpop.f32.mrf.mxu0
    %v7372 = vadd.f32 0.0, %v7371
    %7373 = vmatmul.bf16.gmra.mxu0 %v7212
    %v7374 = vpop.f32.mrf.mxu0
    %v7375 = vadd.f32 0.0, %v7374
    %v7376 = vpop.f32.mrf.mxu0
    %v7377 = vadd.f32 0.0, %v7376
    %7378 = vmatmul.bf16.gmra.mxu0 %v7215
    %v7379 = vpop.f32.mrf.mxu0
    %v7380 = vadd.f32 0.0, %v7379
    %v7381 = vpop.f32.mrf.mxu0
    %v7382 = vadd.f32 0.0, %v7381
    %7383 = vmatmul.bf16.gmra.mxu0 %v7218
    %v7384 = vpop.f32.mrf.mxu0
    %v7385 = vadd.f32 0.0, %v7384
    %v7386 = vpop.f32.mrf.mxu0
    %v7387 = vadd.f32 0.0, %v7386
    %7388 = vdwg.mxu0
    %v7397 = vunpack.c.l.b16 %v7083
    %v7398 = vunpack.c.l.b16 %v7084
    %v7399 = vunpack.c.l.b16 %v7085
    %v7400 = vunpack.c.l.b16 %v7086
    %v7401 = vunpack.c.l.b16 %v7087
    %v7402 = vunpack.c.l.b16 %v7088
    %v7403 = vunpack.c.l.b16 %v7089
    %v7404 = vunpack.c.l.b16 %v7090
    %v7405 = vpack.c.b16 %v7398, %v7397
    %v7406 = vpack.c.b16 %v7400, %v7399
    %v7407 = vpack.c.b16 %v7402, %v7401
    %v7408 = vpack.c.b16 %v7404, %v7403
    %v7414 = vsel %vm2347, %v6826, 0
    %v7417 = vsel %vm2347, %v6827, 0
    %v7420 = vsel %vm2347, %v6828, 0
    %v7423 = vsel %vm2347, %v6829, 0
    %v7426 = vsel %vm2347, %v6830, 0
    %v7429 = vsel %vm2347, %v6831, 0
    %v7432 = vsel %vm2347, %v6832, 0
    %v7435 = vsel %vm2347, %v6833, 0
    %v7438 = vsel %vm2347, %v6834, 0
    %v7441 = vsel %vm2347, %v6835, 0
    %v7444 = vsel %vm2347, %v6836, 0
    %v7447 = vsel %vm2347, %v6837, 0
    %v7450 = vsel %vm2347, %v6838, 0
    %v7453 = vsel %vm2347, %v6839, 0
    %v7456 = vsel %vm2347, %v6840, 0
    %v7459 = vsel %vm2347, %v6841, 0
    %v7462 = vsel %vm2347, %v6842, 0
    %v7465 = vsel %vm2347, %v6843, 0
    %v7468 = vsel %vm2347, %v6844, 0
    %v7471 = vsel %vm2347, %v6845, 0
    %v7474 = vsel %vm2347, %v6846, 0
    %v7477 = vsel %vm2347, %v6847, 0
    %v7480 = vsel %vm2347, %v6848, 0
    %v7483 = vsel %vm2347, %v6849, 0
    %v7486 = vsel %vm2347, %v6850, 0
    %v7489 = vsel %vm2347, %v6851, 0
    %v7492 = vsel %vm2347, %v6852, 0
    %v7495 = vsel %vm2347, %v6853, 0
    %v7498 = vsel %vm2347, %v6854, 0
    %v7501 = vsel %vm2347, %v6855, 0
    %v7504 = vsel %vm2347, %v6856, 0
    %v7507 = vsel %vm2347, %v6857, 0
    %7509 = vmatpush.bf16.msra.mxu0 0
    %7510 = vmatpush.bf16.msra.mxu0 0
    %7511 = vmatpush.bf16.msra.mxu0 0
    %7512 = vmatpush.bf16.msra.mxu0 0
    %7513 = vmatpush.bf16.msra.mxu0 %v7408
    %7514 = vmatpush.bf16.msra.mxu0 %v7407
    %7515 = vmatpush.bf16.msra.mxu0 %v7406
    %7516 = vmatpush.bf16.msra.mxu0 %v7405
    %7517 = vmatmul.bf16.gmra.mxu0 %v7414
    %v7518 = vpop.f32.mrf.mxu0
    %v7519 = vadd.f32 %v7230, %v7518
    %v7520 = vpop.f32.mrf.mxu0
    %v7521 = vadd.f32 %v7232, %v7520
    %7522 = vmatmul.bf16.gmra.mxu0 %v7417
    %v7523 = vpop.f32.mrf.mxu0
    %v7524 = vadd.f32 %v7235, %v7523
    %v7525 = vpop.f32.mrf.mxu0
    %v7526 = vadd.f32 %v7237, %v7525
    %7527 = vmatmul.bf16.gmra.mxu0 %v7420
    %v7528 = vpop.f32.mrf.mxu0
    %v7529 = vadd.f32 %v7240, %v7528
    %v7530 = vpop.f32.mrf.mxu0
    %v7531 = vadd.f32 %v7242, %v7530
    %7532 = vmatmul.bf16.gmra.mxu0 %v7423
    %v7533 = vpop.f32.mrf.mxu0
    %v7534 = vadd.f32 %v7245, %v7533
    %v7535 = vpop.f32.mrf.mxu0
    %v7536 = vadd.f32 %v7247, %v7535
    %7537 = vmatmul.bf16.gmra.mxu0 %v7426
    %v7538 = vpop.f32.mrf.mxu0
    %v7539 = vadd.f32 %v7250, %v7538
    %v7540 = vpop.f32.mrf.mxu0
    %v7541 = vadd.f32 %v7252, %v7540
    %7542 = vmatmul.bf16.gmra.mxu0 %v7429
    %v7543 = vpop.f32.mrf.mxu0
    %v7544 = vadd.f32 %v7255, %v7543
    %v7545 = vpop.f32.mrf.mxu0
    %v7546 = vadd.f32 %v7257, %v7545
    %7547 = vmatmul.bf16.gmra.mxu0 %v7432
    %v7548 = vpop.f32.mrf.mxu0
    %v7549 = vadd.f32 %v7260, %v7548
    %v7550 = vpop.f32.mrf.mxu0
    %v7551 = vadd.f32 %v7262, %v7550
    %7552 = vmatmul.bf16.gmra.mxu0 %v7435
    %v7553 = vpop.f32.mrf.mxu0
    %v7554 = vadd.f32 %v7265, %v7553
    %v7555 = vpop.f32.mrf.mxu0
    %v7556 = vadd.f32 %v7267, %v7555
    %7557 = vmatmul.bf16.gmra.mxu0 %v7438
    %v7558 = vpop.f32.mrf.mxu0
    %v7559 = vadd.f32 %v7270, %v7558
    %v7560 = vpop.f32.mrf.mxu0
    %v7561 = vadd.f32 %v7272, %v7560
    %7562 = vmatmul.bf16.gmra.mxu0 %v7441
    %v7563 = vpop.f32.mrf.mxu0
    %v7564 = vadd.f32 %v7275, %v7563
    %v7565 = vpop.f32.mrf.mxu0
    %v7566 = vadd.f32 %v7277, %v7565
    %7567 = vmatmul.bf16.gmra.mxu0 %v7444
    %v7568 = vpop.f32.mrf.mxu0
    %v7569 = vadd.f32 %v7280, %v7568
    %v7570 = vpop.f32.mrf.mxu0
    %v7571 = vadd.f32 %v7282, %v7570
    %7572 = vmatmul.bf16.gmra.mxu0 %v7447
    %v7573 = vpop.f32.mrf.mxu0
    %v7574 = vadd.f32 %v7285, %v7573
    %v7575 = vpop.f32.mrf.mxu0
    %v7576 = vadd.f32 %v7287, %v7575
    %7577 = vmatmul.bf16.gmra.mxu0 %v7450
    %v7578 = vpop.f32.mrf.mxu0
    %v7579 = vadd.f32 %v7290, %v7578
    %v7580 = vpop.f32.mrf.mxu0
    %v7581 = vadd.f32 %v7292, %v7580
    %7582 = vmatmul.bf16.gmra.mxu0 %v7453
    %v7583 = vpop.f32.mrf.mxu0
    %v7584 = vadd.f32 %v7295, %v7583
    %v7585 = vpop.f32.mrf.mxu0
    %v7586 = vadd.f32 %v7297, %v7585
    %7587 = vmatmul.bf16.gmra.mxu0 %v7456
    %v7588 = vpop.f32.mrf.mxu0
    %v7589 = vadd.f32 %v7300, %v7588
    %v7590 = vpop.f32.mrf.mxu0
    %v7591 = vadd.f32 %v7302, %v7590
    %7592 = vmatmul.bf16.gmra.mxu0 %v7459
    %v7593 = vpop.f32.mrf.mxu0
    %v7594 = vadd.f32 %v7305, %v7593
    %v7595 = vpop.f32.mrf.mxu0
    %v7596 = vadd.f32 %v7307, %v7595
    %7597 = vmatmul.bf16.gmra.mxu0 %v7462
    %v7598 = vpop.f32.mrf.mxu0
    %v7599 = vadd.f32 %v7310, %v7598
    %v7600 = vpop.f32.mrf.mxu0
    %v7601 = vadd.f32 %v7312, %v7600
    %7602 = vmatmul.bf16.gmra.mxu0 %v7465
    %v7603 = vpop.f32.mrf.mxu0
    %v7604 = vadd.f32 %v7315, %v7603
    %v7605 = vpop.f32.mrf.mxu0
    %v7606 = vadd.f32 %v7317, %v7605
    %7607 = vmatmul.bf16.gmra.mxu0 %v7468
    %v7608 = vpop.f32.mrf.mxu0
    %v7609 = vadd.f32 %v7320, %v7608
    %v7610 = vpop.f32.mrf.mxu0
    %v7611 = vadd.f32 %v7322, %v7610
    %7612 = vmatmul.bf16.gmra.mxu0 %v7471
    %v7613 = vpop.f32.mrf.mxu0
    %v7614 = vadd.f32 %v7325, %v7613
    %v7615 = vpop.f32.mrf.mxu0
    %v7616 = vadd.f32 %v7327, %v7615
    %7617 = vmatmul.bf16.gmra.mxu0 %v7474
    %v7618 = vpop.f32.mrf.mxu0
    %v7619 = vadd.f32 %v7330, %v7618
    %v7620 = vpop.f32.mrf.mxu0
    %v7621 = vadd.f32 %v7332, %v7620
    %7622 = vmatmul.bf16.gmra.mxu0 %v7477
    %v7623 = vpop.f32.mrf.mxu0
    %v7624 = vadd.f32 %v7335, %v7623
    %v7625 = vpop.f32.mrf.mxu0
    %v7626 = vadd.f32 %v7337, %v7625
    %7627 = vmatmul.bf16.gmra.mxu0 %v7480
    %v7628 = vpop.f32.mrf.mxu0
    %v7629 = vadd.f32 %v7340, %v7628
    %v7630 = vpop.f32.mrf.mxu0
    %v7631 = vadd.f32 %v7342, %v7630
    %7632 = vmatmul.bf16.gmra.mxu0 %v7483
    %v7633 = vpop.f32.mrf.mxu0
    %v7634 = vadd.f32 %v7345, %v7633
    %v7635 = vpop.f32.mrf.mxu0
    %v7636 = vadd.f32 %v7347, %v7635
    %7637 = vmatmul.bf16.gmra.mxu0 %v7486
    %v7638 = vpop.f32.mrf.mxu0
    %v7639 = vadd.f32 %v7350, %v7638
    %v7640 = vpop.f32.mrf.mxu0
    %v7641 = vadd.f32 %v7352, %v7640
    %7642 = vmatmul.bf16.gmra.mxu0 %v7489
    %v7643 = vpop.f32.mrf.mxu0
    %v7644 = vadd.f32 %v7355, %v7643
    %v7645 = vpop.f32.mrf.mxu0
    %v7646 = vadd.f32 %v7357, %v7645
    %7647 = vmatmul.bf16.gmra.mxu0 %v7492
    %v7648 = vpop.f32.mrf.mxu0
    %v7649 = vadd.f32 %v7360, %v7648
    %v7650 = vpop.f32.mrf.mxu0
    %v7651 = vadd.f32 %v7362, %v7650
    %7652 = vmatmul.bf16.gmra.mxu0 %v7495
    %v7653 = vpop.f32.mrf.mxu0
    %v7654 = vadd.f32 %v7365, %v7653
    %v7655 = vpop.f32.mrf.mxu0
    %v7656 = vadd.f32 %v7367, %v7655
    %7657 = vmatmul.bf16.gmra.mxu0 %v7498
    %v7658 = vpop.f32.mrf.mxu0
    %v7659 = vadd.f32 %v7370, %v7658
    %v7660 = vpop.f32.mrf.mxu0
    %v7661 = vadd.f32 %v7372, %v7660
    %7662 = vmatmul.bf16.gmra.mxu0 %v7501
    %v7663 = vpop.f32.mrf.mxu0
    %v7664 = vadd.f32 %v7375, %v7663
    %v7665 = vpop.f32.mrf.mxu0
    %v7666 = vadd.f32 %v7377, %v7665
    %7667 = vmatmul.bf16.gmra.mxu0 %v7504
    %v7668 = vpop.f32.mrf.mxu0
    %v7669 = vadd.f32 %v7380, %v7668
    %v7670 = vpop.f32.mrf.mxu0
    %v7671 = vadd.f32 %v7382, %v7670
    %7672 = vmatmul.bf16.gmra.mxu0 %v7507
    %v7673 = vpop.f32.mrf.mxu0
    %v7674 = vadd.f32 %v7385, %v7673
    %v7675 = vpop.f32.mrf.mxu0
    %v7676 = vadd.f32 %v7387, %v7675
    %7677 = vdwg.mxu0
    %s7678 = scalar_lea.vmem [#allocation2], 352
    %v7679 = vld [vmem:[%s7678] sm:$0xf]
    %v7680 = vld [vmem:[%s7678 + $0x4] sm:$0xf]
    %v7681 = vld [vmem:[%s7678 + $0x8] sm:$0xf]
    %v7682 = vld [vmem:[%s7678 + $0xc] sm:$0xf]
    %v7683 = vld [vmem:[%s7678 + $0x10] sm:$0xf]
    %v7684 = vld [vmem:[%s7678 + $0x14] sm:$0xf]
    %v7685 = vld [vmem:[%s7678 + $0x18] sm:$0xf]
    %v7686 = vld [vmem:[%s7678 + $0x1c] sm:$0xf]
    %v7695 = vunpack.c.l.b16 %v7679
    %v7696 = vunpack.c.l.b16 %v7680
    %v7697 = vunpack.c.l.b16 %v7681
    %v7698 = vunpack.c.l.b16 %v7682
    %v7699 = vunpack.c.l.b16 %v7683
    %v7700 = vunpack.c.l.b16 %v7684
    %v7701 = vunpack.c.l.b16 %v7685
    %v7702 = vunpack.c.l.b16 %v7686
    %v7703 = vpack.c.b16 %v7696, %v7695
    %v7704 = vpack.c.b16 %v7698, %v7697
    %v7705 = vpack.c.b16 %v7700, %v7699
    %v7706 = vpack.c.b16 %v7702, %v7701
    %v7712 = vsel %vm2347, %v7050, 0
    %v7715 = vsel %vm2347, %v7051, 0
    %v7718 = vsel %vm2347, %v7052, 0
    %v7721 = vsel %vm2347, %v7053, 0
    %v7724 = vsel %vm2347, %v7054, 0
    %v7727 = vsel %vm2347, %v7055, 0
    %v7730 = vsel %vm2347, %v7056, 0
    %v7733 = vsel %vm2347, %v7057, 0
    %v7736 = vsel %vm2347, %v7058, 0
    %v7739 = vsel %vm2347, %v7059, 0
    %v7742 = vsel %vm2347, %v7060, 0
    %v7745 = vsel %vm2347, %v7061, 0
    %v7748 = vsel %vm2347, %v7062, 0
    %v7751 = vsel %vm2347, %v7063, 0
    %v7754 = vsel %vm2347, %v7064, 0
    %v7757 = vsel %vm2347, %v7065, 0
    %v7760 = vsel %vm2347, %v7066, 0
    %v7763 = vsel %vm2347, %v7067, 0
    %v7766 = vsel %vm2347, %v7068, 0
    %v7769 = vsel %vm2347, %v7069, 0
    %v7772 = vsel %vm2347, %v7070, 0
    %v7775 = vsel %vm2347, %v7071, 0
    %v7778 = vsel %vm2347, %v7072, 0
    %v7781 = vsel %vm2347, %v7073, 0
    %v7784 = vsel %vm2347, %v7074, 0
    %v7787 = vsel %vm2347, %v7075, 0
    %v7790 = vsel %vm2347, %v7076, 0
    %v7793 = vsel %vm2347, %v7077, 0
    %v7796 = vsel %vm2347, %v7078, 0
    %v7799 = vsel %vm2347, %v7079, 0
    %v7802 = vsel %vm2347, %v7080, 0
    %v7805 = vsel %vm2347, %v7081, 0
    %7807 = vmatpush.bf16.msra.mxu0 0
    %7808 = vmatpush.bf16.msra.mxu0 0
    %7809 = vmatpush.bf16.msra.mxu0 0
    %7810 = vmatpush.bf16.msra.mxu0 0
    %7811 = vmatpush.bf16.msra.mxu0 %v7706
    %7812 = vmatpush.bf16.msra.mxu0 %v7705
    %7813 = vmatpush.bf16.msra.mxu0 %v7704
    %7814 = vmatpush.bf16.msra.mxu0 %v7703
    %7815 = vmatmul.bf16.gmra.mxu0 %v7712
    %v7816 = vpop.f32.mrf.mxu0
    %v7817 = vadd.f32 0.0, %v7816
    %v7818 = vpop.f32.mrf.mxu0
    %v7819 = vadd.f32 0.0, %v7818
    %7820 = vmatmul.bf16.gmra.mxu0 %v7715
    %v7821 = vpop.f32.mrf.mxu0
    %v7822 = vadd.f32 0.0, %v7821
    %v7823 = vpop.f32.mrf.mxu0
    %v7824 = vadd.f32 0.0, %v7823
    %7825 = vmatmul.bf16.gmra.mxu0 %v7718
    %v7826 = vpop.f32.mrf.mxu0
    %v7827 = vadd.f32 0.0, %v7826
    %v7828 = vpop.f32.mrf.mxu0
    %v7829 = vadd.f32 0.0, %v7828
    %7830 = vmatmul.bf16.gmra.mxu0 %v7721
    %v7831 = vpop.f32.mrf.mxu0
    %v7832 = vadd.f32 0.0, %v7831
    %v7833 = vpop.f32.mrf.mxu0
    %v7834 = vadd.f32 0.0, %v7833
    %7835 = vmatmul.bf16.gmra.mxu0 %v7724
    %v7836 = vpop.f32.mrf.mxu0
    %v7837 = vadd.f32 0.0, %v7836
    %v7838 = vpop.f32.mrf.mxu0
    %v7839 = vadd.f32 0.0, %v7838
    %7840 = vmatmul.bf16.gmra.mxu0 %v7727
    %v7841 = vpop.f32.mrf.mxu0
    %v7842 = vadd.f32 0.0, %v7841
    %v7843 = vpop.f32.mrf.mxu0
    %v7844 = vadd.f32 0.0, %v7843
    %7845 = vmatmul.bf16.gmra.mxu0 %v7730
    %v7846 = vpop.f32.mrf.mxu0
    %v7847 = vadd.f32 0.0, %v7846
    %v7848 = vpop.f32.mrf.mxu0
    %v7849 = vadd.f32 0.0, %v7848
    %7850 = vmatmul.bf16.gmra.mxu0 %v7733
    %v7851 = vpop.f32.mrf.mxu0
    %v7852 = vadd.f32 0.0, %v7851
    %v7853 = vpop.f32.mrf.mxu0
    %v7854 = vadd.f32 0.0, %v7853
    %7855 = vmatmul.bf16.gmra.mxu0 %v7736
    %v7856 = vpop.f32.mrf.mxu0
    %v7857 = vadd.f32 0.0, %v7856
    %v7858 = vpop.f32.mrf.mxu0
    %v7859 = vadd.f32 0.0, %v7858
    %7860 = vmatmul.bf16.gmra.mxu0 %v7739
    %v7861 = vpop.f32.mrf.mxu0
    %v7862 = vadd.f32 0.0, %v7861
    %v7863 = vpop.f32.mrf.mxu0
    %v7864 = vadd.f32 0.0, %v7863
    %7865 = vmatmul.bf16.gmra.mxu0 %v7742
    %v7866 = vpop.f32.mrf.mxu0
    %v7867 = vadd.f32 0.0, %v7866
    %v7868 = vpop.f32.mrf.mxu0
    %v7869 = vadd.f32 0.0, %v7868
    %7870 = vmatmul.bf16.gmra.mxu0 %v7745
    %v7871 = vpop.f32.mrf.mxu0
    %v7872 = vadd.f32 0.0, %v7871
    %v7873 = vpop.f32.mrf.mxu0
    %v7874 = vadd.f32 0.0, %v7873
    %7875 = vmatmul.bf16.gmra.mxu0 %v7748
    %v7876 = vpop.f32.mrf.mxu0
    %v7877 = vadd.f32 0.0, %v7876
    %v7878 = vpop.f32.mrf.mxu0
    %v7879 = vadd.f32 0.0, %v7878
    %7880 = vmatmul.bf16.gmra.mxu0 %v7751
    %v7881 = vpop.f32.mrf.mxu0
    %v7882 = vadd.f32 0.0, %v7881
    %v7883 = vpop.f32.mrf.mxu0
    %v7884 = vadd.f32 0.0, %v7883
    %7885 = vmatmul.bf16.gmra.mxu0 %v7754
    %v7886 = vpop.f32.mrf.mxu0
    %v7887 = vadd.f32 0.0, %v7886
    %v7888 = vpop.f32.mrf.mxu0
    %v7889 = vadd.f32 0.0, %v7888
    %7890 = vmatmul.bf16.gmra.mxu0 %v7757
    %v7891 = vpop.f32.mrf.mxu0
    %v7892 = vadd.f32 0.0, %v7891
    %v7893 = vpop.f32.mrf.mxu0
    %v7894 = vadd.f32 0.0, %v7893
    %7895 = vmatmul.bf16.gmra.mxu0 %v7760
    %v7896 = vpop.f32.mrf.mxu0
    %v7897 = vadd.f32 0.0, %v7896
    %v7898 = vpop.f32.mrf.mxu0
    %v7899 = vadd.f32 0.0, %v7898
    %7900 = vmatmul.bf16.gmra.mxu0 %v7763
    %v7901 = vpop.f32.mrf.mxu0
    %v7902 = vadd.f32 0.0, %v7901
    %v7903 = vpop.f32.mrf.mxu0
    %v7904 = vadd.f32 0.0, %v7903
    %7905 = vmatmul.bf16.gmra.mxu0 %v7766
    %v7906 = vpop.f32.mrf.mxu0
    %v7907 = vadd.f32 0.0, %v7906
    %v7908 = vpop.f32.mrf.mxu0
    %v7909 = vadd.f32 0.0, %v7908
    %7910 = vmatmul.bf16.gmra.mxu0 %v7769
    %v7911 = vpop.f32.mrf.mxu0
    %v7912 = vadd.f32 0.0, %v7911
    %v7913 = vpop.f32.mrf.mxu0
    %v7914 = vadd.f32 0.0, %v7913
    %7915 = vmatmul.bf16.gmra.mxu0 %v7772
    %v7916 = vpop.f32.mrf.mxu0
    %v7917 = vadd.f32 0.0, %v7916
    %v7918 = vpop.f32.mrf.mxu0
    %v7919 = vadd.f32 0.0, %v7918
    %7920 = vmatmul.bf16.gmra.mxu0 %v7775
    %v7921 = vpop.f32.mrf.mxu0
    %v7922 = vadd.f32 0.0, %v7921
    %v7923 = vpop.f32.mrf.mxu0
    %v7924 = vadd.f32 0.0, %v7923
    %7925 = vmatmul.bf16.gmra.mxu0 %v7778
    %v7926 = vpop.f32.mrf.mxu0
    %v7927 = vadd.f32 0.0, %v7926
    %v7928 = vpop.f32.mrf.mxu0
    %v7929 = vadd.f32 0.0, %v7928
    %7930 = vmatmul.bf16.gmra.mxu0 %v7781
    %v7931 = vpop.f32.mrf.mxu0
    %v7932 = vadd.f32 0.0, %v7931
    %v7933 = vpop.f32.mrf.mxu0
    %v7934 = vadd.f32 0.0, %v7933
    %7935 = vmatmul.bf16.gmra.mxu0 %v7784
    %v7936 = vpop.f32.mrf.mxu0
    %v7937 = vadd.f32 0.0, %v7936
    %v7938 = vpop.f32.mrf.mxu0
    %v7939 = vadd.f32 0.0, %v7938
    %7940 = vmatmul.bf16.gmra.mxu0 %v7787
    %v7941 = vpop.f32.mrf.mxu0
    %v7942 = vadd.f32 0.0, %v7941
    %v7943 = vpop.f32.mrf.mxu0
    %v7944 = vadd.f32 0.0, %v7943
    %7945 = vmatmul.bf16.gmra.mxu0 %v7790
    %v7946 = vpop.f32.mrf.mxu0
    %v7947 = vadd.f32 0.0, %v7946
    %v7948 = vpop.f32.mrf.mxu0
    %v7949 = vadd.f32 0.0, %v7948
    %7950 = vmatmul.bf16.gmra.mxu0 %v7793
    %v7951 = vpop.f32.mrf.mxu0
    %v7952 = vadd.f32 0.0, %v7951
    %v7953 = vpop.f32.mrf.mxu0
    %v7954 = vadd.f32 0.0, %v7953
    %7955 = vmatmul.bf16.gmra.mxu0 %v7796
    %v7956 = vpop.f32.mrf.mxu0
    %v7957 = vadd.f32 0.0, %v7956
    %v7958 = vpop.f32.mrf.mxu0
    %v7959 = vadd.f32 0.0, %v7958
    %7960 = vmatmul.bf16.gmra.mxu0 %v7799
    %v7961 = vpop.f32.mrf.mxu0
    %v7962 = vadd.f32 0.0, %v7961
    %v7963 = vpop.f32.mrf.mxu0
    %v7964 = vadd.f32 0.0, %v7963
    %7965 = vmatmul.bf16.gmra.mxu0 %v7802
    %v7966 = vpop.f32.mrf.mxu0
    %v7967 = vadd.f32 0.0, %v7966
    %v7968 = vpop.f32.mrf.mxu0
    %v7969 = vadd.f32 0.0, %v7968
    %7970 = vmatmul.bf16.gmra.mxu0 %v7805
    %v7971 = vpop.f32.mrf.mxu0
    %v7972 = vadd.f32 0.0, %v7971
    %v7973 = vpop.f32.mrf.mxu0
    %v7974 = vadd.f32 0.0, %v7973
    %7975 = vdwg.mxu0
    %v7976 = vadd.f32 %v7519, %v7817
    %v7977 = vadd.f32 %v7521, %v7819
    %v7978 = vadd.f32 %v7524, %v7822
    %v7979 = vadd.f32 %v7526, %v7824
    %v7980 = vadd.f32 %v7529, %v7827
    %v7981 = vadd.f32 %v7531, %v7829
    %v7982 = vadd.f32 %v7534, %v7832
    %v7983 = vadd.f32 %v7536, %v7834
    %v7984 = vadd.f32 %v7539, %v7837
    %v7985 = vadd.f32 %v7541, %v7839
    %v7986 = vadd.f32 %v7544, %v7842
    %v7987 = vadd.f32 %v7546, %v7844
    %v7988 = vadd.f32 %v7549, %v7847
    %v7989 = vadd.f32 %v7551, %v7849
    %v7990 = vadd.f32 %v7554, %v7852
    %v7991 = vadd.f32 %v7556, %v7854
    %v7992 = vadd.f32 %v7559, %v7857
    %v7993 = vadd.f32 %v7561, %v7859
    %v7994 = vadd.f32 %v7564, %v7862
    %v7995 = vadd.f32 %v7566, %v7864
    %v7996 = vadd.f32 %v7569, %v7867
    %v7997 = vadd.f32 %v7571, %v7869
    %v7998 = vadd.f32 %v7574, %v7872
    %v7999 = vadd.f32 %v7576, %v7874
    %v8000 = vadd.f32 %v7579, %v7877
    %v8001 = vadd.f32 %v7581, %v7879
    %v8002 = vadd.f32 %v7584, %v7882
    %v8003 = vadd.f32 %v7586, %v7884
    %v8004 = vadd.f32 %v7589, %v7887
    %v8005 = vadd.f32 %v7591, %v7889
    %v8006 = vadd.f32 %v7594, %v7892
    %v8007 = vadd.f32 %v7596, %v7894
    %v8008 = vadd.f32 %v7599, %v7897
    %v8009 = vadd.f32 %v7601, %v7899
    %v8010 = vadd.f32 %v7604, %v7902
    %v8011 = vadd.f32 %v7606, %v7904
    %v8012 = vadd.f32 %v7609, %v7907
    %v8013 = vadd.f32 %v7611, %v7909
    %v8014 = vadd.f32 %v7614, %v7912
    %v8015 = vadd.f32 %v7616, %v7914
    %v8016 = vadd.f32 %v7619, %v7917
    %v8017 = vadd.f32 %v7621, %v7919
    %v8018 = vadd.f32 %v7624, %v7922
    %v8019 = vadd.f32 %v7626, %v7924
    %v8020 = vadd.f32 %v7629, %v7927
    %v8021 = vadd.f32 %v7631, %v7929
    %v8022 = vadd.f32 %v7634, %v7932
    %v8023 = vadd.f32 %v7636, %v7934
    %v8024 = vadd.f32 %v7639, %v7937
    %v8025 = vadd.f32 %v7641, %v7939
    %v8026 = vadd.f32 %v7644, %v7942
    %v8027 = vadd.f32 %v7646, %v7944
    %v8028 = vadd.f32 %v7649, %v7947
    %v8029 = vadd.f32 %v7651, %v7949
    %v8030 = vadd.f32 %v7654, %v7952
    %v8031 = vadd.f32 %v7656, %v7954
    %v8032 = vadd.f32 %v7659, %v7957
    %v8033 = vadd.f32 %v7661, %v7959
    %v8034 = vadd.f32 %v7664, %v7962
    %v8035 = vadd.f32 %v7666, %v7964
    %v8036 = vadd.f32 %v7669, %v7967
    %v8037 = vadd.f32 %v7671, %v7969
    %v8038 = vadd.f32 %v7674, %v7972
    %v8039 = vadd.f32 %v7676, %v7974
    %s8040 = scalar_lea.vmem %s4, 3
    %v8041 = vld [vmem:[%s8040] sm:$0x1]
    %v8043 = vperm.slane %v8041, 0
    %v8045 = vadd.f32 %v7976, %v8043
    %v8046 = vadd.f32 %v7977, %v8043
    %v8047 = vadd.f32 %v7978, %v8043
    %v8048 = vadd.f32 %v7979, %v8043
    %v8049 = vadd.f32 %v7980, %v8043
    %v8050 = vadd.f32 %v7981, %v8043
    %v8051 = vadd.f32 %v7982, %v8043
    %v8052 = vadd.f32 %v7983, %v8043
    %v8053 = vadd.f32 %v7984, %v8043
    %v8054 = vadd.f32 %v7985, %v8043
    %v8055 = vadd.f32 %v7986, %v8043
    %v8056 = vadd.f32 %v7987, %v8043
    %v8057 = vadd.f32 %v7988, %v8043
    %v8058 = vadd.f32 %v7989, %v8043
    %v8059 = vadd.f32 %v7990, %v8043
    %v8060 = vadd.f32 %v7991, %v8043
    %v8061 = vadd.f32 %v7992, %v8043
    %v8062 = vadd.f32 %v7993, %v8043
    %v8063 = vadd.f32 %v7994, %v8043
    %v8064 = vadd.f32 %v7995, %v8043
    %v8065 = vadd.f32 %v7996, %v8043
    %v8066 = vadd.f32 %v7997, %v8043
    %v8067 = vadd.f32 %v7998, %v8043
    %v8068 = vadd.f32 %v7999, %v8043
    %v8069 = vadd.f32 %v8000, %v8043
    %v8070 = vadd.f32 %v8001, %v8043
    %v8071 = vadd.f32 %v8002, %v8043
    %v8072 = vadd.f32 %v8003, %v8043
    %v8073 = vadd.f32 %v8004, %v8043
    %v8074 = vadd.f32 %v8005, %v8043
    %v8075 = vadd.f32 %v8006, %v8043
    %v8076 = vadd.f32 %v8007, %v8043
    %v8077 = vadd.f32 %v8008, %v8043
    %v8078 = vadd.f32 %v8009, %v8043
    %v8079 = vadd.f32 %v8010, %v8043
    %v8080 = vadd.f32 %v8011, %v8043
    %v8081 = vadd.f32 %v8012, %v8043
    %v8082 = vadd.f32 %v8013, %v8043
    %v8083 = vadd.f32 %v8014, %v8043
    %v8084 = vadd.f32 %v8015, %v8043
    %v8085 = vadd.f32 %v8016, %v8043
    %v8086 = vadd.f32 %v8017, %v8043
    %v8087 = vadd.f32 %v8018, %v8043
    %v8088 = vadd.f32 %v8019, %v8043
    %v8089 = vadd.f32 %v8020, %v8043
    %v8090 = vadd.f32 %v8021, %v8043
    %v8091 = vadd.f32 %v8022, %v8043
    %v8092 = vadd.f32 %v8023, %v8043
    %v8093 = vadd.f32 %v8024, %v8043
    %v8094 = vadd.f32 %v8025, %v8043
    %v8095 = vadd.f32 %v8026, %v8043
    %v8096 = vadd.f32 %v8027, %v8043
    %v8097 = vadd.f32 %v8028, %v8043
    %v8098 = vadd.f32 %v8029, %v8043
    %v8099 = vadd.f32 %v8030, %v8043
    %v8100 = vadd.f32 %v8031, %v8043
    %v8101 = vadd.f32 %v8032, %v8043
    %v8102 = vadd.f32 %v8033, %v8043
    %v8103 = vadd.f32 %v8034, %v8043
    %v8104 = vadd.f32 %v8035, %v8043
    %v8105 = vadd.f32 %v8036, %v8043
    %v8106 = vadd.f32 %v8037, %v8043
    %v8107 = vadd.f32 %v8038, %v8043
    %v8108 = vadd.f32 %v8039, %v8043
    %v8109 = vadd.f32 %v8045, %v4967
    %v8110 = vadd.f32 %v8046, %v4968
    %v8111 = vadd.f32 %v8047, %v4969
    %v8112 = vadd.f32 %v8048, %v4970
    %v8113 = vadd.f32 %v8049, %v4971
    %v8114 = vadd.f32 %v8050, %v4972
    %v8115 = vadd.f32 %v8051, %v4973
    %v8116 = vadd.f32 %v8052, %v4974
    %v8117 = vadd.f32 %v8053, %v4975
    %v8118 = vadd.f32 %v8054, %v4976
    %v8119 = vadd.f32 %v8055, %v4977
    %v8120 = vadd.f32 %v8056, %v4978
    %v8121 = vadd.f32 %v8057, %v4979
    %v8122 = vadd.f32 %v8058, %v4980
    %v8123 = vadd.f32 %v8059, %v4981
    %v8124 = vadd.f32 %v8060, %v4982
    %v8125 = vadd.f32 %v8061, %v4983
    %v8126 = vadd.f32 %v8062, %v4984
    %v8127 = vadd.f32 %v8063, %v4985
    %v8128 = vadd.f32 %v8064, %v4986
    %v8129 = vadd.f32 %v8065, %v4987
    %v8130 = vadd.f32 %v8066, %v4988
    %v8131 = vadd.f32 %v8067, %v4989
    %v8132 = vadd.f32 %v8068, %v4990
    %v8133 = vadd.f32 %v8069, %v4991
    %v8134 = vadd.f32 %v8070, %v4992
    %v8135 = vadd.f32 %v8071, %v4993
    %v8136 = vadd.f32 %v8072, %v4994
    %v8137 = vadd.f32 %v8073, %v4995
    %v8138 = vadd.f32 %v8074, %v4996
    %v8139 = vadd.f32 %v8075, %v4997
    %v8140 = vadd.f32 %v8076, %v4998
    %v8141 = vadd.f32 %v8077, %v4999
    %v8142 = vadd.f32 %v8078, %v5000
    %v8143 = vadd.f32 %v8079, %v5001
    %v8144 = vadd.f32 %v8080, %v5002
    %v8145 = vadd.f32 %v8081, %v5003
    %v8146 = vadd.f32 %v8082, %v5004
    %v8147 = vadd.f32 %v8083, %v5005
    %v8148 = vadd.f32 %v8084, %v5006
    %v8149 = vadd.f32 %v8085, %v5007
    %v8150 = vadd.f32 %v8086, %v5008
    %v8151 = vadd.f32 %v8087, %v5009
    %v8152 = vadd.f32 %v8088, %v5010
    %v8153 = vadd.f32 %v8089, %v5011
    %v8154 = vadd.f32 %v8090, %v5012
    %v8155 = vadd.f32 %v8091, %v5013
    %v8156 = vadd.f32 %v8092, %v5014
    %v8157 = vadd.f32 %v8093, %v5015
    %v8158 = vadd.f32 %v8094, %v5016
    %v8159 = vadd.f32 %v8095, %v5017
    %v8160 = vadd.f32 %v8096, %v5018
    %v8161 = vadd.f32 %v8097, %v5019
    %v8162 = vadd.f32 %v8098, %v5020
    %v8163 = vadd.f32 %v8099, %v5021
    %v8164 = vadd.f32 %v8100, %v5022
    %v8165 = vadd.f32 %v8101, %v5023
    %v8166 = vadd.f32 %v8102, %v5024
    %v8167 = vadd.f32 %v8103, %v5025
    %v8168 = vadd.f32 %v8104, %v5026
    %v8169 = vadd.f32 %v8105, %v5027
    %v8170 = vadd.f32 %v8106, %v5028
    %v8171 = vadd.f32 %v8107, %v5029
    %v8172 = vadd.f32 %v8108, %v5030
    %v8173 = vmax.f32 %v8109, 0.0
    %v8174 = vmax.f32 %v8110, 0.0
    %v8175 = vmax.f32 %v8111, 0.0
    %v8176 = vmax.f32 %v8112, 0.0
    %v8177 = vmax.f32 %v8113, 0.0
    %v8178 = vmax.f32 %v8114, 0.0
    %v8179 = vmax.f32 %v8115, 0.0
    %v8180 = vmax.f32 %v8116, 0.0
    %v8181 = vmax.f32 %v8117, 0.0
    %v8182 = vmax.f32 %v8118, 0.0
    %v8183 = vmax.f32 %v8119, 0.0
    %v8184 = vmax.f32 %v8120, 0.0
    %v8185 = vmax.f32 %v8121, 0.0
    %v8186 = vmax.f32 %v8122, 0.0
    %v8187 = vmax.f32 %v8123, 0.0
    %v8188 = vmax.f32 %v8124, 0.0
    %v8189 = vmax.f32 %v8125, 0.0
    %v8190 = vmax.f32 %v8126, 0.0
    %v8191 = vmax.f32 %v8127, 0.0
    %v8192 = vmax.f32 %v8128, 0.0
    %v8193 = vmax.f32 %v8129, 0.0
    %v8194 = vmax.f32 %v8130, 0.0
    %v8195 = vmax.f32 %v8131, 0.0
    %v8196 = vmax.f32 %v8132, 0.0
    %v8197 = vmax.f32 %v8133, 0.0
    %v8198 = vmax.f32 %v8134, 0.0
    %v8199 = vmax.f32 %v8135, 0.0
    %v8200 = vmax.f32 %v8136, 0.0
    %v8201 = vmax.f32 %v8137, 0.0
    %v8202 = vmax.f32 %v8138, 0.0
    %v8203 = vmax.f32 %v8139, 0.0
    %v8204 = vmax.f32 %v8140, 0.0
    %v8205 = vmax.f32 %v8141, 0.0
    %v8206 = vmax.f32 %v8142, 0.0
    %v8207 = vmax.f32 %v8143, 0.0
    %v8208 = vmax.f32 %v8144, 0.0
    %v8209 = vmax.f32 %v8145, 0.0
    %v8210 = vmax.f32 %v8146, 0.0
    %v8211 = vmax.f32 %v8147, 0.0
    %v8212 = vmax.f32 %v8148, 0.0
    %v8213 = vmax.f32 %v8149, 0.0
    %v8214 = vmax.f32 %v8150, 0.0
    %v8215 = vmax.f32 %v8151, 0.0
    %v8216 = vmax.f32 %v8152, 0.0
    %v8217 = vmax.f32 %v8153, 0.0
    %v8218 = vmax.f32 %v8154, 0.0
    %v8219 = vmax.f32 %v8155, 0.0
    %v8220 = vmax.f32 %v8156, 0.0
    %v8221 = vmax.f32 %v8157, 0.0
    %v8222 = vmax.f32 %v8158, 0.0
    %v8223 = vmax.f32 %v8159, 0.0
    %v8224 = vmax.f32 %v8160, 0.0
    %v8225 = vmax.f32 %v8161, 0.0
    %v8226 = vmax.f32 %v8162, 0.0
    %v8227 = vmax.f32 %v8163, 0.0
    %v8228 = vmax.f32 %v8164, 0.0
    %v8229 = vmax.f32 %v8165, 0.0
    %v8230 = vmax.f32 %v8166, 0.0
    %v8231 = vmax.f32 %v8167, 0.0
    %v8232 = vmax.f32 %v8168, 0.0
    %v8233 = vmax.f32 %v8169, 0.0
    %v8234 = vmax.f32 %v8170, 0.0
    %v8235 = vmax.f32 %v8171, 0.0
    %v8236 = vmax.f32 %v8172, 0.0
    %v8237 = vpack.c.bf16 %v8174, %v8173
    %v8238 = vpack.c.bf16 %v8176, %v8175
    %v8239 = vpack.c.bf16 %v8178, %v8177
    %v8240 = vpack.c.bf16 %v8180, %v8179
    %v8241 = vpack.c.bf16 %v8182, %v8181
    %v8242 = vpack.c.bf16 %v8184, %v8183
    %v8243 = vpack.c.bf16 %v8186, %v8185
    %v8244 = vpack.c.bf16 %v8188, %v8187
    %v8245 = vpack.c.bf16 %v8190, %v8189
    %v8246 = vpack.c.bf16 %v8192, %v8191
    %v8247 = vpack.c.bf16 %v8194, %v8193
    %v8248 = vpack.c.bf16 %v8196, %v8195
    %v8249 = vpack.c.bf16 %v8198, %v8197
    %v8250 = vpack.c.bf16 %v8200, %v8199
    %v8251 = vpack.c.bf16 %v8202, %v8201
    %v8252 = vpack.c.bf16 %v8204, %v8203
    %v8253 = vpack.c.bf16 %v8206, %v8205
    %v8254 = vpack.c.bf16 %v8208, %v8207
    %v8255 = vpack.c.bf16 %v8210, %v8209
    %v8256 = vpack.c.bf16 %v8212, %v8211
    %v8257 = vpack.c.bf16 %v8214, %v8213
    %v8258 = vpack.c.bf16 %v8216, %v8215
    %v8259 = vpack.c.bf16 %v8218, %v8217
    %v8260 = vpack.c.bf16 %v8220, %v8219
    %v8261 = vpack.c.bf16 %v8222, %v8221
    %v8262 = vpack.c.bf16 %v8224, %v8223
    %v8263 = vpack.c.bf16 %v8226, %v8225
    %v8264 = vpack.c.bf16 %v8228, %v8227
    %v8265 = vpack.c.bf16 %v8230, %v8229
    %v8266 = vpack.c.bf16 %v8232, %v8231
    %v8267 = vpack.c.bf16 %v8234, %v8233
    %v8268 = vpack.c.bf16 %v8236, %v8235
    %v8269 = vrot.slane %v8173, 7
    %v8270 = vrot.slane %v8174, 7
    %v8271 = vrot.slane %v8175, 7
    %v8272 = vrot.slane %v8176, 7
    %v8273 = vrot.slane %v8177, 7
    %v8274 = vrot.slane %v8178, 7
    %v8275 = vrot.slane %v8179, 7
    %v8276 = vrot.slane %v8180, 7
    %v8277 = vrot.slane %v8181, 7
    %v8278 = vrot.slane %v8182, 7
    %v8279 = vrot.slane %v8183, 7
    %v8280 = vrot.slane %v8184, 7
    %v8281 = vrot.slane %v8185, 7
    %v8282 = vrot.slane %v8186, 7
    %v8283 = vrot.slane %v8187, 7
    %v8284 = vrot.slane %v8188, 7
    %v8285 = vrot.slane %v8189, 7
    %v8286 = vrot.slane %v8190, 7
    %v8287 = vrot.slane %v8191, 7
    %v8288 = vrot.slane %v8192, 7
    %v8289 = vrot.slane %v8193, 7
    %v8290 = vrot.slane %v8194, 7
    %v8291 = vrot.slane %v8195, 7
    %v8292 = vrot.slane %v8196, 7
    %v8293 = vrot.slane %v8197, 7
    %v8294 = vrot.slane %v8198, 7
    %v8295 = vrot.slane %v8199, 7
    %v8296 = vrot.slane %v8200, 7
    %v8297 = vrot.slane %v8201, 7
    %v8298 = vrot.slane %v8202, 7
    %v8299 = vrot.slane %v8203, 7
    %v8300 = vrot.slane %v8204, 7
    %v8301 = vrot.slane %v8205, 7
    %v8302 = vrot.slane %v8206, 7
    %v8303 = vrot.slane %v8207, 7
    %v8304 = vrot.slane %v8208, 7
    %v8305 = vrot.slane %v8209, 7
    %v8306 = vrot.slane %v8210, 7
    %v8307 = vrot.slane %v8211, 7
    %v8308 = vrot.slane %v8212, 7
    %v8309 = vrot.slane %v8213, 7
    %v8310 = vrot.slane %v8214, 7
    %v8311 = vrot.slane %v8215, 7
    %v8312 = vrot.slane %v8216, 7
    %v8313 = vrot.slane %v8217, 7
    %v8314 = vrot.slane %v8218, 7
    %v8315 = vrot.slane %v8219, 7
    %v8316 = vrot.slane %v8220, 7
    %v8317 = vrot.slane %v8221, 7
    %v8318 = vrot.slane %v8222, 7
    %v8319 = vrot.slane %v8223, 7
    %v8320 = vrot.slane %v8224, 7
    %v8321 = vrot.slane %v8225, 7
    %v8322 = vrot.slane %v8226, 7
    %v8323 = vrot.slane %v8227, 7
    %v8324 = vrot.slane %v8228, 7
    %v8325 = vrot.slane %v8229, 7
    %v8326 = vrot.slane %v8230, 7
    %v8327 = vrot.slane %v8231, 7
    %v8328 = vrot.slane %v8232, 7
    %v8329 = vrot.slane %v8233, 7
    %v8330 = vrot.slane %v8234, 7
    %v8331 = vrot.slane %v8235, 7
    %v8332 = vrot.slane %v8236, 7
    %v8333 = vsel %vm1664, %v8331, %v8332
    %v8334 = vsel %vm1664, %v8330, %v8331
    %v8335 = vsel %vm1664, %v8329, %v8330
    %v8336 = vsel %vm1664, %v8328, %v8329
    %v8337 = vsel %vm1664, %v8327, %v8328
    %v8338 = vsel %vm1664, %v8326, %v8327
    %v8339 = vsel %vm1664, %v8325, %v8326
    %v8340 = vsel %vm1664, %v8324, %v8325
    %v8341 = vsel %vm1664, %v8323, %v8324
    %v8342 = vsel %vm1664, %v8322, %v8323
    %v8343 = vsel %vm1664, %v8321, %v8322
    %v8344 = vsel %vm1664, %v8320, %v8321
    %v8345 = vsel %vm1664, %v8319, %v8320
    %v8346 = vsel %vm1664, %v8318, %v8319
    %v8347 = vsel %vm1664, %v8317, %v8318
    %v8348 = vsel %vm1664, %v8316, %v8317
    %v8349 = vsel %vm1664, %v8315, %v8316
    %v8350 = vsel %vm1664, %v8314, %v8315
    %v8351 = vsel %vm1664, %v8313, %v8314
    %v8352 = vsel %vm1664, %v8312, %v8313
    %v8353 = vsel %vm1664, %v8311, %v8312
    %v8354 = vsel %vm1664, %v8310, %v8311
    %v8355 = vsel %vm1664, %v8309, %v8310
    %v8356 = vsel %vm1664, %v8308, %v8309
    %v8357 = vsel %vm1664, %v8307, %v8308
    %v8358 = vsel %vm1664, %v8306, %v8307
    %v8359 = vsel %vm1664, %v8305, %v8306
    %v8360 = vsel %vm1664, %v8304, %v8305
    %v8361 = vsel %vm1664, %v8303, %v8304
    %v8362 = vsel %vm1664, %v8302, %v8303
    %v8363 = vsel %vm1664, %v8301, %v8302
    %v8364 = vsel %vm1664, %v8300, %v8301
    %v8365 = vsel %vm1664, %v8299, %v8300
    %v8366 = vsel %vm1664, %v8298, %v8299
    %v8367 = vsel %vm1664, %v8297, %v8298
    %v8368 = vsel %vm1664, %v8296, %v8297
    %v8369 = vsel %vm1664, %v8295, %v8296
    %v8370 = vsel %vm1664, %v8294, %v8295
    %v8371 = vsel %vm1664, %v8293, %v8294
    %v8372 = vsel %vm1664, %v8292, %v8293
    %v8373 = vsel %vm1664, %v8291, %v8292
    %v8374 = vsel %vm1664, %v8290, %v8291
    %v8375 = vsel %vm1664, %v8289, %v8290
    %v8376 = vsel %vm1664, %v8288, %v8289
    %v8377 = vsel %vm1664, %v8287, %v8288
    %v8378 = vsel %vm1664, %v8286, %v8287
    %v8379 = vsel %vm1664, %v8285, %v8286
    %v8380 = vsel %vm1664, %v8284, %v8285
    %v8381 = vsel %vm1664, %v8283, %v8284
    %v8382 = vsel %vm1664, %v8282, %v8283
    %v8383 = vsel %vm1664, %v8281, %v8282
    %v8384 = vsel %vm1664, %v8280, %v8281
    %v8385 = vsel %vm1664, %v8279, %v8280
    %v8386 = vsel %vm1664, %v8278, %v8279
    %v8387 = vsel %vm1664, %v8277, %v8278
    %v8388 = vsel %vm1664, %v8276, %v8277
    %v8389 = vsel %vm1664, %v8275, %v8276
    %v8390 = vsel %vm1664, %v8274, %v8275
    %v8391 = vsel %vm1664, %v8273, %v8274
    %v8392 = vsel %vm1664, %v8272, %v8273
    %v8393 = vsel %vm1664, %v8271, %v8272
    %v8394 = vsel %vm1664, %v8270, %v8271
    %v8395 = vsel %vm1664, %v8269, %v8270
    %v8396 = vsel %vm1664, %v8332, %v8269
    %v8397 = vsel %vm1793, 0.0, %v8396
    %v8398 = vsel %vm1794, 0.0, %v8395
    %v8399 = vsel %vm1795, 0.0, %v8394
    %v8400 = vsel %vm1796, 0.0, %v8393
    %v8401 = vsel %vm1797, 0.0, %v8392
    %v8402 = vsel %vm1798, 0.0, %v8391
    %v8403 = vsel %vm1799, 0.0, %v8390
    %v8404 = vsel %vm1800, 0.0, %v8389
    %v8405 = vsel %vm1801, 0.0, %v8388
    %v8406 = vsel %vm1802, 0.0, %v8387
    %v8407 = vsel %vm1803, 0.0, %v8386
    %v8408 = vsel %vm1804, 0.0, %v8385
    %v8409 = vsel %vm1805, 0.0, %v8384
    %v8410 = vsel %vm1806, 0.0, %v8383
    %v8411 = vsel %vm1807, 0.0, %v8382
    %v8412 = vsel %vm1808, 0.0, %v8381
    %v8413 = vsel %vm1809, 0.0, %v8380
    %v8414 = vsel %vm1810, 0.0, %v8379
    %v8415 = vsel %vm1811, 0.0, %v8378
    %v8416 = vsel %vm1812, 0.0, %v8377
    %v8417 = vsel %vm1813, 0.0, %v8376
    %v8418 = vsel %vm1814, 0.0, %v8375
    %v8419 = vsel %vm1815, 0.0, %v8374
    %v8420 = vsel %vm1816, 0.0, %v8373
    %v8421 = vsel %vm1817, 0.0, %v8372
    %v8422 = vsel %vm1818, 0.0, %v8371
    %v8423 = vsel %vm1819, 0.0, %v8370
    %v8424 = vsel %vm1820, 0.0, %v8369
    %v8425 = vsel %vm1821, 0.0, %v8368
    %v8426 = vsel %vm1822, 0.0, %v8367
    %v8427 = vsel %vm1823, 0.0, %v8366
    %v8428 = vsel %vm1824, 0.0, %v8365
    %v8429 = vsel %vm1825, 0.0, %v8364
    %v8430 = vsel %vm1826, 0.0, %v8363
    %v8431 = vsel %vm1827, 0.0, %v8362
    %v8432 = vsel %vm1828, 0.0, %v8361
    %v8433 = vsel %vm1829, 0.0, %v8360
    %v8434 = vsel %vm1830, 0.0, %v8359
    %v8435 = vsel %vm1831, 0.0, %v8358
    %v8436 = vsel %vm1832, 0.0, %v8357
    %v8437 = vsel %vm1833, 0.0, %v8356
    %v8438 = vsel %vm1834, 0.0, %v8355
    %v8439 = vsel %vm1835, 0.0, %v8354
    %v8440 = vsel %vm1836, 0.0, %v8353
    %v8441 = vsel %vm1837, 0.0, %v8352
    %v8442 = vsel %vm1838, 0.0, %v8351
    %v8443 = vsel %vm1839, 0.0, %v8350
    %v8444 = vsel %vm1840, 0.0, %v8349
    %v8445 = vsel %vm1841, 0.0, %v8348
    %v8446 = vsel %vm1842, 0.0, %v8347
    %v8447 = vsel %vm1843, 0.0, %v8346
    %v8448 = vsel %vm1844, 0.0, %v8345
    %v8449 = vsel %vm1845, 0.0, %v8344
    %v8450 = vsel %vm1846, 0.0, %v8343
    %v8451 = vsel %vm1847, 0.0, %v8342
    %v8452 = vsel %vm1848, 0.0, %v8341
    %v8453 = vsel %vm1849, 0.0, %v8340
    %v8454 = vsel %vm1850, 0.0, %v8339
    %v8455 = vsel %vm1851, 0.0, %v8338
    %v8456 = vsel %vm1852, 0.0, %v8337
    %v8457 = vsel %vm1853, 0.0, %v8336
    %v8458 = vsel %vm1854, 0.0, %v8335
    %v8459 = vsel %vm1855, 0.0, %v8334
    %v8460 = vsel %vm1856, 0.0, %v8333
    %v8461 = vpack.c.bf16 %v8398, %v8397
    %v8462 = vpack.c.bf16 %v8400, %v8399
    %v8463 = vpack.c.bf16 %v8402, %v8401
    %v8464 = vpack.c.bf16 %v8404, %v8403
    %v8465 = vpack.c.bf16 %v8406, %v8405
    %v8466 = vpack.c.bf16 %v8408, %v8407
    %v8467 = vpack.c.bf16 %v8410, %v8409
    %v8468 = vpack.c.bf16 %v8412, %v8411
    %v8469 = vpack.c.bf16 %v8414, %v8413
    %v8470 = vpack.c.bf16 %v8416, %v8415
    %v8471 = vpack.c.bf16 %v8418, %v8417
    %v8472 = vpack.c.bf16 %v8420, %v8419
    %v8473 = vpack.c.bf16 %v8422, %v8421
    %v8474 = vpack.c.bf16 %v8424, %v8423
    %v8475 = vpack.c.bf16 %v8426, %v8425
    %v8476 = vpack.c.bf16 %v8428, %v8427
    %v8477 = vpack.c.bf16 %v8430, %v8429
    %v8478 = vpack.c.bf16 %v8432, %v8431
    %v8479 = vpack.c.bf16 %v8434, %v8433
    %v8480 = vpack.c.bf16 %v8436, %v8435
    %v8481 = vpack.c.bf16 %v8438, %v8437
    %v8482 = vpack.c.bf16 %v8440, %v8439
    %v8483 = vpack.c.bf16 %v8442, %v8441
    %v8484 = vpack.c.bf16 %v8444, %v8443
    %v8485 = vpack.c.bf16 %v8446, %v8445
    %v8486 = vpack.c.bf16 %v8448, %v8447
    %v8487 = vpack.c.bf16 %v8450, %v8449
    %v8488 = vpack.c.bf16 %v8452, %v8451
    %v8489 = vpack.c.bf16 %v8454, %v8453
    %v8490 = vpack.c.bf16 %v8456, %v8455
    %v8491 = vpack.c.bf16 %v8458, %v8457
    %v8492 = vpack.c.bf16 %v8460, %v8459
    %v8493 = vrot.slane %v8173, 1
    %v8494 = vrot.slane %v8174, 1
    %v8495 = vrot.slane %v8175, 1
    %v8496 = vrot.slane %v8176, 1
    %v8497 = vrot.slane %v8177, 1
    %v8498 = vrot.slane %v8178, 1
    %v8499 = vrot.slane %v8179, 1
    %v8500 = vrot.slane %v8180, 1
    %v8501 = vrot.slane %v8181, 1
    %v8502 = vrot.slane %v8182, 1
    %v8503 = vrot.slane %v8183, 1
    %v8504 = vrot.slane %v8184, 1
    %v8505 = vrot.slane %v8185, 1
    %v8506 = vrot.slane %v8186, 1
    %v8507 = vrot.slane %v8187, 1
    %v8508 = vrot.slane %v8188, 1
    %v8509 = vrot.slane %v8189, 1
    %v8510 = vrot.slane %v8190, 1
    %v8511 = vrot.slane %v8191, 1
    %v8512 = vrot.slane %v8192, 1
    %v8513 = vrot.slane %v8193, 1
    %v8514 = vrot.slane %v8194, 1
    %v8515 = vrot.slane %v8195, 1
    %v8516 = vrot.slane %v8196, 1
    %v8517 = vrot.slane %v8197, 1
    %v8518 = vrot.slane %v8198, 1
    %v8519 = vrot.slane %v8199, 1
    %v8520 = vrot.slane %v8200, 1
    %v8521 = vrot.slane %v8201, 1
    %v8522 = vrot.slane %v8202, 1
    %v8523 = vrot.slane %v8203, 1
    %v8524 = vrot.slane %v8204, 1
    %v8525 = vrot.slane %v8205, 1
    %v8526 = vrot.slane %v8206, 1
    %v8527 = vrot.slane %v8207, 1
    %v8528 = vrot.slane %v8208, 1
    %v8529 = vrot.slane %v8209, 1
    %v8530 = vrot.slane %v8210, 1
    %v8531 = vrot.slane %v8211, 1
    %v8532 = vrot.slane %v8212, 1
    %v8533 = vrot.slane %v8213, 1
    %v8534 = vrot.slane %v8214, 1
    %v8535 = vrot.slane %v8215, 1
    %v8536 = vrot.slane %v8216, 1
    %v8537 = vrot.slane %v8217, 1
    %v8538 = vrot.slane %v8218, 1
    %v8539 = vrot.slane %v8219, 1
    %v8540 = vrot.slane %v8220, 1
    %v8541 = vrot.slane %v8221, 1
    %v8542 = vrot.slane %v8222, 1
    %v8543 = vrot.slane %v8223, 1
    %v8544 = vrot.slane %v8224, 1
    %v8545 = vrot.slane %v8225, 1
    %v8546 = vrot.slane %v8226, 1
    %v8547 = vrot.slane %v8227, 1
    %v8548 = vrot.slane %v8228, 1
    %v8549 = vrot.slane %v8229, 1
    %v8550 = vrot.slane %v8230, 1
    %v8551 = vrot.slane %v8231, 1
    %v8552 = vrot.slane %v8232, 1
    %v8553 = vrot.slane %v8233, 1
    %v8554 = vrot.slane %v8234, 1
    %v8555 = vrot.slane %v8235, 1
    %v8556 = vrot.slane %v8236, 1
    %v8557 = vsel %vm2017, %v8555, %v8556
    %v8558 = vsel %vm2017, %v8554, %v8555
    %v8559 = vsel %vm2017, %v8553, %v8554
    %v8560 = vsel %vm2017, %v8552, %v8553
    %v8561 = vsel %vm2017, %v8551, %v8552
    %v8562 = vsel %vm2017, %v8550, %v8551
    %v8563 = vsel %vm2017, %v8549, %v8550
    %v8564 = vsel %vm2017, %v8548, %v8549
    %v8565 = vsel %vm2017, %v8547, %v8548
    %v8566 = vsel %vm2017, %v8546, %v8547
    %v8567 = vsel %vm2017, %v8545, %v8546
    %v8568 = vsel %vm2017, %v8544, %v8545
    %v8569 = vsel %vm2017, %v8543, %v8544
    %v8570 = vsel %vm2017, %v8542, %v8543
    %v8571 = vsel %vm2017, %v8541, %v8542
    %v8572 = vsel %vm2017, %v8540, %v8541
    %v8573 = vsel %vm2017, %v8539, %v8540
    %v8574 = vsel %vm2017, %v8538, %v8539
    %v8575 = vsel %vm2017, %v8537, %v8538
    %v8576 = vsel %vm2017, %v8536, %v8537
    %v8577 = vsel %vm2017, %v8535, %v8536
    %v8578 = vsel %vm2017, %v8534, %v8535
    %v8579 = vsel %vm2017, %v8533, %v8534
    %v8580 = vsel %vm2017, %v8532, %v8533
    %v8581 = vsel %vm2017, %v8531, %v8532
    %v8582 = vsel %vm2017, %v8530, %v8531
    %v8583 = vsel %vm2017, %v8529, %v8530
    %v8584 = vsel %vm2017, %v8528, %v8529
    %v8585 = vsel %vm2017, %v8527, %v8528
    %v8586 = vsel %vm2017, %v8526, %v8527
    %v8587 = vsel %vm2017, %v8525, %v8526
    %v8588 = vsel %vm2017, %v8524, %v8525
    %v8589 = vsel %vm2017, %v8523, %v8524
    %v8590 = vsel %vm2017, %v8522, %v8523
    %v8591 = vsel %vm2017, %v8521, %v8522
    %v8592 = vsel %vm2017, %v8520, %v8521
    %v8593 = vsel %vm2017, %v8519, %v8520
    %v8594 = vsel %vm2017, %v8518, %v8519
    %v8595 = vsel %vm2017, %v8517, %v8518
    %v8596 = vsel %vm2017, %v8516, %v8517
    %v8597 = vsel %vm2017, %v8515, %v8516
    %v8598 = vsel %vm2017, %v8514, %v8515
    %v8599 = vsel %vm2017, %v8513, %v8514
    %v8600 = vsel %vm2017, %v8512, %v8513
    %v8601 = vsel %vm2017, %v8511, %v8512
    %v8602 = vsel %vm2017, %v8510, %v8511
    %v8603 = vsel %vm2017, %v8509, %v8510
    %v8604 = vsel %vm2017, %v8508, %v8509
    %v8605 = vsel %vm2017, %v8507, %v8508
    %v8606 = vsel %vm2017, %v8506, %v8507
    %v8607 = vsel %vm2017, %v8505, %v8506
    %v8608 = vsel %vm2017, %v8504, %v8505
    %v8609 = vsel %vm2017, %v8503, %v8504
    %v8610 = vsel %vm2017, %v8502, %v8503
    %v8611 = vsel %vm2017, %v8501, %v8502
    %v8612 = vsel %vm2017, %v8500, %v8501
    %v8613 = vsel %vm2017, %v8499, %v8500
    %v8614 = vsel %vm2017, %v8498, %v8499
    %v8615 = vsel %vm2017, %v8497, %v8498
    %v8616 = vsel %vm2017, %v8496, %v8497
    %v8617 = vsel %vm2017, %v8495, %v8496
    %v8618 = vsel %vm2017, %v8494, %v8495
    %v8619 = vsel %vm2017, %v8493, %v8494
    %v8620 = vsel %vm2017, %v8556, %v8493
    %v8621 = vsel %vm2146, 0.0, %v8619
    %v8622 = vsel %vm2147, 0.0, %v8618
    %v8623 = vsel %vm2148, 0.0, %v8617
    %v8624 = vsel %vm2149, 0.0, %v8616
    %v8625 = vsel %vm2150, 0.0, %v8615
    %v8626 = vsel %vm2151, 0.0, %v8614
    %v8627 = vsel %vm2152, 0.0, %v8613
    %v8628 = vsel %vm2153, 0.0, %v8612
    %v8629 = vsel %vm2154, 0.0, %v8611
    %v8630 = vsel %vm2155, 0.0, %v8610
    %v8631 = vsel %vm2156, 0.0, %v8609
    %v8632 = vsel %vm2157, 0.0, %v8608
    %v8633 = vsel %vm2158, 0.0, %v8607
    %v8634 = vsel %vm2159, 0.0, %v8606
    %v8635 = vsel %vm2160, 0.0, %v8605
    %v8636 = vsel %vm2161, 0.0, %v8604
    %v8637 = vsel %vm2162, 0.0, %v8603
    %v8638 = vsel %vm2163, 0.0, %v8602
    %v8639 = vsel %vm2164, 0.0, %v8601
    %v8640 = vsel %vm2165, 0.0, %v8600
    %v8641 = vsel %vm2166, 0.0, %v8599
    %v8642 = vsel %vm2167, 0.0, %v8598
    %v8643 = vsel %vm2168, 0.0, %v8597
    %v8644 = vsel %vm2169, 0.0, %v8596
    %v8645 = vsel %vm2170, 0.0, %v8595
    %v8646 = vsel %vm2171, 0.0, %v8594
    %v8647 = vsel %vm2172, 0.0, %v8593
    %v8648 = vsel %vm2173, 0.0, %v8592
    %v8649 = vsel %vm2174, 0.0, %v8591
    %v8650 = vsel %vm2175, 0.0, %v8590
    %v8651 = vsel %vm2176, 0.0, %v8589
    %v8652 = vsel %vm2177, 0.0, %v8588
    %v8653 = vsel %vm2178, 0.0, %v8587
    %v8654 = vsel %vm2179, 0.0, %v8586
    %v8655 = vsel %vm2180, 0.0, %v8585
    %v8656 = vsel %vm2181, 0.0, %v8584
    %v8657 = vsel %vm2182, 0.0, %v8583
    %v8658 = vsel %vm2183, 0.0, %v8582
    %v8659 = vsel %vm2184, 0.0, %v8581
    %v8660 = vsel %vm2185, 0.0, %v8580
    %v8661 = vsel %vm2186, 0.0, %v8579
    %v8662 = vsel %vm2187, 0.0, %v8578
    %v8663 = vsel %vm2188, 0.0, %v8577
    %v8664 = vsel %vm2189, 0.0, %v8576
    %v8665 = vsel %vm2190, 0.0, %v8575
    %v8666 = vsel %vm2191, 0.0, %v8574
    %v8667 = vsel %vm2192, 0.0, %v8573
    %v8668 = vsel %vm2193, 0.0, %v8572
    %v8669 = vsel %vm2194, 0.0, %v8571
    %v8670 = vsel %vm2195, 0.0, %v8570
    %v8671 = vsel %vm2196, 0.0, %v8569
    %v8672 = vsel %vm2197, 0.0, %v8568
    %v8673 = vsel %vm2198, 0.0, %v8567
    %v8674 = vsel %vm2199, 0.0, %v8566
    %v8675 = vsel %vm2200, 0.0, %v8565
    %v8676 = vsel %vm2201, 0.0, %v8564
    %v8677 = vsel %vm2202, 0.0, %v8563
    %v8678 = vsel %vm2203, 0.0, %v8562
    %v8679 = vsel %vm2204, 0.0, %v8561
    %v8680 = vsel %vm2205, 0.0, %v8560
    %v8681 = vsel %vm2206, 0.0, %v8559
    %v8682 = vsel %vm2207, 0.0, %v8558
    %v8683 = vsel %vm2208, 0.0, %v8557
    %v8684 = vsel %vm2209, 0.0, %v8620
    %v8685 = vpack.c.bf16 %v8622, %v8621
    %v8686 = vpack.c.bf16 %v8624, %v8623
    %v8687 = vpack.c.bf16 %v8626, %v8625
    %v8688 = vpack.c.bf16 %v8628, %v8627
    %v8689 = vpack.c.bf16 %v8630, %v8629
    %v8690 = vpack.c.bf16 %v8632, %v8631
    %v8691 = vpack.c.bf16 %v8634, %v8633
    %v8692 = vpack.c.bf16 %v8636, %v8635
    %v8693 = vpack.c.bf16 %v8638, %v8637
    %v8694 = vpack.c.bf16 %v8640, %v8639
    %v8695 = vpack.c.bf16 %v8642, %v8641
    %v8696 = vpack.c.bf16 %v8644, %v8643
    %v8697 = vpack.c.bf16 %v8646, %v8645
    %v8698 = vpack.c.bf16 %v8648, %v8647
    %v8699 = vpack.c.bf16 %v8650, %v8649
    %v8700 = vpack.c.bf16 %v8652, %v8651
    %v8701 = vpack.c.bf16 %v8654, %v8653
    %v8702 = vpack.c.bf16 %v8656, %v8655
    %v8703 = vpack.c.bf16 %v8658, %v8657
    %v8704 = vpack.c.bf16 %v8660, %v8659
    %v8705 = vpack.c.bf16 %v8662, %v8661
    %v8706 = vpack.c.bf16 %v8664, %v8663
    %v8707 = vpack.c.bf16 %v8666, %v8665
    %v8708 = vpack.c.bf16 %v8668, %v8667
    %v8709 = vpack.c.bf16 %v8670, %v8669
    %v8710 = vpack.c.bf16 %v8672, %v8671
    %v8711 = vpack.c.bf16 %v8674, %v8673
    %v8712 = vpack.c.bf16 %v8676, %v8675
    %v8713 = vpack.c.bf16 %v8678, %v8677
    %v8714 = vpack.c.bf16 %v8680, %v8679
    %v8715 = vpack.c.bf16 %v8682, %v8681
    %v8716 = vpack.c.bf16 %v8684, %v8683
    %s8717 = scalar_lea.vmem [#allocation2], 384
    %v8718 = vld [vmem:[%s8717] sm:$0xf]
    %v8719 = vld [vmem:[%s8717 + $0x4] sm:$0xf]
    %v8720 = vld [vmem:[%s8717 + $0x8] sm:$0xf]
    %v8721 = vld [vmem:[%s8717 + $0xc] sm:$0xf]
    %v8722 = vld [vmem:[%s8717 + $0x10] sm:$0xf]
    %v8723 = vld [vmem:[%s8717 + $0x14] sm:$0xf]
    %v8724 = vld [vmem:[%s8717 + $0x18] sm:$0xf]
    %v8725 = vld [vmem:[%s8717 + $0x1c] sm:$0xf]
    %s8726 = scalar_lea.vmem [#allocation2], 416
    %v8727 = vld [vmem:[%s8726] sm:$0xf]
    %v8728 = vld [vmem:[%s8726 + $0x4] sm:$0xf]
    %v8729 = vld [vmem:[%s8726 + $0x8] sm:$0xf]
    %v8730 = vld [vmem:[%s8726 + $0xc] sm:$0xf]
    %v8731 = vld [vmem:[%s8726 + $0x10] sm:$0xf]
    %v8732 = vld [vmem:[%s8726 + $0x14] sm:$0xf]
    %v8733 = vld [vmem:[%s8726 + $0x18] sm:$0xf]
    %v8734 = vld [vmem:[%s8726 + $0x1c] sm:$0xf]
    %v8743 = vunpack.c.l.b16 %v8727
    %v8744 = vunpack.c.l.b16 %v8728
    %v8745 = vunpack.c.l.b16 %v8729
    %v8746 = vunpack.c.l.b16 %v8730
    %v8747 = vunpack.c.l.b16 %v8731
    %v8748 = vunpack.c.l.b16 %v8732
    %v8749 = vunpack.c.l.b16 %v8733
    %v8750 = vunpack.c.l.b16 %v8734
    %v8751 = vpack.c.b16 %v8744, %v8743
    %v8752 = vpack.c.b16 %v8746, %v8745
    %v8753 = vpack.c.b16 %v8748, %v8747
    %v8754 = vpack.c.b16 %v8750, %v8749
    %v8760 = vsel %vm2347, %v8237, 0
    %v8763 = vsel %vm2347, %v8238, 0
    %v8766 = vsel %vm2347, %v8239, 0
    %v8769 = vsel %vm2347, %v8240, 0
    %v8772 = vsel %vm2347, %v8241, 0
    %v8775 = vsel %vm2347, %v8242, 0
    %v8778 = vsel %vm2347, %v8243, 0
    %v8781 = vsel %vm2347, %v8244, 0
    %v8784 = vsel %vm2347, %v8245, 0
    %v8787 = vsel %vm2347, %v8246, 0
    %v8790 = vsel %vm2347, %v8247, 0
    %v8793 = vsel %vm2347, %v8248, 0
    %v8796 = vsel %vm2347, %v8249, 0
    %v8799 = vsel %vm2347, %v8250, 0
    %v8802 = vsel %vm2347, %v8251, 0
    %v8805 = vsel %vm2347, %v8252, 0
    %v8808 = vsel %vm2347, %v8253, 0
    %v8811 = vsel %vm2347, %v8254, 0
    %v8814 = vsel %vm2347, %v8255, 0
    %v8817 = vsel %vm2347, %v8256, 0
    %v8820 = vsel %vm2347, %v8257, 0
    %v8823 = vsel %vm2347, %v8258, 0
    %v8826 = vsel %vm2347, %v8259, 0
    %v8829 = vsel %vm2347, %v8260, 0
    %v8832 = vsel %vm2347, %v8261, 0
    %v8835 = vsel %vm2347, %v8262, 0
    %v8838 = vsel %vm2347, %v8263, 0
    %v8841 = vsel %vm2347, %v8264, 0
    %v8844 = vsel %vm2347, %v8265, 0
    %v8847 = vsel %vm2347, %v8266, 0
    %v8850 = vsel %vm2347, %v8267, 0
    %v8853 = vsel %vm2347, %v8268, 0
    %8855 = vmatpush.bf16.msra.mxu0 0
    %8856 = vmatpush.bf16.msra.mxu0 0
    %8857 = vmatpush.bf16.msra.mxu0 0
    %8858 = vmatpush.bf16.msra.mxu0 0
    %8859 = vmatpush.bf16.msra.mxu0 %v8754
    %8860 = vmatpush.bf16.msra.mxu0 %v8753
    %8861 = vmatpush.bf16.msra.mxu0 %v8752
    %8862 = vmatpush.bf16.msra.mxu0 %v8751
    %8863 = vmatmul.bf16.gmra.mxu0 %v8760
    %v8864 = vpop.f32.mrf.mxu0
    %v8865 = vadd.f32 0.0, %v8864
    %v8866 = vpop.f32.mrf.mxu0
    %v8867 = vadd.f32 0.0, %v8866
    %8868 = vmatmul.bf16.gmra.mxu0 %v8763
    %v8869 = vpop.f32.mrf.mxu0
    %v8870 = vadd.f32 0.0, %v8869
    %v8871 = vpop.f32.mrf.mxu0
    %v8872 = vadd.f32 0.0, %v8871
    %8873 = vmatmul.bf16.gmra.mxu0 %v8766
    %v8874 = vpop.f32.mrf.mxu0
    %v8875 = vadd.f32 0.0, %v8874
    %v8876 = vpop.f32.mrf.mxu0
    %v8877 = vadd.f32 0.0, %v8876
    %8878 = vmatmul.bf16.gmra.mxu0 %v8769
    %v8879 = vpop.f32.mrf.mxu0
    %v8880 = vadd.f32 0.0, %v8879
    %v8881 = vpop.f32.mrf.mxu0
    %v8882 = vadd.f32 0.0, %v8881
    %8883 = vmatmul.bf16.gmra.mxu0 %v8772
    %v8884 = vpop.f32.mrf.mxu0
    %v8885 = vadd.f32 0.0, %v8884
    %v8886 = vpop.f32.mrf.mxu0
    %v8887 = vadd.f32 0.0, %v8886
    %8888 = vmatmul.bf16.gmra.mxu0 %v8775
    %v8889 = vpop.f32.mrf.mxu0
    %v8890 = vadd.f32 0.0, %v8889
    %v8891 = vpop.f32.mrf.mxu0
    %v8892 = vadd.f32 0.0, %v8891
    %8893 = vmatmul.bf16.gmra.mxu0 %v8778
    %v8894 = vpop.f32.mrf.mxu0
    %v8895 = vadd.f32 0.0, %v8894
    %v8896 = vpop.f32.mrf.mxu0
    %v8897 = vadd.f32 0.0, %v8896
    %8898 = vmatmul.bf16.gmra.mxu0 %v8781
    %v8899 = vpop.f32.mrf.mxu0
    %v8900 = vadd.f32 0.0, %v8899
    %v8901 = vpop.f32.mrf.mxu0
    %v8902 = vadd.f32 0.0, %v8901
    %8903 = vmatmul.bf16.gmra.mxu0 %v8784
    %v8904 = vpop.f32.mrf.mxu0
    %v8905 = vadd.f32 0.0, %v8904
    %v8906 = vpop.f32.mrf.mxu0
    %v8907 = vadd.f32 0.0, %v8906
    %8908 = vmatmul.bf16.gmra.mxu0 %v8787
    %v8909 = vpop.f32.mrf.mxu0
    %v8910 = vadd.f32 0.0, %v8909
    %v8911 = vpop.f32.mrf.mxu0
    %v8912 = vadd.f32 0.0, %v8911
    %8913 = vmatmul.bf16.gmra.mxu0 %v8790
    %v8914 = vpop.f32.mrf.mxu0
    %v8915 = vadd.f32 0.0, %v8914
    %v8916 = vpop.f32.mrf.mxu0
    %v8917 = vadd.f32 0.0, %v8916
    %8918 = vmatmul.bf16.gmra.mxu0 %v8793
    %v8919 = vpop.f32.mrf.mxu0
    %v8920 = vadd.f32 0.0, %v8919
    %v8921 = vpop.f32.mrf.mxu0
    %v8922 = vadd.f32 0.0, %v8921
    %8923 = vmatmul.bf16.gmra.mxu0 %v8796
    %v8924 = vpop.f32.mrf.mxu0
    %v8925 = vadd.f32 0.0, %v8924
    %v8926 = vpop.f32.mrf.mxu0
    %v8927 = vadd.f32 0.0, %v8926
    %8928 = vmatmul.bf16.gmra.mxu0 %v8799
    %v8929 = vpop.f32.mrf.mxu0
    %v8930 = vadd.f32 0.0, %v8929
    %v8931 = vpop.f32.mrf.mxu0
    %v8932 = vadd.f32 0.0, %v8931
    %8933 = vmatmul.bf16.gmra.mxu0 %v8802
    %v8934 = vpop.f32.mrf.mxu0
    %v8935 = vadd.f32 0.0, %v8934
    %v8936 = vpop.f32.mrf.mxu0
    %v8937 = vadd.f32 0.0, %v8936
    %8938 = vmatmul.bf16.gmra.mxu0 %v8805
    %v8939 = vpop.f32.mrf.mxu0
    %v8940 = vadd.f32 0.0, %v8939
    %v8941 = vpop.f32.mrf.mxu0
    %v8942 = vadd.f32 0.0, %v8941
    %8943 = vmatmul.bf16.gmra.mxu0 %v8808
    %v8944 = vpop.f32.mrf.mxu0
    %v8945 = vadd.f32 0.0, %v8944
    %v8946 = vpop.f32.mrf.mxu0
    %v8947 = vadd.f32 0.0, %v8946
    %8948 = vmatmul.bf16.gmra.mxu0 %v8811
    %v8949 = vpop.f32.mrf.mxu0
    %v8950 = vadd.f32 0.0, %v8949
    %v8951 = vpop.f32.mrf.mxu0
    %v8952 = vadd.f32 0.0, %v8951
    %8953 = vmatmul.bf16.gmra.mxu0 %v8814
    %v8954 = vpop.f32.mrf.mxu0
    %v8955 = vadd.f32 0.0, %v8954
    %v8956 = vpop.f32.mrf.mxu0
    %v8957 = vadd.f32 0.0, %v8956
    %8958 = vmatmul.bf16.gmra.mxu0 %v8817
    %v8959 = vpop.f32.mrf.mxu0
    %v8960 = vadd.f32 0.0, %v8959
    %v8961 = vpop.f32.mrf.mxu0
    %v8962 = vadd.f32 0.0, %v8961
    %8963 = vmatmul.bf16.gmra.mxu0 %v8820
    %v8964 = vpop.f32.mrf.mxu0
    %v8965 = vadd.f32 0.0, %v8964
    %v8966 = vpop.f32.mrf.mxu0
    %v8967 = vadd.f32 0.0, %v8966
    %8968 = vmatmul.bf16.gmra.mxu0 %v8823
    %v8969 = vpop.f32.mrf.mxu0
    %v8970 = vadd.f32 0.0, %v8969
    %v8971 = vpop.f32.mrf.mxu0
    %v8972 = vadd.f32 0.0, %v8971
    %8973 = vmatmul.bf16.gmra.mxu0 %v8826
    %v8974 = vpop.f32.mrf.mxu0
    %v8975 = vadd.f32 0.0, %v8974
    %v8976 = vpop.f32.mrf.mxu0
    %v8977 = vadd.f32 0.0, %v8976
    %8978 = vmatmul.bf16.gmra.mxu0 %v8829
    %v8979 = vpop.f32.mrf.mxu0
    %v8980 = vadd.f32 0.0, %v8979
    %v8981 = vpop.f32.mrf.mxu0
    %v8982 = vadd.f32 0.0, %v8981
    %8983 = vmatmul.bf16.gmra.mxu0 %v8832
    %v8984 = vpop.f32.mrf.mxu0
    %v8985 = vadd.f32 0.0, %v8984
    %v8986 = vpop.f32.mrf.mxu0
    %v8987 = vadd.f32 0.0, %v8986
    %8988 = vmatmul.bf16.gmra.mxu0 %v8835
    %v8989 = vpop.f32.mrf.mxu0
    %v8990 = vadd.f32 0.0, %v8989
    %v8991 = vpop.f32.mrf.mxu0
    %v8992 = vadd.f32 0.0, %v8991
    %8993 = vmatmul.bf16.gmra.mxu0 %v8838
    %v8994 = vpop.f32.mrf.mxu0
    %v8995 = vadd.f32 0.0, %v8994
    %v8996 = vpop.f32.mrf.mxu0
    %v8997 = vadd.f32 0.0, %v8996
    %8998 = vmatmul.bf16.gmra.mxu0 %v8841
    %v8999 = vpop.f32.mrf.mxu0
    %v9000 = vadd.f32 0.0, %v8999
    %v9001 = vpop.f32.mrf.mxu0
    %v9002 = vadd.f32 0.0, %v9001
    %9003 = vmatmul.bf16.gmra.mxu0 %v8844
    %v9004 = vpop.f32.mrf.mxu0
    %v9005 = vadd.f32 0.0, %v9004
    %v9006 = vpop.f32.mrf.mxu0
    %v9007 = vadd.f32 0.0, %v9006
    %9008 = vmatmul.bf16.gmra.mxu0 %v8847
    %v9009 = vpop.f32.mrf.mxu0
    %v9010 = vadd.f32 0.0, %v9009
    %v9011 = vpop.f32.mrf.mxu0
    %v9012 = vadd.f32 0.0, %v9011
    %9013 = vmatmul.bf16.gmra.mxu0 %v8850
    %v9014 = vpop.f32.mrf.mxu0
    %v9015 = vadd.f32 0.0, %v9014
    %v9016 = vpop.f32.mrf.mxu0
    %v9017 = vadd.f32 0.0, %v9016
    %9018 = vmatmul.bf16.gmra.mxu0 %v8853
    %v9019 = vpop.f32.mrf.mxu0
    %v9020 = vadd.f32 0.0, %v9019
    %v9021 = vpop.f32.mrf.mxu0
    %v9022 = vadd.f32 0.0, %v9021
    %9023 = vdwg.mxu0
    %v9032 = vunpack.c.l.b16 %v8718
    %v9033 = vunpack.c.l.b16 %v8719
    %v9034 = vunpack.c.l.b16 %v8720
    %v9035 = vunpack.c.l.b16 %v8721
    %v9036 = vunpack.c.l.b16 %v8722
    %v9037 = vunpack.c.l.b16 %v8723
    %v9038 = vunpack.c.l.b16 %v8724
    %v9039 = vunpack.c.l.b16 %v8725
    %v9040 = vpack.c.b16 %v9033, %v9032
    %v9041 = vpack.c.b16 %v9035, %v9034
    %v9042 = vpack.c.b16 %v9037, %v9036
    %v9043 = vpack.c.b16 %v9039, %v9038
    %v9049 = vsel %vm2347, %v8461, 0
    %v9052 = vsel %vm2347, %v8462, 0
    %v9055 = vsel %vm2347, %v8463, 0
    %v9058 = vsel %vm2347, %v8464, 0
    %v9061 = vsel %vm2347, %v8465, 0
    %v9064 = vsel %vm2347, %v8466, 0
    %v9067 = vsel %vm2347, %v8467, 0
    %v9070 = vsel %vm2347, %v8468, 0
    %v9073 = vsel %vm2347, %v8469, 0
    %v9076 = vsel %vm2347, %v8470, 0
    %v9079 = vsel %vm2347, %v8471, 0
    %v9082 = vsel %vm2347, %v8472, 0
    %v9085 = vsel %vm2347, %v8473, 0
    %v9088 = vsel %vm2347, %v8474, 0
    %v9091 = vsel %vm2347, %v8475, 0
    %v9094 = vsel %vm2347, %v8476, 0
    %v9097 = vsel %vm2347, %v8477, 0
    %v9100 = vsel %vm2347, %v8478, 0
    %v9103 = vsel %vm2347, %v8479, 0
    %v9106 = vsel %vm2347, %v8480, 0
    %v9109 = vsel %vm2347, %v8481, 0
    %v9112 = vsel %vm2347, %v8482, 0
    %v9115 = vsel %vm2347, %v8483, 0
    %v9118 = vsel %vm2347, %v8484, 0
    %v9121 = vsel %vm2347, %v8485, 0
    %v9124 = vsel %vm2347, %v8486, 0
    %v9127 = vsel %vm2347, %v8487, 0
    %v9130 = vsel %vm2347, %v8488, 0
    %v9133 = vsel %vm2347, %v8489, 0
    %v9136 = vsel %vm2347, %v8490, 0
    %v9139 = vsel %vm2347, %v8491, 0
    %v9142 = vsel %vm2347, %v8492, 0
    %9144 = vmatpush.bf16.msra.mxu0 0
    %9145 = vmatpush.bf16.msra.mxu0 0
    %9146 = vmatpush.bf16.msra.mxu0 0
    %9147 = vmatpush.bf16.msra.mxu0 0
    %9148 = vmatpush.bf16.msra.mxu0 %v9043
    %9149 = vmatpush.bf16.msra.mxu0 %v9042
    %9150 = vmatpush.bf16.msra.mxu0 %v9041
    %9151 = vmatpush.bf16.msra.mxu0 %v9040
    %9152 = vmatmul.bf16.gmra.mxu0 %v9049
    %v9153 = vpop.f32.mrf.mxu0
    %v9154 = vadd.f32 %v8865, %v9153
    %v9155 = vpop.f32.mrf.mxu0
    %v9156 = vadd.f32 %v8867, %v9155
    %9157 = vmatmul.bf16.gmra.mxu0 %v9052
    %v9158 = vpop.f32.mrf.mxu0
    %v9159 = vadd.f32 %v8870, %v9158
    %v9160 = vpop.f32.mrf.mxu0
    %v9161 = vadd.f32 %v8872, %v9160
    %9162 = vmatmul.bf16.gmra.mxu0 %v9055
    %v9163 = vpop.f32.mrf.mxu0
    %v9164 = vadd.f32 %v8875, %v9163
    %v9165 = vpop.f32.mrf.mxu0
    %v9166 = vadd.f32 %v8877, %v9165
    %9167 = vmatmul.bf16.gmra.mxu0 %v9058
    %v9168 = vpop.f32.mrf.mxu0
    %v9169 = vadd.f32 %v8880, %v9168
    %v9170 = vpop.f32.mrf.mxu0
    %v9171 = vadd.f32 %v8882, %v9170
    %9172 = vmatmul.bf16.gmra.mxu0 %v9061
    %v9173 = vpop.f32.mrf.mxu0
    %v9174 = vadd.f32 %v8885, %v9173
    %v9175 = vpop.f32.mrf.mxu0
    %v9176 = vadd.f32 %v8887, %v9175
    %9177 = vmatmul.bf16.gmra.mxu0 %v9064
    %v9178 = vpop.f32.mrf.mxu0
    %v9179 = vadd.f32 %v8890, %v9178
    %v9180 = vpop.f32.mrf.mxu0
    %v9181 = vadd.f32 %v8892, %v9180
    %9182 = vmatmul.bf16.gmra.mxu0 %v9067
    %v9183 = vpop.f32.mrf.mxu0
    %v9184 = vadd.f32 %v8895, %v9183
    %v9185 = vpop.f32.mrf.mxu0
    %v9186 = vadd.f32 %v8897, %v9185
    %9187 = vmatmul.bf16.gmra.mxu0 %v9070
    %v9188 = vpop.f32.mrf.mxu0
    %v9189 = vadd.f32 %v8900, %v9188
    %v9190 = vpop.f32.mrf.mxu0
    %v9191 = vadd.f32 %v8902, %v9190
    %9192 = vmatmul.bf16.gmra.mxu0 %v9073
    %v9193 = vpop.f32.mrf.mxu0
    %v9194 = vadd.f32 %v8905, %v9193
    %v9195 = vpop.f32.mrf.mxu0
    %v9196 = vadd.f32 %v8907, %v9195
    %9197 = vmatmul.bf16.gmra.mxu0 %v9076
    %v9198 = vpop.f32.mrf.mxu0
    %v9199 = vadd.f32 %v8910, %v9198
    %v9200 = vpop.f32.mrf.mxu0
    %v9201 = vadd.f32 %v8912, %v9200
    %9202 = vmatmul.bf16.gmra.mxu0 %v9079
    %v9203 = vpop.f32.mrf.mxu0
    %v9204 = vadd.f32 %v8915, %v9203
    %v9205 = vpop.f32.mrf.mxu0
    %v9206 = vadd.f32 %v8917, %v9205
    %9207 = vmatmul.bf16.gmra.mxu0 %v9082
    %v9208 = vpop.f32.mrf.mxu0
    %v9209 = vadd.f32 %v8920, %v9208
    %v9210 = vpop.f32.mrf.mxu0
    %v9211 = vadd.f32 %v8922, %v9210
    %9212 = vmatmul.bf16.gmra.mxu0 %v9085
    %v9213 = vpop.f32.mrf.mxu0
    %v9214 = vadd.f32 %v8925, %v9213
    %v9215 = vpop.f32.mrf.mxu0
    %v9216 = vadd.f32 %v8927, %v9215
    %9217 = vmatmul.bf16.gmra.mxu0 %v9088
    %v9218 = vpop.f32.mrf.mxu0
    %v9219 = vadd.f32 %v8930, %v9218
    %v9220 = vpop.f32.mrf.mxu0
    %v9221 = vadd.f32 %v8932, %v9220
    %9222 = vmatmul.bf16.gmra.mxu0 %v9091
    %v9223 = vpop.f32.mrf.mxu0
    %v9224 = vadd.f32 %v8935, %v9223
    %v9225 = vpop.f32.mrf.mxu0
    %v9226 = vadd.f32 %v8937, %v9225
    %9227 = vmatmul.bf16.gmra.mxu0 %v9094
    %v9228 = vpop.f32.mrf.mxu0
    %v9229 = vadd.f32 %v8940, %v9228
    %v9230 = vpop.f32.mrf.mxu0
    %v9231 = vadd.f32 %v8942, %v9230
    %9232 = vmatmul.bf16.gmra.mxu0 %v9097
    %v9233 = vpop.f32.mrf.mxu0
    %v9234 = vadd.f32 %v8945, %v9233
    %v9235 = vpop.f32.mrf.mxu0
    %v9236 = vadd.f32 %v8947, %v9235
    %9237 = vmatmul.bf16.gmra.mxu0 %v9100
    %v9238 = vpop.f32.mrf.mxu0
    %v9239 = vadd.f32 %v8950, %v9238
    %v9240 = vpop.f32.mrf.mxu0
    %v9241 = vadd.f32 %v8952, %v9240
    %9242 = vmatmul.bf16.gmra.mxu0 %v9103
    %v9243 = vpop.f32.mrf.mxu0
    %v9244 = vadd.f32 %v8955, %v9243
    %v9245 = vpop.f32.mrf.mxu0
    %v9246 = vadd.f32 %v8957, %v9245
    %9247 = vmatmul.bf16.gmra.mxu0 %v9106
    %v9248 = vpop.f32.mrf.mxu0
    %v9249 = vadd.f32 %v8960, %v9248
    %v9250 = vpop.f32.mrf.mxu0
    %v9251 = vadd.f32 %v8962, %v9250
    %9252 = vmatmul.bf16.gmra.mxu0 %v9109
    %v9253 = vpop.f32.mrf.mxu0
    %v9254 = vadd.f32 %v8965, %v9253
    %v9255 = vpop.f32.mrf.mxu0
    %v9256 = vadd.f32 %v8967, %v9255
    %9257 = vmatmul.bf16.gmra.mxu0 %v9112
    %v9258 = vpop.f32.mrf.mxu0
    %v9259 = vadd.f32 %v8970, %v9258
    %v9260 = vpop.f32.mrf.mxu0
    %v9261 = vadd.f32 %v8972, %v9260
    %9262 = vmatmul.bf16.gmra.mxu0 %v9115
    %v9263 = vpop.f32.mrf.mxu0
    %v9264 = vadd.f32 %v8975, %v9263
    %v9265 = vpop.f32.mrf.mxu0
    %v9266 = vadd.f32 %v8977, %v9265
    %9267 = vmatmul.bf16.gmra.mxu0 %v9118
    %v9268 = vpop.f32.mrf.mxu0
    %v9269 = vadd.f32 %v8980, %v9268
    %v9270 = vpop.f32.mrf.mxu0
    %v9271 = vadd.f32 %v8982, %v9270
    %9272 = vmatmul.bf16.gmra.mxu0 %v9121
    %v9273 = vpop.f32.mrf.mxu0
    %v9274 = vadd.f32 %v8985, %v9273
    %v9275 = vpop.f32.mrf.mxu0
    %v9276 = vadd.f32 %v8987, %v9275
    %9277 = vmatmul.bf16.gmra.mxu0 %v9124
    %v9278 = vpop.f32.mrf.mxu0
    %v9279 = vadd.f32 %v8990, %v9278
    %v9280 = vpop.f32.mrf.mxu0
    %v9281 = vadd.f32 %v8992, %v9280
    %9282 = vmatmul.bf16.gmra.mxu0 %v9127
    %v9283 = vpop.f32.mrf.mxu0
    %v9284 = vadd.f32 %v8995, %v9283
    %v9285 = vpop.f32.mrf.mxu0
    %v9286 = vadd.f32 %v8997, %v9285
    %9287 = vmatmul.bf16.gmra.mxu0 %v9130
    %v9288 = vpop.f32.mrf.mxu0
    %v9289 = vadd.f32 %v9000, %v9288
    %v9290 = vpop.f32.mrf.mxu0
    %v9291 = vadd.f32 %v9002, %v9290
    %9292 = vmatmul.bf16.gmra.mxu0 %v9133
    %v9293 = vpop.f32.mrf.mxu0
    %v9294 = vadd.f32 %v9005, %v9293
    %v9295 = vpop.f32.mrf.mxu0
    %v9296 = vadd.f32 %v9007, %v9295
    %9297 = vmatmul.bf16.gmra.mxu0 %v9136
    %v9298 = vpop.f32.mrf.mxu0
    %v9299 = vadd.f32 %v9010, %v9298
    %v9300 = vpop.f32.mrf.mxu0
    %v9301 = vadd.f32 %v9012, %v9300
    %9302 = vmatmul.bf16.gmra.mxu0 %v9139
    %v9303 = vpop.f32.mrf.mxu0
    %v9304 = vadd.f32 %v9015, %v9303
    %v9305 = vpop.f32.mrf.mxu0
    %v9306 = vadd.f32 %v9017, %v9305
    %9307 = vmatmul.bf16.gmra.mxu0 %v9142
    %v9308 = vpop.f32.mrf.mxu0
    %v9309 = vadd.f32 %v9020, %v9308
    %v9310 = vpop.f32.mrf.mxu0
    %v9311 = vadd.f32 %v9022, %v9310
    %9312 = vdwg.mxu0
    %s9313 = scalar_lea.vmem [#allocation2], 448
    %v9314 = vld [vmem:[%s9313] sm:$0xf]
    %v9315 = vld [vmem:[%s9313 + $0x4] sm:$0xf]
    %v9316 = vld [vmem:[%s9313 + $0x8] sm:$0xf]
    %v9317 = vld [vmem:[%s9313 + $0xc] sm:$0xf]
    %v9318 = vld [vmem:[%s9313 + $0x10] sm:$0xf]
    %v9319 = vld [vmem:[%s9313 + $0x14] sm:$0xf]
    %v9320 = vld [vmem:[%s9313 + $0x18] sm:$0xf]
    %v9321 = vld [vmem:[%s9313 + $0x1c] sm:$0xf]
    %v9330 = vunpack.c.l.b16 %v9314
    %v9331 = vunpack.c.l.b16 %v9315
    %v9332 = vunpack.c.l.b16 %v9316
    %v9333 = vunpack.c.l.b16 %v9317
    %v9334 = vunpack.c.l.b16 %v9318
    %v9335 = vunpack.c.l.b16 %v9319
    %v9336 = vunpack.c.l.b16 %v9320
    %v9337 = vunpack.c.l.b16 %v9321
    %v9338 = vpack.c.b16 %v9331, %v9330
    %v9339 = vpack.c.b16 %v9333, %v9332
    %v9340 = vpack.c.b16 %v9335, %v9334
    %v9341 = vpack.c.b16 %v9337, %v9336
    %v9347 = vsel %vm2347, %v8685, 0
    %v9350 = vsel %vm2347, %v8686, 0
    %v9353 = vsel %vm2347, %v8687, 0
    %v9356 = vsel %vm2347, %v8688, 0
    %v9359 = vsel %vm2347, %v8689, 0
    %v9362 = vsel %vm2347, %v8690, 0
    %v9365 = vsel %vm2347, %v8691, 0
    %v9368 = vsel %vm2347, %v8692, 0
    %v9371 = vsel %vm2347, %v8693, 0
    %v9374 = vsel %vm2347, %v8694, 0
    %v9377 = vsel %vm2347, %v8695, 0
    %v9380 = vsel %vm2347, %v8696, 0
    %v9383 = vsel %vm2347, %v8697, 0
    %v9386 = vsel %vm2347, %v8698, 0
    %v9389 = vsel %vm2347, %v8699, 0
    %v9392 = vsel %vm2347, %v8700, 0
    %v9395 = vsel %vm2347, %v8701, 0
    %v9398 = vsel %vm2347, %v8702, 0
    %v9401 = vsel %vm2347, %v8703, 0
    %v9404 = vsel %vm2347, %v8704, 0
    %v9407 = vsel %vm2347, %v8705, 0
    %v9410 = vsel %vm2347, %v8706, 0
    %v9413 = vsel %vm2347, %v8707, 0
    %v9416 = vsel %vm2347, %v8708, 0
    %v9419 = vsel %vm2347, %v8709, 0
    %v9422 = vsel %vm2347, %v8710, 0
    %v9425 = vsel %vm2347, %v8711, 0
    %v9428 = vsel %vm2347, %v8712, 0
    %v9431 = vsel %vm2347, %v8713, 0
    %v9434 = vsel %vm2347, %v8714, 0
    %v9437 = vsel %vm2347, %v8715, 0
    %v9440 = vsel %vm2347, %v8716, 0
    %9442 = vmatpush.bf16.msra.mxu0 0
    %9443 = vmatpush.bf16.msra.mxu0 0
    %9444 = vmatpush.bf16.msra.mxu0 0
    %9445 = vmatpush.bf16.msra.mxu0 0
    %9446 = vmatpush.bf16.msra.mxu0 %v9341
    %9447 = vmatpush.bf16.msra.mxu0 %v9340
    %9448 = vmatpush.bf16.msra.mxu0 %v9339
    %9449 = vmatpush.bf16.msra.mxu0 %v9338
    %9450 = vmatmul.bf16.gmra.mxu0 %v9347
    %v9451 = vpop.f32.mrf.mxu0
    %v9452 = vadd.f32 0.0, %v9451
    %v9453 = vpop.f32.mrf.mxu0
    %v9454 = vadd.f32 0.0, %v9453
    %9455 = vmatmul.bf16.gmra.mxu0 %v9350
    %v9456 = vpop.f32.mrf.mxu0
    %v9457 = vadd.f32 0.0, %v9456
    %v9458 = vpop.f32.mrf.mxu0
    %v9459 = vadd.f32 0.0, %v9458
    %9460 = vmatmul.bf16.gmra.mxu0 %v9353
    %v9461 = vpop.f32.mrf.mxu0
    %v9462 = vadd.f32 0.0, %v9461
    %v9463 = vpop.f32.mrf.mxu0
    %v9464 = vadd.f32 0.0, %v9463
    %9465 = vmatmul.bf16.gmra.mxu0 %v9356
    %v9466 = vpop.f32.mrf.mxu0
    %v9467 = vadd.f32 0.0, %v9466
    %v9468 = vpop.f32.mrf.mxu0
    %v9469 = vadd.f32 0.0, %v9468
    %9470 = vmatmul.bf16.gmra.mxu0 %v9359
    %v9471 = vpop.f32.mrf.mxu0
    %v9472 = vadd.f32 0.0, %v9471
    %v9473 = vpop.f32.mrf.mxu0
    %v9474 = vadd.f32 0.0, %v9473
    %9475 = vmatmul.bf16.gmra.mxu0 %v9362
    %v9476 = vpop.f32.mrf.mxu0
    %v9477 = vadd.f32 0.0, %v9476
    %v9478 = vpop.f32.mrf.mxu0
    %v9479 = vadd.f32 0.0, %v9478
    %9480 = vmatmul.bf16.gmra.mxu0 %v9365
    %v9481 = vpop.f32.mrf.mxu0
    %v9482 = vadd.f32 0.0, %v9481
    %v9483 = vpop.f32.mrf.mxu0
    %v9484 = vadd.f32 0.0, %v9483
    %9485 = vmatmul.bf16.gmra.mxu0 %v9368
    %v9486 = vpop.f32.mrf.mxu0
    %v9487 = vadd.f32 0.0, %v9486
    %v9488 = vpop.f32.mrf.mxu0
    %v9489 = vadd.f32 0.0, %v9488
    %9490 = vmatmul.bf16.gmra.mxu0 %v9371
    %v9491 = vpop.f32.mrf.mxu0
    %v9492 = vadd.f32 0.0, %v9491
    %v9493 = vpop.f32.mrf.mxu0
    %v9494 = vadd.f32 0.0, %v9493
    %9495 = vmatmul.bf16.gmra.mxu0 %v9374
    %v9496 = vpop.f32.mrf.mxu0
    %v9497 = vadd.f32 0.0, %v9496
    %v9498 = vpop.f32.mrf.mxu0
    %v9499 = vadd.f32 0.0, %v9498
    %9500 = vmatmul.bf16.gmra.mxu0 %v9377
    %v9501 = vpop.f32.mrf.mxu0
    %v9502 = vadd.f32 0.0, %v9501
    %v9503 = vpop.f32.mrf.mxu0
    %v9504 = vadd.f32 0.0, %v9503
    %9505 = vmatmul.bf16.gmra.mxu0 %v9380
    %v9506 = vpop.f32.mrf.mxu0
    %v9507 = vadd.f32 0.0, %v9506
    %v9508 = vpop.f32.mrf.mxu0
    %v9509 = vadd.f32 0.0, %v9508
    %9510 = vmatmul.bf16.gmra.mxu0 %v9383
    %v9511 = vpop.f32.mrf.mxu0
    %v9512 = vadd.f32 0.0, %v9511
    %v9513 = vpop.f32.mrf.mxu0
    %v9514 = vadd.f32 0.0, %v9513
    %9515 = vmatmul.bf16.gmra.mxu0 %v9386
    %v9516 = vpop.f32.mrf.mxu0
    %v9517 = vadd.f32 0.0, %v9516
    %v9518 = vpop.f32.mrf.mxu0
    %v9519 = vadd.f32 0.0, %v9518
    %9520 = vmatmul.bf16.gmra.mxu0 %v9389
    %v9521 = vpop.f32.mrf.mxu0
    %v9522 = vadd.f32 0.0, %v9521
    %v9523 = vpop.f32.mrf.mxu0
    %v9524 = vadd.f32 0.0, %v9523
    %9525 = vmatmul.bf16.gmra.mxu0 %v9392
    %v9526 = vpop.f32.mrf.mxu0
    %v9527 = vadd.f32 0.0, %v9526
    %v9528 = vpop.f32.mrf.mxu0
    %v9529 = vadd.f32 0.0, %v9528
    %9530 = vmatmul.bf16.gmra.mxu0 %v9395
    %v9531 = vpop.f32.mrf.mxu0
    %v9532 = vadd.f32 0.0, %v9531
    %v9533 = vpop.f32.mrf.mxu0
    %v9534 = vadd.f32 0.0, %v9533
    %9535 = vmatmul.bf16.gmra.mxu0 %v9398
    %v9536 = vpop.f32.mrf.mxu0
    %v9537 = vadd.f32 0.0, %v9536
    %v9538 = vpop.f32.mrf.mxu0
    %v9539 = vadd.f32 0.0, %v9538
    %9540 = vmatmul.bf16.gmra.mxu0 %v9401
    %v9541 = vpop.f32.mrf.mxu0
    %v9542 = vadd.f32 0.0, %v9541
    %v9543 = vpop.f32.mrf.mxu0
    %v9544 = vadd.f32 0.0, %v9543
    %9545 = vmatmul.bf16.gmra.mxu0 %v9404
    %v9546 = vpop.f32.mrf.mxu0
    %v9547 = vadd.f32 0.0, %v9546
    %v9548 = vpop.f32.mrf.mxu0
    %v9549 = vadd.f32 0.0, %v9548
    %9550 = vmatmul.bf16.gmra.mxu0 %v9407
    %v9551 = vpop.f32.mrf.mxu0
    %v9552 = vadd.f32 0.0, %v9551
    %v9553 = vpop.f32.mrf.mxu0
    %v9554 = vadd.f32 0.0, %v9553
    %9555 = vmatmul.bf16.gmra.mxu0 %v9410
    %v9556 = vpop.f32.mrf.mxu0
    %v9557 = vadd.f32 0.0, %v9556
    %v9558 = vpop.f32.mrf.mxu0
    %v9559 = vadd.f32 0.0, %v9558
    %9560 = vmatmul.bf16.gmra.mxu0 %v9413
    %v9561 = vpop.f32.mrf.mxu0
    %v9562 = vadd.f32 0.0, %v9561
    %v9563 = vpop.f32.mrf.mxu0
    %v9564 = vadd.f32 0.0, %v9563
    %9565 = vmatmul.bf16.gmra.mxu0 %v9416
    %v9566 = vpop.f32.mrf.mxu0
    %v9567 = vadd.f32 0.0, %v9566
    %v9568 = vpop.f32.mrf.mxu0
    %v9569 = vadd.f32 0.0, %v9568
    %9570 = vmatmul.bf16.gmra.mxu0 %v9419
    %v9571 = vpop.f32.mrf.mxu0
    %v9572 = vadd.f32 0.0, %v9571
    %v9573 = vpop.f32.mrf.mxu0
    %v9574 = vadd.f32 0.0, %v9573
    %9575 = vmatmul.bf16.gmra.mxu0 %v9422
    %v9576 = vpop.f32.mrf.mxu0
    %v9577 = vadd.f32 0.0, %v9576
    %v9578 = vpop.f32.mrf.mxu0
    %v9579 = vadd.f32 0.0, %v9578
    %9580 = vmatmul.bf16.gmra.mxu0 %v9425
    %v9581 = vpop.f32.mrf.mxu0
    %v9582 = vadd.f32 0.0, %v9581
    %v9583 = vpop.f32.mrf.mxu0
    %v9584 = vadd.f32 0.0, %v9583
    %9585 = vmatmul.bf16.gmra.mxu0 %v9428
    %v9586 = vpop.f32.mrf.mxu0
    %v9587 = vadd.f32 0.0, %v9586
    %v9588 = vpop.f32.mrf.mxu0
    %v9589 = vadd.f32 0.0, %v9588
    %9590 = vmatmul.bf16.gmra.mxu0 %v9431
    %v9591 = vpop.f32.mrf.mxu0
    %v9592 = vadd.f32 0.0, %v9591
    %v9593 = vpop.f32.mrf.mxu0
    %v9594 = vadd.f32 0.0, %v9593
    %9595 = vmatmul.bf16.gmra.mxu0 %v9434
    %v9596 = vpop.f32.mrf.mxu0
    %v9597 = vadd.f32 0.0, %v9596
    %v9598 = vpop.f32.mrf.mxu0
    %v9599 = vadd.f32 0.0, %v9598
    %9600 = vmatmul.bf16.gmra.mxu0 %v9437
    %v9601 = vpop.f32.mrf.mxu0
    %v9602 = vadd.f32 0.0, %v9601
    %v9603 = vpop.f32.mrf.mxu0
    %v9604 = vadd.f32 0.0, %v9603
    %9605 = vmatmul.bf16.gmra.mxu0 %v9440
    %v9606 = vpop.f32.mrf.mxu0
    %v9607 = vadd.f32 0.0, %v9606
    %v9608 = vpop.f32.mrf.mxu0
    %v9609 = vadd.f32 0.0, %v9608
    %9610 = vdwg.mxu0
    %v9611 = vadd.f32 %v9154, %v9452
    %v9612 = vadd.f32 %v9156, %v9454
    %v9613 = vadd.f32 %v9159, %v9457
    %v9614 = vadd.f32 %v9161, %v9459
    %v9615 = vadd.f32 %v9164, %v9462
    %v9616 = vadd.f32 %v9166, %v9464
    %v9617 = vadd.f32 %v9169, %v9467
    %v9618 = vadd.f32 %v9171, %v9469
    %v9619 = vadd.f32 %v9174, %v9472
    %v9620 = vadd.f32 %v9176, %v9474
    %v9621 = vadd.f32 %v9179, %v9477
    %v9622 = vadd.f32 %v9181, %v9479
    %v9623 = vadd.f32 %v9184, %v9482
    %v9624 = vadd.f32 %v9186, %v9484
    %v9625 = vadd.f32 %v9189, %v9487
    %v9626 = vadd.f32 %v9191, %v9489
    %v9627 = vadd.f32 %v9194, %v9492
    %v9628 = vadd.f32 %v9196, %v9494
    %v9629 = vadd.f32 %v9199, %v9497
    %v9630 = vadd.f32 %v9201, %v9499
    %v9631 = vadd.f32 %v9204, %v9502
    %v9632 = vadd.f32 %v9206, %v9504
    %v9633 = vadd.f32 %v9209, %v9507
    %v9634 = vadd.f32 %v9211, %v9509
    %v9635 = vadd.f32 %v9214, %v9512
    %v9636 = vadd.f32 %v9216, %v9514
    %v9637 = vadd.f32 %v9219, %v9517
    %v9638 = vadd.f32 %v9221, %v9519
    %v9639 = vadd.f32 %v9224, %v9522
    %v9640 = vadd.f32 %v9226, %v9524
    %v9641 = vadd.f32 %v9229, %v9527
    %v9642 = vadd.f32 %v9231, %v9529
    %v9643 = vadd.f32 %v9234, %v9532
    %v9644 = vadd.f32 %v9236, %v9534
    %v9645 = vadd.f32 %v9239, %v9537
    %v9646 = vadd.f32 %v9241, %v9539
    %v9647 = vadd.f32 %v9244, %v9542
    %v9648 = vadd.f32 %v9246, %v9544
    %v9649 = vadd.f32 %v9249, %v9547
    %v9650 = vadd.f32 %v9251, %v9549
    %v9651 = vadd.f32 %v9254, %v9552
    %v9652 = vadd.f32 %v9256, %v9554
    %v9653 = vadd.f32 %v9259, %v9557
    %v9654 = vadd.f32 %v9261, %v9559
    %v9655 = vadd.f32 %v9264, %v9562
    %v9656 = vadd.f32 %v9266, %v9564
    %v9657 = vadd.f32 %v9269, %v9567
    %v9658 = vadd.f32 %v9271, %v9569
    %v9659 = vadd.f32 %v9274, %v9572
    %v9660 = vadd.f32 %v9276, %v9574
    %v9661 = vadd.f32 %v9279, %v9577
    %v9662 = vadd.f32 %v9281, %v9579
    %v9663 = vadd.f32 %v9284, %v9582
    %v9664 = vadd.f32 %v9286, %v9584
    %v9665 = vadd.f32 %v9289, %v9587
    %v9666 = vadd.f32 %v9291, %v9589
    %v9667 = vadd.f32 %v9294, %v9592
    %v9668 = vadd.f32 %v9296, %v9594
    %v9669 = vadd.f32 %v9299, %v9597
    %v9670 = vadd.f32 %v9301, %v9599
    %v9671 = vadd.f32 %v9304, %v9602
    %v9672 = vadd.f32 %v9306, %v9604
    %v9673 = vadd.f32 %v9309, %v9607
    %v9674 = vadd.f32 %v9311, %v9609
    %s9675 = scalar_lea.vmem %s4, 4
    %v9676 = vld [vmem:[%s9675] sm:$0x1]
    %v9678 = vperm.slane %v9676, 0
    %v9680 = vadd.f32 %v9611, %v9678
    %v9681 = vadd.f32 %v9612, %v9678
    %v9682 = vadd.f32 %v9613, %v9678
    %v9683 = vadd.f32 %v9614, %v9678
    %v9684 = vadd.f32 %v9615, %v9678
    %v9685 = vadd.f32 %v9616, %v9678
    %v9686 = vadd.f32 %v9617, %v9678
    %v9687 = vadd.f32 %v9618, %v9678
    %v9688 = vadd.f32 %v9619, %v9678
    %v9689 = vadd.f32 %v9620, %v9678
    %v9690 = vadd.f32 %v9621, %v9678
    %v9691 = vadd.f32 %v9622, %v9678
    %v9692 = vadd.f32 %v9623, %v9678
    %v9693 = vadd.f32 %v9624, %v9678
    %v9694 = vadd.f32 %v9625, %v9678
    %v9695 = vadd.f32 %v9626, %v9678
    %v9696 = vadd.f32 %v9627, %v9678
    %v9697 = vadd.f32 %v9628, %v9678
    %v9698 = vadd.f32 %v9629, %v9678
    %v9699 = vadd.f32 %v9630, %v9678
    %v9700 = vadd.f32 %v9631, %v9678
    %v9701 = vadd.f32 %v9632, %v9678
    %v9702 = vadd.f32 %v9633, %v9678
    %v9703 = vadd.f32 %v9634, %v9678
    %v9704 = vadd.f32 %v9635, %v9678
    %v9705 = vadd.f32 %v9636, %v9678
    %v9706 = vadd.f32 %v9637, %v9678
    %v9707 = vadd.f32 %v9638, %v9678
    %v9708 = vadd.f32 %v9639, %v9678
    %v9709 = vadd.f32 %v9640, %v9678
    %v9710 = vadd.f32 %v9641, %v9678
    %v9711 = vadd.f32 %v9642, %v9678
    %v9712 = vadd.f32 %v9643, %v9678
    %v9713 = vadd.f32 %v9644, %v9678
    %v9714 = vadd.f32 %v9645, %v9678
    %v9715 = vadd.f32 %v9646, %v9678
    %v9716 = vadd.f32 %v9647, %v9678
    %v9717 = vadd.f32 %v9648, %v9678
    %v9718 = vadd.f32 %v9649, %v9678
    %v9719 = vadd.f32 %v9650, %v9678
    %v9720 = vadd.f32 %v9651, %v9678
    %v9721 = vadd.f32 %v9652, %v9678
    %v9722 = vadd.f32 %v9653, %v9678
    %v9723 = vadd.f32 %v9654, %v9678
    %v9724 = vadd.f32 %v9655, %v9678
    %v9725 = vadd.f32 %v9656, %v9678
    %v9726 = vadd.f32 %v9657, %v9678
    %v9727 = vadd.f32 %v9658, %v9678
    %v9728 = vadd.f32 %v9659, %v9678
    %v9729 = vadd.f32 %v9660, %v9678
    %v9730 = vadd.f32 %v9661, %v9678
    %v9731 = vadd.f32 %v9662, %v9678
    %v9732 = vadd.f32 %v9663, %v9678
    %v9733 = vadd.f32 %v9664, %v9678
    %v9734 = vadd.f32 %v9665, %v9678
    %v9735 = vadd.f32 %v9666, %v9678
    %v9736 = vadd.f32 %v9667, %v9678
    %v9737 = vadd.f32 %v9668, %v9678
    %v9738 = vadd.f32 %v9669, %v9678
    %v9739 = vadd.f32 %v9670, %v9678
    %v9740 = vadd.f32 %v9671, %v9678
    %v9741 = vadd.f32 %v9672, %v9678
    %v9742 = vadd.f32 %v9673, %v9678
    %v9743 = vadd.f32 %v9674, %v9678
    %v9744 = vmax.f32 %v9680, 0.0
    %v9745 = vmax.f32 %v9681, 0.0
    %v9746 = vmax.f32 %v9682, 0.0
    %v9747 = vmax.f32 %v9683, 0.0
    %v9748 = vmax.f32 %v9684, 0.0
    %v9749 = vmax.f32 %v9685, 0.0
    %v9750 = vmax.f32 %v9686, 0.0
    %v9751 = vmax.f32 %v9687, 0.0
    %v9752 = vmax.f32 %v9688, 0.0
    %v9753 = vmax.f32 %v9689, 0.0
    %v9754 = vmax.f32 %v9690, 0.0
    %v9755 = vmax.f32 %v9691, 0.0
    %v9756 = vmax.f32 %v9692, 0.0
    %v9757 = vmax.f32 %v9693, 0.0
    %v9758 = vmax.f32 %v9694, 0.0
    %v9759 = vmax.f32 %v9695, 0.0
    %v9760 = vmax.f32 %v9696, 0.0
    %v9761 = vmax.f32 %v9697, 0.0
    %v9762 = vmax.f32 %v9698, 0.0
    %v9763 = vmax.f32 %v9699, 0.0
    %v9764 = vmax.f32 %v9700, 0.0
    %v9765 = vmax.f32 %v9701, 0.0
    %v9766 = vmax.f32 %v9702, 0.0
    %v9767 = vmax.f32 %v9703, 0.0
    %v9768 = vmax.f32 %v9704, 0.0
    %v9769 = vmax.f32 %v9705, 0.0
    %v9770 = vmax.f32 %v9706, 0.0
    %v9771 = vmax.f32 %v9707, 0.0
    %v9772 = vmax.f32 %v9708, 0.0
    %v9773 = vmax.f32 %v9709, 0.0
    %v9774 = vmax.f32 %v9710, 0.0
    %v9775 = vmax.f32 %v9711, 0.0
    %v9776 = vmax.f32 %v9712, 0.0
    %v9777 = vmax.f32 %v9713, 0.0
    %v9778 = vmax.f32 %v9714, 0.0
    %v9779 = vmax.f32 %v9715, 0.0
    %v9780 = vmax.f32 %v9716, 0.0
    %v9781 = vmax.f32 %v9717, 0.0
    %v9782 = vmax.f32 %v9718, 0.0
    %v9783 = vmax.f32 %v9719, 0.0
    %v9784 = vmax.f32 %v9720, 0.0
    %v9785 = vmax.f32 %v9721, 0.0
    %v9786 = vmax.f32 %v9722, 0.0
    %v9787 = vmax.f32 %v9723, 0.0
    %v9788 = vmax.f32 %v9724, 0.0
    %v9789 = vmax.f32 %v9725, 0.0
    %v9790 = vmax.f32 %v9726, 0.0
    %v9791 = vmax.f32 %v9727, 0.0
    %v9792 = vmax.f32 %v9728, 0.0
    %v9793 = vmax.f32 %v9729, 0.0
    %v9794 = vmax.f32 %v9730, 0.0
    %v9795 = vmax.f32 %v9731, 0.0
    %v9796 = vmax.f32 %v9732, 0.0
    %v9797 = vmax.f32 %v9733, 0.0
    %v9798 = vmax.f32 %v9734, 0.0
    %v9799 = vmax.f32 %v9735, 0.0
    %v9800 = vmax.f32 %v9736, 0.0
    %v9801 = vmax.f32 %v9737, 0.0
    %v9802 = vmax.f32 %v9738, 0.0
    %v9803 = vmax.f32 %v9739, 0.0
    %v9804 = vmax.f32 %v9740, 0.0
    %v9805 = vmax.f32 %v9741, 0.0
    %v9806 = vmax.f32 %v9742, 0.0
    %v9807 = vmax.f32 %v9743, 0.0
    %v9808 = vpack.c.bf16 %v9745, %v9744
    %v9809 = vpack.c.bf16 %v9747, %v9746
    %v9810 = vpack.c.bf16 %v9749, %v9748
    %v9811 = vpack.c.bf16 %v9751, %v9750
    %v9812 = vpack.c.bf16 %v9753, %v9752
    %v9813 = vpack.c.bf16 %v9755, %v9754
    %v9814 = vpack.c.bf16 %v9757, %v9756
    %v9815 = vpack.c.bf16 %v9759, %v9758
    %v9816 = vpack.c.bf16 %v9761, %v9760
    %v9817 = vpack.c.bf16 %v9763, %v9762
    %v9818 = vpack.c.bf16 %v9765, %v9764
    %v9819 = vpack.c.bf16 %v9767, %v9766
    %v9820 = vpack.c.bf16 %v9769, %v9768
    %v9821 = vpack.c.bf16 %v9771, %v9770
    %v9822 = vpack.c.bf16 %v9773, %v9772
    %v9823 = vpack.c.bf16 %v9775, %v9774
    %v9824 = vpack.c.bf16 %v9777, %v9776
    %v9825 = vpack.c.bf16 %v9779, %v9778
    %v9826 = vpack.c.bf16 %v9781, %v9780
    %v9827 = vpack.c.bf16 %v9783, %v9782
    %v9828 = vpack.c.bf16 %v9785, %v9784
    %v9829 = vpack.c.bf16 %v9787, %v9786
    %v9830 = vpack.c.bf16 %v9789, %v9788
    %v9831 = vpack.c.bf16 %v9791, %v9790
    %v9832 = vpack.c.bf16 %v9793, %v9792
    %v9833 = vpack.c.bf16 %v9795, %v9794
    %v9834 = vpack.c.bf16 %v9797, %v9796
    %v9835 = vpack.c.bf16 %v9799, %v9798
    %v9836 = vpack.c.bf16 %v9801, %v9800
    %v9837 = vpack.c.bf16 %v9803, %v9802
    %v9838 = vpack.c.bf16 %v9805, %v9804
    %v9839 = vpack.c.bf16 %v9807, %v9806
    %v9840 = vrot.slane %v9744, 7
    %v9841 = vrot.slane %v9745, 7
    %v9842 = vrot.slane %v9746, 7
    %v9843 = vrot.slane %v9747, 7
    %v9844 = vrot.slane %v9748, 7
    %v9845 = vrot.slane %v9749, 7
    %v9846 = vrot.slane %v9750, 7
    %v9847 = vrot.slane %v9751, 7
    %v9848 = vrot.slane %v9752, 7
    %v9849 = vrot.slane %v9753, 7
    %v9850 = vrot.slane %v9754, 7
    %v9851 = vrot.slane %v9755, 7
    %v9852 = vrot.slane %v9756, 7
    %v9853 = vrot.slane %v9757, 7
    %v9854 = vrot.slane %v9758, 7
    %v9855 = vrot.slane %v9759, 7
    %v9856 = vrot.slane %v9760, 7
    %v9857 = vrot.slane %v9761, 7
    %v9858 = vrot.slane %v9762, 7
    %v9859 = vrot.slane %v9763, 7
    %v9860 = vrot.slane %v9764, 7
    %v9861 = vrot.slane %v9765, 7
    %v9862 = vrot.slane %v9766, 7
    %v9863 = vrot.slane %v9767, 7
    %v9864 = vrot.slane %v9768, 7
    %v9865 = vrot.slane %v9769, 7
    %v9866 = vrot.slane %v9770, 7
    %v9867 = vrot.slane %v9771, 7
    %v9868 = vrot.slane %v9772, 7
    %v9869 = vrot.slane %v9773, 7
    %v9870 = vrot.slane %v9774, 7
    %v9871 = vrot.slane %v9775, 7
    %v9872 = vrot.slane %v9776, 7
    %v9873 = vrot.slane %v9777, 7
    %v9874 = vrot.slane %v9778, 7
    %v9875 = vrot.slane %v9779, 7
    %v9876 = vrot.slane %v9780, 7
    %v9877 = vrot.slane %v9781, 7
    %v9878 = vrot.slane %v9782, 7
    %v9879 = vrot.slane %v9783, 7
    %v9880 = vrot.slane %v9784, 7
    %v9881 = vrot.slane %v9785, 7
    %v9882 = vrot.slane %v9786, 7
    %v9883 = vrot.slane %v9787, 7
    %v9884 = vrot.slane %v9788, 7
    %v9885 = vrot.slane %v9789, 7
    %v9886 = vrot.slane %v9790, 7
    %v9887 = vrot.slane %v9791, 7
    %v9888 = vrot.slane %v9792, 7
    %v9889 = vrot.slane %v9793, 7
    %v9890 = vrot.slane %v9794, 7
    %v9891 = vrot.slane %v9795, 7
    %v9892 = vrot.slane %v9796, 7
    %v9893 = vrot.slane %v9797, 7
    %v9894 = vrot.slane %v9798, 7
    %v9895 = vrot.slane %v9799, 7
    %v9896 = vrot.slane %v9800, 7
    %v9897 = vrot.slane %v9801, 7
    %v9898 = vrot.slane %v9802, 7
    %v9899 = vrot.slane %v9803, 7
    %v9900 = vrot.slane %v9804, 7
    %v9901 = vrot.slane %v9805, 7
    %v9902 = vrot.slane %v9806, 7
    %v9903 = vrot.slane %v9807, 7
    %v9904 = vsel %vm1664, %v9902, %v9903
    %v9905 = vsel %vm1664, %v9901, %v9902
    %v9906 = vsel %vm1664, %v9900, %v9901
    %v9907 = vsel %vm1664, %v9899, %v9900
    %v9908 = vsel %vm1664, %v9898, %v9899
    %v9909 = vsel %vm1664, %v9897, %v9898
    %v9910 = vsel %vm1664, %v9896, %v9897
    %v9911 = vsel %vm1664, %v9895, %v9896
    %v9912 = vsel %vm1664, %v9894, %v9895
    %v9913 = vsel %vm1664, %v9893, %v9894
    %v9914 = vsel %vm1664, %v9892, %v9893
    %v9915 = vsel %vm1664, %v9891, %v9892
    %v9916 = vsel %vm1664, %v9890, %v9891
    %v9917 = vsel %vm1664, %v9889, %v9890
    %v9918 = vsel %vm1664, %v9888, %v9889
    %v9919 = vsel %vm1664, %v9887, %v9888
    %v9920 = vsel %vm1664, %v9886, %v9887
    %v9921 = vsel %vm1664, %v9885, %v9886
    %v9922 = vsel %vm1664, %v9884, %v9885
    %v9923 = vsel %vm1664, %v9883, %v9884
    %v9924 = vsel %vm1664, %v9882, %v9883
    %v9925 = vsel %vm1664, %v9881, %v9882
    %v9926 = vsel %vm1664, %v9880, %v9881
    %v9927 = vsel %vm1664, %v9879, %v9880
    %v9928 = vsel %vm1664, %v9878, %v9879
    %v9929 = vsel %vm1664, %v9877, %v9878
    %v9930 = vsel %vm1664, %v9876, %v9877
    %v9931 = vsel %vm1664, %v9875, %v9876
    %v9932 = vsel %vm1664, %v9874, %v9875
    %v9933 = vsel %vm1664, %v9873, %v9874
    %v9934 = vsel %vm1664, %v9872, %v9873
    %v9935 = vsel %vm1664, %v9871, %v9872
    %v9936 = vsel %vm1664, %v9870, %v9871
    %v9937 = vsel %vm1664, %v9869, %v9870
    %v9938 = vsel %vm1664, %v9868, %v9869
    %v9939 = vsel %vm1664, %v9867, %v9868
    %v9940 = vsel %vm1664, %v9866, %v9867
    %v9941 = vsel %vm1664, %v9865, %v9866
    %v9942 = vsel %vm1664, %v9864, %v9865
    %v9943 = vsel %vm1664, %v9863, %v9864
    %v9944 = vsel %vm1664, %v9862, %v9863
    %v9945 = vsel %vm1664, %v9861, %v9862
    %v9946 = vsel %vm1664, %v9860, %v9861
    %v9947 = vsel %vm1664, %v9859, %v9860
    %v9948 = vsel %vm1664, %v9858, %v9859
    %v9949 = vsel %vm1664, %v9857, %v9858
    %v9950 = vsel %vm1664, %v9856, %v9857
    %v9951 = vsel %vm1664, %v9855, %v9856
    %v9952 = vsel %vm1664, %v9854, %v9855
    %v9953 = vsel %vm1664, %v9853, %v9854
    %v9954 = vsel %vm1664, %v9852, %v9853
    %v9955 = vsel %vm1664, %v9851, %v9852
    %v9956 = vsel %vm1664, %v9850, %v9851
    %v9957 = vsel %vm1664, %v9849, %v9850
    %v9958 = vsel %vm1664, %v9848, %v9849
    %v9959 = vsel %vm1664, %v9847, %v9848
    %v9960 = vsel %vm1664, %v9846, %v9847
    %v9961 = vsel %vm1664, %v9845, %v9846
    %v9962 = vsel %vm1664, %v9844, %v9845
    %v9963 = vsel %vm1664, %v9843, %v9844
    %v9964 = vsel %vm1664, %v9842, %v9843
    %v9965 = vsel %vm1664, %v9841, %v9842
    %v9966 = vsel %vm1664, %v9840, %v9841
    %v9967 = vsel %vm1664, %v9903, %v9840
    %v9968 = vsel %vm1793, 0.0, %v9967
    %v9969 = vsel %vm1794, 0.0, %v9966
    %v9970 = vsel %vm1795, 0.0, %v9965
    %v9971 = vsel %vm1796, 0.0, %v9964
    %v9972 = vsel %vm1797, 0.0, %v9963
    %v9973 = vsel %vm1798, 0.0, %v9962
    %v9974 = vsel %vm1799, 0.0, %v9961
    %v9975 = vsel %vm1800, 0.0, %v9960
    %v9976 = vsel %vm1801, 0.0, %v9959
    %v9977 = vsel %vm1802, 0.0, %v9958
    %v9978 = vsel %vm1803, 0.0, %v9957
    %v9979 = vsel %vm1804, 0.0, %v9956
    %v9980 = vsel %vm1805, 0.0, %v9955
    %v9981 = vsel %vm1806, 0.0, %v9954
    %v9982 = vsel %vm1807, 0.0, %v9953
    %v9983 = vsel %vm1808, 0.0, %v9952
    %v9984 = vsel %vm1809, 0.0, %v9951
    %v9985 = vsel %vm1810, 0.0, %v9950
    %v9986 = vsel %vm1811, 0.0, %v9949
    %v9987 = vsel %vm1812, 0.0, %v9948
    %v9988 = vsel %vm1813, 0.0, %v9947
    %v9989 = vsel %vm1814, 0.0, %v9946
    %v9990 = vsel %vm1815, 0.0, %v9945
    %v9991 = vsel %vm1816, 0.0, %v9944
    %v9992 = vsel %vm1817, 0.0, %v9943
    %v9993 = vsel %vm1818, 0.0, %v9942
    %v9994 = vsel %vm1819, 0.0, %v9941
    %v9995 = vsel %vm1820, 0.0, %v9940
    %v9996 = vsel %vm1821, 0.0, %v9939
    %v9997 = vsel %vm1822, 0.0, %v9938
    %v9998 = vsel %vm1823, 0.0, %v9937
    %v9999 = vsel %vm1824, 0.0, %v9936
    %v10000 = vsel %vm1825, 0.0, %v9935
    %v10001 = vsel %vm1826, 0.0, %v9934
    %v10002 = vsel %vm1827, 0.0, %v9933
    %v10003 = vsel %vm1828, 0.0, %v9932
    %v10004 = vsel %vm1829, 0.0, %v9931
    %v10005 = vsel %vm1830, 0.0, %v9930
    %v10006 = vsel %vm1831, 0.0, %v9929
    %v10007 = vsel %vm1832, 0.0, %v9928
    %v10008 = vsel %vm1833, 0.0, %v9927
    %v10009 = vsel %vm1834, 0.0, %v9926
    %v10010 = vsel %vm1835, 0.0, %v9925
    %v10011 = vsel %vm1836, 0.0, %v9924
    %v10012 = vsel %vm1837, 0.0, %v9923
    %v10013 = vsel %vm1838, 0.0, %v9922
    %v10014 = vsel %vm1839, 0.0, %v9921
    %v10015 = vsel %vm1840, 0.0, %v9920
    %v10016 = vsel %vm1841, 0.0, %v9919
    %v10017 = vsel %vm1842, 0.0, %v9918
    %v10018 = vsel %vm1843, 0.0, %v9917
    %v10019 = vsel %vm1844, 0.0, %v9916
    %v10020 = vsel %vm1845, 0.0, %v9915
    %v10021 = vsel %vm1846, 0.0, %v9914
    %v10022 = vsel %vm1847, 0.0, %v9913
    %v10023 = vsel %vm1848, 0.0, %v9912
    %v10024 = vsel %vm1849, 0.0, %v9911
    %v10025 = vsel %vm1850, 0.0, %v9910
    %v10026 = vsel %vm1851, 0.0, %v9909
    %v10027 = vsel %vm1852, 0.0, %v9908
    %v10028 = vsel %vm1853, 0.0, %v9907
    %v10029 = vsel %vm1854, 0.0, %v9906
    %v10030 = vsel %vm1855, 0.0, %v9905
    %v10031 = vsel %vm1856, 0.0, %v9904
    %v10032 = vpack.c.bf16 %v9969, %v9968
    %v10033 = vpack.c.bf16 %v9971, %v9970
    %v10034 = vpack.c.bf16 %v9973, %v9972
    %v10035 = vpack.c.bf16 %v9975, %v9974
    %v10036 = vpack.c.bf16 %v9977, %v9976
    %v10037 = vpack.c.bf16 %v9979, %v9978
    %v10038 = vpack.c.bf16 %v9981, %v9980
    %v10039 = vpack.c.bf16 %v9983, %v9982
    %v10040 = vpack.c.bf16 %v9985, %v9984
    %v10041 = vpack.c.bf16 %v9987, %v9986
    %v10042 = vpack.c.bf16 %v9989, %v9988
    %v10043 = vpack.c.bf16 %v9991, %v9990
    %v10044 = vpack.c.bf16 %v9993, %v9992
    %v10045 = vpack.c.bf16 %v9995, %v9994
    %v10046 = vpack.c.bf16 %v9997, %v9996
    %v10047 = vpack.c.bf16 %v9999, %v9998
    %v10048 = vpack.c.bf16 %v10001, %v10000
    %v10049 = vpack.c.bf16 %v10003, %v10002
    %v10050 = vpack.c.bf16 %v10005, %v10004
    %v10051 = vpack.c.bf16 %v10007, %v10006
    %v10052 = vpack.c.bf16 %v10009, %v10008
    %v10053 = vpack.c.bf16 %v10011, %v10010
    %v10054 = vpack.c.bf16 %v10013, %v10012
    %v10055 = vpack.c.bf16 %v10015, %v10014
    %v10056 = vpack.c.bf16 %v10017, %v10016
    %v10057 = vpack.c.bf16 %v10019, %v10018
    %v10058 = vpack.c.bf16 %v10021, %v10020
    %v10059 = vpack.c.bf16 %v10023, %v10022
    %v10060 = vpack.c.bf16 %v10025, %v10024
    %v10061 = vpack.c.bf16 %v10027, %v10026
    %v10062 = vpack.c.bf16 %v10029, %v10028
    %v10063 = vpack.c.bf16 %v10031, %v10030
    %v10064 = vrot.slane %v9744, 1
    %v10065 = vrot.slane %v9745, 1
    %v10066 = vrot.slane %v9746, 1
    %v10067 = vrot.slane %v9747, 1
    %v10068 = vrot.slane %v9748, 1
    %v10069 = vrot.slane %v9749, 1
    %v10070 = vrot.slane %v9750, 1
    %v10071 = vrot.slane %v9751, 1
    %v10072 = vrot.slane %v9752, 1
    %v10073 = vrot.slane %v9753, 1
    %v10074 = vrot.slane %v9754, 1
    %v10075 = vrot.slane %v9755, 1
    %v10076 = vrot.slane %v9756, 1
    %v10077 = vrot.slane %v9757, 1
    %v10078 = vrot.slane %v9758, 1
    %v10079 = vrot.slane %v9759, 1
    %v10080 = vrot.slane %v9760, 1
    %v10081 = vrot.slane %v9761, 1
    %v10082 = vrot.slane %v9762, 1
    %v10083 = vrot.slane %v9763, 1
    %v10084 = vrot.slane %v9764, 1
    %v10085 = vrot.slane %v9765, 1
    %v10086 = vrot.slane %v9766, 1
    %v10087 = vrot.slane %v9767, 1
    %v10088 = vrot.slane %v9768, 1
    %v10089 = vrot.slane %v9769, 1
    %v10090 = vrot.slane %v9770, 1
    %v10091 = vrot.slane %v9771, 1
    %v10092 = vrot.slane %v9772, 1
    %v10093 = vrot.slane %v9773, 1
    %v10094 = vrot.slane %v9774, 1
    %v10095 = vrot.slane %v9775, 1
    %v10096 = vrot.slane %v9776, 1
    %v10097 = vrot.slane %v9777, 1
    %v10098 = vrot.slane %v9778, 1
    %v10099 = vrot.slane %v9779, 1
    %v10100 = vrot.slane %v9780, 1
    %v10101 = vrot.slane %v9781, 1
    %v10102 = vrot.slane %v9782, 1
    %v10103 = vrot.slane %v9783, 1
    %v10104 = vrot.slane %v9784, 1
    %v10105 = vrot.slane %v9785, 1
    %v10106 = vrot.slane %v9786, 1
    %v10107 = vrot.slane %v9787, 1
    %v10108 = vrot.slane %v9788, 1
    %v10109 = vrot.slane %v9789, 1
    %v10110 = vrot.slane %v9790, 1
    %v10111 = vrot.slane %v9791, 1
    %v10112 = vrot.slane %v9792, 1
    %v10113 = vrot.slane %v9793, 1
    %v10114 = vrot.slane %v9794, 1
    %v10115 = vrot.slane %v9795, 1
    %v10116 = vrot.slane %v9796, 1
    %v10117 = vrot.slane %v9797, 1
    %v10118 = vrot.slane %v9798, 1
    %v10119 = vrot.slane %v9799, 1
    %v10120 = vrot.slane %v9800, 1
    %v10121 = vrot.slane %v9801, 1
    %v10122 = vrot.slane %v9802, 1
    %v10123 = vrot.slane %v9803, 1
    %v10124 = vrot.slane %v9804, 1
    %v10125 = vrot.slane %v9805, 1
    %v10126 = vrot.slane %v9806, 1
    %v10127 = vrot.slane %v9807, 1
    %v10128 = vsel %vm2017, %v10126, %v10127
    %v10129 = vsel %vm2017, %v10125, %v10126
    %v10130 = vsel %vm2017, %v10124, %v10125
    %v10131 = vsel %vm2017, %v10123, %v10124
    %v10132 = vsel %vm2017, %v10122, %v10123
    %v10133 = vsel %vm2017, %v10121, %v10122
    %v10134 = vsel %vm2017, %v10120, %v10121
    %v10135 = vsel %vm2017, %v10119, %v10120
    %v10136 = vsel %vm2017, %v10118, %v10119
    %v10137 = vsel %vm2017, %v10117, %v10118
    %v10138 = vsel %vm2017, %v10116, %v10117
    %v10139 = vsel %vm2017, %v10115, %v10116
    %v10140 = vsel %vm2017, %v10114, %v10115
    %v10141 = vsel %vm2017, %v10113, %v10114
    %v10142 = vsel %vm2017, %v10112, %v10113
    %v10143 = vsel %vm2017, %v10111, %v10112
    %v10144 = vsel %vm2017, %v10110, %v10111
    %v10145 = vsel %vm2017, %v10109, %v10110
    %v10146 = vsel %vm2017, %v10108, %v10109
    %v10147 = vsel %vm2017, %v10107, %v10108
    %v10148 = vsel %vm2017, %v10106, %v10107
    %v10149 = vsel %vm2017, %v10105, %v10106
    %v10150 = vsel %vm2017, %v10104, %v10105
    %v10151 = vsel %vm2017, %v10103, %v10104
    %v10152 = vsel %vm2017, %v10102, %v10103
    %v10153 = vsel %vm2017, %v10101, %v10102
    %v10154 = vsel %vm2017, %v10100, %v10101
    %v10155 = vsel %vm2017, %v10099, %v10100
    %v10156 = vsel %vm2017, %v10098, %v10099
    %v10157 = vsel %vm2017, %v10097, %v10098
    %v10158 = vsel %vm2017, %v10096, %v10097
    %v10159 = vsel %vm2017, %v10095, %v10096
    %v10160 = vsel %vm2017, %v10094, %v10095
    %v10161 = vsel %vm2017, %v10093, %v10094
    %v10162 = vsel %vm2017, %v10092, %v10093
    %v10163 = vsel %vm2017, %v10091, %v10092
    %v10164 = vsel %vm2017, %v10090, %v10091
    %v10165 = vsel %vm2017, %v10089, %v10090
    %v10166 = vsel %vm2017, %v10088, %v10089
    %v10167 = vsel %vm2017, %v10087, %v10088
    %v10168 = vsel %vm2017, %v10086, %v10087
    %v10169 = vsel %vm2017, %v10085, %v10086
    %v10170 = vsel %vm2017, %v10084, %v10085
    %v10171 = vsel %vm2017, %v10083, %v10084
    %v10172 = vsel %vm2017, %v10082, %v10083
    %v10173 = vsel %vm2017, %v10081, %v10082
    %v10174 = vsel %vm2017, %v10080, %v10081
    %v10175 = vsel %vm2017, %v10079, %v10080
    %v10176 = vsel %vm2017, %v10078, %v10079
    %v10177 = vsel %vm2017, %v10077, %v10078
    %v10178 = vsel %vm2017, %v10076, %v10077
    %v10179 = vsel %vm2017, %v10075, %v10076
    %v10180 = vsel %vm2017, %v10074, %v10075
    %v10181 = vsel %vm2017, %v10073, %v10074
    %v10182 = vsel %vm2017, %v10072, %v10073
    %v10183 = vsel %vm2017, %v10071, %v10072
    %v10184 = vsel %vm2017, %v10070, %v10071
    %v10185 = vsel %vm2017, %v10069, %v10070
    %v10186 = vsel %vm2017, %v10068, %v10069
    %v10187 = vsel %vm2017, %v10067, %v10068
    %v10188 = vsel %vm2017, %v10066, %v10067
    %v10189 = vsel %vm2017, %v10065, %v10066
    %v10190 = vsel %vm2017, %v10064, %v10065
    %v10191 = vsel %vm2017, %v10127, %v10064
    %v10192 = vsel %vm2146, 0.0, %v10190
    %v10193 = vsel %vm2147, 0.0, %v10189
    %v10194 = vsel %vm2148, 0.0, %v10188
    %v10195 = vsel %vm2149, 0.0, %v10187
    %v10196 = vsel %vm2150, 0.0, %v10186
    %v10197 = vsel %vm2151, 0.0, %v10185
    %v10198 = vsel %vm2152, 0.0, %v10184
    %v10199 = vsel %vm2153, 0.0, %v10183
    %v10200 = vsel %vm2154, 0.0, %v10182
    %v10201 = vsel %vm2155, 0.0, %v10181
    %v10202 = vsel %vm2156, 0.0, %v10180
    %v10203 = vsel %vm2157, 0.0, %v10179
    %v10204 = vsel %vm2158, 0.0, %v10178
    %v10205 = vsel %vm2159, 0.0, %v10177
    %v10206 = vsel %vm2160, 0.0, %v10176
    %v10207 = vsel %vm2161, 0.0, %v10175
    %v10208 = vsel %vm2162, 0.0, %v10174
    %v10209 = vsel %vm2163, 0.0, %v10173
    %v10210 = vsel %vm2164, 0.0, %v10172
    %v10211 = vsel %vm2165, 0.0, %v10171
    %v10212 = vsel %vm2166, 0.0, %v10170
    %v10213 = vsel %vm2167, 0.0, %v10169
    %v10214 = vsel %vm2168, 0.0, %v10168
    %v10215 = vsel %vm2169, 0.0, %v10167
    %v10216 = vsel %vm2170, 0.0, %v10166
    %v10217 = vsel %vm2171, 0.0, %v10165
    %v10218 = vsel %vm2172, 0.0, %v10164
    %v10219 = vsel %vm2173, 0.0, %v10163
    %v10220 = vsel %vm2174, 0.0, %v10162
    %v10221 = vsel %vm2175, 0.0, %v10161
    %v10222 = vsel %vm2176, 0.0, %v10160
    %v10223 = vsel %vm2177, 0.0, %v10159
    %v10224 = vsel %vm2178, 0.0, %v10158
    %v10225 = vsel %vm2179, 0.0, %v10157
    %v10226 = vsel %vm2180, 0.0, %v10156
    %v10227 = vsel %vm2181, 0.0, %v10155
    %v10228 = vsel %vm2182, 0.0, %v10154
    %v10229 = vsel %vm2183, 0.0, %v10153
    %v10230 = vsel %vm2184, 0.0, %v10152
    %v10231 = vsel %vm2185, 0.0, %v10151
    %v10232 = vsel %vm2186, 0.0, %v10150
    %v10233 = vsel %vm2187, 0.0, %v10149
    %v10234 = vsel %vm2188, 0.0, %v10148
    %v10235 = vsel %vm2189, 0.0, %v10147
    %v10236 = vsel %vm2190, 0.0, %v10146
    %v10237 = vsel %vm2191, 0.0, %v10145
    %v10238 = vsel %vm2192, 0.0, %v10144
    %v10239 = vsel %vm2193, 0.0, %v10143
    %v10240 = vsel %vm2194, 0.0, %v10142
    %v10241 = vsel %vm2195, 0.0, %v10141
    %v10242 = vsel %vm2196, 0.0, %v10140
    %v10243 = vsel %vm2197, 0.0, %v10139
    %v10244 = vsel %vm2198, 0.0, %v10138
    %v10245 = vsel %vm2199, 0.0, %v10137
    %v10246 = vsel %vm2200, 0.0, %v10136
    %v10247 = vsel %vm2201, 0.0, %v10135
    %v10248 = vsel %vm2202, 0.0, %v10134
    %v10249 = vsel %vm2203, 0.0, %v10133
    %v10250 = vsel %vm2204, 0.0, %v10132
    %v10251 = vsel %vm2205, 0.0, %v10131
    %v10252 = vsel %vm2206, 0.0, %v10130
    %v10253 = vsel %vm2207, 0.0, %v10129
    %v10254 = vsel %vm2208, 0.0, %v10128
    %v10255 = vsel %vm2209, 0.0, %v10191
    %v10256 = vpack.c.bf16 %v10193, %v10192
    %v10257 = vpack.c.bf16 %v10195, %v10194
    %v10258 = vpack.c.bf16 %v10197, %v10196
    %v10259 = vpack.c.bf16 %v10199, %v10198
    %v10260 = vpack.c.bf16 %v10201, %v10200
    %v10261 = vpack.c.bf16 %v10203, %v10202
    %v10262 = vpack.c.bf16 %v10205, %v10204
    %v10263 = vpack.c.bf16 %v10207, %v10206
    %v10264 = vpack.c.bf16 %v10209, %v10208
    %v10265 = vpack.c.bf16 %v10211, %v10210
    %v10266 = vpack.c.bf16 %v10213, %v10212
    %v10267 = vpack.c.bf16 %v10215, %v10214
    %v10268 = vpack.c.bf16 %v10217, %v10216
    %v10269 = vpack.c.bf16 %v10219, %v10218
    %v10270 = vpack.c.bf16 %v10221, %v10220
    %v10271 = vpack.c.bf16 %v10223, %v10222
    %v10272 = vpack.c.bf16 %v10225, %v10224
    %v10273 = vpack.c.bf16 %v10227, %v10226
    %v10274 = vpack.c.bf16 %v10229, %v10228
    %v10275 = vpack.c.bf16 %v10231, %v10230
    %v10276 = vpack.c.bf16 %v10233, %v10232
    %v10277 = vpack.c.bf16 %v10235, %v10234
    %v10278 = vpack.c.bf16 %v10237, %v10236
    %v10279 = vpack.c.bf16 %v10239, %v10238
    %v10280 = vpack.c.bf16 %v10241, %v10240
    %v10281 = vpack.c.bf16 %v10243, %v10242
    %v10282 = vpack.c.bf16 %v10245, %v10244
    %v10283 = vpack.c.bf16 %v10247, %v10246
    %v10284 = vpack.c.bf16 %v10249, %v10248
    %v10285 = vpack.c.bf16 %v10251, %v10250
    %v10286 = vpack.c.bf16 %v10253, %v10252
    %v10287 = vpack.c.bf16 %v10255, %v10254
    %s10288 = scalar_lea.vmem [#allocation2], 480
    %v10289 = vld [vmem:[%s10288] sm:$0xf]
    %v10290 = vld [vmem:[%s10288 + $0x4] sm:$0xf]
    %v10291 = vld [vmem:[%s10288 + $0x8] sm:$0xf]
    %v10292 = vld [vmem:[%s10288 + $0xc] sm:$0xf]
    %v10293 = vld [vmem:[%s10288 + $0x10] sm:$0xf]
    %v10294 = vld [vmem:[%s10288 + $0x14] sm:$0xf]
    %v10295 = vld [vmem:[%s10288 + $0x18] sm:$0xf]
    %v10296 = vld [vmem:[%s10288 + $0x1c] sm:$0xf]
    %s10297 = scalar_lea.vmem [#allocation2], 512
    %v10298 = vld [vmem:[%s10297] sm:$0xf]
    %v10299 = vld [vmem:[%s10297 + $0x4] sm:$0xf]
    %v10300 = vld [vmem:[%s10297 + $0x8] sm:$0xf]
    %v10301 = vld [vmem:[%s10297 + $0xc] sm:$0xf]
    %v10302 = vld [vmem:[%s10297 + $0x10] sm:$0xf]
    %v10303 = vld [vmem:[%s10297 + $0x14] sm:$0xf]
    %v10304 = vld [vmem:[%s10297 + $0x18] sm:$0xf]
    %v10305 = vld [vmem:[%s10297 + $0x1c] sm:$0xf]
    %v10314 = vunpack.c.l.b16 %v10298
    %v10315 = vunpack.c.l.b16 %v10299
    %v10316 = vunpack.c.l.b16 %v10300
    %v10317 = vunpack.c.l.b16 %v10301
    %v10318 = vunpack.c.l.b16 %v10302
    %v10319 = vunpack.c.l.b16 %v10303
    %v10320 = vunpack.c.l.b16 %v10304
    %v10321 = vunpack.c.l.b16 %v10305
    %v10322 = vpack.c.b16 %v10315, %v10314
    %v10323 = vpack.c.b16 %v10317, %v10316
    %v10324 = vpack.c.b16 %v10319, %v10318
    %v10325 = vpack.c.b16 %v10321, %v10320
    %v10331 = vsel %vm2347, %v9808, 0
    %v10334 = vsel %vm2347, %v9809, 0
    %v10337 = vsel %vm2347, %v9810, 0
    %v10340 = vsel %vm2347, %v9811, 0
    %v10343 = vsel %vm2347, %v9812, 0
    %v10346 = vsel %vm2347, %v9813, 0
    %v10349 = vsel %vm2347, %v9814, 0
    %v10352 = vsel %vm2347, %v9815, 0
    %v10355 = vsel %vm2347, %v9816, 0
    %v10358 = vsel %vm2347, %v9817, 0
    %v10361 = vsel %vm2347, %v9818, 0
    %v10364 = vsel %vm2347, %v9819, 0
    %v10367 = vsel %vm2347, %v9820, 0
    %v10370 = vsel %vm2347, %v9821, 0
    %v10373 = vsel %vm2347, %v9822, 0
    %v10376 = vsel %vm2347, %v9823, 0
    %v10379 = vsel %vm2347, %v9824, 0
    %v10382 = vsel %vm2347, %v9825, 0
    %v10385 = vsel %vm2347, %v9826, 0
    %v10388 = vsel %vm2347, %v9827, 0
    %v10391 = vsel %vm2347, %v9828, 0
    %v10394 = vsel %vm2347, %v9829, 0
    %v10397 = vsel %vm2347, %v9830, 0
    %v10400 = vsel %vm2347, %v9831, 0
    %v10403 = vsel %vm2347, %v9832, 0
    %v10406 = vsel %vm2347, %v9833, 0
    %v10409 = vsel %vm2347, %v9834, 0
    %v10412 = vsel %vm2347, %v9835, 0
    %v10415 = vsel %vm2347, %v9836, 0
    %v10418 = vsel %vm2347, %v9837, 0
    %v10421 = vsel %vm2347, %v9838, 0
    %v10424 = vsel %vm2347, %v9839, 0
    %10426 = vmatpush.bf16.msra.mxu0 0
    %10427 = vmatpush.bf16.msra.mxu0 0
    %10428 = vmatpush.bf16.msra.mxu0 0
    %10429 = vmatpush.bf16.msra.mxu0 0
    %10430 = vmatpush.bf16.msra.mxu0 %v10325
    %10431 = vmatpush.bf16.msra.mxu0 %v10324
    %10432 = vmatpush.bf16.msra.mxu0 %v10323
    %10433 = vmatpush.bf16.msra.mxu0 %v10322
    %10434 = vmatmul.bf16.gmra.mxu0 %v10331
    %v10435 = vpop.f32.mrf.mxu0
    %v10436 = vadd.f32 0.0, %v10435
    %v10437 = vpop.f32.mrf.mxu0
    %v10438 = vadd.f32 0.0, %v10437
    %10439 = vmatmul.bf16.gmra.mxu0 %v10334
    %v10440 = vpop.f32.mrf.mxu0
    %v10441 = vadd.f32 0.0, %v10440
    %v10442 = vpop.f32.mrf.mxu0
    %v10443 = vadd.f32 0.0, %v10442
    %10444 = vmatmul.bf16.gmra.mxu0 %v10337
    %v10445 = vpop.f32.mrf.mxu0
    %v10446 = vadd.f32 0.0, %v10445
    %v10447 = vpop.f32.mrf.mxu0
    %v10448 = vadd.f32 0.0, %v10447
    %10449 = vmatmul.bf16.gmra.mxu0 %v10340
    %v10450 = vpop.f32.mrf.mxu0
    %v10451 = vadd.f32 0.0, %v10450
    %v10452 = vpop.f32.mrf.mxu0
    %v10453 = vadd.f32 0.0, %v10452
    %10454 = vmatmul.bf16.gmra.mxu0 %v10343
    %v10455 = vpop.f32.mrf.mxu0
    %v10456 = vadd.f32 0.0, %v10455
    %v10457 = vpop.f32.mrf.mxu0
    %v10458 = vadd.f32 0.0, %v10457
    %10459 = vmatmul.bf16.gmra.mxu0 %v10346
    %v10460 = vpop.f32.mrf.mxu0
    %v10461 = vadd.f32 0.0, %v10460
    %v10462 = vpop.f32.mrf.mxu0
    %v10463 = vadd.f32 0.0, %v10462
    %10464 = vmatmul.bf16.gmra.mxu0 %v10349
    %v10465 = vpop.f32.mrf.mxu0
    %v10466 = vadd.f32 0.0, %v10465
    %v10467 = vpop.f32.mrf.mxu0
    %v10468 = vadd.f32 0.0, %v10467
    %10469 = vmatmul.bf16.gmra.mxu0 %v10352
    %v10470 = vpop.f32.mrf.mxu0
    %v10471 = vadd.f32 0.0, %v10470
    %v10472 = vpop.f32.mrf.mxu0
    %v10473 = vadd.f32 0.0, %v10472
    %10474 = vmatmul.bf16.gmra.mxu0 %v10355
    %v10475 = vpop.f32.mrf.mxu0
    %v10476 = vadd.f32 0.0, %v10475
    %v10477 = vpop.f32.mrf.mxu0
    %v10478 = vadd.f32 0.0, %v10477
    %10479 = vmatmul.bf16.gmra.mxu0 %v10358
    %v10480 = vpop.f32.mrf.mxu0
    %v10481 = vadd.f32 0.0, %v10480
    %v10482 = vpop.f32.mrf.mxu0
    %v10483 = vadd.f32 0.0, %v10482
    %10484 = vmatmul.bf16.gmra.mxu0 %v10361
    %v10485 = vpop.f32.mrf.mxu0
    %v10486 = vadd.f32 0.0, %v10485
    %v10487 = vpop.f32.mrf.mxu0
    %v10488 = vadd.f32 0.0, %v10487
    %10489 = vmatmul.bf16.gmra.mxu0 %v10364
    %v10490 = vpop.f32.mrf.mxu0
    %v10491 = vadd.f32 0.0, %v10490
    %v10492 = vpop.f32.mrf.mxu0
    %v10493 = vadd.f32 0.0, %v10492
    %10494 = vmatmul.bf16.gmra.mxu0 %v10367
    %v10495 = vpop.f32.mrf.mxu0
    %v10496 = vadd.f32 0.0, %v10495
    %v10497 = vpop.f32.mrf.mxu0
    %v10498 = vadd.f32 0.0, %v10497
    %10499 = vmatmul.bf16.gmra.mxu0 %v10370
    %v10500 = vpop.f32.mrf.mxu0
    %v10501 = vadd.f32 0.0, %v10500
    %v10502 = vpop.f32.mrf.mxu0
    %v10503 = vadd.f32 0.0, %v10502
    %10504 = vmatmul.bf16.gmra.mxu0 %v10373
    %v10505 = vpop.f32.mrf.mxu0
    %v10506 = vadd.f32 0.0, %v10505
    %v10507 = vpop.f32.mrf.mxu0
    %v10508 = vadd.f32 0.0, %v10507
    %10509 = vmatmul.bf16.gmra.mxu0 %v10376
    %v10510 = vpop.f32.mrf.mxu0
    %v10511 = vadd.f32 0.0, %v10510
    %v10512 = vpop.f32.mrf.mxu0
    %v10513 = vadd.f32 0.0, %v10512
    %10514 = vmatmul.bf16.gmra.mxu0 %v10379
    %v10515 = vpop.f32.mrf.mxu0
    %v10516 = vadd.f32 0.0, %v10515
    %v10517 = vpop.f32.mrf.mxu0
    %v10518 = vadd.f32 0.0, %v10517
    %10519 = vmatmul.bf16.gmra.mxu0 %v10382
    %v10520 = vpop.f32.mrf.mxu0
    %v10521 = vadd.f32 0.0, %v10520
    %v10522 = vpop.f32.mrf.mxu0
    %v10523 = vadd.f32 0.0, %v10522
    %10524 = vmatmul.bf16.gmra.mxu0 %v10385
    %v10525 = vpop.f32.mrf.mxu0
    %v10526 = vadd.f32 0.0, %v10525
    %v10527 = vpop.f32.mrf.mxu0
    %v10528 = vadd.f32 0.0, %v10527
    %10529 = vmatmul.bf16.gmra.mxu0 %v10388
    %v10530 = vpop.f32.mrf.mxu0
    %v10531 = vadd.f32 0.0, %v10530
    %v10532 = vpop.f32.mrf.mxu0
    %v10533 = vadd.f32 0.0, %v10532
    %10534 = vmatmul.bf16.gmra.mxu0 %v10391
    %v10535 = vpop.f32.mrf.mxu0
    %v10536 = vadd.f32 0.0, %v10535
    %v10537 = vpop.f32.mrf.mxu0
    %v10538 = vadd.f32 0.0, %v10537
    %10539 = vmatmul.bf16.gmra.mxu0 %v10394
    %v10540 = vpop.f32.mrf.mxu0
    %v10541 = vadd.f32 0.0, %v10540
    %v10542 = vpop.f32.mrf.mxu0
    %v10543 = vadd.f32 0.0, %v10542
    %10544 = vmatmul.bf16.gmra.mxu0 %v10397
    %v10545 = vpop.f32.mrf.mxu0
    %v10546 = vadd.f32 0.0, %v10545
    %v10547 = vpop.f32.mrf.mxu0
    %v10548 = vadd.f32 0.0, %v10547
    %10549 = vmatmul.bf16.gmra.mxu0 %v10400
    %v10550 = vpop.f32.mrf.mxu0
    %v10551 = vadd.f32 0.0, %v10550
    %v10552 = vpop.f32.mrf.mxu0
    %v10553 = vadd.f32 0.0, %v10552
    %10554 = vmatmul.bf16.gmra.mxu0 %v10403
    %v10555 = vpop.f32.mrf.mxu0
    %v10556 = vadd.f32 0.0, %v10555
    %v10557 = vpop.f32.mrf.mxu0
    %v10558 = vadd.f32 0.0, %v10557
    %10559 = vmatmul.bf16.gmra.mxu0 %v10406
    %v10560 = vpop.f32.mrf.mxu0
    %v10561 = vadd.f32 0.0, %v10560
    %v10562 = vpop.f32.mrf.mxu0
    %v10563 = vadd.f32 0.0, %v10562
    %10564 = vmatmul.bf16.gmra.mxu0 %v10409
    %v10565 = vpop.f32.mrf.mxu0
    %v10566 = vadd.f32 0.0, %v10565
    %v10567 = vpop.f32.mrf.mxu0
    %v10568 = vadd.f32 0.0, %v10567
    %10569 = vmatmul.bf16.gmra.mxu0 %v10412
    %v10570 = vpop.f32.mrf.mxu0
    %v10571 = vadd.f32 0.0, %v10570
    %v10572 = vpop.f32.mrf.mxu0
    %v10573 = vadd.f32 0.0, %v10572
    %10574 = vmatmul.bf16.gmra.mxu0 %v10415
    %v10575 = vpop.f32.mrf.mxu0
    %v10576 = vadd.f32 0.0, %v10575
    %v10577 = vpop.f32.mrf.mxu0
    %v10578 = vadd.f32 0.0, %v10577
    %10579 = vmatmul.bf16.gmra.mxu0 %v10418
    %v10580 = vpop.f32.mrf.mxu0
    %v10581 = vadd.f32 0.0, %v10580
    %v10582 = vpop.f32.mrf.mxu0
    %v10583 = vadd.f32 0.0, %v10582
    %10584 = vmatmul.bf16.gmra.mxu0 %v10421
    %v10585 = vpop.f32.mrf.mxu0
    %v10586 = vadd.f32 0.0, %v10585
    %v10587 = vpop.f32.mrf.mxu0
    %v10588 = vadd.f32 0.0, %v10587
    %10589 = vmatmul.bf16.gmra.mxu0 %v10424
    %v10590 = vpop.f32.mrf.mxu0
    %v10591 = vadd.f32 0.0, %v10590
    %v10592 = vpop.f32.mrf.mxu0
    %v10593 = vadd.f32 0.0, %v10592
    %10594 = vdwg.mxu0
    %v10603 = vunpack.c.l.b16 %v10289
    %v10604 = vunpack.c.l.b16 %v10290
    %v10605 = vunpack.c.l.b16 %v10291
    %v10606 = vunpack.c.l.b16 %v10292
    %v10607 = vunpack.c.l.b16 %v10293
    %v10608 = vunpack.c.l.b16 %v10294
    %v10609 = vunpack.c.l.b16 %v10295
    %v10610 = vunpack.c.l.b16 %v10296
    %v10611 = vpack.c.b16 %v10604, %v10603
    %v10612 = vpack.c.b16 %v10606, %v10605
    %v10613 = vpack.c.b16 %v10608, %v10607
    %v10614 = vpack.c.b16 %v10610, %v10609
    %v10620 = vsel %vm2347, %v10032, 0
    %v10623 = vsel %vm2347, %v10033, 0
    %v10626 = vsel %vm2347, %v10034, 0
    %v10629 = vsel %vm2347, %v10035, 0
    %v10632 = vsel %vm2347, %v10036, 0
    %v10635 = vsel %vm2347, %v10037, 0
    %v10638 = vsel %vm2347, %v10038, 0
    %v10641 = vsel %vm2347, %v10039, 0
    %v10644 = vsel %vm2347, %v10040, 0
    %v10647 = vsel %vm2347, %v10041, 0
    %v10650 = vsel %vm2347, %v10042, 0
    %v10653 = vsel %vm2347, %v10043, 0
    %v10656 = vsel %vm2347, %v10044, 0
    %v10659 = vsel %vm2347, %v10045, 0
    %v10662 = vsel %vm2347, %v10046, 0
    %v10665 = vsel %vm2347, %v10047, 0
    %v10668 = vsel %vm2347, %v10048, 0
    %v10671 = vsel %vm2347, %v10049, 0
    %v10674 = vsel %vm2347, %v10050, 0
    %v10677 = vsel %vm2347, %v10051, 0
    %v10680 = vsel %vm2347, %v10052, 0
    %v10683 = vsel %vm2347, %v10053, 0
    %v10686 = vsel %vm2347, %v10054, 0
    %v10689 = vsel %vm2347, %v10055, 0
    %v10692 = vsel %vm2347, %v10056, 0
    %v10695 = vsel %vm2347, %v10057, 0
    %v10698 = vsel %vm2347, %v10058, 0
    %v10701 = vsel %vm2347, %v10059, 0
    %v10704 = vsel %vm2347, %v10060, 0
    %v10707 = vsel %vm2347, %v10061, 0
    %v10710 = vsel %vm2347, %v10062, 0
    %v10713 = vsel %vm2347, %v10063, 0
    %10715 = vmatpush.bf16.msra.mxu0 0
    %10716 = vmatpush.bf16.msra.mxu0 0
    %10717 = vmatpush.bf16.msra.mxu0 0
    %10718 = vmatpush.bf16.msra.mxu0 0
    %10719 = vmatpush.bf16.msra.mxu0 %v10614
    %10720 = vmatpush.bf16.msra.mxu0 %v10613
    %10721 = vmatpush.bf16.msra.mxu0 %v10612
    %10722 = vmatpush.bf16.msra.mxu0 %v10611
    %10723 = vmatmul.bf16.gmra.mxu0 %v10620
    %v10724 = vpop.f32.mrf.mxu0
    %v10725 = vadd.f32 %v10436, %v10724
    %v10726 = vpop.f32.mrf.mxu0
    %v10727 = vadd.f32 %v10438, %v10726
    %10728 = vmatmul.bf16.gmra.mxu0 %v10623
    %v10729 = vpop.f32.mrf.mxu0
    %v10730 = vadd.f32 %v10441, %v10729
    %v10731 = vpop.f32.mrf.mxu0
    %v10732 = vadd.f32 %v10443, %v10731
    %10733 = vmatmul.bf16.gmra.mxu0 %v10626
    %v10734 = vpop.f32.mrf.mxu0
    %v10735 = vadd.f32 %v10446, %v10734
    %v10736 = vpop.f32.mrf.mxu0
    %v10737 = vadd.f32 %v10448, %v10736
    %10738 = vmatmul.bf16.gmra.mxu0 %v10629
    %v10739 = vpop.f32.mrf.mxu0
    %v10740 = vadd.f32 %v10451, %v10739
    %v10741 = vpop.f32.mrf.mxu0
    %v10742 = vadd.f32 %v10453, %v10741
    %10743 = vmatmul.bf16.gmra.mxu0 %v10632
    %v10744 = vpop.f32.mrf.mxu0
    %v10745 = vadd.f32 %v10456, %v10744
    %v10746 = vpop.f32.mrf.mxu0
    %v10747 = vadd.f32 %v10458, %v10746
    %10748 = vmatmul.bf16.gmra.mxu0 %v10635
    %v10749 = vpop.f32.mrf.mxu0
    %v10750 = vadd.f32 %v10461, %v10749
    %v10751 = vpop.f32.mrf.mxu0
    %v10752 = vadd.f32 %v10463, %v10751
    %10753 = vmatmul.bf16.gmra.mxu0 %v10638
    %v10754 = vpop.f32.mrf.mxu0
    %v10755 = vadd.f32 %v10466, %v10754
    %v10756 = vpop.f32.mrf.mxu0
    %v10757 = vadd.f32 %v10468, %v10756
    %10758 = vmatmul.bf16.gmra.mxu0 %v10641
    %v10759 = vpop.f32.mrf.mxu0
    %v10760 = vadd.f32 %v10471, %v10759
    %v10761 = vpop.f32.mrf.mxu0
    %v10762 = vadd.f32 %v10473, %v10761
    %10763 = vmatmul.bf16.gmra.mxu0 %v10644
    %v10764 = vpop.f32.mrf.mxu0
    %v10765 = vadd.f32 %v10476, %v10764
    %v10766 = vpop.f32.mrf.mxu0
    %v10767 = vadd.f32 %v10478, %v10766
    %10768 = vmatmul.bf16.gmra.mxu0 %v10647
    %v10769 = vpop.f32.mrf.mxu0
    %v10770 = vadd.f32 %v10481, %v10769
    %v10771 = vpop.f32.mrf.mxu0
    %v10772 = vadd.f32 %v10483, %v10771
    %10773 = vmatmul.bf16.gmra.mxu0 %v10650
    %v10774 = vpop.f32.mrf.mxu0
    %v10775 = vadd.f32 %v10486, %v10774
    %v10776 = vpop.f32.mrf.mxu0
    %v10777 = vadd.f32 %v10488, %v10776
    %10778 = vmatmul.bf16.gmra.mxu0 %v10653
    %v10779 = vpop.f32.mrf.mxu0
    %v10780 = vadd.f32 %v10491, %v10779
    %v10781 = vpop.f32.mrf.mxu0
    %v10782 = vadd.f32 %v10493, %v10781
    %10783 = vmatmul.bf16.gmra.mxu0 %v10656
    %v10784 = vpop.f32.mrf.mxu0
    %v10785 = vadd.f32 %v10496, %v10784
    %v10786 = vpop.f32.mrf.mxu0
    %v10787 = vadd.f32 %v10498, %v10786
    %10788 = vmatmul.bf16.gmra.mxu0 %v10659
    %v10789 = vpop.f32.mrf.mxu0
    %v10790 = vadd.f32 %v10501, %v10789
    %v10791 = vpop.f32.mrf.mxu0
    %v10792 = vadd.f32 %v10503, %v10791
    %10793 = vmatmul.bf16.gmra.mxu0 %v10662
    %v10794 = vpop.f32.mrf.mxu0
    %v10795 = vadd.f32 %v10506, %v10794
    %v10796 = vpop.f32.mrf.mxu0
    %v10797 = vadd.f32 %v10508, %v10796
    %10798 = vmatmul.bf16.gmra.mxu0 %v10665
    %v10799 = vpop.f32.mrf.mxu0
    %v10800 = vadd.f32 %v10511, %v10799
    %v10801 = vpop.f32.mrf.mxu0
    %v10802 = vadd.f32 %v10513, %v10801
    %10803 = vmatmul.bf16.gmra.mxu0 %v10668
    %v10804 = vpop.f32.mrf.mxu0
    %v10805 = vadd.f32 %v10516, %v10804
    %v10806 = vpop.f32.mrf.mxu0
    %v10807 = vadd.f32 %v10518, %v10806
    %10808 = vmatmul.bf16.gmra.mxu0 %v10671
    %v10809 = vpop.f32.mrf.mxu0
    %v10810 = vadd.f32 %v10521, %v10809
    %v10811 = vpop.f32.mrf.mxu0
    %v10812 = vadd.f32 %v10523, %v10811
    %10813 = vmatmul.bf16.gmra.mxu0 %v10674
    %v10814 = vpop.f32.mrf.mxu0
    %v10815 = vadd.f32 %v10526, %v10814
    %v10816 = vpop.f32.mrf.mxu0
    %v10817 = vadd.f32 %v10528, %v10816
    %10818 = vmatmul.bf16.gmra.mxu0 %v10677
    %v10819 = vpop.f32.mrf.mxu0
    %v10820 = vadd.f32 %v10531, %v10819
    %v10821 = vpop.f32.mrf.mxu0
    %v10822 = vadd.f32 %v10533, %v10821
    %10823 = vmatmul.bf16.gmra.mxu0 %v10680
    %v10824 = vpop.f32.mrf.mxu0
    %v10825 = vadd.f32 %v10536, %v10824
    %v10826 = vpop.f32.mrf.mxu0
    %v10827 = vadd.f32 %v10538, %v10826
    %10828 = vmatmul.bf16.gmra.mxu0 %v10683
    %v10829 = vpop.f32.mrf.mxu0
    %v10830 = vadd.f32 %v10541, %v10829
    %v10831 = vpop.f32.mrf.mxu0
    %v10832 = vadd.f32 %v10543, %v10831
    %10833 = vmatmul.bf16.gmra.mxu0 %v10686
    %v10834 = vpop.f32.mrf.mxu0
    %v10835 = vadd.f32 %v10546, %v10834
    %v10836 = vpop.f32.mrf.mxu0
    %v10837 = vadd.f32 %v10548, %v10836
    %10838 = vmatmul.bf16.gmra.mxu0 %v10689
    %v10839 = vpop.f32.mrf.mxu0
    %v10840 = vadd.f32 %v10551, %v10839
    %v10841 = vpop.f32.mrf.mxu0
    %v10842 = vadd.f32 %v10553, %v10841
    %10843 = vmatmul.bf16.gmra.mxu0 %v10692
    %v10844 = vpop.f32.mrf.mxu0
    %v10845 = vadd.f32 %v10556, %v10844
    %v10846 = vpop.f32.mrf.mxu0
    %v10847 = vadd.f32 %v10558, %v10846
    %10848 = vmatmul.bf16.gmra.mxu0 %v10695
    %v10849 = vpop.f32.mrf.mxu0
    %v10850 = vadd.f32 %v10561, %v10849
    %v10851 = vpop.f32.mrf.mxu0
    %v10852 = vadd.f32 %v10563, %v10851
    %10853 = vmatmul.bf16.gmra.mxu0 %v10698
    %v10854 = vpop.f32.mrf.mxu0
    %v10855 = vadd.f32 %v10566, %v10854
    %v10856 = vpop.f32.mrf.mxu0
    %v10857 = vadd.f32 %v10568, %v10856
    %10858 = vmatmul.bf16.gmra.mxu0 %v10701
    %v10859 = vpop.f32.mrf.mxu0
    %v10860 = vadd.f32 %v10571, %v10859
    %v10861 = vpop.f32.mrf.mxu0
    %v10862 = vadd.f32 %v10573, %v10861
    %10863 = vmatmul.bf16.gmra.mxu0 %v10704
    %v10864 = vpop.f32.mrf.mxu0
    %v10865 = vadd.f32 %v10576, %v10864
    %v10866 = vpop.f32.mrf.mxu0
    %v10867 = vadd.f32 %v10578, %v10866
    %10868 = vmatmul.bf16.gmra.mxu0 %v10707
    %v10869 = vpop.f32.mrf.mxu0
    %v10870 = vadd.f32 %v10581, %v10869
    %v10871 = vpop.f32.mrf.mxu0
    %v10872 = vadd.f32 %v10583, %v10871
    %10873 = vmatmul.bf16.gmra.mxu0 %v10710
    %v10874 = vpop.f32.mrf.mxu0
    %v10875 = vadd.f32 %v10586, %v10874
    %v10876 = vpop.f32.mrf.mxu0
    %v10877 = vadd.f32 %v10588, %v10876
    %10878 = vmatmul.bf16.gmra.mxu0 %v10713
    %v10879 = vpop.f32.mrf.mxu0
    %v10880 = vadd.f32 %v10591, %v10879
    %v10881 = vpop.f32.mrf.mxu0
    %v10882 = vadd.f32 %v10593, %v10881
    %10883 = vdwg.mxu0
    %s10884 = scalar_lea.vmem [#allocation2], 544
    %v10885 = vld [vmem:[%s10884] sm:$0xf]
    %v10886 = vld [vmem:[%s10884 + $0x4] sm:$0xf]
    %v10887 = vld [vmem:[%s10884 + $0x8] sm:$0xf]
    %v10888 = vld [vmem:[%s10884 + $0xc] sm:$0xf]
    %v10889 = vld [vmem:[%s10884 + $0x10] sm:$0xf]
    %v10890 = vld [vmem:[%s10884 + $0x14] sm:$0xf]
    %v10891 = vld [vmem:[%s10884 + $0x18] sm:$0xf]
    %v10892 = vld [vmem:[%s10884 + $0x1c] sm:$0xf]
    %v10901 = vunpack.c.l.b16 %v10885
    %v10902 = vunpack.c.l.b16 %v10886
    %v10903 = vunpack.c.l.b16 %v10887
    %v10904 = vunpack.c.l.b16 %v10888
    %v10905 = vunpack.c.l.b16 %v10889
    %v10906 = vunpack.c.l.b16 %v10890
    %v10907 = vunpack.c.l.b16 %v10891
    %v10908 = vunpack.c.l.b16 %v10892
    %v10909 = vpack.c.b16 %v10902, %v10901
    %v10910 = vpack.c.b16 %v10904, %v10903
    %v10911 = vpack.c.b16 %v10906, %v10905
    %v10912 = vpack.c.b16 %v10908, %v10907
    %v10918 = vsel %vm2347, %v10256, 0
    %v10921 = vsel %vm2347, %v10257, 0
    %v10924 = vsel %vm2347, %v10258, 0
    %v10927 = vsel %vm2347, %v10259, 0
    %v10930 = vsel %vm2347, %v10260, 0
    %v10933 = vsel %vm2347, %v10261, 0
    %v10936 = vsel %vm2347, %v10262, 0
    %v10939 = vsel %vm2347, %v10263, 0
    %v10942 = vsel %vm2347, %v10264, 0
    %v10945 = vsel %vm2347, %v10265, 0
    %v10948 = vsel %vm2347, %v10266, 0
    %v10951 = vsel %vm2347, %v10267, 0
    %v10954 = vsel %vm2347, %v10268, 0
    %v10957 = vsel %vm2347, %v10269, 0
    %v10960 = vsel %vm2347, %v10270, 0
    %v10963 = vsel %vm2347, %v10271, 0
    %v10966 = vsel %vm2347, %v10272, 0
    %v10969 = vsel %vm2347, %v10273, 0
    %v10972 = vsel %vm2347, %v10274, 0
    %v10975 = vsel %vm2347, %v10275, 0
    %v10978 = vsel %vm2347, %v10276, 0
    %v10981 = vsel %vm2347, %v10277, 0
    %v10984 = vsel %vm2347, %v10278, 0
    %v10987 = vsel %vm2347, %v10279, 0
    %v10990 = vsel %vm2347, %v10280, 0
    %v10993 = vsel %vm2347, %v10281, 0
    %v10996 = vsel %vm2347, %v10282, 0
    %v10999 = vsel %vm2347, %v10283, 0
    %v11002 = vsel %vm2347, %v10284, 0
    %v11005 = vsel %vm2347, %v10285, 0
    %v11008 = vsel %vm2347, %v10286, 0
    %v11011 = vsel %vm2347, %v10287, 0
    %11013 = vmatpush.bf16.msra.mxu0 0
    %11014 = vmatpush.bf16.msra.mxu0 0
    %11015 = vmatpush.bf16.msra.mxu0 0
    %11016 = vmatpush.bf16.msra.mxu0 0
    %11017 = vmatpush.bf16.msra.mxu0 %v10912
    %11018 = vmatpush.bf16.msra.mxu0 %v10911
    %11019 = vmatpush.bf16.msra.mxu0 %v10910
    %11020 = vmatpush.bf16.msra.mxu0 %v10909
    %11021 = vmatmul.bf16.gmra.mxu0 %v10918
    %v11022 = vpop.f32.mrf.mxu0
    %v11023 = vadd.f32 0.0, %v11022
    %v11024 = vpop.f32.mrf.mxu0
    %v11025 = vadd.f32 0.0, %v11024
    %11026 = vmatmul.bf16.gmra.mxu0 %v10921
    %v11027 = vpop.f32.mrf.mxu0
    %v11028 = vadd.f32 0.0, %v11027
    %v11029 = vpop.f32.mrf.mxu0
    %v11030 = vadd.f32 0.0, %v11029
    %11031 = vmatmul.bf16.gmra.mxu0 %v10924
    %v11032 = vpop.f32.mrf.mxu0
    %v11033 = vadd.f32 0.0, %v11032
    %v11034 = vpop.f32.mrf.mxu0
    %v11035 = vadd.f32 0.0, %v11034
    %11036 = vmatmul.bf16.gmra.mxu0 %v10927
    %v11037 = vpop.f32.mrf.mxu0
    %v11038 = vadd.f32 0.0, %v11037
    %v11039 = vpop.f32.mrf.mxu0
    %v11040 = vadd.f32 0.0, %v11039
    %11041 = vmatmul.bf16.gmra.mxu0 %v10930
    %v11042 = vpop.f32.mrf.mxu0
    %v11043 = vadd.f32 0.0, %v11042
    %v11044 = vpop.f32.mrf.mxu0
    %v11045 = vadd.f32 0.0, %v11044
    %11046 = vmatmul.bf16.gmra.mxu0 %v10933
    %v11047 = vpop.f32.mrf.mxu0
    %v11048 = vadd.f32 0.0, %v11047
    %v11049 = vpop.f32.mrf.mxu0
    %v11050 = vadd.f32 0.0, %v11049
    %11051 = vmatmul.bf16.gmra.mxu0 %v10936
    %v11052 = vpop.f32.mrf.mxu0
    %v11053 = vadd.f32 0.0, %v11052
    %v11054 = vpop.f32.mrf.mxu0
    %v11055 = vadd.f32 0.0, %v11054
    %11056 = vmatmul.bf16.gmra.mxu0 %v10939
    %v11057 = vpop.f32.mrf.mxu0
    %v11058 = vadd.f32 0.0, %v11057
    %v11059 = vpop.f32.mrf.mxu0
    %v11060 = vadd.f32 0.0, %v11059
    %11061 = vmatmul.bf16.gmra.mxu0 %v10942
    %v11062 = vpop.f32.mrf.mxu0
    %v11063 = vadd.f32 0.0, %v11062
    %v11064 = vpop.f32.mrf.mxu0
    %v11065 = vadd.f32 0.0, %v11064
    %11066 = vmatmul.bf16.gmra.mxu0 %v10945
    %v11067 = vpop.f32.mrf.mxu0
    %v11068 = vadd.f32 0.0, %v11067
    %v11069 = vpop.f32.mrf.mxu0
    %v11070 = vadd.f32 0.0, %v11069
    %11071 = vmatmul.bf16.gmra.mxu0 %v10948
    %v11072 = vpop.f32.mrf.mxu0
    %v11073 = vadd.f32 0.0, %v11072
    %v11074 = vpop.f32.mrf.mxu0
    %v11075 = vadd.f32 0.0, %v11074
    %11076 = vmatmul.bf16.gmra.mxu0 %v10951
    %v11077 = vpop.f32.mrf.mxu0
    %v11078 = vadd.f32 0.0, %v11077
    %v11079 = vpop.f32.mrf.mxu0
    %v11080 = vadd.f32 0.0, %v11079
    %11081 = vmatmul.bf16.gmra.mxu0 %v10954
    %v11082 = vpop.f32.mrf.mxu0
    %v11083 = vadd.f32 0.0, %v11082
    %v11084 = vpop.f32.mrf.mxu0
    %v11085 = vadd.f32 0.0, %v11084
    %11086 = vmatmul.bf16.gmra.mxu0 %v10957
    %v11087 = vpop.f32.mrf.mxu0
    %v11088 = vadd.f32 0.0, %v11087
    %v11089 = vpop.f32.mrf.mxu0
    %v11090 = vadd.f32 0.0, %v11089
    %11091 = vmatmul.bf16.gmra.mxu0 %v10960
    %v11092 = vpop.f32.mrf.mxu0
    %v11093 = vadd.f32 0.0, %v11092
    %v11094 = vpop.f32.mrf.mxu0
    %v11095 = vadd.f32 0.0, %v11094
    %11096 = vmatmul.bf16.gmra.mxu0 %v10963
    %v11097 = vpop.f32.mrf.mxu0
    %v11098 = vadd.f32 0.0, %v11097
    %v11099 = vpop.f32.mrf.mxu0
    %v11100 = vadd.f32 0.0, %v11099
    %11101 = vmatmul.bf16.gmra.mxu0 %v10966
    %v11102 = vpop.f32.mrf.mxu0
    %v11103 = vadd.f32 0.0, %v11102
    %v11104 = vpop.f32.mrf.mxu0
    %v11105 = vadd.f32 0.0, %v11104
    %11106 = vmatmul.bf16.gmra.mxu0 %v10969
    %v11107 = vpop.f32.mrf.mxu0
    %v11108 = vadd.f32 0.0, %v11107
    %v11109 = vpop.f32.mrf.mxu0
    %v11110 = vadd.f32 0.0, %v11109
    %11111 = vmatmul.bf16.gmra.mxu0 %v10972
    %v11112 = vpop.f32.mrf.mxu0
    %v11113 = vadd.f32 0.0, %v11112
    %v11114 = vpop.f32.mrf.mxu0
    %v11115 = vadd.f32 0.0, %v11114
    %11116 = vmatmul.bf16.gmra.mxu0 %v10975
    %v11117 = vpop.f32.mrf.mxu0
    %v11118 = vadd.f32 0.0, %v11117
    %v11119 = vpop.f32.mrf.mxu0
    %v11120 = vadd.f32 0.0, %v11119
    %11121 = vmatmul.bf16.gmra.mxu0 %v10978
    %v11122 = vpop.f32.mrf.mxu0
    %v11123 = vadd.f32 0.0, %v11122
    %v11124 = vpop.f32.mrf.mxu0
    %v11125 = vadd.f32 0.0, %v11124
    %11126 = vmatmul.bf16.gmra.mxu0 %v10981
    %v11127 = vpop.f32.mrf.mxu0
    %v11128 = vadd.f32 0.0, %v11127
    %v11129 = vpop.f32.mrf.mxu0
    %v11130 = vadd.f32 0.0, %v11129
    %11131 = vmatmul.bf16.gmra.mxu0 %v10984
    %v11132 = vpop.f32.mrf.mxu0
    %v11133 = vadd.f32 0.0, %v11132
    %v11134 = vpop.f32.mrf.mxu0
    %v11135 = vadd.f32 0.0, %v11134
    %11136 = vmatmul.bf16.gmra.mxu0 %v10987
    %v11137 = vpop.f32.mrf.mxu0
    %v11138 = vadd.f32 0.0, %v11137
    %v11139 = vpop.f32.mrf.mxu0
    %v11140 = vadd.f32 0.0, %v11139
    %11141 = vmatmul.bf16.gmra.mxu0 %v10990
    %v11142 = vpop.f32.mrf.mxu0
    %v11143 = vadd.f32 0.0, %v11142
    %v11144 = vpop.f32.mrf.mxu0
    %v11145 = vadd.f32 0.0, %v11144
    %11146 = vmatmul.bf16.gmra.mxu0 %v10993
    %v11147 = vpop.f32.mrf.mxu0
    %v11148 = vadd.f32 0.0, %v11147
    %v11149 = vpop.f32.mrf.mxu0
    %v11150 = vadd.f32 0.0, %v11149
    %11151 = vmatmul.bf16.gmra.mxu0 %v10996
    %v11152 = vpop.f32.mrf.mxu0
    %v11153 = vadd.f32 0.0, %v11152
    %v11154 = vpop.f32.mrf.mxu0
    %v11155 = vadd.f32 0.0, %v11154
    %11156 = vmatmul.bf16.gmra.mxu0 %v10999
    %v11157 = vpop.f32.mrf.mxu0
    %v11158 = vadd.f32 0.0, %v11157
    %v11159 = vpop.f32.mrf.mxu0
    %v11160 = vadd.f32 0.0, %v11159
    %11161 = vmatmul.bf16.gmra.mxu0 %v11002
    %v11162 = vpop.f32.mrf.mxu0
    %v11163 = vadd.f32 0.0, %v11162
    %v11164 = vpop.f32.mrf.mxu0
    %v11165 = vadd.f32 0.0, %v11164
    %11166 = vmatmul.bf16.gmra.mxu0 %v11005
    %v11167 = vpop.f32.mrf.mxu0
    %v11168 = vadd.f32 0.0, %v11167
    %v11169 = vpop.f32.mrf.mxu0
    %v11170 = vadd.f32 0.0, %v11169
    %11171 = vmatmul.bf16.gmra.mxu0 %v11008
    %v11172 = vpop.f32.mrf.mxu0
    %v11173 = vadd.f32 0.0, %v11172
    %v11174 = vpop.f32.mrf.mxu0
    %v11175 = vadd.f32 0.0, %v11174
    %11176 = vmatmul.bf16.gmra.mxu0 %v11011
    %v11177 = vpop.f32.mrf.mxu0
    %v11178 = vadd.f32 0.0, %v11177
    %v11179 = vpop.f32.mrf.mxu0
    %v11180 = vadd.f32 0.0, %v11179
    %11181 = vdwg.mxu0
    %v11182 = vadd.f32 %v10725, %v11023
    %v11183 = vadd.f32 %v10727, %v11025
    %v11184 = vadd.f32 %v10730, %v11028
    %v11185 = vadd.f32 %v10732, %v11030
    %v11186 = vadd.f32 %v10735, %v11033
    %v11187 = vadd.f32 %v10737, %v11035
    %v11188 = vadd.f32 %v10740, %v11038
    %v11189 = vadd.f32 %v10742, %v11040
    %v11190 = vadd.f32 %v10745, %v11043
    %v11191 = vadd.f32 %v10747, %v11045
    %v11192 = vadd.f32 %v10750, %v11048
    %v11193 = vadd.f32 %v10752, %v11050
    %v11194 = vadd.f32 %v10755, %v11053
    %v11195 = vadd.f32 %v10757, %v11055
    %v11196 = vadd.f32 %v10760, %v11058
    %v11197 = vadd.f32 %v10762, %v11060
    %v11198 = vadd.f32 %v10765, %v11063
    %v11199 = vadd.f32 %v10767, %v11065
    %v11200 = vadd.f32 %v10770, %v11068
    %v11201 = vadd.f32 %v10772, %v11070
    %v11202 = vadd.f32 %v10775, %v11073
    %v11203 = vadd.f32 %v10777, %v11075
    %v11204 = vadd.f32 %v10780, %v11078
    %v11205 = vadd.f32 %v10782, %v11080
    %v11206 = vadd.f32 %v10785, %v11083
    %v11207 = vadd.f32 %v10787, %v11085
    %v11208 = vadd.f32 %v10790, %v11088
    %v11209 = vadd.f32 %v10792, %v11090
    %v11210 = vadd.f32 %v10795, %v11093
    %v11211 = vadd.f32 %v10797, %v11095
    %v11212 = vadd.f32 %v10800, %v11098
    %v11213 = vadd.f32 %v10802, %v11100
    %v11214 = vadd.f32 %v10805, %v11103
    %v11215 = vadd.f32 %v10807, %v11105
    %v11216 = vadd.f32 %v10810, %v11108
    %v11217 = vadd.f32 %v10812, %v11110
    %v11218 = vadd.f32 %v10815, %v11113
    %v11219 = vadd.f32 %v10817, %v11115
    %v11220 = vadd.f32 %v10820, %v11118
    %v11221 = vadd.f32 %v10822, %v11120
    %v11222 = vadd.f32 %v10825, %v11123
    %v11223 = vadd.f32 %v10827, %v11125
    %v11224 = vadd.f32 %v10830, %v11128
    %v11225 = vadd.f32 %v10832, %v11130
    %v11226 = vadd.f32 %v10835, %v11133
    %v11227 = vadd.f32 %v10837, %v11135
    %v11228 = vadd.f32 %v10840, %v11138
    %v11229 = vadd.f32 %v10842, %v11140
    %v11230 = vadd.f32 %v10845, %v11143
    %v11231 = vadd.f32 %v10847, %v11145
    %v11232 = vadd.f32 %v10850, %v11148
    %v11233 = vadd.f32 %v10852, %v11150
    %v11234 = vadd.f32 %v10855, %v11153
    %v11235 = vadd.f32 %v10857, %v11155
    %v11236 = vadd.f32 %v10860, %v11158
    %v11237 = vadd.f32 %v10862, %v11160
    %v11238 = vadd.f32 %v10865, %v11163
    %v11239 = vadd.f32 %v10867, %v11165
    %v11240 = vadd.f32 %v10870, %v11168
    %v11241 = vadd.f32 %v10872, %v11170
    %v11242 = vadd.f32 %v10875, %v11173
    %v11243 = vadd.f32 %v10877, %v11175
    %v11244 = vadd.f32 %v10880, %v11178
    %v11245 = vadd.f32 %v10882, %v11180
    %s11246 = scalar_lea.vmem %s4, 5
    %v11247 = vld [vmem:[%s11246] sm:$0x1]
    %v11249 = vperm.slane %v11247, 0
    %v11251 = vadd.f32 %v11182, %v11249
    %v11252 = vadd.f32 %v11183, %v11249
    %v11253 = vadd.f32 %v11184, %v11249
    %v11254 = vadd.f32 %v11185, %v11249
    %v11255 = vadd.f32 %v11186, %v11249
    %v11256 = vadd.f32 %v11187, %v11249
    %v11257 = vadd.f32 %v11188, %v11249
    %v11258 = vadd.f32 %v11189, %v11249
    %v11259 = vadd.f32 %v11190, %v11249
    %v11260 = vadd.f32 %v11191, %v11249
    %v11261 = vadd.f32 %v11192, %v11249
    %v11262 = vadd.f32 %v11193, %v11249
    %v11263 = vadd.f32 %v11194, %v11249
    %v11264 = vadd.f32 %v11195, %v11249
    %v11265 = vadd.f32 %v11196, %v11249
    %v11266 = vadd.f32 %v11197, %v11249
    %v11267 = vadd.f32 %v11198, %v11249
    %v11268 = vadd.f32 %v11199, %v11249
    %v11269 = vadd.f32 %v11200, %v11249
    %v11270 = vadd.f32 %v11201, %v11249
    %v11271 = vadd.f32 %v11202, %v11249
    %v11272 = vadd.f32 %v11203, %v11249
    %v11273 = vadd.f32 %v11204, %v11249
    %v11274 = vadd.f32 %v11205, %v11249
    %v11275 = vadd.f32 %v11206, %v11249
    %v11276 = vadd.f32 %v11207, %v11249
    %v11277 = vadd.f32 %v11208, %v11249
    %v11278 = vadd.f32 %v11209, %v11249
    %v11279 = vadd.f32 %v11210, %v11249
    %v11280 = vadd.f32 %v11211, %v11249
    %v11281 = vadd.f32 %v11212, %v11249
    %v11282 = vadd.f32 %v11213, %v11249
    %v11283 = vadd.f32 %v11214, %v11249
    %v11284 = vadd.f32 %v11215, %v11249
    %v11285 = vadd.f32 %v11216, %v11249
    %v11286 = vadd.f32 %v11217, %v11249
    %v11287 = vadd.f32 %v11218, %v11249
    %v11288 = vadd.f32 %v11219, %v11249
    %v11289 = vadd.f32 %v11220, %v11249
    %v11290 = vadd.f32 %v11221, %v11249
    %v11291 = vadd.f32 %v11222, %v11249
    %v11292 = vadd.f32 %v11223, %v11249
    %v11293 = vadd.f32 %v11224, %v11249
    %v11294 = vadd.f32 %v11225, %v11249
    %v11295 = vadd.f32 %v11226, %v11249
    %v11296 = vadd.f32 %v11227, %v11249
    %v11297 = vadd.f32 %v11228, %v11249
    %v11298 = vadd.f32 %v11229, %v11249
    %v11299 = vadd.f32 %v11230, %v11249
    %v11300 = vadd.f32 %v11231, %v11249
    %v11301 = vadd.f32 %v11232, %v11249
    %v11302 = vadd.f32 %v11233, %v11249
    %v11303 = vadd.f32 %v11234, %v11249
    %v11304 = vadd.f32 %v11235, %v11249
    %v11305 = vadd.f32 %v11236, %v11249
    %v11306 = vadd.f32 %v11237, %v11249
    %v11307 = vadd.f32 %v11238, %v11249
    %v11308 = vadd.f32 %v11239, %v11249
    %v11309 = vadd.f32 %v11240, %v11249
    %v11310 = vadd.f32 %v11241, %v11249
    %v11311 = vadd.f32 %v11242, %v11249
    %v11312 = vadd.f32 %v11243, %v11249
    %v11313 = vadd.f32 %v11244, %v11249
    %v11314 = vadd.f32 %v11245, %v11249
    %v11315 = vadd.f32 %v11251, %v8173
    %v11316 = vadd.f32 %v11252, %v8174
    %v11317 = vadd.f32 %v11253, %v8175
    %v11318 = vadd.f32 %v11254, %v8176
    %v11319 = vadd.f32 %v11255, %v8177
    %v11320 = vadd.f32 %v11256, %v8178
    %v11321 = vadd.f32 %v11257, %v8179
    %v11322 = vadd.f32 %v11258, %v8180
    %v11323 = vadd.f32 %v11259, %v8181
    %v11324 = vadd.f32 %v11260, %v8182
    %v11325 = vadd.f32 %v11261, %v8183
    %v11326 = vadd.f32 %v11262, %v8184
    %v11327 = vadd.f32 %v11263, %v8185
    %v11328 = vadd.f32 %v11264, %v8186
    %v11329 = vadd.f32 %v11265, %v8187
    %v11330 = vadd.f32 %v11266, %v8188
    %v11331 = vadd.f32 %v11267, %v8189
    %v11332 = vadd.f32 %v11268, %v8190
    %v11333 = vadd.f32 %v11269, %v8191
    %v11334 = vadd.f32 %v11270, %v8192
    %v11335 = vadd.f32 %v11271, %v8193
    %v11336 = vadd.f32 %v11272, %v8194
    %v11337 = vadd.f32 %v11273, %v8195
    %v11338 = vadd.f32 %v11274, %v8196
    %v11339 = vadd.f32 %v11275, %v8197
    %v11340 = vadd.f32 %v11276, %v8198
    %v11341 = vadd.f32 %v11277, %v8199
    %v11342 = vadd.f32 %v11278, %v8200
    %v11343 = vadd.f32 %v11279, %v8201
    %v11344 = vadd.f32 %v11280, %v8202
    %v11345 = vadd.f32 %v11281, %v8203
    %v11346 = vadd.f32 %v11282, %v8204
    %v11347 = vadd.f32 %v11283, %v8205
    %v11348 = vadd.f32 %v11284, %v8206
    %v11349 = vadd.f32 %v11285, %v8207
    %v11350 = vadd.f32 %v11286, %v8208
    %v11351 = vadd.f32 %v11287, %v8209
    %v11352 = vadd.f32 %v11288, %v8210
    %v11353 = vadd.f32 %v11289, %v8211
    %v11354 = vadd.f32 %v11290, %v8212
    %v11355 = vadd.f32 %v11291, %v8213
    %v11356 = vadd.f32 %v11292, %v8214
    %v11357 = vadd.f32 %v11293, %v8215
    %v11358 = vadd.f32 %v11294, %v8216
    %v11359 = vadd.f32 %v11295, %v8217
    %v11360 = vadd.f32 %v11296, %v8218
    %v11361 = vadd.f32 %v11297, %v8219
    %v11362 = vadd.f32 %v11298, %v8220
    %v11363 = vadd.f32 %v11299, %v8221
    %v11364 = vadd.f32 %v11300, %v8222
    %v11365 = vadd.f32 %v11301, %v8223
    %v11366 = vadd.f32 %v11302, %v8224
    %v11367 = vadd.f32 %v11303, %v8225
    %v11368 = vadd.f32 %v11304, %v8226
    %v11369 = vadd.f32 %v11305, %v8227
    %v11370 = vadd.f32 %v11306, %v8228
    %v11371 = vadd.f32 %v11307, %v8229
    %v11372 = vadd.f32 %v11308, %v8230
    %v11373 = vadd.f32 %v11309, %v8231
    %v11374 = vadd.f32 %v11310, %v8232
    %v11375 = vadd.f32 %v11311, %v8233
    %v11376 = vadd.f32 %v11312, %v8234
    %v11377 = vadd.f32 %v11313, %v8235
    %v11378 = vadd.f32 %v11314, %v8236
    %v11379 = vmax.f32 %v11315, 0.0
    %v11380 = vmax.f32 %v11316, 0.0
    %v11381 = vmax.f32 %v11317, 0.0
    %v11382 = vmax.f32 %v11318, 0.0
    %v11383 = vmax.f32 %v11319, 0.0
    %v11384 = vmax.f32 %v11320, 0.0
    %v11385 = vmax.f32 %v11321, 0.0
    %v11386 = vmax.f32 %v11322, 0.0
    %v11387 = vmax.f32 %v11323, 0.0
    %v11388 = vmax.f32 %v11324, 0.0
    %v11389 = vmax.f32 %v11325, 0.0
    %v11390 = vmax.f32 %v11326, 0.0
    %v11391 = vmax.f32 %v11327, 0.0
    %v11392 = vmax.f32 %v11328, 0.0
    %v11393 = vmax.f32 %v11329, 0.0
    %v11394 = vmax.f32 %v11330, 0.0
    %v11395 = vmax.f32 %v11331, 0.0
    %v11396 = vmax.f32 %v11332, 0.0
    %v11397 = vmax.f32 %v11333, 0.0
    %v11398 = vmax.f32 %v11334, 0.0
    %v11399 = vmax.f32 %v11335, 0.0
    %v11400 = vmax.f32 %v11336, 0.0
    %v11401 = vmax.f32 %v11337, 0.0
    %v11402 = vmax.f32 %v11338, 0.0
    %v11403 = vmax.f32 %v11339, 0.0
    %v11404 = vmax.f32 %v11340, 0.0
    %v11405 = vmax.f32 %v11341, 0.0
    %v11406 = vmax.f32 %v11342, 0.0
    %v11407 = vmax.f32 %v11343, 0.0
    %v11408 = vmax.f32 %v11344, 0.0
    %v11409 = vmax.f32 %v11345, 0.0
    %v11410 = vmax.f32 %v11346, 0.0
    %v11411 = vmax.f32 %v11347, 0.0
    %v11412 = vmax.f32 %v11348, 0.0
    %v11413 = vmax.f32 %v11349, 0.0
    %v11414 = vmax.f32 %v11350, 0.0
    %v11415 = vmax.f32 %v11351, 0.0
    %v11416 = vmax.f32 %v11352, 0.0
    %v11417 = vmax.f32 %v11353, 0.0
    %v11418 = vmax.f32 %v11354, 0.0
    %v11419 = vmax.f32 %v11355, 0.0
    %v11420 = vmax.f32 %v11356, 0.0
    %v11421 = vmax.f32 %v11357, 0.0
    %v11422 = vmax.f32 %v11358, 0.0
    %v11423 = vmax.f32 %v11359, 0.0
    %v11424 = vmax.f32 %v11360, 0.0
    %v11425 = vmax.f32 %v11361, 0.0
    %v11426 = vmax.f32 %v11362, 0.0
    %v11427 = vmax.f32 %v11363, 0.0
    %v11428 = vmax.f32 %v11364, 0.0
    %v11429 = vmax.f32 %v11365, 0.0
    %v11430 = vmax.f32 %v11366, 0.0
    %v11431 = vmax.f32 %v11367, 0.0
    %v11432 = vmax.f32 %v11368, 0.0
    %v11433 = vmax.f32 %v11369, 0.0
    %v11434 = vmax.f32 %v11370, 0.0
    %v11435 = vmax.f32 %v11371, 0.0
    %v11436 = vmax.f32 %v11372, 0.0
    %v11437 = vmax.f32 %v11373, 0.0
    %v11438 = vmax.f32 %v11374, 0.0
    %v11439 = vmax.f32 %v11375, 0.0
    %v11440 = vmax.f32 %v11376, 0.0
    %v11441 = vmax.f32 %v11377, 0.0
    %v11442 = vmax.f32 %v11378, 0.0
    %v11443 = vsel %vm2347, %v11379, 0.0
    %v11444 = vsel %vm2347, %v11380, 0.0
    %v11445 = vadd.f32 %v11443, %v11444
    %v11446 = vsel %vm2347, %v11381, 0.0
    %v11447 = vadd.f32 %v11445, %v11446
    %v11448 = vsel %vm2347, %v11382, 0.0
    %v11449 = vadd.f32 %v11447, %v11448
    %v11450 = vsel %vm2347, %v11383, 0.0
    %v11451 = vadd.f32 %v11449, %v11450
    %v11452 = vsel %vm2347, %v11384, 0.0
    %v11453 = vadd.f32 %v11451, %v11452
    %v11454 = vsel %vm2347, %v11385, 0.0
    %v11455 = vadd.f32 %v11453, %v11454
    %v11456 = vsel %vm2347, %v11386, 0.0
    %v11457 = vadd.f32 %v11455, %v11456
    %v11458 = vsel %vm2347, %v11387, 0.0
    %v11459 = vadd.f32 %v11457, %v11458
    %v11460 = vsel %vm2347, %v11388, 0.0
    %v11461 = vadd.f32 %v11459, %v11460
    %v11462 = vsel %vm2347, %v11389, 0.0
    %v11463 = vadd.f32 %v11461, %v11462
    %v11464 = vsel %vm2347, %v11390, 0.0
    %v11465 = vadd.f32 %v11463, %v11464
    %v11466 = vsel %vm2347, %v11391, 0.0
    %v11467 = vadd.f32 %v11465, %v11466
    %v11468 = vsel %vm2347, %v11392, 0.0
    %v11469 = vadd.f32 %v11467, %v11468
    %v11470 = vsel %vm2347, %v11393, 0.0
    %v11471 = vadd.f32 %v11469, %v11470
    %v11472 = vsel %vm2347, %v11394, 0.0
    %v11473 = vadd.f32 %v11471, %v11472
    %v11474 = vrot.slane %v11473, 4
    %v11475 = vadd.f32 %v11473, %v11474
    %v11476 = vrot.slane %v11475, 2
    %v11477 = vadd.f32 %v11475, %v11476
    %v11478 = vrot.slane %v11477, 1
    %v11479 = vadd.f32 %v11477, %v11478
    %v11480 = vsel %vm2347, %v11395, 0.0
    %v11481 = vsel %vm2347, %v11396, 0.0
    %v11482 = vadd.f32 %v11480, %v11481
    %v11483 = vsel %vm2347, %v11397, 0.0
    %v11484 = vadd.f32 %v11482, %v11483
    %v11485 = vsel %vm2347, %v11398, 0.0
    %v11486 = vadd.f32 %v11484, %v11485
    %v11487 = vsel %vm2347, %v11399, 0.0
    %v11488 = vadd.f32 %v11486, %v11487
    %v11489 = vsel %vm2347, %v11400, 0.0
    %v11490 = vadd.f32 %v11488, %v11489
    %v11491 = vsel %vm2347, %v11401, 0.0
    %v11492 = vadd.f32 %v11490, %v11491
    %v11493 = vsel %vm2347, %v11402, 0.0
    %v11494 = vadd.f32 %v11492, %v11493
    %v11495 = vsel %vm2347, %v11403, 0.0
    %v11496 = vadd.f32 %v11494, %v11495
    %v11497 = vsel %vm2347, %v11404, 0.0
    %v11498 = vadd.f32 %v11496, %v11497
    %v11499 = vsel %vm2347, %v11405, 0.0
    %v11500 = vadd.f32 %v11498, %v11499
    %v11501 = vsel %vm2347, %v11406, 0.0
    %v11502 = vadd.f32 %v11500, %v11501
    %v11503 = vsel %vm2347, %v11407, 0.0
    %v11504 = vadd.f32 %v11502, %v11503
    %v11505 = vsel %vm2347, %v11408, 0.0
    %v11506 = vadd.f32 %v11504, %v11505
    %v11507 = vsel %vm2347, %v11409, 0.0
    %v11508 = vadd.f32 %v11506, %v11507
    %v11509 = vsel %vm2347, %v11410, 0.0
    %v11510 = vadd.f32 %v11508, %v11509
    %v11511 = vrot.slane %v11510, 4
    %v11512 = vadd.f32 %v11510, %v11511
    %v11513 = vrot.slane %v11512, 2
    %v11514 = vadd.f32 %v11512, %v11513
    %v11515 = vrot.slane %v11514, 1
    %v11516 = vadd.f32 %v11514, %v11515
    %v11517 = vsel %vm2347, %v11411, 0.0
    %v11518 = vsel %vm2347, %v11412, 0.0
    %v11519 = vadd.f32 %v11517, %v11518
    %v11520 = vsel %vm2347, %v11413, 0.0
    %v11521 = vadd.f32 %v11519, %v11520
    %v11522 = vsel %vm2347, %v11414, 0.0
    %v11523 = vadd.f32 %v11521, %v11522
    %v11524 = vsel %vm2347, %v11415, 0.0
    %v11525 = vadd.f32 %v11523, %v11524
    %v11526 = vsel %vm2347, %v11416, 0.0
    %v11527 = vadd.f32 %v11525, %v11526
    %v11528 = vsel %vm2347, %v11417, 0.0
    %v11529 = vadd.f32 %v11527, %v11528
    %v11530 = vsel %vm2347, %v11418, 0.0
    %v11531 = vadd.f32 %v11529, %v11530
    %v11532 = vsel %vm2347, %v11419, 0.0
    %v11533 = vadd.f32 %v11531, %v11532
    %v11534 = vsel %vm2347, %v11420, 0.0
    %v11535 = vadd.f32 %v11533, %v11534
    %v11536 = vsel %vm2347, %v11421, 0.0
    %v11537 = vadd.f32 %v11535, %v11536
    %v11538 = vsel %vm2347, %v11422, 0.0
    %v11539 = vadd.f32 %v11537, %v11538
    %v11540 = vsel %vm2347, %v11423, 0.0
    %v11541 = vadd.f32 %v11539, %v11540
    %v11542 = vsel %vm2347, %v11424, 0.0
    %v11543 = vadd.f32 %v11541, %v11542
    %v11544 = vsel %vm2347, %v11425, 0.0
    %v11545 = vadd.f32 %v11543, %v11544
    %v11546 = vsel %vm2347, %v11426, 0.0
    %v11547 = vadd.f32 %v11545, %v11546
    %v11548 = vrot.slane %v11547, 4
    %v11549 = vadd.f32 %v11547, %v11548
    %v11550 = vrot.slane %v11549, 2
    %v11551 = vadd.f32 %v11549, %v11550
    %v11552 = vrot.slane %v11551, 1
    %v11553 = vadd.f32 %v11551, %v11552
    %v11554 = vsel %vm2347, %v11427, 0.0
    %v11555 = vsel %vm2347, %v11428, 0.0
    %v11556 = vadd.f32 %v11554, %v11555
    %v11557 = vsel %vm2347, %v11429, 0.0
    %v11558 = vadd.f32 %v11556, %v11557
    %v11559 = vsel %vm2347, %v11430, 0.0
    %v11560 = vadd.f32 %v11558, %v11559
    %v11561 = vsel %vm2347, %v11431, 0.0
    %v11562 = vadd.f32 %v11560, %v11561
    %v11563 = vsel %vm2347, %v11432, 0.0
    %v11564 = vadd.f32 %v11562, %v11563
    %v11565 = vsel %vm2347, %v11433, 0.0
    %v11566 = vadd.f32 %v11564, %v11565
    %v11567 = vsel %vm2347, %v11434, 0.0
    %v11568 = vadd.f32 %v11566, %v11567
    %v11569 = vsel %vm2347, %v11435, 0.0
    %v11570 = vadd.f32 %v11568, %v11569
    %v11571 = vsel %vm2347, %v11436, 0.0
    %v11572 = vadd.f32 %v11570, %v11571
    %v11573 = vsel %vm2347, %v11437, 0.0
    %v11574 = vadd.f32 %v11572, %v11573
    %v11575 = vsel %vm2347, %v11438, 0.0
    %v11576 = vadd.f32 %v11574, %v11575
    %v11577 = vsel %vm2347, %v11439, 0.0
    %v11578 = vadd.f32 %v11576, %v11577
    %v11579 = vsel %vm2347, %v11440, 0.0
    %v11580 = vadd.f32 %v11578, %v11579
    %v11581 = vsel %vm2347, %v11441, 0.0
    %v11582 = vadd.f32 %v11580, %v11581
    %v11583 = vsel %vm2347, %v11442, 0.0
    %v11584 = vadd.f32 %v11582, %v11583
    %v11585 = vrot.slane %v11584, 4
    %v11586 = vadd.f32 %v11584, %v11585
    %v11587 = vrot.slane %v11586, 2
    %v11588 = vadd.f32 %v11586, %v11587
    %v11589 = vrot.slane %v11588, 1
    %v11590 = vadd.f32 %v11588, %v11589
    %v11591 = vmul.f32 %v11479, 0.0078125
    %v11592 = vmul.f32 %v11516, 0.0078125
    %v11593 = vmul.f32 %v11553, 0.0078125
    %v11594 = vmul.f32 %v11590, 0.0078125
    %v11595 = vpack.c.bf16 %v11591, %v11591
    %v11596 = vpack.c.bf16 %v11592, %v11592
    %v11597 = vpack.c.bf16 %v11593, %v11593
    %v11598 = vpack.c.bf16 %v11594, %v11594
    %v11599 = vld [vmem:[%s5] sm:$0xf]
    %v11600 = vld [vmem:[%s5 + $0x4] sm:$0xf]
    %v11601 = vld [vmem:[%s5 + $0x8] sm:$0xf]
    %v11602 = vld [vmem:[%s5 + $0xc] sm:$0xf]
    %v11603 = vld [vmem:[%s5 + $0x10] sm:$0xf]
    %v11604 = vld [vmem:[%s5 + $0x14] sm:$0xf]
    %v11605 = vld [vmem:[%s5 + $0x18] sm:$0xf]
    %v11606 = vld [vmem:[%s5 + $0x1c] sm:$0xf]
    %v11607 = vld [vmem:[%s6] sm:$0x1]
    %v11609 = vperm.slane %v11607, 0
    %v11615 = vunpack.c.l.b16 %v11595
    %v11616 = vunpack.c.l.b16 %v11596
    %v11617 = vunpack.c.l.b16 %v11597
    %v11618 = vunpack.c.l.b16 %v11598
    %vm11619 = vcmask 1041409
    %v11620 = vsel %vm11619, %v11616, %v11615
    %vm11621 = vcmask 1042434
    %v11622 = vsel %vm11621, %v11617, %v11620
    %vm11623 = vcmask 1043459
    %v11624 = vsel %vm11623, %v11618, %v11622
    %v11625 = vpack.c.b16 %v11624, %v11624
    %v11634 = vunpack.c.l.b16 %v11599
    %v11635 = vunpack.c.l.b16 %v11600
    %v11636 = vunpack.c.l.b16 %v11601
    %v11637 = vunpack.c.l.b16 %v11602
    %v11638 = vunpack.c.l.b16 %v11603
    %v11639 = vunpack.c.l.b16 %v11604
    %v11640 = vunpack.c.l.b16 %v11605
    %v11641 = vunpack.c.l.b16 %v11606
    %v11642 = vpack.c.b16 %v11635, %v11634
    %v11643 = vpack.c.b16 %v11637, %v11636
    %v11644 = vpack.c.b16 %v11639, %v11638
    %v11645 = vpack.c.b16 %v11641, %v11640
    %v11651 = vsel %vm2347, %v11625, 0
    %11653 = vmatpush.bf16.msra.mxu0 0
    %11654 = vmatpush.bf16.msra.mxu0 0
    %11655 = vmatpush.bf16.msra.mxu0 0
    %11656 = vmatpush.bf16.msra.mxu0 0
    %11657 = vmatpush.bf16.msra.mxu0 %v11645
    %11658 = vmatpush.bf16.msra.mxu0 %v11644
    %11659 = vmatpush.bf16.msra.mxu0 %v11643
    %11660 = vmatpush.bf16.msra.mxu0 %v11642
    %11661 = vmatmul.bf16.gmra.mxu0 %v11651
    %v11662 = vpop.f32.mrf.mxu0
    %v11663 = vadd.f32 %v11609, %v11662
    %v11664 = vpop.f32.mrf.mxu0
    %11665 = vdwg.mxu0
    %vm11666 = vcmask 27648
    %v11667 = vsel %vm11666, %v11663, -inf
    %11668 = vmax.xlane.f32.xlu0 %v11667
    %v11669 = vpop.xlane.xlu0 %11668
    %v11670 = vsub.f32 %v11663, %v11669
    %v11671 = vmul.f32 %v11670, 1.442695
    %v11672 = vpow.pop %v11671
    %v11673 = vsel %vm11666, %v11672, 0.0
    %11674 = vadd.xlane.f32.xlu0 %v11673
    %v11675 = vpop.xlane.xlu0 %11674
    %v11676 = vrcp.pop %v11675
    %v11677 = vmul.f32 %v11675, %v11676
    %v11678 = vsub.f32 1.0, %v11677
    %v11679 = vmul.f32 %v11676, %v11678
    %v11680 = vadd.f32 %v11676, %v11679
    %vm11681 = vweird.f32 %v11675
    %vm11682 = vweird.f32 %v11676
    %vm11683 = vmor %vm11681, %vm11682
    %v11684 = vsel %vm11683, %v11676, %v11680
    %v11685 = vand.u32 2147483647, %v11675
    %vm11686 = vcmp.eq.f32.partialorder %v11685, 8.507059e+37
    %v11687 = vand.u32 %v11675, 2147483648
    %v11688 = vor.u32 1.1754944e-38, %v11687
    %v11689 = vsel %vm11686, %v11688, %v11684
    %v11690 = vmul.f32 %v11672, %v11689
    %11691 = vst.msk [vmem:[#allocation5] sm:$0xf] %vm11666, %v11690
    // Predicated region
    $region34: #{tpu_custom_call.1} parent=1 // pred_check
      _
    $region35: #{tpu_custom_call.1} parent=1 // pred_check_branch
      %11693 = sbr.rel (0) target = $region37
    $region36: #{tpu_custom_call.1} parent=1 // pred_region
      %11695 = vsyncadd [#allocation4], 0
      %s11697 = sshll.u32 [#allocation5], 4
      %s11698 = int_to_ptr.vmem [resolvable:$true] %s11697
      %s11699 = sshll.u32 %s7, 4
      %s11700 = int_to_ptr.hbm [resolvable:$true] %s11699
      %11702 = dma.vmem_to_hbm [thread:$0]  %s11698, 64, %s11700, [#allocation4]
    $region37: #{tpu_custom_call.1} parent=1 // pred_fallthru
      _
    // Predicated region
    $region38: #{tpu_custom_call.1} parent=1 // pred_check
      _
    $region39: #{tpu_custom_call.1} parent=1 // pred_check_branch
      %11704 = sbr.rel (0) target = $region41
    $region40: #{tpu_custom_call.1} parent=1 // pred_region
      %11706 = dma.done [#allocation4], 64
    $region41: #{tpu_custom_call.1} parent=1 // pred_fallthru
      _
    %11707 = vsyncpa [#allocation3], 1
    %11708 = vsyncpa [#allocation4], 1

</llo_original>
